<compile_context>
chip_gen: v5e
topology: v5e:2x2
jax: 0.10.0
libtpu: 0.0.40
codegen_flags: <defaults>
</compile_context>

<pallas_src>
from functools import partial

import jax
import jax.numpy as jnp
from jax.experimental import pallas as pl
from jax.experimental.pallas import tpu as pltpu

# ----------------------------- reduced MHRMedSeg config -----------------------------
# Reference: MHRMedSeg(dim=96, img_size=1024); reduced sizes so the script runs quickly.
IMG = 64             # img_size            (ref: 1024)
PATCH = 16           # patch size          (ref: 16)
EMBED = 64           # encoder dim         (ref: 96)
HEADS = 4
DEPTH = 4
WINDOW = 2           # local-attention window
GLOBAL_IDX = (1, 3)  # blocks using global attention (LGViT local/global mix)
MLP_RATIO = 4
OUT_CHANS = 128      # neck out channels   (ref: 256) -- multiple of 128 for lane-dense stores
HP = IMG // PATCH    # token grid side = 4
HEAD_DIM = EMBED // HEADS
LN_EPS = 1e-6


# ================================ tile-size helpers ================================
def _pick_row_tile(m, target=256):
    """Largest multiple-of-8 divisor of m (<= target) that still yields >= 2 grid steps."""
    for t in (target, 128, 64, 32, 16, 8):
        if t < m and m % t == 0:
            return t
    return m


def _pick_col_tile(n):
    for t in (512, 256, 128):
        if t < n and n % t == 0:
            return t
    return n


def _pick_k_tile(k):
    for t in (512, 256, 128):
        if t < k and k % t == 0:
            return t
    return k


def _pick_group(bh, n):
    """Largest divisor of bh with <= ~512 score rows per step, keeping >= 2 grid steps."""
    best = 1
    for d in range(1, bh + 1):
        if bh % d == 0 and d * n <= 512 and (bh // d >= 2 or bh == 1):
            best = d
    return best


# ================================ in-kernel math helpers ================================
def _erf_approx(x):
    # Abramowitz & Stegun 7.1.26 rational approximation (abs err ~1.5e-7) so exact
    # (erf-based) GELU can be evaluated with VPU/EUP ops.
    a1, a2, a3, a4, a5 = 0.254829592, -0.284496736, 1.421413741, -1.453152027, 1.061405429
    pp = 0.3275911
    ax = jnp.abs(x)
    t = 1.0 / (1.0 + pp * ax)
    poly = ((((a5 * t + a4) * t + a3) * t + a2) * t + a1) * t
    y = 1.0 - poly * jnp.exp(-ax * ax)
    return jnp.where(x >= 0, y, -y)


def _gelu_exact(x):
    return 0.5 * x * (1.0 + _erf_approx(x * 0.7071067811865476))


def _layernorm(x, gamma, beta, eps):
    mu = jnp.mean(x, axis=-1, keepdims=True)
    xc = x - mu
    var = jnp.mean(xc * xc, axis=-1, keepdims=True)   # biased variance (PyTorch LayerNorm)
    return xc * jax.lax.rsqrt(var + eps) * gamma + beta


# ================================ Pallas kernels ================================
def _make_matmul_kernel(has_bias, act):
    """Tiled matmul with K-axis accumulation into a VMEM f32 scratch."""
    def kernel(*refs):
        if has_bias:
            x_ref, w_ref, b_ref, o_ref, acc_ref = refs
        else:
            x_ref, w_ref, o_ref, acc_ref = refs
            b_ref = None

        @pl.when(pl.program_id(2) == 0)
        def _init():
            acc_ref[...] = jnp.zeros_like(acc_ref)

        acc_ref[...] += jnp.dot(x_ref[...], w_ref[...],
                                preferred_element_type=jnp.float32)

        @pl.when(pl.program_id(2) == pl.num_programs(2) - 1)
        def _finalize():
            y = acc_ref[...]
            if b_ref is not None:
                y = y + b_ref[...]
            if act == "gelu":
                y = _gelu_exact(y)
            o_ref[...] = y.astype(o_ref.dtype)

    return kernel


def _make_fused_linear_kernel(ln_in, has_bias, act, ln_out, eps):
    """[LayerNorm prologue] -> matmul -> [+bias] -> [GELU] -> [LayerNorm epilogue]."""
    def kernel(*refs):
        idx = 0
        x_ref = refs[idx]; idx += 1
        if ln_in:
            gi_ref, bi_ref = refs[idx], refs[idx + 1]; idx += 2
        w_ref = refs[idx]; idx += 1
        if has_bias:
            b_ref = refs[idx]; idx += 1
        if ln_out:
            go_ref, bo_ref = refs[idx], refs[idx + 1]; idx += 2
        o_ref = refs[idx]

        x = x_ref[...]                                    # f32 (LN stats in f32)
        if ln_in:
            x = _layernorm(x, gi_ref[...], bi_ref[...], eps)
        y = jnp.dot(x.astype(jnp.bfloat16), w_ref[...],
                    preferred_element_type=jnp.float32)
        if has_bias:
            y = y + b_ref[...]
        if act == "gelu":
            y = _gelu_exact(y)
        if ln_out:
            y = _layernorm(y, go_ref[...], bo_ref[...], eps)
        o_ref[...] = y.astype(o_ref.dtype)

    return kernel


def _make_mlp_kernel(eps):
    """out = x + Linear2(GELU(Linear1(LayerNorm(x)))) -- hidden never leaves VMEM."""
    def kernel(x_ref, g_ref, b_ref, w1_ref, b1_ref, w2_ref, b2_ref, o_ref):
        x = x_ref[...]                                    # (tm, C) f32
        xn = _layernorm(x, g_ref[...], b_ref[...], eps)
        h = jnp.dot(xn.astype(jnp.bfloat16), w1_ref[...],
                    preferred_element_type=jnp.float32) + b1_ref[...]
        h = _gelu_exact(h)
        y = jnp.dot(h.astype(jnp.bfloat16), w2_ref[...],
                    preferred_element_type=jnp.float32) + b2_ref[...]
        o_ref[...] = (x + y).astype(o_ref.dtype)

    return kernel


def _make_attn_kernel(scale, kh, kw):
    """Batched attention over G (batch*head) slices per step; rel-pos bias built in-kernel."""
    def kernel(q_ref, k_ref, v_ref, rh_ref, rw_ref, eh_ref, ew_ref, o_ref):
        q = q_ref[...]                                    # (G, N, D) bf16
        k = k_ref[...]
        v = v_ref[...]
        s = jnp.einsum('gqd,gkd->gqk', q, k,
                       preferred_element_type=jnp.float32) * scale      # (G, N, N) f32
        g, n, _ = s.shape
        # decomposed rel-pos bias: expand (G,N,kh)/(G,N,kw) terms to (G,N,N) with one-hot matmuls
        rh = rh_ref[...].reshape(g * n, kh)
        rw = rw_ref[...].reshape(g * n, kw)
        bias = (jnp.dot(rh, eh_ref[...], preferred_element_type=jnp.float32)
                + jnp.dot(rw, ew_ref[...], preferred_element_type=jnp.float32)
                ).reshape(g, n, n)
        s = s + bias
        s = s - jnp.max(s, axis=-1, keepdims=True)
        e = jnp.exp(s)
        p = e * pl.reciprocal(jnp.sum(e, axis=-1, keepdims=True), approx=True)
        o = jnp.einsum('gqk,gkd->gqd', p.astype(jnp.bfloat16), v,
                       preferred_element_type=jnp.float32)
        o_ref[...] = o.astype(o_ref.dtype)

    return kernel


def _make_conv3_ln_kernel(H, W, eps):
    """3x3 conv (pad already applied) as 9 shifted matmuls + LayerNorm2d epilogue."""
    def kernel(xp_ref, w_ref, g_ref, b_ref, o_ref):
        x = xp_ref[0]                                     # (H+2, W+2, C) bf16
        cout = w_ref.shape[-1]
        acc = jnp.zeros((H * W, cout), jnp.float32)
        for di in range(3):
            for dj in range(3):
                patch = x[di:di + H, dj:dj + W, :].reshape(H * W, -1)
                acc = acc + jnp.dot(patch, w_ref[di * 3 + dj],
                                    preferred_element_type=jnp.float32)
        y = _layernorm(acc, g_ref[...], b_ref[...], eps)
        o_ref[0] = y.reshape(H, W, cout).astype(o_ref.dtype)

    return kernel


# ================================ Pallas wrappers ================================
def pallas_matmul(x, w, b=None, act=None):
    """y = x @ w (+ b) (+GELU). bf16 MXU inputs, f32 accumulation, full M/N/K tiling."""
    M, K = x.shape
    _, N = w.shape
    tm, tn, tk = _pick_row_tile(M), _pick_col_tile(N), _pick_k_tile(K)
    has_bias = b is not None

    in_specs = [pl.BlockSpec((tm, tk), lambda i, j, kk: (i, kk)),
                pl.BlockSpec((tk, tn), lambda i, j, kk: (kk, j))]
    inputs = [x.astype(jnp.bfloat16), w.astype(jnp.bfloat16)]
    if has_bias:
        in_specs.append(pl.BlockSpec((1, tn), lambda i, j, kk: (0, j)))
        inputs.append(b.reshape(1, N).astype(jnp.float32))

    return pl.pallas_call(
        _make_matmul_kernel(has_bias, act),
        out_shape=jax.ShapeDtypeStruct((M, N), jnp.float32),
        grid=(M // tm, N // tn, K // tk),
        in_specs=in_specs,
        out_specs=pl.BlockSpec((tm, tn), lambda i, j, kk: (i, j)),
        scratch_shapes=[pltpu.VMEM((tm, tn), jnp.float32)],
        compiler_params=pltpu.CompilerParams(
            dimension_semantics=("parallel", "parallel", "arbitrary")),
        cost_estimate=pl.CostEstimate(
            flops=2 * M * N * K,
            transcendentals=M * N if act == "gelu" else 0,
            bytes_accessed=(M * K + K * N) * 2 + M * N * 4),
    )(*inputs)


def pallas_fused_linear(x, w, b=None, ln_in=None, ln_out=None, act=None, eps=LN_EPS):
    """Fused [LN] -> x @ w (+b) -> [GELU] -> [LN].  K and N kept whole so LN stats are exact."""
    M, K = x.shape
    _, N = w.shape
    tm = _pick_row_tile(M)

    inputs = [x.astype(jnp.float32)]
    in_specs = [pl.BlockSpec((tm, K), lambda i: (i, 0))]
    if ln_in is not None:
        g, bt = ln_in
        inputs += [g.reshape(1, K).astype(jnp.float32), bt.reshape(1, K).astype(jnp.float32)]
        in_specs += [pl.BlockSpec((1, K), lambda i: (0, 0))] * 2
    inputs.append(w.astype(jnp.bfloat16))
    in_specs.append(pl.BlockSpec((K, N), lambda i: (0, 0)))
    if b is not None:
        inputs.append(b.reshape(1, N).astype(jnp.float32))
        in_specs.append(pl.BlockSpec((1, N), lambda i: (0, 0)))
    if ln_out is not None:
        g2, b2 = ln_out
        inputs += [g2.reshape(1, N).astype(jnp.float32), b2.reshape(1, N).astype(jnp.float32)]
        in_specs += [pl.BlockSpec((1, N), lambda i: (0, 0))] * 2

    return pl.pallas_call(
        _make_fused_linear_kernel(ln_in is not None, b is not None, act,
                                  ln_out is not None, eps),
        out_shape=jax.ShapeDtypeStruct((M, N), jnp.float32),
        grid=(M // tm,),
        in_specs=in_specs,
        out_specs=pl.BlockSpec((tm, N), lambda i: (i, 0)),
        compiler_params=pltpu.CompilerParams(dimension_semantics=("parallel",)),
        cost_estimate=pl.CostEstimate(
            flops=2 * M * K * N,
            transcendentals=M * N if act == "gelu" else 0,
            bytes_accessed=M * K * 4 + K * N * 2 + M * N * 4),
    )(*inputs)


def pallas_ln_mlp_residual(x, g, b, w1, b1, w2, b2, eps=LN_EPS):
    """out = x + MLP(LayerNorm(x)); the GELU hidden stays in VMEM."""
    M, C = x.shape
    Hd = w1.shape[1]
    tm = _pick_row_tile(M)
    return pl.pallas_call(
        _make_mlp_kernel(eps),
        out_shape=jax.ShapeDtypeStruct((M, C), jnp.float32),
        grid=(M // tm,),
        in_specs=[pl.BlockSpec((tm, C), lambda i: (i, 0)),
                  pl.BlockSpec((1, C), lambda i: (0, 0)),
                  pl.BlockSpec((1, C), lambda i: (0, 0)),
                  pl.BlockSpec((C, Hd), lambda i: (0, 0)),
                  pl.BlockSpec((1, Hd), lambda i: (0, 0)),
                  pl.BlockSpec((Hd, C), lambda i: (0, 0)),
                  pl.BlockSpec((1, C), lambda i: (0, 0))],
        out_specs=pl.BlockSpec((tm, C), lambda i: (i, 0)),
        compiler_params=pltpu.CompilerParams(dimension_semantics=("parallel",)),
        cost_estimate=pl.CostEstimate(
            flops=4 * M * C * Hd,
            transcendentals=M * Hd,
            bytes_accessed=2 * M * C * 4 + 2 * C * Hd * 2),
    )(x.astype(jnp.float32),
      g.reshape(1, C).astype(jnp.float32), b.reshape(1, C).astype(jnp.float32),
      w1.astype(jnp.bfloat16), b1.reshape(1, Hd).astype(jnp.float32),
      w2.astype(jnp.bfloat16), b2.reshape(1, C).astype(jnp.float32))


def pallas_attention(q, k, v, rel_h, rel_w, eh, ew, scale):
    """q/k/v: (BH, N, D) bf16; rel_h/rel_w: (BH, N, Kh/Kw) f32; eh/ew: one-hot expanders."""
    BH, N, D = q.shape
    KH, KW = rel_h.shape[-1], rel_w.shape[-1]
    G = _pick_group(BH, N)

    def spec3(last):
        return pl.BlockSpec((G, N, last), lambda i: (i, 0, 0))

    return pl.pallas_call(
        _make_attn_kernel(scale, KH, KW),
        out_shape=jax.ShapeDtypeStruct((BH, N, D), jnp.float32),
        grid=(BH // G,),
        in_specs=[spec3(D), spec3(D), spec3(D), spec3(KH), spec3(KW),
                  pl.BlockSpec((KH, N), lambda i: (0, 0)),
                  pl.BlockSpec((KW, N), lambda i: (0, 0))],
        out_specs=spec3(D),
        compiler_params=pltpu.CompilerParams(dimension_semantics=("parallel",)),
        cost_estimate=pl.CostEstimate(
            flops=4 * BH * N * N * D + 2 * BH * N * N * (KH + KW),
            transcendentals=BH * N * N,
            bytes_accessed=3 * BH * N * D * 2 + BH * N * (KH + KW) * 4 + BH * N * D * 4),
    )(q, k, v, rel_h, rel_w, eh, ew)


def pallas_conv3x3_ln(xp, w9, gamma, beta, H, W, eps=LN_EPS):
    """xp: (B, H+2, W+2, C) padded bf16; w9: (9, C, Cout) bf16; LN2d epilogue over channels."""
    B, _, _, C = xp.shape
    Cout = w9.shape[-1]
    return pl.pallas_call(
        _make_conv3_ln_kernel(H, W, eps),
        out_shape=jax.ShapeDtypeStruct((B, H, W, Cout), jnp.float32),
        grid=(B,),
        in_specs=[pl.BlockSpec((1, H + 2, W + 2, C), lambda bI: (bI, 0, 0, 0)),
                  pl.BlockSpec((9, C, Cout), lambda bI: (0, 0, 0)),
                  pl.BlockSpec((1, Cout), lambda bI: (0, 0)),
                  pl.BlockSpec((1, Cout), lambda bI: (0, 0))],
        out_specs=pl.BlockSpec((1, H, W, Cout), lambda bI: (bI, 0, 0, 0)),
        compiler_params=pltpu.CompilerParams(dimension_semantics=("parallel",)),
        cost_estimate=pl.CostEstimate(
            flops=2 * B * H * W * 9 * C * Cout,
            transcendentals=0,
            bytes_accessed=B * (H + 2) * (W + 2) * C * 2 + 9 * C * Cout * 2 + B * H * W * Cout * 4),
    )(xp, w9,
      gamma.reshape(1, Cout).astype(jnp.float32), beta.reshape(1, Cout).astype(jnp.float32))


# ================================ ViT building blocks ================================
def window_partition(x, ws):
    B, H, W, C = x.shape
    pad_h = (ws - H % ws) % ws
    pad_w = (ws - W % ws) % ws
    if pad_h or pad_w:
        # TODO(synk): with padding, the reference applies LN1 before zero-padding; here LN1 is
        # fused into the QKV kernel (applied after padding).  No padding occurs in this config.
        x = jnp.pad(x, ((0, 0), (0, pad_h), (0, pad_w), (0, 0)))
    Hp, Wp = H + pad_h, W + pad_w
    x = x.reshape(B, Hp // ws, ws, Wp // ws, ws, C)
    windows = x.transpose(0, 1, 3, 2, 4, 5).reshape(-1, ws, ws, C)
    return windows, (Hp, Wp)


def window_unpartition(windows, ws, pad_hw, hw):
    Hp, Wp = pad_hw
    H, W = hw
    B = windows.shape[0] // (Hp * Wp // ws // ws)
    x = windows.reshape(B, Hp // ws, Wp // ws, ws, ws, -1)
    x = x.transpose(0, 1, 3, 2, 4, 5).reshape(B, Hp, Wp, -1)
    return x[:, :H, :W, :]


def get_rel_pos(q_size, k_size, rel_pos):
    # TODO(synk): F.interpolate branch of get_rel_pos omitted; tables always have 2*max(q,k)-1 rows here.
    q_coords = jnp.arange(q_size)[:, None] * max(k_size / q_size, 1.0)
    k_coords = jnp.arange(k_size)[None, :] * max(q_size / k_size, 1.0)
    rel = (q_coords - k_coords) + (k_size - 1) * max(q_size / k_size, 1.0)
    return rel_pos[rel.astype(jnp.int32)]                 # (q, k, head_dim)


def attention(x, p):
    """x: (B_, Hh, Ww, C) windows/tokens; LN1 is fused into the QKV projection kernel."""
    B_, Hh, Ww, C = x.shape
    N = Hh * Ww
    hd = C // HEADS
    scale = hd ** -0.5

    qkv = pallas_fused_linear(x.reshape(B_ * N, C), p['qkv_w'], p['qkv_b'],
                              ln_in=(p['ln1_w'], p['ln1_b']))            # (B_*N, 3C)
    # TODO(synk): head-split layout via out_specs not implemented; this transpose stays in XLA glue.
    qkv = qkv.reshape(B_, N, 3, HEADS, hd).transpose(2, 0, 3, 1, 4).reshape(3, B_ * HEADS, N, hd)
    q, k, v = qkv[0], qkv[1], qkv[2]                                     # (BH, N, hd) f32

    # decomposed rel-pos: only tiny per-row terms (BH, N, Kh/Kw) leave XLA; the (N, N)
    # expansion and broadcast-add happen inside the attention kernel.
    Rh = get_rel_pos(Hh, Hh, p['rel_pos_h'])
    Rw = get_rel_pos(Ww, Ww, p['rel_pos_w'])
    r_q = q.reshape(-1, Hh, Ww, hd)
    rel_h = jnp.einsum('bhwc,hkc->bhwk', r_q, Rh).reshape(-1, N, Hh).astype(jnp.float32)
    rel_w = jnp.einsum('bhwc,wkc->bhwk', r_q, Rw).reshape(-1, N, Ww).astype(jnp.float32)
    jcol = jnp.arange(N)
    eh = (jcol[None, :] // Ww == jnp.arange(Hh)[:, None]).astype(jnp.float32)   # (Hh, N)
    ew = (jcol[None, :] % Ww == jnp.arange(Ww)[:, None]).astype(jnp.float32)    # (Ww, N)

    o = pallas_attention(q.astype(jnp.bfloat16), k.astype(jnp.bfloat16),
                         v.astype(jnp.bfloat16), rel_h, rel_w, eh, ew, scale)   # (BH, N, hd)
    o = o.reshape(B_, HEADS, Hh, Ww, hd).transpose(0, 2, 3, 1, 4).reshape(B_ * N, C)
    o = pallas_matmul(o, p['proj_w'], p['proj_b'])
    return o.reshape(B_, Hh, Ww, C)


def block_forward(p, x, window_size):
    B, H, W, C = x.shape
    shortcut = x
    if window_size > 0:
        xw, pad_hw = window_partition(x, window_size)     # LN1 applied inside the QKV kernel
    else:
        xw, pad_hw = x, (H, W)
    xa = attention(xw, p)
    if window_size > 0:
        xa = window_unpartition(xa, window_size, pad_hw, (H, W))
    x = shortcut + xa
    # fused LN2 + MLP(GELU) + residual in a single kernel
    x = pallas_ln_mlp_residual(x.reshape(-1, C), p['ln2_w'], p['ln2_b'],
                               p['mlp_w1'], p['mlp_b1'], p['mlp_w2'], p['mlp_b2'])
    return x.reshape(B, H, W, C)


def patch_embed(x, p):
    # Conv2d(3, EMBED, kernel=PATCH, stride=PATCH) as unfold + tiled matmul (K accumulated).
    B, C, H, W = x.shape
    Hp, Wp = H // PATCH, W // PATCH
    patches = x.reshape(B, C, Hp, PATCH, Wp, PATCH).transpose(0, 2, 4, 1, 3, 5)
    patches = patches.reshape(B * Hp * Wp, C * PATCH * PATCH)
    y = pallas_matmul(patches, p['patch_w'], p['patch_b'])
    return y.reshape(B, Hp, Wp, EMBED)


def neck(x, p):
    """Conv1x1 -> LayerNorm2d -> Conv3x3(pad=1) -> LayerNorm2d (both convs bias-free)."""
    B, H, W, C = x.shape
    # 1x1 conv fused with the first LayerNorm2d epilogue
    y = pallas_fused_linear(x.reshape(-1, C), p['neck_conv1_w'], b=None,
                            ln_out=(p['neck_ln1_w'], p['neck_ln1_b']))
    y = y.reshape(B, H, W, OUT_CHANS)
    # 3x3 conv as 9 shifted matmuls accumulated in VMEM, fused with the second LayerNorm2d
    yp = jnp.pad(y, ((0, 0), (1, 1), (1, 1), (0, 0))).astype(jnp.bfloat16)
    w9 = p['neck_conv2_w'].astype(jnp.bfloat16)           # (9, C_in, C_out), taps in (di, dj) order
    out = pallas_conv3x3_ln(yp, w9, p['neck_ln2_w'], p['neck_ln2_b'], H, W)
    return out.transpose(0, 3, 1, 2)                      # NHWC -> NCHW


# ================================ model forward ================================
def mhr_medseg_forward(params, x):
    """x: (B, 3, IMG, IMG) NCHW -> neck image embeddings (B, OUT_CHANS, IMG//16, IMG//16) NCHW.

    Mirrors MHRMedSeg.forward through `self.neck(image_embeddings)`.
    """
    # image_encoder (LGViT approximated by SAM-style local/global ViT blocks)
    h = patch_embed(x, params) + params['pos_embed']      # (B, Hp, Wp, EMBED)
    for i, blk in enumerate(params['blocks']):
        ws = 0 if i in GLOBAL_IDX else WINDOW
        h = block_forward(blk, h, ws)
    # (B, N, C) -> (B, Hp, Wp, C) -> NCHW handled implicitly by the NHWC layout; then neck.
    emb = neck(h, params)
    # TODO(synk): prompt_encoder (no-prompt embeddings), mask_decoder (TwoWayTransformer) and the
    # final bilinear upsample are not implemented -- their definitions are not in the spec snippet.
    return emb


# ================================ parameter init ================================
def init_params(key):
    keys = iter(jax.random.split(key, 256))

    def nrm(shape, scale=0.02):
        return (scale * jax.random.normal(next(keys), shape)).astype(jnp.float32)

    ones = lambda s: jnp.ones(s, jnp.float32)
    zeros = lambda s: jnp.zeros(s, jnp.float32)

    p = {
        'patch_w': nrm((3 * PATCH * PATCH, EMBED)),       # torch conv weight (E,3,p,p) reshaped.T
        'patch_b': nrm((EMBED,)),
        'pos_embed': nrm((1, HP, HP, EMBED)),
        'neck_conv1_w': nrm((EMBED, OUT_CHANS)),          # torch (out,in,1,1) -> (in,out)
        'neck_ln1_w': ones((OUT_CHANS,)), 'neck_ln1_b': zeros((OUT_CHANS,)),
        'neck_conv2_w': nrm((9, OUT_CHANS, OUT_CHANS)),   # torch (out,in,3,3) -> (di*3+dj, in, out)
        'neck_ln2_w': ones((OUT_CHANS,)), 'neck_ln2_b': zeros((OUT_CHANS,)),
        'blocks': [],
    }
    for i in range(DEPTH):
        s = HP if i in GLOBAL_IDX else WINDOW             # rel-pos table size per block type
        p['blocks'].append({
            'ln1_w': ones((EMBED,)), 'ln1_b': zeros((EMBED,)),
            'qkv_w': nrm((EMBED, 3 * EMBED)), 'qkv_b': nrm((3 * EMBED,)),
            'rel_pos_h': nrm((2 * s - 1, HEAD_DIM)),
            'rel_pos_w': nrm((2 * s - 1, HEAD_DIM)),
            'proj_w': nrm((EMBED, EMBED)), 'proj_b': nrm((EMBED,)),
            'ln2_w': ones((EMBED,)), 'ln2_b': zeros((EMBED,)),
            'mlp_w1': nrm((EMBED, MLP_RATIO * EMBED)), 'mlp_b1': nrm((MLP_RATIO * EMBED,)),
            'mlp_w2': nrm((MLP_RATIO * EMBED, EMBED)), 'mlp_b2': nrm((EMBED,)),
        })
    return p


# ==================================== main ====================================
if __name__ == "__main__":
    root = jax.random.PRNGKey(0)
    pkey, xkey = jax.random.split(root)
    params = init_params(pkey)
    x = jax.random.normal(xkey, (2, 3, IMG, IMG), jnp.float32)   # NCHW like PyTorch

    fwd = jax.jit(mhr_medseg_forward)
    out = jax.block_until_ready(fwd(params, x))

    assert out.shape == (2, OUT_CHANS, IMG // PATCH, IMG // PATCH), out.shape
    assert out.dtype == jnp.float32
    assert bool(jnp.all(jnp.isfinite(out)))
    print("KERNEL_OK")
</pallas_src>

<mosaic_0001>
module attributes {stable_mosaic.version = 11 : i64} {
  func.func @kernel(%arg0: i32, %arg1: i32, %arg2: i32, %arg3: memref<16x256xbf16, #tpu.memory_space<vmem>>, %arg4: memref<256x64xbf16, #tpu.memory_space<vmem>>, %arg5: memref<1x64xf32, #tpu.memory_space<vmem>>, %arg6: memref<16x64xf32, #tpu.memory_space<vmem>>, %arg7: memref<16x64xf32, #tpu.memory_space<vmem>>) attributes {dimension_semantics = [#tpu.dimension_semantics<parallel>, #tpu.dimension_semantics<parallel>, #tpu.dimension_semantics<arbitrary>], iteration_bounds = array<i64: 2, 1, 3>, scalar_prefetch = 0 : i64, scratch_operands = 1 : i64, tpu.core_type = #tpu.core_type<tc>, window_params = [{transform_indices = @transform_0, window_bounds = array<i64: 16, 256>}, {transform_indices = @transform_1, window_bounds = array<i64: 256, 64>}, {transform_indices = @transform_2, window_bounds = array<i64: 1, 64>}, {transform_indices = @transform_3, window_bounds = array<i64: 16, 64>}]} {
    %c0_i32 = arith.constant 0 : i32
    %0 = arith.cmpi eq, %arg2, %c0_i32 : i32
    %1 = arith.extui %0 : i1 to i32
    %c0_i32_0 = arith.constant 0 : i32
    %2 = arith.cmpi ne, %1, %c0_i32_0 : i32
    scf.if %2 {
      %cst_9 = arith.constant 0.000000e+00 : f32
      %12 = vector.broadcast %cst_9 : f32 to vector<16x64xf32>
      %c0_10 = arith.constant 0 : index
      %c0_11 = arith.constant 0 : index
      %13 = vector.load %arg7[%c0_10, %c0_11] : memref<16x64xf32, #tpu.memory_space<vmem>>, vector<16x64xf32>
      tpu.vector_store %arg7[%c0_10, %c0_11], %12 {strides = array<i32>} : memref<16x64xf32, #tpu.memory_space<vmem>>, vector<16x64xf32>,
    } else {
    }
    %c0 = arith.constant 0 : index
    %c0_1 = arith.constant 0 : index
    %3 = vector.load %arg7[%c0, %c0_1] : memref<16x64xf32, #tpu.memory_space<vmem>>, vector<16x64xf32>
    %c0_2 = arith.constant 0 : index
    %c0_3 = arith.constant 0 : index
    %4 = vector.load %arg3[%c0_2, %c0_3] : memref<16x256xbf16, #tpu.memory_space<vmem>>, vector<16x256xbf16>
    %c0_4 = arith.constant 0 : index
    %c0_5 = arith.constant 0 : index
    %5 = vector.load %arg4[%c0_4, %c0_5] : memref<256x64xbf16, #tpu.memory_space<vmem>>, vector<256x64xbf16>
    %cst = arith.constant dense<0.000000e+00> : vector<16x64xf32>
    %6 = tpu.matmul %4, %5, %cst {dimension_numbers = #tpu.dot_dimension_numbers<[1], [0], [0], [1], [0, 0, 1, 1], [], []>} : vector<16x256xbf16>, vector<256x64xbf16>, vector<16x64xf32> -> vector<16x64xf32>
    %7 = arith.addf %3, %6 : vector<16x64xf32>
    %c0_6 = arith.constant 0 : index
    %c0_7 = arith.constant 0 : index
    %8 = vector.load %arg7[%c0_6, %c0_7] : memref<16x64xf32, #tpu.memory_space<vmem>>, vector<16x64xf32>
    tpu.vector_store %arg7[%c0_6, %c0_7], %7 {strides = array<i32>} : memref<16x64xf32, #tpu.memory_space<vmem>>, vector<16x64xf32>,
    %c2_i32 = arith.constant 2 : i32
    %9 = arith.cmpi eq, %arg2, %c2_i32 : i32
    %10 = arith.extui %9 : i1 to i32
    %c0_i32_8 = arith.constant 0 : i32
    %11 = arith.cmpi ne, %10, %c0_i32_8 : i32
    scf.if %11 {
      %c0_9 = arith.constant 0 : index
      %c0_10 = arith.constant 0 : index
      %12 = vector.load %arg7[%c0_9, %c0_10] : memref<16x64xf32, #tpu.memory_space<vmem>>, vector<16x64xf32>
      %c0_11 = arith.constant 0 : index
      %c0_12 = arith.constant 0 : index
      %13 = vector.load %arg5[%c0_11, %c0_12] : memref<1x64xf32, #tpu.memory_space<vmem>>, vector<1x64xf32>
      %14 = vector.broadcast %13 : vector<1x64xf32> to vector<16x64xf32>
      %15 = arith.addf %12, %14 : vector<16x64xf32>
      %c0_13 = arith.constant 0 : index
      %c0_14 = arith.constant 0 : index
      %16 = vector.load %arg6[%c0_13, %c0_14] : memref<16x64xf32, #tpu.memory_space<vmem>>, vector<16x64xf32>
      tpu.vector_store %arg6[%c0_13, %c0_14], %15 {strides = array<i32>} : memref<16x64xf32, #tpu.memory_space<vmem>>, vector<16x64xf32>,
    } else {
    }
    return
  }
  func.func @transform_0(%arg0: i32, %arg1: i32, %arg2: i32) -> (i32, i32) {
    %c0_i32 = arith.constant 0 : i32
    return %arg0, %arg2 : i32, i32
  }
  func.func @transform_1(%arg0: i32, %arg1: i32, %arg2: i32) -> (i32, i32) {
    %c0_i32 = arith.constant 0 : i32
    return %arg2, %arg1 : i32, i32
  }
  func.func @transform_2(%arg0: i32, %arg1: i32, %arg2: i32) -> (i32, i32) {
    %c0_i32 = arith.constant 0 : i32
    %c0_i32_0 = arith.constant 0 : i32
    return %c0_i32, %arg1 : i32, i32
  }
  func.func @transform_3(%arg0: i32, %arg1: i32, %arg2: i32) -> (i32, i32) {
    %c0_i32 = arith.constant 0 : i32
    return %arg0, %arg1 : i32, i32
  }
}

module attributes {stable_mosaic.version = 11 : i64} {
  func.func @kernel(%arg0: i32, %arg1: memref<16x64xf32, #tpu.memory_space<vmem>>, %arg2: memref<1x64xf32, #tpu.memory_space<vmem>>, %arg3: memref<1x64xf32, #tpu.memory_space<vmem>>, %arg4: memref<64x192xbf16, #tpu.memory_space<vmem>>, %arg5: memref<1x192xf32, #tpu.memory_space<vmem>>, %arg6: memref<16x192xf32, #tpu.memory_space<vmem>>) attributes {dimension_semantics = [#tpu.dimension_semantics<parallel>], iteration_bounds = array<i64: 2>, scalar_prefetch = 0 : i64, scratch_operands = 0 : i64, tpu.core_type = #tpu.core_type<tc>, window_params = [{transform_indices = @transform_0, window_bounds = array<i64: 16, 64>}, {pipeline_mode = #tpu.pipeline_mode<synchronous>, transform_indices = @transform_1, window_bounds = array<i64: 1, 64>}, {pipeline_mode = #tpu.pipeline_mode<synchronous>, transform_indices = @transform_2, window_bounds = array<i64: 1, 64>}, {pipeline_mode = #tpu.pipeline_mode<synchronous>, transform_indices = @transform_3, window_bounds = array<i64: 64, 192>}, {pipeline_mode = #tpu.pipeline_mode<synchronous>, transform_indices = @transform_4, window_bounds = array<i64: 1, 192>}, {transform_indices = @transform_5, window_bounds = array<i64: 16, 192>}]} {
    %c0 = arith.constant 0 : index
    %c0_0 = arith.constant 0 : index
    %0 = vector.load %arg1[%c0, %c0_0] : memref<16x64xf32, #tpu.memory_space<vmem>>, vector<16x64xf32>
    %c0_1 = arith.constant 0 : index
    %c0_2 = arith.constant 0 : index
    %1 = vector.load %arg2[%c0_1, %c0_2] : memref<1x64xf32, #tpu.memory_space<vmem>>, vector<1x64xf32>
    %c0_3 = arith.constant 0 : index
    %c0_4 = arith.constant 0 : index
    %2 = vector.load %arg3[%c0_3, %c0_4] : memref<1x64xf32, #tpu.memory_space<vmem>>, vector<1x64xf32>
    %cst = arith.constant dense<0.000000e+00> : vector<16xf32>
    %3 = vector.multi_reduction <add>, %0, %cst [1] : vector<16x64xf32> to vector<16xf32>
    %4 = vector.shape_cast %3 : vector<16xf32> to vector<16x1xf32>
    %cst_5 = arith.constant 6.400000e+01 : f32
    %5 = vector.broadcast %cst_5 : f32 to vector<16x1xf32>
    %6 = arith.divf %4, %5 : vector<16x1xf32>
    %7 = vector.broadcast %6 : vector<16x1xf32> to vector<16x64xf32>
    %8 = arith.subf %0, %7 : vector<16x64xf32>
    %9 = arith.mulf %8, %8 : vector<16x64xf32>
    %cst_6 = arith.constant dense<0.000000e+00> : vector<16xf32>
    %10 = vector.multi_reduction <add>, %9, %cst_6 [1] : vector<16x64xf32> to vector<16xf32>
    %11 = vector.shape_cast %10 : vector<16xf32> to vector<16x1xf32>
    %cst_7 = arith.constant 6.400000e+01 : f32
    %12 = vector.broadcast %cst_7 : f32 to vector<16x1xf32>
    %13 = arith.divf %11, %12 : vector<16x1xf32>
    %cst_8 = arith.constant 9.99999997E-7 : f32
    %14 = vector.broadcast %cst_8 : f32 to vector<16x1xf32>
    %15 = arith.addf %13, %14 : vector<16x1xf32>
    %16 = math.rsqrt %15 : vector<16x1xf32>
    %17 = vector.broadcast %16 : vector<16x1xf32> to vector<16x64xf32>
    %18 = arith.mulf %8, %17 : vector<16x64xf32>
    %19 = vector.broadcast %1 : vector<1x64xf32> to vector<16x64xf32>
    %20 = arith.mulf %18, %19 : vector<16x64xf32>
    %21 = vector.broadcast %2 : vector<1x64xf32> to vector<16x64xf32>
    %22 = arith.addf %20, %21 : vector<16x64xf32>
    %23 = arith.truncf %22 : vector<16x64xf32> to vector<16x64xbf16>
    %c0_9 = arith.constant 0 : index
    %c0_10 = arith.constant 0 : index
    %24 = vector.load %arg4[%c0_9, %c0_10] : memref<64x192xbf16, #tpu.memory_space<vmem>>, vector<64x192xbf16>
    %cst_11 = arith.constant dense<0.000000e+00> : vector<16x192xf32>
    %25 = tpu.matmul %23, %24, %cst_11 {dimension_numbers = #tpu.dot_dimension_numbers<[1], [0], [0], [1], [0, 0, 1, 1], [], []>} : vector<16x64xbf16>, vector<64x192xbf16>, vector<16x192xf32> -> vector<16x192xf32>
    %c0_12 = arith.constant 0 : index
    %c0_13 = arith.constant 0 : index
    %26 = vector.load %arg5[%c0_12, %c0_13] : memref<1x192xf32, #tpu.memory_space<vmem>>, vector<1x192xf32>
    %27 = vector.broadcast %26 : vector<1x192xf32> to vector<16x192xf32>
    %28 = arith.addf %25, %27 : vector<16x192xf32>
    %c0_14 = arith.constant 0 : index
    %c0_15 = arith.constant 0 : index
    %29 = vector.load %arg6[%c0_14, %c0_15] : memref<16x192xf32, #tpu.memory_space<vmem>>, vector<16x192xf32>
    tpu.vector_store %arg6[%c0_14, %c0_15], %28 {strides = array<i32>} : memref<16x192xf32, #tpu.memory_space<vmem>>, vector<16x192xf32>,
    return
  }
  func.func @transform_0(%arg0: i32) -> (i32, i32) {
    %c0_i32 = arith.constant 0 : i32
    %c0_i32_0 = arith.constant 0 : i32
    return %arg0, %c0_i32 : i32, i32
  }
  func.func @transform_1(%arg0: i32) -> (i32, i32) {
    %c0_i32 = arith.constant 0 : i32
    %c0_i32_0 = arith.constant 0 : i32
    %c0_i32_1 = arith.constant 0 : i32
    return %c0_i32, %c0_i32_0 : i32, i32
  }
  func.func @transform_2(%arg0: i32) -> (i32, i32) {
    %c0_i32 = arith.constant 0 : i32
    %c0_i32_0 = arith.constant 0 : i32
    %c0_i32_1 = arith.constant 0 : i32
    return %c0_i32, %c0_i32_0 : i32, i32
  }
  func.func @transform_3(%arg0: i32) -> (i32, i32) {
    %c0_i32 = arith.constant 0 : i32
    %c0_i32_0 = arith.constant 0 : i32
    %c0_i32_1 = arith.constant 0 : i32
    return %c0_i32, %c0_i32_0 : i32, i32
  }
  func.func @transform_4(%arg0: i32) -> (i32, i32) {
    %c0_i32 = arith.constant 0 : i32
    %c0_i32_0 = arith.constant 0 : i32
    %c0_i32_1 = arith.constant 0 : i32
    return %c0_i32, %c0_i32_0 : i32, i32
  }
  func.func @transform_5(%arg0: i32) -> (i32, i32) {
    %c0_i32 = arith.constant 0 : i32
    %c0_i32_0 = arith.constant 0 : i32
    return %arg0, %c0_i32 : i32, i32
  }
}

module attributes {stable_mosaic.version = 11 : i64} {
  func.func @kernel(%arg0: i32, %arg1: memref<16x4x16xbf16, #tpu.memory_space<vmem>>, %arg2: memref<16x4x16xbf16, #tpu.memory_space<vmem>>, %arg3: memref<16x4x16xbf16, #tpu.memory_space<vmem>>, %arg4: memref<16x4x2xf32, #tpu.memory_space<vmem>>, %arg5: memref<16x4x2xf32, #tpu.memory_space<vmem>>, %arg6: memref<2x4xf32, #tpu.memory_space<vmem>>, %arg7: memref<2x4xf32, #tpu.memory_space<vmem>>, %arg8: memref<16x4x16xf32, #tpu.memory_space<vmem>>) attributes {dimension_semantics = [#tpu.dimension_semantics<parallel>], iteration_bounds = array<i64: 2>, scalar_prefetch = 0 : i64, scratch_operands = 0 : i64, tpu.core_type = #tpu.core_type<tc>, window_params = [{transform_indices = @transform_0, window_bounds = array<i64: 16, 4, 16>}, {transform_indices = @transform_1, window_bounds = array<i64: 16, 4, 16>}, {transform_indices = @transform_2, window_bounds = array<i64: 16, 4, 16>}, {transform_indices = @transform_3, window_bounds = array<i64: 16, 4, 2>}, {transform_indices = @transform_4, window_bounds = array<i64: 16, 4, 2>}, {pipeline_mode = #tpu.pipeline_mode<synchronous>, transform_indices = @transform_5, window_bounds = array<i64: 2, 4>}, {pipeline_mode = #tpu.pipeline_mode<synchronous>, transform_indices = @transform_6, window_bounds = array<i64: 2, 4>}, {transform_indices = @transform_7, window_bounds = array<i64: 16, 4, 16>}]} {
    %c0 = arith.constant 0 : index
    %c0_0 = arith.constant 0 : index
    %c0_1 = arith.constant 0 : index
    %0 = vector.load %arg1[%c0, %c0_0, %c0_1] : memref<16x4x16xbf16, #tpu.memory_space<vmem>>, vector<16x4x16xbf16>
    %c0_2 = arith.constant 0 : index
    %c0_3 = arith.constant 0 : index
    %c0_4 = arith.constant 0 : index
    %1 = vector.load %arg2[%c0_2, %c0_3, %c0_4] : memref<16x4x16xbf16, #tpu.memory_space<vmem>>, vector<16x4x16xbf16>
    %c0_5 = arith.constant 0 : index
    %c0_6 = arith.constant 0 : index
    %c0_7 = arith.constant 0 : index
    %2 = vector.load %arg3[%c0_5, %c0_6, %c0_7] : memref<16x4x16xbf16, #tpu.memory_space<vmem>>, vector<16x4x16xbf16>
    "tpu.trace_start"() <{level = 10 : i32, message = "gqd,gkd->gqk"}> : () -> ()
    %cst = arith.constant dense<0.000000e+00> : vector<16x4x4xf32>
    %3 = tpu.matmul %0, %1, %cst {dimension_numbers = #tpu.dot_dimension_numbers<[2], [2], [1], [1], [0, 0, 0, 1, 1, 1], [0], [0]>} : vector<16x4x16xbf16>, vector<16x4x16xbf16>, vector<16x4x4xf32> -> vector<16x4x4xf32>
    "tpu.trace_stop"() : () -> ()
    %cst_8 = arith.constant 2.500000e-01 : f32
    %4 = vector.broadcast %cst_8 : f32 to vector<16x4x4xf32>
    %5 = arith.mulf %3, %4 : vector<16x4x4xf32>
    %c0_9 = arith.constant 0 : index
    %c0_10 = arith.constant 0 : index
    %c0_11 = arith.constant 0 : index
    %6 = vector.load %arg4[%c0_9, %c0_10, %c0_11] : memref<16x4x2xf32, #tpu.memory_space<vmem>>, vector<16x4x2xf32>
    %7 = vector.shape_cast %6 : vector<16x4x2xf32> to vector<64x2xf32>
    %c0_12 = arith.constant 0 : index
    %c0_13 = arith.constant 0 : index
    %c0_14 = arith.constant 0 : index
    %8 = vector.load %arg5[%c0_12, %c0_13, %c0_14] : memref<16x4x2xf32, #tpu.memory_space<vmem>>, vector<16x4x2xf32>
    %9 = vector.shape_cast %8 : vector<16x4x2xf32> to vector<64x2xf32>
    %c0_15 = arith.constant 0 : index
    %c0_16 = arith.constant 0 : index
    %10 = vector.load %arg6[%c0_15, %c0_16] : memref<2x4xf32, #tpu.memory_space<vmem>>, vector<2x4xf32>
    %cst_17 = arith.constant dense<0.000000e+00> : vector<64x4xf32>
    %11 = tpu.matmul %7, %10, %cst_17 {dimension_numbers = #tpu.dot_dimension_numbers<[1], [0], [0], [1], [0, 0, 1, 1], [], []>} : vector<64x2xf32>, vector<2x4xf32>, vector<64x4xf32> -> vector<64x4xf32>
    %c0_18 = arith.constant 0 : index
    %c0_19 = arith.constant 0 : index
    %12 = vector.load %arg7[%c0_18, %c0_19] : memref<2x4xf32, #tpu.memory_space<vmem>>, vector<2x4xf32>
    %cst_20 = arith.constant dense<0.000000e+00> : vector<64x4xf32>
    %13 = tpu.matmul %9, %12, %cst_20 {dimension_numbers = #tpu.dot_dimension_numbers<[1], [0], [0], [1], [0, 0, 1, 1], [], []>} : vector<64x2xf32>, vector<2x4xf32>, vector<64x4xf32> -> vector<64x4xf32>
    %14 = arith.addf %11, %13 : vector<64x4xf32>
    %15 = vector.shape_cast %14 : vector<64x4xf32> to vector<16x4x4xf32>
    %16 = arith.addf %5, %15 : vector<16x4x4xf32>
    %cst_21 = arith.constant dense<0xFF800000> : vector<16x4xf32>
    %17 = vector.multi_reduction <maximumf>, %16, %cst_21 [2] : vector<16x4x4xf32> to vector<16x4xf32>
    %18 = vector.shape_cast %17 : vector<16x4xf32> to vector<16x4x1xf32>
    %19 = vector.broadcast %18 : vector<16x4x1xf32> to vector<16x4x4xf32>
    %20 = arith.subf %16, %19 : vector<16x4x4xf32>
    %21 = math.exp %20 : vector<16x4x4xf32>
    %cst_22 = arith.constant dense<0.000000e+00> : vector<16x4xf32>
    %22 = vector.multi_reduction <add>, %21, %cst_22 [2] : vector<16x4x4xf32> to vector<16x4xf32>
    %23 = vector.shape_cast %22 : vector<16x4xf32> to vector<16x4x1xf32>
    %24 = tpu.reciprocal %23 {approx = true} : vector<16x4x1xf32> -> vector<16x4x1xf32>
    %25 = vector.broadcast %24 : vector<16x4x1xf32> to vector<16x4x4xf32>
    %26 = arith.mulf %21, %25 : vector<16x4x4xf32>
    %27 = arith.truncf %26 : vector<16x4x4xf32> to vector<16x4x4xbf16>
    "tpu.trace_start"() <{level = 10 : i32, message = "gqk,gkd->gqd"}> : () -> ()
    %cst_23 = arith.constant dense<0.000000e+00> : vector<16x4x16xf32>
    %28 = tpu.matmul %27, %2, %cst_23 {dimension_numbers = #tpu.dot_dimension_numbers<[2], [1], [1], [2], [0, 0, 0, 1, 1, 2], [0], [0]>} : vector<16x4x4xbf16>, vector<16x4x16xbf16>, vector<16x4x16xf32> -> vector<16x4x16xf32>
    "tpu.trace_stop"() : () -> ()
    %c0_24 = arith.constant 0 : index
    %c0_25 = arith.constant 0 : index
    %c0_26 = arith.constant 0 : index
    %29 = vector.load %arg8[%c0_24, %c0_25, %c0_26] : memref<16x4x16xf32, #tpu.memory_space<vmem>>, vector<16x4x16xf32>
    tpu.vector_store %arg8[%c0_24, %c0_25, %c0_26], %28 {strides = array<i32>} : memref<16x4x16xf32, #tpu.memory_space<vmem>>, vector<16x4x16xf32>,
    return
  }
  func.func @transform_0(%arg0: i32) -> (i32, i32, i32) {
    %c0_i32 = arith.constant 0 : i32
    %c0_i32_0 = arith.constant 0 : i32
    %c0_i32_1 = arith.constant 0 : i32
    return %arg0, %c0_i32, %c0_i32_0 : i32, i32, i32
  }
  func.func @transform_1(%arg0: i32) -> (i32, i32, i32) {
    %c0_i32 = arith.constant 0 : i32
    %c0_i32_0 = arith.constant 0 : i32
    %c0_i32_1 = arith.constant 0 : i32
    return %arg0, %c0_i32, %c0_i32_0 : i32, i32, i32
  }
  func.func @transform_2(%arg0: i32) -> (i32, i32, i32) {
    %c0_i32 = arith.constant 0 : i32
    %c0_i32_0 = arith.constant 0 : i32
    %c0_i32_1 = arith.constant 0 : i32
    return %arg0, %c0_i32, %c0_i32_0 : i32, i32, i32
  }
  func.func @transform_3(%arg0: i32) -> (i32, i32, i32) {
    %c0_i32 = arith.constant 0 : i32
    %c0_i32_0 = arith.constant 0 : i32
    %c0_i32_1 = arith.constant 0 : i32
    return %arg0, %c0_i32, %c0_i32_0 : i32, i32, i32
  }
  func.func @transform_4(%arg0: i32) -> (i32, i32, i32) {
    %c0_i32 = arith.constant 0 : i32
    %c0_i32_0 = arith.constant 0 : i32
    %c0_i32_1 = arith.constant 0 : i32
    return %arg0, %c0_i32, %c0_i32_0 : i32, i32, i32
  }
  func.func @transform_5(%arg0: i32) -> (i32, i32) {
    %c0_i32 = arith.constant 0 : i32
    %c0_i32_0 = arith.constant 0 : i32
    %c0_i32_1 = arith.constant 0 : i32
    return %c0_i32, %c0_i32_0 : i32, i32
  }
  func.func @transform_6(%arg0: i32) -> (i32, i32) {
    %c0_i32 = arith.constant 0 : i32
    %c0_i32_0 = arith.constant 0 : i32
    %c0_i32_1 = arith.constant 0 : i32
    return %c0_i32, %c0_i32_0 : i32, i32
  }
  func.func @transform_7(%arg0: i32) -> (i32, i32, i32) {
    %c0_i32 = arith.constant 0 : i32
    %c0_i32_0 = arith.constant 0 : i32
    %c0_i32_1 = arith.constant 0 : i32
    return %arg0, %c0_i32, %c0_i32_0 : i32, i32, i32
  }
}

module attributes {stable_mosaic.version = 11 : i64} {
  func.func @kernel(%arg0: i32, %arg1: i32, %arg2: i32, %arg3: memref<16x64xbf16, #tpu.memory_space<vmem>>, %arg4: memref<64x64xbf16, #tpu.memory_space<vmem>>, %arg5: memref<1x64xf32, #tpu.memory_space<vmem>>, %arg6: memref<16x64xf32, #tpu.memory_space<vmem>>, %arg7: memref<16x64xf32, #tpu.memory_space<vmem>>) attributes {dimension_semantics = [#tpu.dimension_semantics<parallel>, #tpu.dimension_semantics<parallel>, #tpu.dimension_semantics<arbitrary>], iteration_bounds = array<i64: 2, 1, 1>, scalar_prefetch = 0 : i64, scratch_operands = 1 : i64, tpu.core_type = #tpu.core_type<tc>, window_params = [{transform_indices = @transform_0, window_bounds = array<i64: 16, 64>}, {transform_indices = @transform_1, window_bounds = array<i64: 64, 64>}, {transform_indices = @transform_2, window_bounds = array<i64: 1, 64>}, {transform_indices = @transform_3, window_bounds = array<i64: 16, 64>}]} {
    %c0_i32 = arith.constant 0 : i32
    %0 = arith.cmpi eq, %arg2, %c0_i32 : i32
    %1 = arith.extui %0 : i1 to i32
    %c0_i32_0 = arith.constant 0 : i32
    %2 = arith.cmpi ne, %1, %c0_i32_0 : i32
    scf.if %2 {
      %cst_10 = arith.constant 0.000000e+00 : f32
      %12 = vector.broadcast %cst_10 : f32 to vector<16x64xf32>
      %c0_11 = arith.constant 0 : index
      %c0_12 = arith.constant 0 : index
      %13 = vector.load %arg7[%c0_11, %c0_12] : memref<16x64xf32, #tpu.memory_space<vmem>>, vector<16x64xf32>
      tpu.vector_store %arg7[%c0_11, %c0_12], %12 {strides = array<i32>} : memref<16x64xf32, #tpu.memory_space<vmem>>, vector<16x64xf32>,
    } else {
    }
    %c0 = arith.constant 0 : index
    %c0_1 = arith.constant 0 : index
    %3 = vector.load %arg7[%c0, %c0_1] : memref<16x64xf32, #tpu.memory_space<vmem>>, vector<16x64xf32>
    %c0_2 = arith.constant 0 : index
    %c0_3 = arith.constant 0 : index
    %4 = vector.load %arg3[%c0_2, %c0_3] : memref<16x64xbf16, #tpu.memory_space<vmem>>, vector<16x64xbf16>
    %c0_4 = arith.constant 0 : index
    %c0_5 = arith.constant 0 : index
    %5 = vector.load %arg4[%c0_4, %c0_5] : memref<64x64xbf16, #tpu.memory_space<vmem>>, vector<64x64xbf16>
    %cst = arith.constant dense<0.000000e+00> : vector<16x64xf32>
    %6 = tpu.matmul %4, %5, %cst {dimension_numbers = #tpu.dot_dimension_numbers<[1], [0], [0], [1], [0, 0, 1, 1], [], []>} : vector<16x64xbf16>, vector<64x64xbf16>, vector<16x64xf32> -> vector<16x64xf32>
    %7 = arith.addf %3, %6 : vector<16x64xf32>
    %c0_6 = arith.constant 0 : index
    %c0_7 = arith.constant 0 : index
    %8 = vector.load %arg7[%c0_6, %c0_7] : memref<16x64xf32, #tpu.memory_space<vmem>>, vector<16x64xf32>
    tpu.vector_store %arg7[%c0_6, %c0_7], %7 {strides = array<i32>} : memref<16x64xf32, #tpu.memory_space<vmem>>, vector<16x64xf32>,
    %c0_i32_8 = arith.constant 0 : i32
    %9 = arith.cmpi eq, %arg2, %c0_i32_8 : i32
    %10 = arith.extui %9 : i1 to i32
    %c0_i32_9 = arith.constant 0 : i32
    %11 = arith.cmpi ne, %10, %c0_i32_9 : i32
    scf.if %11 {
      %c0_10 = arith.constant 0 : index
      %c0_11 = arith.constant 0 : index
      %12 = vector.load %arg7[%c0_10, %c0_11] : memref<16x64xf32, #tpu.memory_space<vmem>>, vector<16x64xf32>
      %c0_12 = arith.constant 0 : index
      %c0_13 = arith.constant 0 : index
      %13 = vector.load %arg5[%c0_12, %c0_13] : memref<1x64xf32, #tpu.memory_space<vmem>>, vector<1x64xf32>
      %14 = vector.broadcast %13 : vector<1x64xf32> to vector<16x64xf32>
      %15 = arith.addf %12, %14 : vector<16x64xf32>
      %c0_14 = arith.constant 0 : index
      %c0_15 = arith.constant 0 : index
      %16 = vector.load %arg6[%c0_14, %c0_15] : memref<16x64xf32, #tpu.memory_space<vmem>>, vector<16x64xf32>
      tpu.vector_store %arg6[%c0_14, %c0_15], %15 {strides = array<i32>} : memref<16x64xf32, #tpu.memory_space<vmem>>, vector<16x64xf32>,
    } else {
    }
    return
  }
  func.func @transform_0(%arg0: i32, %arg1: i32, %arg2: i32) -> (i32, i32) {
    %c0_i32 = arith.constant 0 : i32
    return %arg0, %arg2 : i32, i32
  }
  func.func @transform_1(%arg0: i32, %arg1: i32, %arg2: i32) -> (i32, i32) {
    %c0_i32 = arith.constant 0 : i32
    return %arg2, %arg1 : i32, i32
  }
  func.func @transform_2(%arg0: i32, %arg1: i32, %arg2: i32) -> (i32, i32) {
    %c0_i32 = arith.constant 0 : i32
    %c0_i32_0 = arith.constant 0 : i32
    return %c0_i32, %arg1 : i32, i32
  }
  func.func @transform_3(%arg0: i32, %arg1: i32, %arg2: i32) -> (i32, i32) {
    %c0_i32 = arith.constant 0 : i32
    return %arg0, %arg1 : i32, i32
  }
}

module attributes {stable_mosaic.version = 11 : i64} {
  func.func @kernel(%arg0: i32, %arg1: memref<16x64xf32, #tpu.memory_space<vmem>>, %arg2: memref<1x64xf32, #tpu.memory_space<vmem>>, %arg3: memref<1x64xf32, #tpu.memory_space<vmem>>, %arg4: memref<64x256xbf16, #tpu.memory_space<vmem>>, %arg5: memref<1x256xf32, #tpu.memory_space<vmem>>, %arg6: memref<256x64xbf16, #tpu.memory_space<vmem>>, %arg7: memref<1x64xf32, #tpu.memory_space<vmem>>, %arg8: memref<16x64xf32, #tpu.memory_space<vmem>>) attributes {dimension_semantics = [#tpu.dimension_semantics<parallel>], iteration_bounds = array<i64: 2>, scalar_prefetch = 0 : i64, scratch_operands = 0 : i64, tpu.core_type = #tpu.core_type<tc>, window_params = [{transform_indices = @transform_0, window_bounds = array<i64: 16, 64>}, {pipeline_mode = #tpu.pipeline_mode<synchronous>, transform_indices = @transform_1, window_bounds = array<i64: 1, 64>}, {pipeline_mode = #tpu.pipeline_mode<synchronous>, transform_indices = @transform_2, window_bounds = array<i64: 1, 64>}, {pipeline_mode = #tpu.pipeline_mode<synchronous>, transform_indices = @transform_3, window_bounds = array<i64: 64, 256>}, {pipeline_mode = #tpu.pipeline_mode<synchronous>, transform_indices = @transform_4, window_bounds = array<i64: 1, 256>}, {pipeline_mode = #tpu.pipeline_mode<synchronous>, transform_indices = @transform_5, window_bounds = array<i64: 256, 64>}, {pipeline_mode = #tpu.pipeline_mode<synchronous>, transform_indices = @transform_6, window_bounds = array<i64: 1, 64>}, {transform_indices = @transform_7, window_bounds = array<i64: 16, 64>}]} {
    %c0 = arith.constant 0 : index
    %c0_0 = arith.constant 0 : index
    %0 = vector.load %arg1[%c0, %c0_0] : memref<16x64xf32, #tpu.memory_space<vmem>>, vector<16x64xf32>
    %c0_1 = arith.constant 0 : index
    %c0_2 = arith.constant 0 : index
    %1 = vector.load %arg2[%c0_1, %c0_2] : memref<1x64xf32, #tpu.memory_space<vmem>>, vector<1x64xf32>
    %c0_3 = arith.constant 0 : index
    %c0_4 = arith.constant 0 : index
    %2 = vector.load %arg3[%c0_3, %c0_4] : memref<1x64xf32, #tpu.memory_space<vmem>>, vector<1x64xf32>
    %cst = arith.constant dense<0.000000e+00> : vector<16xf32>
    %3 = vector.multi_reduction <add>, %0, %cst [1] : vector<16x64xf32> to vector<16xf32>
    %4 = vector.shape_cast %3 : vector<16xf32> to vector<16x1xf32>
    %cst_5 = arith.constant 6.400000e+01 : f32
    %5 = vector.broadcast %cst_5 : f32 to vector<16x1xf32>
    %6 = arith.divf %4, %5 : vector<16x1xf32>
    %7 = vector.broadcast %6 : vector<16x1xf32> to vector<16x64xf32>
    %8 = arith.subf %0, %7 : vector<16x64xf32>
    %9 = arith.mulf %8, %8 : vector<16x64xf32>
    %cst_6 = arith.constant dense<0.000000e+00> : vector<16xf32>
    %10 = vector.multi_reduction <add>, %9, %cst_6 [1] : vector<16x64xf32> to vector<16xf32>
    %11 = vector.shape_cast %10 : vector<16xf32> to vector<16x1xf32>
    %cst_7 = arith.constant 6.400000e+01 : f32
    %12 = vector.broadcast %cst_7 : f32 to vector<16x1xf32>
    %13 = arith.divf %11, %12 : vector<16x1xf32>
    %cst_8 = arith.constant 9.99999997E-7 : f32
    %14 = vector.broadcast %cst_8 : f32 to vector<16x1xf32>
    %15 = arith.addf %13, %14 : vector<16x1xf32>
    %16 = math.rsqrt %15 : vector<16x1xf32>
    %17 = vector.broadcast %16 : vector<16x1xf32> to vector<16x64xf32>
    %18 = arith.mulf %8, %17 : vector<16x64xf32>
    %19 = vector.broadcast %1 : vector<1x64xf32> to vector<16x64xf32>
    %20 = arith.mulf %18, %19 : vector<16x64xf32>
    %21 = vector.broadcast %2 : vector<1x64xf32> to vector<16x64xf32>
    %22 = arith.addf %20, %21 : vector<16x64xf32>
    %23 = arith.truncf %22 : vector<16x64xf32> to vector<16x64xbf16>
    %c0_9 = arith.constant 0 : index
    %c0_10 = arith.constant 0 : index
    %24 = vector.load %arg4[%c0_9, %c0_10] : memref<64x256xbf16, #tpu.memory_space<vmem>>, vector<64x256xbf16>
    %cst_11 = arith.constant dense<0.000000e+00> : vector<16x256xf32>
    %25 = tpu.matmul %23, %24, %cst_11 {dimension_numbers = #tpu.dot_dimension_numbers<[1], [0], [0], [1], [0, 0, 1, 1], [], []>} : vector<16x64xbf16>, vector<64x256xbf16>, vector<16x256xf32> -> vector<16x256xf32>
    %c0_12 = arith.constant 0 : index
    %c0_13 = arith.constant 0 : index
    %26 = vector.load %arg5[%c0_12, %c0_13] : memref<1x256xf32, #tpu.memory_space<vmem>>, vector<1x256xf32>
    %27 = vector.broadcast %26 : vector<1x256xf32> to vector<16x256xf32>
    %28 = arith.addf %25, %27 : vector<16x256xf32>
    %cst_14 = arith.constant 5.000000e-01 : f32
    %29 = vector.broadcast %cst_14 : f32 to vector<16x256xf32>
    %30 = arith.mulf %29, %28 : vector<16x256xf32>
    %cst_15 = arith.constant 0.707106769 : f32
    %31 = vector.broadcast %cst_15 : f32 to vector<16x256xf32>
    %32 = arith.mulf %28, %31 : vector<16x256xf32>
    %33 = math.absf %32 : vector<16x256xf32>
    %cst_16 = arith.constant 0.327591091 : f32
    %34 = vector.broadcast %cst_16 : f32 to vector<16x256xf32>
    %35 = arith.mulf %34, %33 : vector<16x256xf32>
    %cst_17 = arith.constant 1.000000e+00 : f32
    %36 = vector.broadcast %cst_17 : f32 to vector<16x256xf32>
    %37 = arith.addf %36, %35 : vector<16x256xf32>
    %cst_18 = arith.constant 1.000000e+00 : f32
    %38 = vector.broadcast %cst_18 : f32 to vector<16x256xf32>
    %39 = arith.divf %38, %37 : vector<16x256xf32>
    %cst_19 = arith.constant 1.06140542 : f32
    %40 = vector.broadcast %cst_19 : f32 to vector<16x256xf32>
    %41 = arith.mulf %40, %39 : vector<16x256xf32>
    %cst_20 = arith.constant -1.45315206 : f32
    %42 = vector.broadcast %cst_20 : f32 to vector<16x256xf32>
    %43 = arith.addf %41, %42 : vector<16x256xf32>
    %44 = arith.mulf %43, %39 : vector<16x256xf32>
    %cst_21 = arith.constant 1.42141378 : f32
    %45 = vector.broadcast %cst_21 : f32 to vector<16x256xf32>
    %46 = arith.addf %44, %45 : vector<16x256xf32>
    %47 = arith.mulf %46, %39 : vector<16x256xf32>
    %cst_22 = arith.constant -0.284496725 : f32
    %48 = vector.broadcast %cst_22 : f32 to vector<16x256xf32>
    %49 = arith.addf %47, %48 : vector<16x256xf32>
    %50 = arith.mulf %49, %39 : vector<16x256xf32>
    %cst_23 = arith.constant 0.254829586 : f32
    %51 = vector.broadcast %cst_23 : f32 to vector<16x256xf32>
    %52 = arith.addf %50, %51 : vector<16x256xf32>
    %53 = arith.mulf %52, %39 : vector<16x256xf32>
    %cst_24 = arith.constant 0.000000e+00 : f32
    %54 = vector.broadcast %cst_24 : f32 to vector<16x256xf32>
    %55 = arith.subf %54, %33 : vector<16x256xf32>
    %56 = arith.mulf %55, %33 : vector<16x256xf32>
    %57 = math.exp %56 : vector<16x256xf32>
    %58 = arith.mulf %53, %57 : vector<16x256xf32>
    %cst_25 = arith.constant 1.000000e+00 : f32
    %59 = vector.broadcast %cst_25 : f32 to vector<16x256xf32>
    %60 = arith.subf %59, %58 : vector<16x256xf32>
    %cst_26 = arith.constant 0.000000e+00 : f32
    %61 = vector.broadcast %cst_26 : f32 to vector<16x256xf32>
    %62 = arith.cmpf oge, %32, %61 : vector<16x256xf32>
    %cst_27 = arith.constant 0.000000e+00 : f32
    %63 = vector.broadcast %cst_27 : f32 to vector<16x256xf32>
    %64 = arith.subf %63, %60 : vector<16x256xf32>
    %65 = arith.select %62, %60, %64 : vector<16x256xi1>, vector<16x256xf32>
    %cst_28 = arith.constant 1.000000e+00 : f32
    %66 = vector.broadcast %cst_28 : f32 to vector<16x256xf32>
    %67 = arith.addf %66, %65 : vector<16x256xf32>
    %68 = arith.mulf %30, %67 : vector<16x256xf32>
    %69 = arith.truncf %68 : vector<16x256xf32> to vector<16x256xbf16>
    %c0_29 = arith.constant 0 : index
    %c0_30 = arith.constant 0 : index
    %70 = vector.load %arg6[%c0_29, %c0_30] : memref<256x64xbf16, #tpu.memory_space<vmem>>, vector<256x64xbf16>
    %cst_31 = arith.constant dense<0.000000e+00> : vector<16x64xf32>
    %71 = tpu.matmul %69, %70, %cst_31 {dimension_numbers = #tpu.dot_dimension_numbers<[1], [0], [0], [1], [0, 0, 1, 1], [], []>} : vector<16x256xbf16>, vector<256x64xbf16>, vector<16x64xf32> -> vector<16x64xf32>
    %c0_32 = arith.constant 0 : index
    %c0_33 = arith.constant 0 : index
    %72 = vector.load %arg7[%c0_32, %c0_33] : memref<1x64xf32, #tpu.memory_space<vmem>>, vector<1x64xf32>
    %73 = vector.broadcast %72 : vector<1x64xf32> to vector<16x64xf32>
    %74 = arith.addf %71, %73 : vector<16x64xf32>
    %75 = arith.addf %0, %74 : vector<16x64xf32>
    %c0_34 = arith.constant 0 : index
    %c0_35 = arith.constant 0 : index
    %76 = vector.load %arg8[%c0_34, %c0_35] : memref<16x64xf32, #tpu.memory_space<vmem>>, vector<16x64xf32>
    tpu.vector_store %arg8[%c0_34, %c0_35], %75 {strides = array<i32>} : memref<16x64xf32, #tpu.memory_space<vmem>>, vector<16x64xf32>,
    return
  }
  func.func @transform_0(%arg0: i32) -> (i32, i32) {
    %c0_i32 = arith.constant 0 : i32
    %c0_i32_0 = arith.constant 0 : i32
    return %arg0, %c0_i32 : i32, i32
  }
  func.func @transform_1(%arg0: i32) -> (i32, i32) {
    %c0_i32 = arith.constant 0 : i32
    %c0_i32_0 = arith.constant 0 : i32
    %c0_i32_1 = arith.constant 0 : i32
    return %c0_i32, %c0_i32_0 : i32, i32
  }
  func.func @transform_2(%arg0: i32) -> (i32, i32) {
    %c0_i32 = arith.constant 0 : i32
    %c0_i32_0 = arith.constant 0 : i32
    %c0_i32_1 = arith.constant 0 : i32
    return %c0_i32, %c0_i32_0 : i32, i32
  }
  func.func @transform_3(%arg0: i32) -> (i32, i32) {
    %c0_i32 = arith.constant 0 : i32
    %c0_i32_0 = arith.constant 0 : i32
    %c0_i32_1 = arith.constant 0 : i32
    return %c0_i32, %c0_i32_0 : i32, i32
  }
  func.func @transform_4(%arg0: i32) -> (i32, i32) {
    %c0_i32 = arith.constant 0 : i32
    %c0_i32_0 = arith.constant 0 : i32
    %c0_i32_1 = arith.constant 0 : i32
    return %c0_i32, %c0_i32_0 : i32, i32
  }
  func.func @transform_5(%arg0: i32) -> (i32, i32) {
    %c0_i32 = arith.constant 0 : i32
    %c0_i32_0 = arith.constant 0 : i32
    %c0_i32_1 = arith.constant 0 : i32
    return %c0_i32, %c0_i32_0 : i32, i32
  }
  func.func @transform_6(%arg0: i32) -> (i32, i32) {
    %c0_i32 = arith.constant 0 : i32
    %c0_i32_0 = arith.constant 0 : i32
    %c0_i32_1 = arith.constant 0 : i32
    return %c0_i32, %c0_i32_0 : i32, i32
  }
  func.func @transform_7(%arg0: i32) -> (i32, i32) {
    %c0_i32 = arith.constant 0 : i32
    %c0_i32_0 = arith.constant 0 : i32
    return %arg0, %c0_i32 : i32, i32
  }
}

module attributes {stable_mosaic.version = 11 : i64} {
  func.func @kernel(%arg0: i32, %arg1: memref<4x16x16xbf16, #tpu.memory_space<vmem>>, %arg2: memref<4x16x16xbf16, #tpu.memory_space<vmem>>, %arg3: memref<4x16x16xbf16, #tpu.memory_space<vmem>>, %arg4: memref<4x16x4xf32, #tpu.memory_space<vmem>>, %arg5: memref<4x16x4xf32, #tpu.memory_space<vmem>>, %arg6: memref<4x16xf32, #tpu.memory_space<vmem>>, %arg7: memref<4x16xf32, #tpu.memory_space<vmem>>, %arg8: memref<4x16x16xf32, #tpu.memory_space<vmem>>) attributes {dimension_semantics = [#tpu.dimension_semantics<parallel>], iteration_bounds = array<i64: 2>, scalar_prefetch = 0 : i64, scratch_operands = 0 : i64, tpu.core_type = #tpu.core_type<tc>, window_params = [{transform_indices = @transform_0, window_bounds = array<i64: 4, 16, 16>}, {transform_indices = @transform_1, window_bounds = array<i64: 4, 16, 16>}, {transform_indices = @transform_2, window_bounds = array<i64: 4, 16, 16>}, {transform_indices = @transform_3, window_bounds = array<i64: 4, 16, 4>}, {transform_indices = @transform_4, window_bounds = array<i64: 4, 16, 4>}, {pipeline_mode = #tpu.pipeline_mode<synchronous>, transform_indices = @transform_5, window_bounds = array<i64: 4, 16>}, {pipeline_mode = #tpu.pipeline_mode<synchronous>, transform_indices = @transform_6, window_bounds = array<i64: 4, 16>}, {transform_indices = @transform_7, window_bounds = array<i64: 4, 16, 16>}]} {
    %c0 = arith.constant 0 : index
    %c0_0 = arith.constant 0 : index
    %c0_1 = arith.constant 0 : index
    %0 = vector.load %arg1[%c0, %c0_0, %c0_1] : memref<4x16x16xbf16, #tpu.memory_space<vmem>>, vector<4x16x16xbf16>
    %c0_2 = arith.constant 0 : index
    %c0_3 = arith.constant 0 : index
    %c0_4 = arith.constant 0 : index
    %1 = vector.load %arg2[%c0_2, %c0_3, %c0_4] : memref<4x16x16xbf16, #tpu.memory_space<vmem>>, vector<4x16x16xbf16>
    %c0_5 = arith.constant 0 : index
    %c0_6 = arith.constant 0 : index
    %c0_7 = arith.constant 0 : index
    %2 = vector.load %arg3[%c0_5, %c0_6, %c0_7] : memref<4x16x16xbf16, #tpu.memory_space<vmem>>, vector<4x16x16xbf16>
    "tpu.trace_start"() <{level = 10 : i32, message = "gqd,gkd->gqk"}> : () -> ()
    %cst = arith.constant dense<0.000000e+00> : vector<4x16x16xf32>
    %3 = tpu.matmul %0, %1, %cst {dimension_numbers = #tpu.dot_dimension_numbers<[2], [2], [1], [1], [0, 0, 0, 1, 1, 1], [0], [0]>} : vector<4x16x16xbf16>, vector<4x16x16xbf16>, vector<4x16x16xf32> -> vector<4x16x16xf32>
    "tpu.trace_stop"() : () -> ()
    %cst_8 = arith.constant 2.500000e-01 : f32
    %4 = vector.broadcast %cst_8 : f32 to vector<4x16x16xf32>
    %5 = arith.mulf %3, %4 : vector<4x16x16xf32>
    %c0_9 = arith.constant 0 : index
    %c0_10 = arith.constant 0 : index
    %c0_11 = arith.constant 0 : index
    %6 = vector.load %arg4[%c0_9, %c0_10, %c0_11] : memref<4x16x4xf32, #tpu.memory_space<vmem>>, vector<4x16x4xf32>
    %7 = vector.shape_cast %6 : vector<4x16x4xf32> to vector<64x4xf32>
    %c0_12 = arith.constant 0 : index
    %c0_13 = arith.constant 0 : index
    %c0_14 = arith.constant 0 : index
    %8 = vector.load %arg5[%c0_12, %c0_13, %c0_14] : memref<4x16x4xf32, #tpu.memory_space<vmem>>, vector<4x16x4xf32>
    %9 = vector.shape_cast %8 : vector<4x16x4xf32> to vector<64x4xf32>
    %c0_15 = arith.constant 0 : index
    %c0_16 = arith.constant 0 : index
    %10 = vector.load %arg6[%c0_15, %c0_16] : memref<4x16xf32, #tpu.memory_space<vmem>>, vector<4x16xf32>
    %cst_17 = arith.constant dense<0.000000e+00> : vector<64x16xf32>
    %11 = tpu.matmul %7, %10, %cst_17 {dimension_numbers = #tpu.dot_dimension_numbers<[1], [0], [0], [1], [0, 0, 1, 1], [], []>} : vector<64x4xf32>, vector<4x16xf32>, vector<64x16xf32> -> vector<64x16xf32>
    %c0_18 = arith.constant 0 : index
    %c0_19 = arith.constant 0 : index
    %12 = vector.load %arg7[%c0_18, %c0_19] : memref<4x16xf32, #tpu.memory_space<vmem>>, vector<4x16xf32>
    %cst_20 = arith.constant dense<0.000000e+00> : vector<64x16xf32>
    %13 = tpu.matmul %9, %12, %cst_20 {dimension_numbers = #tpu.dot_dimension_numbers<[1], [0], [0], [1], [0, 0, 1, 1], [], []>} : vector<64x4xf32>, vector<4x16xf32>, vector<64x16xf32> -> vector<64x16xf32>
    %14 = arith.addf %11, %13 : vector<64x16xf32>
    %15 = vector.shape_cast %14 : vector<64x16xf32> to vector<4x16x16xf32>
    %16 = arith.addf %5, %15 : vector<4x16x16xf32>
    %cst_21 = arith.constant dense<0xFF800000> : vector<4x16xf32>
    %17 = vector.multi_reduction <maximumf>, %16, %cst_21 [2] : vector<4x16x16xf32> to vector<4x16xf32>
    %18 = vector.shape_cast %17 : vector<4x16xf32> to vector<4x16x1xf32>
    %19 = vector.broadcast %18 : vector<4x16x1xf32> to vector<4x16x16xf32>
    %20 = arith.subf %16, %19 : vector<4x16x16xf32>
    %21 = math.exp %20 : vector<4x16x16xf32>
    %cst_22 = arith.constant dense<0.000000e+00> : vector<4x16xf32>
    %22 = vector.multi_reduction <add>, %21, %cst_22 [2] : vector<4x16x16xf32> to vector<4x16xf32>
    %23 = vector.shape_cast %22 : vector<4x16xf32> to vector<4x16x1xf32>
    %24 = tpu.reciprocal %23 {approx = true} : vector<4x16x1xf32> -> vector<4x16x1xf32>
    %25 = vector.broadcast %24 : vector<4x16x1xf32> to vector<4x16x16xf32>
    %26 = arith.mulf %21, %25 : vector<4x16x16xf32>
    %27 = arith.truncf %26 : vector<4x16x16xf32> to vector<4x16x16xbf16>
    "tpu.trace_start"() <{level = 10 : i32, message = "gqk,gkd->gqd"}> : () -> ()
    %cst_23 = arith.constant dense<0.000000e+00> : vector<4x16x16xf32>
    %28 = tpu.matmul %27, %2, %cst_23 {dimension_numbers = #tpu.dot_dimension_numbers<[2], [1], [1], [2], [0, 0, 0, 1, 1, 2], [0], [0]>} : vector<4x16x16xbf16>, vector<4x16x16xbf16>, vector<4x16x16xf32> -> vector<4x16x16xf32>
    "tpu.trace_stop"() : () -> ()
    %c0_24 = arith.constant 0 : index
    %c0_25 = arith.constant 0 : index
    %c0_26 = arith.constant 0 : index
    %29 = vector.load %arg8[%c0_24, %c0_25, %c0_26] : memref<4x16x16xf32, #tpu.memory_space<vmem>>, vector<4x16x16xf32>
    tpu.vector_store %arg8[%c0_24, %c0_25, %c0_26], %28 {strides = array<i32>} : memref<4x16x16xf32, #tpu.memory_space<vmem>>, vector<4x16x16xf32>,
    return
  }
  func.func @transform_0(%arg0: i32) -> (i32, i32, i32) {
    %c0_i32 = arith.constant 0 : i32
    %c0_i32_0 = arith.constant 0 : i32
    %c0_i32_1 = arith.constant 0 : i32
    return %arg0, %c0_i32, %c0_i32_0 : i32, i32, i32
  }
  func.func @transform_1(%arg0: i32) -> (i32, i32, i32) {
    %c0_i32 = arith.constant 0 : i32
    %c0_i32_0 = arith.constant 0 : i32
    %c0_i32_1 = arith.constant 0 : i32
    return %arg0, %c0_i32, %c0_i32_0 : i32, i32, i32
  }
  func.func @transform_2(%arg0: i32) -> (i32, i32, i32) {
    %c0_i32 = arith.constant 0 : i32
    %c0_i32_0 = arith.constant 0 : i32
    %c0_i32_1 = arith.constant 0 : i32
    return %arg0, %c0_i32, %c0_i32_0 : i32, i32, i32
  }
  func.func @transform_3(%arg0: i32) -> (i32, i32, i32) {
    %c0_i32 = arith.constant 0 : i32
    %c0_i32_0 = arith.constant 0 : i32
    %c0_i32_1 = arith.constant 0 : i32
    return %arg0, %c0_i32, %c0_i32_0 : i32, i32, i32
  }
  func.func @transform_4(%arg0: i32) -> (i32, i32, i32) {
    %c0_i32 = arith.constant 0 : i32
    %c0_i32_0 = arith.constant 0 : i32
    %c0_i32_1 = arith.constant 0 : i32
    return %arg0, %c0_i32, %c0_i32_0 : i32, i32, i32
  }
  func.func @transform_5(%arg0: i32) -> (i32, i32) {
    %c0_i32 = arith.constant 0 : i32
    %c0_i32_0 = arith.constant 0 : i32
    %c0_i32_1 = arith.constant 0 : i32
    return %c0_i32, %c0_i32_0 : i32, i32
  }
  func.func @transform_6(%arg0: i32) -> (i32, i32) {
    %c0_i32 = arith.constant 0 : i32
    %c0_i32_0 = arith.constant 0 : i32
    %c0_i32_1 = arith.constant 0 : i32
    return %c0_i32, %c0_i32_0 : i32, i32
  }
  func.func @transform_7(%arg0: i32) -> (i32, i32, i32) {
    %c0_i32 = arith.constant 0 : i32
    %c0_i32_0 = arith.constant 0 : i32
    %c0_i32_1 = arith.constant 0 : i32
    return %arg0, %c0_i32, %c0_i32_0 : i32, i32, i32
  }
}

module attributes {stable_mosaic.version = 11 : i64} {
  func.func @kernel(%arg0: i32, %arg1: memref<16x64xf32, #tpu.memory_space<vmem>>, %arg2: memref<64x128xbf16, #tpu.memory_space<vmem>>, %arg3: memref<1x128xf32, #tpu.memory_space<vmem>>, %arg4: memref<1x128xf32, #tpu.memory_space<vmem>>, %arg5: memref<16x128xf32, #tpu.memory_space<vmem>>) attributes {dimension_semantics = [#tpu.dimension_semantics<parallel>], iteration_bounds = array<i64: 2>, scalar_prefetch = 0 : i64, scratch_operands = 0 : i64, tpu.core_type = #tpu.core_type<tc>, window_params = [{transform_indices = @transform_0, window_bounds = array<i64: 16, 64>}, {pipeline_mode = #tpu.pipeline_mode<synchronous>, transform_indices = @transform_1, window_bounds = array<i64: 64, 128>}, {pipeline_mode = #tpu.pipeline_mode<synchronous>, transform_indices = @transform_2, window_bounds = array<i64: 1, 128>}, {pipeline_mode = #tpu.pipeline_mode<synchronous>, transform_indices = @transform_3, window_bounds = array<i64: 1, 128>}, {transform_indices = @transform_4, window_bounds = array<i64: 16, 128>}]} {
    %c0 = arith.constant 0 : index
    %c0_0 = arith.constant 0 : index
    %0 = vector.load %arg1[%c0, %c0_0] : memref<16x64xf32, #tpu.memory_space<vmem>>, vector<16x64xf32>
    %1 = arith.truncf %0 : vector<16x64xf32> to vector<16x64xbf16>
    %c0_1 = arith.constant 0 : index
    %c0_2 = arith.constant 0 : index
    %2 = vector.load %arg2[%c0_1, %c0_2] : memref<64x128xbf16, #tpu.memory_space<vmem>>, vector<64x128xbf16>
    %cst = arith.constant dense<0.000000e+00> : vector<16x128xf32>
    %3 = tpu.matmul %1, %2, %cst {dimension_numbers = #tpu.dot_dimension_numbers<[1], [0], [0], [1], [0, 0, 1, 1], [], []>} : vector<16x64xbf16>, vector<64x128xbf16>, vector<16x128xf32> -> vector<16x128xf32>
    %c0_3 = arith.constant 0 : index
    %c0_4 = arith.constant 0 : index
    %4 = vector.load %arg3[%c0_3, %c0_4] : memref<1x128xf32, #tpu.memory_space<vmem>>, vector<1x128xf32>
    %c0_5 = arith.constant 0 : index
    %c0_6 = arith.constant 0 : index
    %5 = vector.load %arg4[%c0_5, %c0_6] : memref<1x128xf32, #tpu.memory_space<vmem>>, vector<1x128xf32>
    %cst_7 = arith.constant dense<0.000000e+00> : vector<16xf32>
    %6 = vector.multi_reduction <add>, %3, %cst_7 [1] : vector<16x128xf32> to vector<16xf32>
    %7 = vector.shape_cast %6 : vector<16xf32> to vector<16x1xf32>
    %cst_8 = arith.constant 1.280000e+02 : f32
    %8 = vector.broadcast %cst_8 : f32 to vector<16x1xf32>
    %9 = arith.divf %7, %8 : vector<16x1xf32>
    %10 = vector.broadcast %9 : vector<16x1xf32> to vector<16x128xf32>
    %11 = arith.subf %3, %10 : vector<16x128xf32>
    %12 = arith.mulf %11, %11 : vector<16x128xf32>
    %cst_9 = arith.constant dense<0.000000e+00> : vector<16xf32>
    %13 = vector.multi_reduction <add>, %12, %cst_9 [1] : vector<16x128xf32> to vector<16xf32>
    %14 = vector.shape_cast %13 : vector<16xf32> to vector<16x1xf32>
    %cst_10 = arith.constant 1.280000e+02 : f32
    %15 = vector.broadcast %cst_10 : f32 to vector<16x1xf32>
    %16 = arith.divf %14, %15 : vector<16x1xf32>
    %cst_11 = arith.constant 9.99999997E-7 : f32
    %17 = vector.broadcast %cst_11 : f32 to vector<16x1xf32>
    %18 = arith.addf %16, %17 : vector<16x1xf32>
    %19 = math.rsqrt %18 : vector<16x1xf32>
    %20 = vector.broadcast %19 : vector<16x1xf32> to vector<16x128xf32>
    %21 = arith.mulf %11, %20 : vector<16x128xf32>
    %22 = vector.broadcast %4 : vector<1x128xf32> to vector<16x128xf32>
    %23 = arith.mulf %21, %22 : vector<16x128xf32>
    %24 = vector.broadcast %5 : vector<1x128xf32> to vector<16x128xf32>
    %25 = arith.addf %23, %24 : vector<16x128xf32>
    %c0_12 = arith.constant 0 : index
    %c0_13 = arith.constant 0 : index
    %26 = vector.load %arg5[%c0_12, %c0_13] : memref<16x128xf32, #tpu.memory_space<vmem>>, vector<16x128xf32>
    tpu.vector_store %arg5[%c0_12, %c0_13], %25 {strides = array<i32>} : memref<16x128xf32, #tpu.memory_space<vmem>>, vector<16x128xf32>,
    return
  }
  func.func @transform_0(%arg0: i32) -> (i32, i32) {
    %c0_i32 = arith.constant 0 : i32
    %c0_i32_0 = arith.constant 0 : i32
    return %arg0, %c0_i32 : i32, i32
  }
  func.func @transform_1(%arg0: i32) -> (i32, i32) {
    %c0_i32 = arith.constant 0 : i32
    %c0_i32_0 = arith.constant 0 : i32
    %c0_i32_1 = arith.constant 0 : i32
    return %c0_i32, %c0_i32_0 : i32, i32
  }
  func.func @transform_2(%arg0: i32) -> (i32, i32) {
    %c0_i32 = arith.constant 0 : i32
    %c0_i32_0 = arith.constant 0 : i32
    %c0_i32_1 = arith.constant 0 : i32
    return %c0_i32, %c0_i32_0 : i32, i32
  }
  func.func @transform_3(%arg0: i32) -> (i32, i32) {
    %c0_i32 = arith.constant 0 : i32
    %c0_i32_0 = arith.constant 0 : i32
    %c0_i32_1 = arith.constant 0 : i32
    return %c0_i32, %c0_i32_0 : i32, i32
  }
  func.func @transform_4(%arg0: i32) -> (i32, i32) {
    %c0_i32 = arith.constant 0 : i32
    %c0_i32_0 = arith.constant 0 : i32
    return %arg0, %c0_i32 : i32, i32
  }
}

module attributes {stable_mosaic.version = 11 : i64} {
  func.func @kernel(%arg0: i32, %arg1: memref<1x6x6x128xbf16, #tpu.memory_space<vmem>>, %arg2: memref<9x128x128xbf16, #tpu.memory_space<vmem>>, %arg3: memref<1x128xf32, #tpu.memory_space<vmem>>, %arg4: memref<1x128xf32, #tpu.memory_space<vmem>>, %arg5: memref<1x4x4x128xf32, #tpu.memory_space<vmem>>) attributes {dimension_semantics = [#tpu.dimension_semantics<parallel>], iteration_bounds = array<i64: 2>, scalar_prefetch = 0 : i64, scratch_operands = 0 : i64, tpu.core_type = #tpu.core_type<tc>, window_params = [{transform_indices = @transform_0, window_bounds = array<i64: 1, 6, 6, 128>}, {pipeline_mode = #tpu.pipeline_mode<synchronous>, transform_indices = @transform_1, window_bounds = array<i64: 9, 128, 128>}, {pipeline_mode = #tpu.pipeline_mode<synchronous>, transform_indices = @transform_2, window_bounds = array<i64: 1, 128>}, {pipeline_mode = #tpu.pipeline_mode<synchronous>, transform_indices = @transform_3, window_bounds = array<i64: 1, 128>}, {transform_indices = @transform_4, window_bounds = array<i64: 1, 4, 4, 128>}]} {
    %c0 = arith.constant 0 : index
    %c0_0 = arith.constant 0 : index
    %c0_1 = arith.constant 0 : index
    %c0_2 = arith.constant 0 : index
    %0 = vector.load %arg1[%c0, %c0_0, %c0_1, %c0_2] : memref<1x6x6x128xbf16, #tpu.memory_space<vmem>>, vector<1x6x6x128xbf16>
    %1 = vector.shape_cast %0 : vector<1x6x6x128xbf16> to vector<6x6x128xbf16>
    %cst = arith.constant 0.000000e+00 : f32
    %2 = vector.broadcast %cst : f32 to vector<16x128xf32>
    %3 = vector.extract_strided_slice %1 {offsets = [0, 0, 0], sizes = [4, 4, 128], strides = [1, 1, 1]} : vector<6x6x128xbf16> to vector<4x4x128xbf16>
    %4 = vector.shape_cast %3 : vector<4x4x128xbf16> to vector<16x128xbf16>
    %c0_3 = arith.constant 0 : index
    %c0_4 = arith.constant 0 : index
    %c0_5 = arith.constant 0 : index
    %5 = vector.load %arg2[%c0_3, %c0_4, %c0_5] : memref<9x128x128xbf16, #tpu.memory_space<vmem>>, vector<1x128x128xbf16>
    %6 = vector.shape_cast %5 : vector<1x128x128xbf16> to vector<128x128xbf16>
    %cst_6 = arith.constant dense<0.000000e+00> : vector<16x128xf32>
    %7 = tpu.matmul %4, %6, %cst_6 {dimension_numbers = #tpu.dot_dimension_numbers<[1], [0], [0], [1], [0, 0, 1, 1], [], []>} : vector<16x128xbf16>, vector<128x128xbf16>, vector<16x128xf32> -> vector<16x128xf32>
    %8 = arith.addf %2, %7 : vector<16x128xf32>
    %9 = vector.extract_strided_slice %1 {offsets = [0, 1, 0], sizes = [4, 4, 128], strides = [1, 1, 1]} : vector<6x6x128xbf16> to vector<4x4x128xbf16>
    %10 = vector.shape_cast %9 : vector<4x4x128xbf16> to vector<16x128xbf16>
    %c1 = arith.constant 1 : index
    %c0_7 = arith.constant 0 : index
    %c0_8 = arith.constant 0 : index
    %11 = vector.load %arg2[%c1, %c0_7, %c0_8] : memref<9x128x128xbf16, #tpu.memory_space<vmem>>, vector<1x128x128xbf16>
    %12 = vector.shape_cast %11 : vector<1x128x128xbf16> to vector<128x128xbf16>
    %cst_9 = arith.constant dense<0.000000e+00> : vector<16x128xf32>
    %13 = tpu.matmul %10, %12, %cst_9 {dimension_numbers = #tpu.dot_dimension_numbers<[1], [0], [0], [1], [0, 0, 1, 1], [], []>} : vector<16x128xbf16>, vector<128x128xbf16>, vector<16x128xf32> -> vector<16x128xf32>
    %14 = arith.addf %8, %13 : vector<16x128xf32>
    %15 = vector.extract_strided_slice %1 {offsets = [0, 2, 0], sizes = [4, 4, 128], strides = [1, 1, 1]} : vector<6x6x128xbf16> to vector<4x4x128xbf16>
    %16 = vector.shape_cast %15 : vector<4x4x128xbf16> to vector<16x128xbf16>
    %c2 = arith.constant 2 : index
    %c0_10 = arith.constant 0 : index
    %c0_11 = arith.constant 0 : index
    %17 = vector.load %arg2[%c2, %c0_10, %c0_11] : memref<9x128x128xbf16, #tpu.memory_space<vmem>>, vector<1x128x128xbf16>
    %18 = vector.shape_cast %17 : vector<1x128x128xbf16> to vector<128x128xbf16>
    %cst_12 = arith.constant dense<0.000000e+00> : vector<16x128xf32>
    %19 = tpu.matmul %16, %18, %cst_12 {dimension_numbers = #tpu.dot_dimension_numbers<[1], [0], [0], [1], [0, 0, 1, 1], [], []>} : vector<16x128xbf16>, vector<128x128xbf16>, vector<16x128xf32> -> vector<16x128xf32>
    %20 = arith.addf %14, %19 : vector<16x128xf32>
    %21 = vector.extract_strided_slice %1 {offsets = [1, 0, 0], sizes = [4, 4, 128], strides = [1, 1, 1]} : vector<6x6x128xbf16> to vector<4x4x128xbf16>
    %22 = vector.shape_cast %21 : vector<4x4x128xbf16> to vector<16x128xbf16>
    %c3 = arith.constant 3 : index
    %c0_13 = arith.constant 0 : index
    %c0_14 = arith.constant 0 : index
    %23 = vector.load %arg2[%c3, %c0_13, %c0_14] : memref<9x128x128xbf16, #tpu.memory_space<vmem>>, vector<1x128x128xbf16>
    %24 = vector.shape_cast %23 : vector<1x128x128xbf16> to vector<128x128xbf16>
    %cst_15 = arith.constant dense<0.000000e+00> : vector<16x128xf32>
    %25 = tpu.matmul %22, %24, %cst_15 {dimension_numbers = #tpu.dot_dimension_numbers<[1], [0], [0], [1], [0, 0, 1, 1], [], []>} : vector<16x128xbf16>, vector<128x128xbf16>, vector<16x128xf32> -> vector<16x128xf32>
    %26 = arith.addf %20, %25 : vector<16x128xf32>
    %27 = vector.extract_strided_slice %1 {offsets = [1, 1, 0], sizes = [4, 4, 128], strides = [1, 1, 1]} : vector<6x6x128xbf16> to vector<4x4x128xbf16>
    %28 = vector.shape_cast %27 : vector<4x4x128xbf16> to vector<16x128xbf16>
    %c4 = arith.constant 4 : index
    %c0_16 = arith.constant 0 : index
    %c0_17 = arith.constant 0 : index
    %29 = vector.load %arg2[%c4, %c0_16, %c0_17] : memref<9x128x128xbf16, #tpu.memory_space<vmem>>, vector<1x128x128xbf16>
    %30 = vector.shape_cast %29 : vector<1x128x128xbf16> to vector<128x128xbf16>
    %cst_18 = arith.constant dense<0.000000e+00> : vector<16x128xf32>
    %31 = tpu.matmul %28, %30, %cst_18 {dimension_numbers = #tpu.dot_dimension_numbers<[1], [0], [0], [1], [0, 0, 1, 1], [], []>} : vector<16x128xbf16>, vector<128x128xbf16>, vector<16x128xf32> -> vector<16x128xf32>
    %32 = arith.addf %26, %31 : vector<16x128xf32>
    %33 = vector.extract_strided_slice %1 {offsets = [1, 2, 0], sizes = [4, 4, 128], strides = [1, 1, 1]} : vector<6x6x128xbf16> to vector<4x4x128xbf16>
    %34 = vector.shape_cast %33 : vector<4x4x128xbf16> to vector<16x128xbf16>
    %c5 = arith.constant 5 : index
    %c0_19 = arith.constant 0 : index
    %c0_20 = arith.constant 0 : index
    %35 = vector.load %arg2[%c5, %c0_19, %c0_20] : memref<9x128x128xbf16, #tpu.memory_space<vmem>>, vector<1x128x128xbf16>
    %36 = vector.shape_cast %35 : vector<1x128x128xbf16> to vector<128x128xbf16>
    %cst_21 = arith.constant dense<0.000000e+00> : vector<16x128xf32>
    %37 = tpu.matmul %34, %36, %cst_21 {dimension_numbers = #tpu.dot_dimension_numbers<[1], [0], [0], [1], [0, 0, 1, 1], [], []>} : vector<16x128xbf16>, vector<128x128xbf16>, vector<16x128xf32> -> vector<16x128xf32>
    %38 = arith.addf %32, %37 : vector<16x128xf32>
    %39 = vector.extract_strided_slice %1 {offsets = [2, 0, 0], sizes = [4, 4, 128], strides = [1, 1, 1]} : vector<6x6x128xbf16> to vector<4x4x128xbf16>
    %40 = vector.shape_cast %39 : vector<4x4x128xbf16> to vector<16x128xbf16>
    %c6 = arith.constant 6 : index
    %c0_22 = arith.constant 0 : index
    %c0_23 = arith.constant 0 : index
    %41 = vector.load %arg2[%c6, %c0_22, %c0_23] : memref<9x128x128xbf16, #tpu.memory_space<vmem>>, vector<1x128x128xbf16>
    %42 = vector.shape_cast %41 : vector<1x128x128xbf16> to vector<128x128xbf16>
    %cst_24 = arith.constant dense<0.000000e+00> : vector<16x128xf32>
    %43 = tpu.matmul %40, %42, %cst_24 {dimension_numbers = #tpu.dot_dimension_numbers<[1], [0], [0], [1], [0, 0, 1, 1], [], []>} : vector<16x128xbf16>, vector<128x128xbf16>, vector<16x128xf32> -> vector<16x128xf32>
    %44 = arith.addf %38, %43 : vector<16x128xf32>
    %45 = vector.extract_strided_slice %1 {offsets = [2, 1, 0], sizes = [4, 4, 128], strides = [1, 1, 1]} : vector<6x6x128xbf16> to vector<4x4x128xbf16>
    %46 = vector.shape_cast %45 : vector<4x4x128xbf16> to vector<16x128xbf16>
    %c7 = arith.constant 7 : index
    %c0_25 = arith.constant 0 : index
    %c0_26 = arith.constant 0 : index
    %47 = vector.load %arg2[%c7, %c0_25, %c0_26] : memref<9x128x128xbf16, #tpu.memory_space<vmem>>, vector<1x128x128xbf16>
    %48 = vector.shape_cast %47 : vector<1x128x128xbf16> to vector<128x128xbf16>
    %cst_27 = arith.constant dense<0.000000e+00> : vector<16x128xf32>
    %49 = tpu.matmul %46, %48, %cst_27 {dimension_numbers = #tpu.dot_dimension_numbers<[1], [0], [0], [1], [0, 0, 1, 1], [], []>} : vector<16x128xbf16>, vector<128x128xbf16>, vector<16x128xf32> -> vector<16x128xf32>
    %50 = arith.addf %44, %49 : vector<16x128xf32>
    %51 = vector.extract_strided_slice %1 {offsets = [2, 2, 0], sizes = [4, 4, 128], strides = [1, 1, 1]} : vector<6x6x128xbf16> to vector<4x4x128xbf16>
    %52 = vector.shape_cast %51 : vector<4x4x128xbf16> to vector<16x128xbf16>
    %c8 = arith.constant 8 : index
    %c0_28 = arith.constant 0 : index
    %c0_29 = arith.constant 0 : index
    %53 = vector.load %arg2[%c8, %c0_28, %c0_29] : memref<9x128x128xbf16, #tpu.memory_space<vmem>>, vector<1x128x128xbf16>
    %54 = vector.shape_cast %53 : vector<1x128x128xbf16> to vector<128x128xbf16>
    %cst_30 = arith.constant dense<0.000000e+00> : vector<16x128xf32>
    %55 = tpu.matmul %52, %54, %cst_30 {dimension_numbers = #tpu.dot_dimension_numbers<[1], [0], [0], [1], [0, 0, 1, 1], [], []>} : vector<16x128xbf16>, vector<128x128xbf16>, vector<16x128xf32> -> vector<16x128xf32>
    %56 = arith.addf %50, %55 : vector<16x128xf32>
    %c0_31 = arith.constant 0 : index
    %c0_32 = arith.constant 0 : index
    %57 = vector.load %arg3[%c0_31, %c0_32] : memref<1x128xf32, #tpu.memory_space<vmem>>, vector<1x128xf32>
    %c0_33 = arith.constant 0 : index
    %c0_34 = arith.constant 0 : index
    %58 = vector.load %arg4[%c0_33, %c0_34] : memref<1x128xf32, #tpu.memory_space<vmem>>, vector<1x128xf32>
    %cst_35 = arith.constant dense<0.000000e+00> : vector<16xf32>
    %59 = vector.multi_reduction <add>, %56, %cst_35 [1] : vector<16x128xf32> to vector<16xf32>
    %60 = vector.shape_cast %59 : vector<16xf32> to vector<16x1xf32>
    %cst_36 = arith.constant 1.280000e+02 : f32
    %61 = vector.broadcast %cst_36 : f32 to vector<16x1xf32>
    %62 = arith.divf %60, %61 : vector<16x1xf32>
    %63 = vector.broadcast %62 : vector<16x1xf32> to vector<16x128xf32>
    %64 = arith.subf %56, %63 : vector<16x128xf32>
    %65 = arith.mulf %64, %64 : vector<16x128xf32>
    %cst_37 = arith.constant dense<0.000000e+00> : vector<16xf32>
    %66 = vector.multi_reduction <add>, %65, %cst_37 [1] : vector<16x128xf32> to vector<16xf32>
    %67 = vector.shape_cast %66 : vector<16xf32> to vector<16x1xf32>
    %cst_38 = arith.constant 1.280000e+02 : f32
    %68 = vector.broadcast %cst_38 : f32 to vector<16x1xf32>
    %69 = arith.divf %67, %68 : vector<16x1xf32>
    %cst_39 = arith.constant 9.99999997E-7 : f32
    %70 = vector.broadcast %cst_39 : f32 to vector<16x1xf32>
    %71 = arith.addf %69, %70 : vector<16x1xf32>
    %72 = math.rsqrt %71 : vector<16x1xf32>
    %73 = vector.broadcast %72 : vector<16x1xf32> to vector<16x128xf32>
    %74 = arith.mulf %64, %73 : vector<16x128xf32>
    %75 = vector.broadcast %57 : vector<1x128xf32> to vector<16x128xf32>
    %76 = arith.mulf %74, %75 : vector<16x128xf32>
    %77 = vector.broadcast %58 : vector<1x128xf32> to vector<16x128xf32>
    %78 = arith.addf %76, %77 : vector<16x128xf32>
    %79 = vector.shape_cast %78 : vector<16x128xf32> to vector<4x4x128xf32>
    %c0_40 = arith.constant 0 : index
    %c0_41 = arith.constant 0 : index
    %c0_42 = arith.constant 0 : index
    %c0_43 = arith.constant 0 : index
    %80 = vector.load %arg5[%c0_40, %c0_41, %c0_42, %c0_43] : memref<1x4x4x128xf32, #tpu.memory_space<vmem>>, vector<1x4x4x128xf32>
    %81 = vector.shape_cast %80 : vector<1x4x4x128xf32> to vector<4x4x128xf32>
    %82 = vector.shape_cast %79 : vector<4x4x128xf32> to vector<1x4x4x128xf32>
    tpu.vector_store %arg5[%c0_40, %c0_41, %c0_42, %c0_43], %82 {strides = array<i32>} : memref<1x4x4x128xf32, #tpu.memory_space<vmem>>, vector<1x4x4x128xf32>,
    return
  }
  func.func @transform_0(%arg0: i32) -> (i32, i32, i32, i32) {
    %c0_i32 = arith.constant 0 : i32
    %c0_i32_0 = arith.constant 0 : i32
    %c0_i32_1 = arith.constant 0 : i32
    %c0_i32_2 = arith.constant 0 : i32
    return %arg0, %c0_i32, %c0_i32_0, %c0_i32_1 : i32, i32, i32, i32
  }
  func.func @transform_1(%arg0: i32) -> (i32, i32, i32) {
    %c0_i32 = arith.constant 0 : i32
    %c0_i32_0 = arith.constant 0 : i32
    %c0_i32_1 = arith.constant 0 : i32
    %c0_i32_2 = arith.constant 0 : i32
    return %c0_i32, %c0_i32_0, %c0_i32_1 : i32, i32, i32
  }
  func.func @transform_2(%arg0: i32) -> (i32, i32) {
    %c0_i32 = arith.constant 0 : i32
    %c0_i32_0 = arith.constant 0 : i32
    %c0_i32_1 = arith.constant 0 : i32
    return %c0_i32, %c0_i32_0 : i32, i32
  }
  func.func @transform_3(%arg0: i32) -> (i32, i32) {
    %c0_i32 = arith.constant 0 : i32
    %c0_i32_0 = arith.constant 0 : i32
    %c0_i32_1 = arith.constant 0 : i32
    return %c0_i32, %c0_i32_0 : i32, i32
  }
  func.func @transform_4(%arg0: i32) -> (i32, i32, i32, i32) {
    %c0_i32 = arith.constant 0 : i32
    %c0_i32_0 = arith.constant 0 : i32
    %c0_i32_1 = arith.constant 0 : i32
    %c0_i32_2 = arith.constant 0 : i32
    return %arg0, %c0_i32, %c0_i32_0, %c0_i32_1 : i32, i32, i32, i32
  }
}

</mosaic_0001>

<llo_original>
// kernel: mhr_medseg_forward.19
$region0: #{mhr_medseg_forward.19}
  #allocation0 [shape = 'u32[]', space=smem, size = 0x4, offset = 0x4, fixed_abs, tag = 'smem constant byte address 0x4 - core index']
  #allocation1 [shape = 'u32[72,128]{1,0:T(1,128)}', space=vmem, size = 0x9000, scoped, tag = 'internal scratch']
  #allocation2 [shape = 'f32[16,64]{1,0:T(8,128)}', space=vmem, size = 0x2000, scoped, tag = 'scratch operand']
  %s0 = inlined_call_operand.vmem [shape: bf16[32,768], index: 0, kind: input, shape index: {}]
  %s1 = inlined_call_operand.vmem [shape: bf16[768,64], index: 1, kind: input, shape index: {}]
  %s2 = inlined_call_operand.vmem [shape: f32[1,64], index: 2, kind: input, shape index: {}]
  %s3 = inlined_call_operand.vmem [shape: f32[32,64], index: 3, kind: output, shape index: {}]
  %s4 = sld [smem:[#allocation0]]
  $region91: #{mhr_medseg_forward.19} parent=0
    _
  %s6 = ssub.s32 1, %s4
  %s7 = scalar_select 0, %s6, %s4
  $region1: #{mhr_medseg_forward.19} parent=0
    #allocation3 [shape = 'u8[16384]{0}', space=vmem, size = 0x4000, scoped, tag = 'input window, operand 0']
    loop: start=0, step=1, limit=8
    $region2: #{mhr_medseg_forward.19} parent=1 // loop_pre_header
      _
    $region3: #{mhr_medseg_forward.19} parent=1 // loop_header
      %s9 = sphi 0, %s13
      %p10 = scmp.ge.s32.totalorder %s9, 8
      %s16 = sphi 0, %s35
      %s17 = sphi 0, %s31
      %s18 = sphi 0, %s27
      %s19 = sphi 0, %s16
      %s20 = sphi 0, %s17
      %s21 = sphi 0, %s18
      %s22 = sphi 0, %s19
      %s23 = sphi 0, %s20
      %s24 = sphi 0, %s21
      %s40 = sphi 0, %s42
      %s43 = sphi 0, %s40
      %s44 = sphi 0, %s43
      %s60 = sphi 0, %s44
      %s68 = sphi 0, %s70
      %s71 = sphi 0, %s68
      %s72 = sphi 0, %s71
      %s88 = sphi 0, %s72
      %s94 = sphi 0, %s96
      %s97 = sphi 0, %s94
      %s98 = sphi 0, %s97
      %s114 = sphi 0, %s98
      %s122 = sphi 0, %s124
      %s125 = sphi 0, %s122
      %s126 = sphi 0, %s125
      %s142 = sphi 0, %s126
    $region4: #{mhr_medseg_forward.19} parent=1 // loop_header_branch
      %12 = sbr.rel (%p10) target = $region8
    $region5: #{mhr_medseg_forward.19} parent=1 // loop_body
      %s14 = ssub.s32 %s9, 1
      %s15 = ssub.s32 %s9, 2
      %s25 = sadd.s32 1, %s18
      %p26 = scmp.ge.s32.totalorder %s25, 3
      %s27 = scalar_select %p26, 0, %s25
      %s28 = sadd.s32 1, %s17
      %s29 = scalar_select %p26, %s28, %s17
      %p30 = scmp.ge.s32.totalorder %s29, 1
      %s31 = scalar_select %p30, 0, %s29
      %s32 = sadd.s32 1, %s16
      %s33 = scalar_select %p30, %s32, %s16
      %p34 = scmp.ge.s32.totalorder %s33, 2
      %s35 = scalar_select %p34, 0, %s33
      %s36 = ssub.s32 %s16, %s35
      %s37 = ssub.s32 %s18, %s27
      %s38 = sor.u32 %s36, %s37
      %p39 = scmp.eq.s32.totalorder %s38, 0
      %s41 = sadd.s32 %s40, 1
      %s42 = scalar_select %p39, %s40, %s41
      %p45 = pneg %p39
      %p46 = scmp.eq.s32.totalorder %s9, 5
      %p47 = por %p45, %p46
      %p48 = scmp.ne.s32.totalorder %s40, %s43
      %p49 = scmp.eq.s32.totalorder %s9, 0
      %p50 = por %p48, %p49
      %p51 = scmp.ne.s32.totalorder %s40, %s43
      %p52 = scmp.eq.s32.totalorder %s14, 5
      %p53 = por %p51, %p52
      %p54 = scmp.ne.s32.totalorder %s43, %s44
      %p55 = scmp.eq.s32.totalorder %s14, 0
      %p56 = por %p54, %p55
      %p57 = scmp.ne.s32.totalorder %s43, %s44
      %p58 = scmp.eq.s32.totalorder %s15, 5
      %p59 = por %p57, %p58
      %p61 = scmp.ne.s32.totalorder %s44, %s60
      %p62 = scmp.eq.s32.totalorder %s15, 0
      %p63 = por %p61, %p62
      %s64 = ssub.s32 %s18, %s27
      %s65 = ssub.s32 %s17, %s31
      %s66 = sor.u32 %s64, %s65
      %p67 = scmp.eq.s32.totalorder %s66, 0
      %s69 = sadd.s32 %s68, 1
      %s70 = scalar_select %p67, %s68, %s69
      %p73 = pneg %p67
      %p74 = scmp.eq.s32.totalorder %s9, 5
      %p75 = por %p73, %p74
      %p76 = scmp.ne.s32.totalorder %s68, %s71
      %p77 = scmp.eq.s32.totalorder %s9, 0
      %p78 = por %p76, %p77
      %p79 = scmp.ne.s32.totalorder %s68, %s71
      %p80 = scmp.eq.s32.totalorder %s14, 5
      %p81 = por %p79, %p80
      %p82 = scmp.ne.s32.totalorder %s71, %s72
      %p83 = scmp.eq.s32.totalorder %s14, 0
      %p84 = por %p82, %p83
      %p85 = scmp.ne.s32.totalorder %s71, %s72
      %p86 = scmp.eq.s32.totalorder %s15, 5
      %p87 = por %p85, %p86
      %p89 = scmp.ne.s32.totalorder %s72, %s88
      %p90 = scmp.eq.s32.totalorder %s15, 0
      %p91 = por %p89, %p90
      %s92 = ssub.s32 %s17, %s31
      %p93 = scmp.eq.s32.totalorder %s92, 0
      %s95 = sadd.s32 %s94, 1
      %s96 = scalar_select %p93, %s94, %s95
      %p99 = pneg %p93
      %p100 = scmp.eq.s32.totalorder %s9, 5
      %p101 = por %p99, %p100
      %p102 = scmp.ne.s32.totalorder %s94, %s97
      %p103 = scmp.eq.s32.totalorder %s9, 0
      %p104 = por %p102, %p103
      %p105 = scmp.ne.s32.totalorder %s94, %s97
      %p106 = scmp.eq.s32.totalorder %s14, 5
      %p107 = por %p105, %p106
      %p108 = scmp.ne.s32.totalorder %s97, %s98
      %p109 = scmp.eq.s32.totalorder %s14, 0
      %p110 = por %p108, %p109
      %p111 = scmp.ne.s32.totalorder %s97, %s98
      %p112 = scmp.eq.s32.totalorder %s15, 5
      %p113 = por %p111, %p112
      %p115 = scmp.ne.s32.totalorder %s98, %s114
      %p116 = scmp.eq.s32.totalorder %s15, 0
      %p117 = por %p115, %p116
      %s118 = ssub.s32 %s16, %s35
      %s119 = ssub.s32 %s17, %s31
      %s120 = sor.u32 %s118, %s119
      %p121 = scmp.eq.s32.totalorder %s120, 0
      %s123 = sadd.s32 %s122, 1
      %s124 = scalar_select %p121, %s122, %s123
      %p127 = pneg %p121
      %p128 = scmp.eq.s32.totalorder %s9, 5
      %p129 = por %p127, %p128
      %p130 = scmp.ne.s32.totalorder %s122, %s125
      %p131 = scmp.eq.s32.totalorder %s9, 0
      %p132 = por %p130, %p131
      %p133 = scmp.ne.s32.totalorder %s122, %s125
      %p134 = scmp.eq.s32.totalorder %s14, 5
      %p135 = por %p133, %p134
      %p136 = scmp.ne.s32.totalorder %s125, %s126
      %p137 = scmp.eq.s32.totalorder %s14, 0
      %p138 = por %p136, %p137
      %p139 = scmp.ne.s32.totalorder %s125, %s126
      %p140 = scmp.eq.s32.totalorder %s15, 5
      %p141 = por %p139, %p140
      %p143 = scmp.ne.s32.totalorder %s126, %s142
      %p144 = scmp.eq.s32.totalorder %s15, 0
      %p145 = por %p143, %p144
      %p146 = scmp.le.s32.totalorder 1, %s9
      %p147 = scmp.lt.s32.totalorder %s9, 7
      %p148 = pnand %p146, %p147
      %p149 = pneg %p148
      // Predicated region
      $region9: #{mhr_medseg_forward.19} parent=5 // pred_check
        _
      $region10: #{mhr_medseg_forward.19} parent=5 // pred_check_branch
        %151 = sbr.rel (%p148) target = $region12
      $region11: #{mhr_medseg_forward.19} parent=5 // pred_region
        %s152 = ssub.s32 %s9, 1
        // Predicated region
        $region13: #{mhr_medseg_forward.19} parent=11 // pred_check
          %p153 = pneg %p110
        $region14: #{mhr_medseg_forward.19} parent=11 // pred_check_branch
          %155 = sbr.rel (%p153) target = $region16
        $region15: #{mhr_medseg_forward.19} parent=11 // pred_region
          %p156 = scmp.lt.s32.totalorder %s20, 0
          %s157 = scalar_select %p156, %s20, 0
          %s158 = scalar_lea.vmem %s2, %s157
        $region16: #{mhr_medseg_forward.19} parent=11 // pred_fallthru
          _
      $region12: #{mhr_medseg_forward.19} parent=5 // pred_fallthru
        _
      %p159 = scmp.lt.s32.totalorder %s9, 6
      // Predicated region
      $region17: #{mhr_medseg_forward.19} parent=5 // pred_check
        %p160 = pneg %p159
      $region18: #{mhr_medseg_forward.19} parent=5 // pred_check_branch
        %162 = sbr.rel (%p160) target = $region20
      $region19: #{mhr_medseg_forward.19} parent=5 // pred_region
        // Predicated region
        $region21: #{mhr_medseg_forward.19} parent=19 // pred_check
          %p163 = pneg %p50
        $region22: #{mhr_medseg_forward.19} parent=19 // pred_check_branch
          %165 = sbr.rel (%p163) target = $region24
        $region23: #{mhr_medseg_forward.19} parent=19 // pred_region
          %s166 = sand.u32 %s40, 1
          %s167 = sand.u32 %s40, 1
          %s168 = smul.addr %s167, 16
          %s169 = scalar_lea.vmem [#allocation3], %s168
          %s170 = smul.u32 2, %s16
          %s171 = smul.u32 2, %s18
          %s172 = smul.addr %s170, 6
          %s173 = sadd.s32 %s171, %s172
          %s174 = smul.addr %s173, 4
          %s175 = scalar_lea.vmem %s0, %s174
          // Predicated region
          $region25: #{mhr_medseg_forward.19} parent=23 // pred_check
            _
          $region26: #{mhr_medseg_forward.19} parent=23 // pred_check_branch
            %177 = sbr.rel (0) target = $region28
          $region27: #{mhr_medseg_forward.19} parent=23 // pred_region
            // Predicated region
            $region29: #{mhr_medseg_forward.19} parent=27 // pred_check
              _
            $region30: #{mhr_medseg_forward.19} parent=27 // pred_check_branch
              %179 = sbr.rel (0) target = $region32
            $region31: #{mhr_medseg_forward.19} parent=27 // pred_region
              // Predicated region
              $region44: #{mhr_medseg_forward.19} parent=31 // pred_check
                _
              $region45: #{mhr_medseg_forward.19} parent=31 // pred_check_branch
                %197 = sbr.rel (0) target = $region47
              $region46: #{mhr_medseg_forward.19} parent=31 // pred_region
                loop: start=0, step=1, limit=1
                $region48: #{mhr_medseg_forward.19} parent=46 // loop_pre_header
                  _
                $region49: #{mhr_medseg_forward.19} parent=46 // loop_header
                  %s199 = sphi 0, %s203
                  %p200 = scmp.ge.s32.totalorder %s199, 1
                  %s204 = sphi %s175, %s175
                  %s205 = sphi %s169, %s169
                $region50: #{mhr_medseg_forward.19} parent=46 // loop_header_branch
                  %202 = sbr.rel (%p200) target = $region54
                $region51: #{mhr_medseg_forward.19} parent=46 // loop_body
                  %v206 = vld [vmem:[%s204] sm:$0xff]
                  %207 = vst [vmem:[%s205] sm:$0xff] %v206
                  %v208 = vld [vmem:[%s204 + $0x18] sm:$0xff]
                  %209 = vst [vmem:[%s205 + $0x8] sm:$0xff] %v208
                $region52: #{mhr_medseg_forward.19} parent=46 // loop_footer
                  %s203 = sadd.s32 1, %s199
                $region53: #{mhr_medseg_forward.19} parent=46 // loop_footer_branch
                  %198 = sbr.rel target = $region49
                $region54: #{mhr_medseg_forward.19} parent=46 // loop_exit
                  _
              $region47: #{mhr_medseg_forward.19} parent=31 // pred_fallthru
                _
              // Predicated region
              $region55: #{mhr_medseg_forward.19} parent=31 // pred_check
                _
              $region56: #{mhr_medseg_forward.19} parent=31 // pred_check_branch
                %211 = sbr.rel target = $region58
              $region57: #{mhr_medseg_forward.19} parent=31 // pred_region
                _
              $region58: #{mhr_medseg_forward.19} parent=31 // pred_fallthru
                _
            $region32: #{mhr_medseg_forward.19} parent=27 // pred_fallthru
              _
            // Predicated region
            $region33: #{mhr_medseg_forward.19} parent=27 // pred_check
              _
            $region34: #{mhr_medseg_forward.19} parent=27 // pred_check_branch
              %181 = sbr.rel target = $region36
            $region35: #{mhr_medseg_forward.19} parent=27 // pred_region
              %s183 = ssub.s32 256, 1
              loop: start=0, step=1, limit=1
              $region37: #{mhr_medseg_forward.19} parent=35 // loop_pre_header
                _
              $region38: #{mhr_medseg_forward.19} parent=35 // loop_header
                %s185 = sphi 0, %s189
                %p186 = scmp.ge.s32.totalorder %s185, 1
                %s190 = sphi %s175, %s175
                %s191 = sphi %s169, %s169
              $region39: #{mhr_medseg_forward.19} parent=35 // loop_header_branch
                %188 = sbr.rel (%p186) target = $region43
              $region40: #{mhr_medseg_forward.19} parent=35 // loop_body
                %v192 = vld [vmem:[%s190] sm:%s183]
                %193 = vst [vmem:[%s191] sm:%s183] %v192
                %v194 = vld [vmem:[%s190 + $0x18] sm:%s183]
                %195 = vst [vmem:[%s191 + $0x8] sm:%s183] %v194
              $region41: #{mhr_medseg_forward.19} parent=35 // loop_footer
                %s189 = sadd.s32 1, %s185
              $region42: #{mhr_medseg_forward.19} parent=35 // loop_footer_branch
                %184 = sbr.rel target = $region38
              $region43: #{mhr_medseg_forward.19} parent=35 // loop_exit
                _
            $region36: #{mhr_medseg_forward.19} parent=27 // pred_fallthru
              _
          $region28: #{mhr_medseg_forward.19} parent=23 // pred_fallthru
            _
          %212 = vnop
        $region24: #{mhr_medseg_forward.19} parent=19 // pred_fallthru
          _
        // Predicated region
        $region59: #{mhr_medseg_forward.19} parent=19 // pred_check
          %p213 = pneg %p78
        $region60: #{mhr_medseg_forward.19} parent=19 // pred_check_branch
          %215 = sbr.rel (%p213) target = $region62
        $region61: #{mhr_medseg_forward.19} parent=19 // pred_region
          %s216 = smul.u32 32, %s18
          %p217 = scmp.lt.s32.totalorder %s216, 95
          %s218 = scalar_select %p217, %s216, 95
          %p219 = scmp.lt.s32.totalorder %s17, 0
          %s220 = scalar_select %p219, %s17, 0
          %s221 = sadd.s32 %s220, %s218
          %s222 = smul.addr %s221, 4
          %s223 = scalar_lea.vmem %s1, %s222
          %s224 = smul.u32 32, %s18
        $region62: #{mhr_medseg_forward.19} parent=19 // pred_fallthru
          _
      $region20: #{mhr_medseg_forward.19} parent=5 // pred_fallthru
        _
      %p225 = scmp.le.s32.totalorder 1, %s9
      %p226 = scmp.lt.s32.totalorder %s9, 7
      %p227 = pnand %p225, %p226
      %p228 = pneg %p227
      // Predicated region
      $region63: #{mhr_medseg_forward.19} parent=5 // pred_check
        _
      $region64: #{mhr_medseg_forward.19} parent=5 // pred_check_branch
        %230 = sbr.rel (%p227) target = $region66
      $region65: #{mhr_medseg_forward.19} parent=5 // pred_region
        %s231 = ssub.s32 %s9, 1
        %s232 = sand.u32 %s43, 1
        %s233 = sand.u32 %s43, 1
        %s234 = smul.addr %s233, 16
        %s235 = scalar_lea.vmem [#allocation3], %s234
        // Predicated region
        $region67: #{mhr_medseg_forward.19} parent=65 // pred_check
          %p236 = pneg %p56
        $region68: #{mhr_medseg_forward.19} parent=65 // pred_check_branch
          %238 = sbr.rel (%p236) target = $region70
        $region69: #{mhr_medseg_forward.19} parent=65 // pred_region
          _
        $region70: #{mhr_medseg_forward.19} parent=65 // pred_fallthru
          _
        %s239 = sand.u32 %s43, 1
        %s240 = sand.u32 %s43, 1
        %s241 = smul.addr %s240, 16
        %s242 = scalar_lea.vmem [#allocation3], %s241
        %p243 = pneg %p56
        %p244 = pneg %p53
        %s245 = smul.u32 32, %s21
        %p246 = scmp.lt.s32.totalorder %s245, 95
        %s247 = scalar_select %p246, %s245, 95
        %p248 = scmp.lt.s32.totalorder %s20, 0
        %s249 = scalar_select %p248, %s20, 0
        %s250 = sadd.s32 %s249, %s247
        %s251 = smul.addr %s250, 4
        %s252 = scalar_lea.vmem %s1, %s251
        %p253 = pneg %p84
        %p254 = pneg %p81
        %p255 = scmp.lt.s32.totalorder %s20, 0
        %s256 = scalar_select %p255, %s20, 0
        %s257 = scalar_lea.vmem %s2, %s256
        %p258 = pneg %p110
        %p259 = pneg %p107
        %p260 = pneg %p138
        %p261 = pneg %p135
        %s262 = smul.u32 2, %s19
        %p263 = scmp.lt.s32.totalorder %s262, 3
        %s264 = scalar_select %p263, %s262, 3
        %p265 = scmp.lt.s32.totalorder %s20, 0
        %s266 = scalar_select %p265, %s20, 0
        %s267 = sadd.s32 %s266, %s264
        %s268 = smul.addr %s267, 8
        %s269 = scalar_lea.vmem %s3, %s268
        %s270 = smul.u32 2, %s19
        %s271 = smul.u32 2, %s21
        %s272 = smul.u32 32, %s21
        %p273 = scmp.lt.s32.totalorder %s272, 95
        %s274 = scalar_select %p273, %s272, 95
        %p275 = scmp.lt.s32.totalorder %s20, 0
        %s276 = scalar_select %p275, %s20, 0
        %s277 = sadd.s32 %s276, %s274
        %s278 = smul.addr %s277, 4
        %s279 = scalar_lea.vmem %s1, %s278
        %s280 = smul.u32 32, %s21
        %p281 = scmp.lt.s32.totalorder %s20, 0
        %s282 = scalar_select %p281, %s20, 0
        %s283 = scalar_lea.vmem %s2, %s282
        %s284 = smul.u32 2, %s19
        %p285 = scmp.lt.s32.totalorder %s284, 3
        %s286 = scalar_select %p285, %s284, 3
        %p287 = scmp.lt.s32.totalorder %s20, 0
        %s288 = scalar_select %p287, %s20, 0
        %s289 = sadd.s32 %s288, %s286
        %s290 = smul.addr %s289, 8
        %s291 = scalar_lea.vmem %s3, %s290
        %s292 = smul.u32 2, %s19
        %p293 = scmp.eq.s32.totalorder %s21, 0
        // Predicated region
        $region71: #{mhr_medseg_forward.19} parent=65 // pred_check
          %p294 = pneg %p293
        $region72: #{mhr_medseg_forward.19} parent=65 // pred_check_branch
          %296 = sbr.rel (%p294) target = $region74
        $region73: #{mhr_medseg_forward.19} parent=65 // pred_region
          %vm297 = vcmask 523264
          %298 = vst.msk [vmem:[#allocation2] sm:$0xff] %vm297, 0.0
          %299 = vst.msk [vmem:[#allocation2 + $0x8] sm:$0xff] %vm297, 0.0
        $region74: #{mhr_medseg_forward.19} parent=65 // pred_fallthru
          _
        %v300 = vld [vmem:[#allocation2] sm:$0xff]
        %v301 = vld [vmem:[#allocation2 + $0x8] sm:$0xff]
        %v302 = vld [vmem:[%s235] sm:$0xff]
        %v303 = vld [vmem:[%s235 + $0x8] sm:$0xff]
        %v304 = vld [vmem:[%s279] sm:$0xf]
        %v305 = vld [vmem:[%s279 + $0x4] sm:$0xf]
        %v306 = vld [vmem:[%s279 + $0x8] sm:$0xf]
        %v307 = vld [vmem:[%s279 + $0xc] sm:$0xf]
        %v308 = vld [vmem:[%s279 + $0x10] sm:$0xf]
        %v309 = vld [vmem:[%s279 + $0x14] sm:$0xf]
        %v310 = vld [vmem:[%s279 + $0x18] sm:$0xf]
        %v311 = vld [vmem:[%s279 + $0x1c] sm:$0xf]
        %v312 = vld [vmem:[%s279 + $0x20] sm:$0xf]
        %v313 = vld [vmem:[%s279 + $0x24] sm:$0xf]
        %v314 = vld [vmem:[%s279 + $0x28] sm:$0xf]
        %v315 = vld [vmem:[%s279 + $0x2c] sm:$0xf]
        %v316 = vld [vmem:[%s279 + $0x30] sm:$0xf]
        %v317 = vld [vmem:[%s279 + $0x34] sm:$0xf]
        %v318 = vld [vmem:[%s279 + $0x38] sm:$0xf]
        %v319 = vld [vmem:[%s279 + $0x3c] sm:$0xf]
        %v320 = vld [vmem:[%s279 + $0x40] sm:$0xf]
        %v321 = vld [vmem:[%s279 + $0x44] sm:$0xf]
        %v322 = vld [vmem:[%s279 + $0x48] sm:$0xf]
        %v323 = vld [vmem:[%s279 + $0x4c] sm:$0xf]
        %v324 = vld [vmem:[%s279 + $0x50] sm:$0xf]
        %v325 = vld [vmem:[%s279 + $0x54] sm:$0xf]
        %v326 = vld [vmem:[%s279 + $0x58] sm:$0xf]
        %v327 = vld [vmem:[%s279 + $0x5c] sm:$0xf]
        %v328 = vld [vmem:[%s279 + $0x60] sm:$0xf]
        %v329 = vld [vmem:[%s279 + $0x64] sm:$0xf]
        %v330 = vld [vmem:[%s279 + $0x68] sm:$0xf]
        %v331 = vld [vmem:[%s279 + $0x6c] sm:$0xf]
        %v332 = vld [vmem:[%s279 + $0x70] sm:$0xf]
        %v333 = vld [vmem:[%s279 + $0x74] sm:$0xf]
        %v334 = vld [vmem:[%s279 + $0x78] sm:$0xf]
        %v335 = vld [vmem:[%s279 + $0x7c] sm:$0xf]
        %v338 = vunpack.c.l.b16 %v302
        %v339 = vunpack.c.h.b16 %v302
        %v340 = vunpack.c.l.b16 %v303
        %v341 = vunpack.c.h.b16 %v303
        %v342 = vpack.c.b16 %v340, %v338
        %v343 = vpack.c.b16 %v341, %v339
        %v378 = vunpack.c.l.b16 %v304
        %v379 = vunpack.c.l.b16 %v305
        %v380 = vunpack.c.l.b16 %v306
        %v381 = vunpack.c.l.b16 %v307
        %v382 = vunpack.c.l.b16 %v308
        %v383 = vunpack.c.l.b16 %v309
        %v384 = vunpack.c.l.b16 %v310
        %v385 = vunpack.c.l.b16 %v311
        %v386 = vunpack.c.l.b16 %v312
        %v387 = vunpack.c.l.b16 %v313
        %v388 = vunpack.c.l.b16 %v314
        %v389 = vunpack.c.l.b16 %v315
        %v390 = vunpack.c.l.b16 %v316
        %v391 = vunpack.c.l.b16 %v317
        %v392 = vunpack.c.l.b16 %v318
        %v393 = vunpack.c.l.b16 %v319
        %v394 = vunpack.c.l.b16 %v320
        %v395 = vunpack.c.l.b16 %v321
        %v396 = vunpack.c.l.b16 %v322
        %v397 = vunpack.c.l.b16 %v323
        %v398 = vunpack.c.l.b16 %v324
        %v399 = vunpack.c.l.b16 %v325
        %v400 = vunpack.c.l.b16 %v326
        %v401 = vunpack.c.l.b16 %v327
        %v402 = vunpack.c.l.b16 %v328
        %v403 = vunpack.c.l.b16 %v329
        %v404 = vunpack.c.l.b16 %v330
        %v405 = vunpack.c.l.b16 %v331
        %v406 = vunpack.c.l.b16 %v332
        %v407 = vunpack.c.l.b16 %v333
        %v408 = vunpack.c.l.b16 %v334
        %v409 = vunpack.c.l.b16 %v335
        %v410 = vpack.c.b16 %v379, %v378
        %v411 = vpack.c.b16 %v381, %v380
        %v412 = vpack.c.b16 %v383, %v382
        %v413 = vpack.c.b16 %v385, %v384
        %v414 = vpack.c.b16 %v387, %v386
        %v415 = vpack.c.b16 %v389, %v388
        %v416 = vpack.c.b16 %v391, %v390
        %v417 = vpack.c.b16 %v393, %v392
        %v418 = vpack.c.b16 %v395, %v394
        %v419 = vpack.c.b16 %v397, %v396
        %v420 = vpack.c.b16 %v399, %v398
        %v421 = vpack.c.b16 %v401, %v400
        %v422 = vpack.c.b16 %v403, %v402
        %v423 = vpack.c.b16 %v405, %v404
        %v424 = vpack.c.b16 %v407, %v406
        %v425 = vpack.c.b16 %v409, %v408
        %442 = vmatpush.bf16.msra.mxu0 %v417
        %443 = vmatpush.bf16.msra.mxu0 %v416
        %444 = vmatpush.bf16.msra.mxu0 %v415
        %445 = vmatpush.bf16.msra.mxu0 %v414
        %446 = vmatpush.bf16.msra.mxu0 %v413
        %447 = vmatpush.bf16.msra.mxu0 %v412
        %448 = vmatpush.bf16.msra.mxu0 %v411
        %449 = vmatpush.bf16.msra.mxu0 %v410
        %450 = vmatmul.bf16.gmra.mxu0 %v342
        %v451 = vpop.f32.mrf.mxu0
        %v452 = vadd.f32 0.0, %v451
        %v453 = vpop.f32.mrf.mxu0
        %v454 = vadd.f32 0.0, %v453
        %455 = vdwg.mxu0
        %456 = vmatpush.bf16.msra.mxu0 %v425
        %457 = vmatpush.bf16.msra.mxu0 %v424
        %458 = vmatpush.bf16.msra.mxu0 %v423
        %459 = vmatpush.bf16.msra.mxu0 %v422
        %460 = vmatpush.bf16.msra.mxu0 %v421
        %461 = vmatpush.bf16.msra.mxu0 %v420
        %462 = vmatpush.bf16.msra.mxu0 %v419
        %463 = vmatpush.bf16.msra.mxu0 %v418
        %464 = vmatmul.bf16.gmra.mxu0 %v343
        %v465 = vpop.f32.mrf.mxu0
        %v466 = vadd.f32 %v452, %v465
        %v467 = vpop.f32.mrf.mxu0
        %v468 = vadd.f32 %v454, %v467
        %469 = vdwg.mxu0
        %v470 = vadd.f32 %v300, %v466
        %v471 = vadd.f32 %v301, %v468
        %vm472 = vcmask 523264
        %473 = vst.msk [vmem:[#allocation2] sm:$0xff] %vm472, %v470
        %474 = vst.msk [vmem:[#allocation2 + $0x8] sm:$0xff] %vm472, %v471
        %p475 = scmp.eq.s32.totalorder %s21, 2
        // Predicated region
        $region75: #{mhr_medseg_forward.19} parent=65 // pred_check
          %p476 = pneg %p475
        $region76: #{mhr_medseg_forward.19} parent=65 // pred_check_branch
          %478 = sbr.rel (%p476) target = $region78
        $region77: #{mhr_medseg_forward.19} parent=65 // pred_region
          %v479 = vld [vmem:[#allocation2] sm:$0xff]
          %v480 = vld [vmem:[#allocation2 + $0x8] sm:$0xff]
          %v481 = vld [vmem:[%s283] sm:$0x1]
          %v483 = vperm.slane %v481, 0
          %v485 = vadd.f32 %v479, %v483
          %v486 = vadd.f32 %v480, %v483
          %487 = vst.msk [vmem:[%s291] sm:$0xff] %vm472, %v485
          %488 = vst.msk [vmem:[%s291 + $0x8] sm:$0xff] %vm472, %v486
        $region78: #{mhr_medseg_forward.19} parent=65 // pred_fallthru
          _
        %s489 = smul.u32 2, %s19
        %p490 = scmp.lt.s32.totalorder %s489, 3
        %s491 = scalar_select %p490, %s489, 3
        %p492 = scmp.lt.s32.totalorder %s20, 0
        %s493 = scalar_select %p492, %s20, 0
        %s494 = sadd.s32 %s493, %s491
        %s495 = smul.addr %s494, 8
        %s496 = scalar_lea.vmem %s3, %s495
        // Predicated region
        $region79: #{mhr_medseg_forward.19} parent=65 // pred_check
          %p497 = pneg %p135
        $region80: #{mhr_medseg_forward.19} parent=65 // pred_check_branch
          %499 = sbr.rel (%p497) target = $region82
        $region81: #{mhr_medseg_forward.19} parent=65 // pred_region
          %s500 = smul.u32 2, %s19
        $region82: #{mhr_medseg_forward.19} parent=65 // pred_fallthru
          _
      $region66: #{mhr_medseg_forward.19} parent=5 // pred_fallthru
        _
      %p501 = scmp.le.s32.totalorder 2, %s9
      // Predicated region
      $region83: #{mhr_medseg_forward.19} parent=5 // pred_check
        %p502 = pneg %p501
      $region84: #{mhr_medseg_forward.19} parent=5 // pred_check_branch
        %504 = sbr.rel (%p502) target = $region86
      $region85: #{mhr_medseg_forward.19} parent=5 // pred_region
        %s505 = ssub.s32 %s9, 2
        // Predicated region
        $region87: #{mhr_medseg_forward.19} parent=85 // pred_check
          %p506 = pneg %p141
        $region88: #{mhr_medseg_forward.19} parent=85 // pred_check_branch
          %508 = sbr.rel (%p506) target = $region90
        $region89: #{mhr_medseg_forward.19} parent=85 // pred_region
          %s509 = smul.u32 2, %s22
          %p510 = scmp.lt.s32.totalorder %s509, 3
          %s511 = scalar_select %p510, %s509, 3
          %p512 = scmp.lt.s32.totalorder %s23, 0
          %s513 = scalar_select %p512, %s23, 0
          %s514 = sadd.s32 %s513, %s511
          %s515 = smul.addr %s514, 8
          %s516 = scalar_lea.vmem %s3, %s515
        $region90: #{mhr_medseg_forward.19} parent=85 // pred_fallthru
          _
      $region86: #{mhr_medseg_forward.19} parent=5 // pred_fallthru
        _
    $region6: #{mhr_medseg_forward.19} parent=1 // loop_footer
      %s13 = sadd.s32 1, %s9
    $region7: #{mhr_medseg_forward.19} parent=1 // loop_footer_branch
      %8 = sbr.rel target = $region3
    $region8: #{mhr_medseg_forward.19} parent=1 // loop_exit
      _

// kernel: mhr_medseg_forward.20
$region0: #{mhr_medseg_forward.20}
  #allocation0 [shape = 'u32[]', space=smem, size = 0x4, offset = 0x4, fixed_abs, tag = 'smem constant byte address 0x4 - core index']
  #allocation1 [shape = 'u32[72,128]{1,0:T(1,128)}', space=vmem, size = 0x9000, scoped, tag = 'internal scratch']
  %s0 = inlined_call_operand.vmem [shape: f32[32,64], index: 0, kind: input, shape index: {}]
  %s1 = inlined_call_operand.vmem [shape: f32[1,64], index: 1, kind: input, shape index: {}]
  %s2 = inlined_call_operand.vmem [shape: f32[1,64], index: 2, kind: input, shape index: {}]
  %s3 = inlined_call_operand.vmem [shape: bf16[64,192], index: 3, kind: input, shape index: {}]
  %s4 = inlined_call_operand.vmem [shape: f32[1,192], index: 4, kind: input, shape index: {}]
  %s5 = inlined_call_operand.vmem [shape: f32[32,192], index: 5, kind: output, shape index: {}]
  %s6 = sld [smem:[#allocation0]]
  $region53: #{mhr_medseg_forward.20} parent=0
    _
  %s8 = ssub.s32 1, %s6
  %s9 = scalar_select 0, %s8, %s6
  loop: start=0, step=1, limit=4
  $region2: #{mhr_medseg_forward.20} parent=0 // loop_pre_header
    _
  $region3: #{mhr_medseg_forward.20} parent=0 // loop_header
    %s11 = sphi 0, %s15
    %p12 = scmp.ge.s32.totalorder %s11, 4
    %s21 = sphi 0, %s23
    %s24 = sphi 0, %s21
    %s25 = sphi 0, %s24
    %s41 = sphi 0, %s25
    %s45 = sphi 0, %s45
    %s47 = sphi 0, %s45
    %s48 = sphi 0, %s47
    %s62 = sphi 0, %s48
    %s66 = sphi 0, %s66
    %s68 = sphi 0, %s66
    %s69 = sphi 0, %s68
    %s83 = sphi 0, %s69
    %s87 = sphi 0, %s87
    %s89 = sphi 0, %s87
    %s90 = sphi 0, %s89
    %s104 = sphi 0, %s90
    %s108 = sphi 0, %s108
    %s110 = sphi 0, %s108
    %s111 = sphi 0, %s110
    %s125 = sphi 0, %s111
    %s131 = sphi 0, %s133
    %s134 = sphi 0, %s131
    %s135 = sphi 0, %s134
    %s151 = sphi 0, %s135
  $region4: #{mhr_medseg_forward.20} parent=0 // loop_header_branch
    %14 = sbr.rel (%p12) target = $region8
  $region5: #{mhr_medseg_forward.20} parent=0 // loop_body
    %s16 = ssub.s32 %s11, 1
    %s17 = ssub.s32 %s11, 2
    %s18 = sadd.s32 %s11, 1
    %s19 = ssub.s32 %s11, %s18
    %p20 = scmp.eq.s32.totalorder %s19, 0
    %s22 = sadd.s32 %s21, 1
    %s23 = scalar_select %p20, %s21, %s22
    %p26 = pneg %p20
    %p27 = scmp.eq.s32.totalorder %s11, 1
    %p28 = por %p26, %p27
    %p29 = scmp.ne.s32.totalorder %s21, %s24
    %p30 = scmp.eq.s32.totalorder %s11, 0
    %p31 = por %p29, %p30
    %p32 = scmp.ne.s32.totalorder %s21, %s24
    %p33 = scmp.eq.s32.totalorder %s16, 1
    %p34 = por %p32, %p33
    %p35 = scmp.ne.s32.totalorder %s24, %s25
    %p36 = scmp.eq.s32.totalorder %s16, 0
    %p37 = por %p35, %p36
    %p38 = scmp.ne.s32.totalorder %s24, %s25
    %p39 = scmp.eq.s32.totalorder %s17, 1
    %p40 = por %p38, %p39
    %p42 = scmp.ne.s32.totalorder %s25, %s41
    %p43 = scmp.eq.s32.totalorder %s17, 0
    %p44 = por %p42, %p43
    %s46 = sadd.s32 %s45, 1
    %p49 = scmp.eq.s32.totalorder %s11, 1
    %p50 = scmp.ne.s32.totalorder %s45, %s47
    %p51 = scmp.eq.s32.totalorder %s11, 0
    %p52 = por %p50, %p51
    %p53 = scmp.ne.s32.totalorder %s45, %s47
    %p54 = scmp.eq.s32.totalorder %s16, 1
    %p55 = por %p53, %p54
    %p56 = scmp.ne.s32.totalorder %s47, %s48
    %p57 = scmp.eq.s32.totalorder %s16, 0
    %p58 = por %p56, %p57
    %p59 = scmp.ne.s32.totalorder %s47, %s48
    %p60 = scmp.eq.s32.totalorder %s17, 1
    %p61 = por %p59, %p60
    %p63 = scmp.ne.s32.totalorder %s48, %s62
    %p64 = scmp.eq.s32.totalorder %s17, 0
    %p65 = por %p63, %p64
    %s67 = sadd.s32 %s66, 1
    %p70 = scmp.eq.s32.totalorder %s11, 1
    %p71 = scmp.ne.s32.totalorder %s66, %s68
    %p72 = scmp.eq.s32.totalorder %s11, 0
    %p73 = por %p71, %p72
    %p74 = scmp.ne.s32.totalorder %s66, %s68
    %p75 = scmp.eq.s32.totalorder %s16, 1
    %p76 = por %p74, %p75
    %p77 = scmp.ne.s32.totalorder %s68, %s69
    %p78 = scmp.eq.s32.totalorder %s16, 0
    %p79 = por %p77, %p78
    %p80 = scmp.ne.s32.totalorder %s68, %s69
    %p81 = scmp.eq.s32.totalorder %s17, 1
    %p82 = por %p80, %p81
    %p84 = scmp.ne.s32.totalorder %s69, %s83
    %p85 = scmp.eq.s32.totalorder %s17, 0
    %p86 = por %p84, %p85
    %s88 = sadd.s32 %s87, 1
    %p91 = scmp.eq.s32.totalorder %s11, 1
    %p92 = scmp.ne.s32.totalorder %s87, %s89
    %p93 = scmp.eq.s32.totalorder %s11, 0
    %p94 = por %p92, %p93
    %p95 = scmp.ne.s32.totalorder %s87, %s89
    %p96 = scmp.eq.s32.totalorder %s16, 1
    %p97 = por %p95, %p96
    %p98 = scmp.ne.s32.totalorder %s89, %s90
    %p99 = scmp.eq.s32.totalorder %s16, 0
    %p100 = por %p98, %p99
    %p101 = scmp.ne.s32.totalorder %s89, %s90
    %p102 = scmp.eq.s32.totalorder %s17, 1
    %p103 = por %p101, %p102
    %p105 = scmp.ne.s32.totalorder %s90, %s104
    %p106 = scmp.eq.s32.totalorder %s17, 0
    %p107 = por %p105, %p106
    %s109 = sadd.s32 %s108, 1
    %p112 = scmp.eq.s32.totalorder %s11, 1
    %p113 = scmp.ne.s32.totalorder %s108, %s110
    %p114 = scmp.eq.s32.totalorder %s11, 0
    %p115 = por %p113, %p114
    %p116 = scmp.ne.s32.totalorder %s108, %s110
    %p117 = scmp.eq.s32.totalorder %s16, 1
    %p118 = por %p116, %p117
    %p119 = scmp.ne.s32.totalorder %s110, %s111
    %p120 = scmp.eq.s32.totalorder %s16, 0
    %p121 = por %p119, %p120
    %p122 = scmp.ne.s32.totalorder %s110, %s111
    %p123 = scmp.eq.s32.totalorder %s17, 1
    %p124 = por %p122, %p123
    %p126 = scmp.ne.s32.totalorder %s111, %s125
    %p127 = scmp.eq.s32.totalorder %s17, 0
    %p128 = por %p126, %p127
    %s129 = ssub.s32 %s11, %s18
    %p130 = scmp.eq.s32.totalorder %s129, 0
    %s132 = sadd.s32 %s131, 1
    %s133 = scalar_select %p130, %s131, %s132
    %p136 = pneg %p130
    %p137 = scmp.eq.s32.totalorder %s11, 1
    %p138 = por %p136, %p137
    %p139 = scmp.ne.s32.totalorder %s131, %s134
    %p140 = scmp.eq.s32.totalorder %s11, 0
    %p141 = por %p139, %p140
    %p142 = scmp.ne.s32.totalorder %s131, %s134
    %p143 = scmp.eq.s32.totalorder %s16, 1
    %p144 = por %p142, %p143
    %p145 = scmp.ne.s32.totalorder %s134, %s135
    %p146 = scmp.eq.s32.totalorder %s16, 0
    %p147 = por %p145, %p146
    %p148 = scmp.ne.s32.totalorder %s134, %s135
    %p149 = scmp.eq.s32.totalorder %s17, 1
    %p150 = por %p148, %p149
    %p152 = scmp.ne.s32.totalorder %s135, %s151
    %p153 = scmp.eq.s32.totalorder %s17, 0
    %p154 = por %p152, %p153
    %p155 = scmp.le.s32.totalorder 1, %s11
    %p156 = scmp.lt.s32.totalorder %s11, 3
    %p157 = pnand %p155, %p156
    %p158 = pneg %p157
    // Predicated region
    $region9: #{mhr_medseg_forward.20} parent=5 // pred_check
      _
    $region10: #{mhr_medseg_forward.20} parent=5 // pred_check_branch
      %160 = sbr.rel (%p157) target = $region12
    $region11: #{mhr_medseg_forward.20} parent=5 // pred_region
      %s161 = ssub.s32 %s11, 1
      // Predicated region
      $region13: #{mhr_medseg_forward.20} parent=11 // pred_check
        %p162 = pneg %p58
      $region14: #{mhr_medseg_forward.20} parent=11 // pred_check_branch
        %164 = sbr.rel (%p162) target = $region16
      $region15: #{mhr_medseg_forward.20} parent=11 // pred_region
        _
      $region16: #{mhr_medseg_forward.20} parent=11 // pred_fallthru
        _
      // Predicated region
      $region17: #{mhr_medseg_forward.20} parent=11 // pred_check
        %p165 = pneg %p79
      $region18: #{mhr_medseg_forward.20} parent=11 // pred_check_branch
        %167 = sbr.rel (%p165) target = $region20
      $region19: #{mhr_medseg_forward.20} parent=11 // pred_region
        _
      $region20: #{mhr_medseg_forward.20} parent=11 // pred_fallthru
        _
      // Predicated region
      $region21: #{mhr_medseg_forward.20} parent=11 // pred_check
        %p168 = pneg %p100
      $region22: #{mhr_medseg_forward.20} parent=11 // pred_check_branch
        %170 = sbr.rel (%p168) target = $region24
      $region23: #{mhr_medseg_forward.20} parent=11 // pred_region
        _
      $region24: #{mhr_medseg_forward.20} parent=11 // pred_fallthru
        _
      // Predicated region
      $region25: #{mhr_medseg_forward.20} parent=11 // pred_check
        %p171 = pneg %p121
      $region26: #{mhr_medseg_forward.20} parent=11 // pred_check_branch
        %173 = sbr.rel (%p171) target = $region28
      $region27: #{mhr_medseg_forward.20} parent=11 // pred_region
        _
      $region28: #{mhr_medseg_forward.20} parent=11 // pred_fallthru
        _
    $region12: #{mhr_medseg_forward.20} parent=5 // pred_fallthru
      _
    %p174 = scmp.lt.s32.totalorder %s11, 2
    // Predicated region
    $region29: #{mhr_medseg_forward.20} parent=5 // pred_check
      %p175 = pneg %p174
    $region30: #{mhr_medseg_forward.20} parent=5 // pred_check_branch
      %177 = sbr.rel (%p175) target = $region32
    $region31: #{mhr_medseg_forward.20} parent=5 // pred_region
      // Predicated region
      $region33: #{mhr_medseg_forward.20} parent=31 // pred_check
        %p178 = pneg %p31
      $region34: #{mhr_medseg_forward.20} parent=31 // pred_check_branch
        %180 = sbr.rel (%p178) target = $region36
      $region35: #{mhr_medseg_forward.20} parent=31 // pred_region
        %s181 = smul.u32 2, %s11
        %p182 = scmp.lt.s32.totalorder %s181, 3
        %s183 = scalar_select %p182, %s181, 3
        %s184 = smul.addr %s183, 8
        %s185 = scalar_lea.vmem %s0, %s184
        %s186 = smul.u32 2, %s11
      $region36: #{mhr_medseg_forward.20} parent=31 // pred_fallthru
        _
    $region32: #{mhr_medseg_forward.20} parent=5 // pred_fallthru
      _
    %p187 = scmp.le.s32.totalorder 1, %s11
    %p188 = scmp.lt.s32.totalorder %s11, 3
    %p189 = pnand %p187, %p188
    %p190 = pneg %p189
    // Predicated region
    $region37: #{mhr_medseg_forward.20} parent=5 // pred_check
      _
    $region38: #{mhr_medseg_forward.20} parent=5 // pred_check_branch
      %192 = sbr.rel (%p189) target = $region40
    $region39: #{mhr_medseg_forward.20} parent=5 // pred_region
      %s193 = ssub.s32 %s11, 1
      %s194 = smul.u32 2, %s16
      %p195 = scmp.lt.s32.totalorder %s194, 3
      %s196 = scalar_select %p195, %s194, 3
      %s197 = smul.addr %s196, 8
      %s198 = scalar_lea.vmem %s0, %s197
      %p199 = pneg %p37
      %p200 = pneg %p34
      %p201 = pneg %p58
      %p202 = pneg %p55
      %p203 = pneg %p79
      %p204 = pneg %p76
      %p205 = pneg %p100
      %p206 = pneg %p97
      %p207 = pneg %p121
      %p208 = pneg %p118
      %p209 = pneg %p147
      %p210 = pneg %p144
      %s211 = smul.u32 2, %s16
      %p212 = scmp.lt.s32.totalorder %s211, 3
      %s213 = scalar_select %p212, %s211, 3
      %s214 = smul.addr %s213, 2
      %s215 = smul.addr %s214, 8
      %s216 = scalar_lea.vmem %s5, %s215
      %s217 = smul.u32 2, %s16
      %p218 = scmp.lt.s32.totalorder %s217, 3
      %s219 = scalar_select %p218, %s217, 3
      %s220 = smul.addr %s219, 8
      %s221 = scalar_lea.vmem %s0, %s220
      %s222 = smul.u32 2, %s16
      %s223 = smul.u32 2, %s16
      %p224 = scmp.lt.s32.totalorder %s223, 3
      %s225 = scalar_select %p224, %s223, 3
      %s226 = smul.addr %s225, 2
      %s227 = smul.addr %s226, 8
      %s228 = scalar_lea.vmem %s5, %s227
      %s229 = smul.u32 2, %s16
      %v231 = vld [vmem:[%s221] sm:$0xff]
      %v232 = vld [vmem:[%s221 + $0x8] sm:$0xff]
      %v233 = vld [vmem:[%s1] sm:$0x1]
      %v234 = vld [vmem:[%s2] sm:$0x1]
      %vm235 = vcmask 523264
      %v236 = vsel %vm235, %v231, 0.0
      %237 = vadd.xlane.f32.xlu0 %v236
      %v238 = vpop.xlane.xlu0 %237
      %v239 = vsel %vm235, %v232, 0.0
      %240 = vadd.xlane.f32.xlu0 %v239
      %v241 = vpop.xlane.xlu0 %240
      %v242 = vrcp.pop 64.0
      %v243 = vmul.f32 64.0, %v242
      %v244 = vsub.f32 1.0, %v243
      %v245 = vmul.f32 %v242, %v244
      %v246 = vadd.f32 %v242, %v245
      %vm247 = vweird.f32 %v242
      %v248 = vsel %vm247, %v242, %v246
      %v249 = vmul.f32 %v238, %v248
      %v250 = vmul.f32 %v241, %v248
      %v251 = vsub.f32 %v231, %v249
      %v252 = vsub.f32 %v232, %v250
      %v253 = vmul.f32 %v251, %v251
      %v254 = vmul.f32 %v252, %v252
      %v255 = vsel %vm235, %v253, 0.0
      %256 = vadd.xlane.f32.xlu0 %v255
      %v257 = vpop.xlane.xlu0 %256
      %v258 = vsel %vm235, %v254, 0.0
      %259 = vadd.xlane.f32.xlu0 %v258
      %v260 = vpop.xlane.xlu0 %259
      %v261 = vmul.f32 %v257, %v248
      %v262 = vmul.f32 %v260, %v248
      %v263 = vadd.f32 %v261, 1e-06
      %v264 = vadd.f32 %v262, 1e-06
      %v265 = vrsqrt.pop %v263
      %v266 = vmul.f32 %v265, %v263
      %v267 = vmul.f32 %v266, %v265
      %v268 = vmul.f32 0.5, %v267
      %v269 = vsub.f32 1.5, %v268
      %v270 = vmul.f32 %v265, %v269
      %vm271 = vweird.f32 %v263
      %vm272 = vweird.f32 %v265
      %vm273 = vmor %vm271, %vm272
      %v274 = vsel %vm273, %v265, %v270
      %v275 = vrsqrt.pop %v264
      %v276 = vmul.f32 %v275, %v264
      %v277 = vmul.f32 %v276, %v275
      %v278 = vmul.f32 0.5, %v277
      %v279 = vsub.f32 1.5, %v278
      %v280 = vmul.f32 %v275, %v279
      %vm281 = vweird.f32 %v264
      %vm282 = vweird.f32 %v275
      %vm283 = vmor %vm281, %vm282
      %v284 = vsel %vm283, %v275, %v280
      %v285 = vmul.f32 %v251, %v274
      %v286 = vmul.f32 %v252, %v284
      %v288 = vperm.slane %v233, 0
      %v290 = vmul.f32 %v285, %v288
      %v291 = vmul.f32 %v286, %v288
      %v293 = vperm.slane %v234, 0
      %v295 = vadd.f32 %v290, %v293
      %v296 = vadd.f32 %v291, %v293
      %v297 = vpack.c.bf16 %v296, %v295
      %v298 = vld [vmem:[%s3] sm:$0xff]
      %v299 = vld [vmem:[%s3 + $0x8] sm:$0xff]
      %v300 = vld [vmem:[%s3 + $0x10] sm:$0xff]
      %v301 = vld [vmem:[%s3 + $0x18] sm:$0xff]
      %v302 = vld [vmem:[%s3 + $0x20] sm:$0xff]
      %v303 = vld [vmem:[%s3 + $0x28] sm:$0xff]
      %v304 = vld [vmem:[%s3 + $0x30] sm:$0xff]
      %v305 = vld [vmem:[%s3 + $0x38] sm:$0xff]
      %v306 = vld [vmem:[%s4] sm:$0x3]
      %v308 = vperm.slane %v306, 0
      %v309 = vperm.slane %v306, 1
      %v320 = vunpack.c.l.b16 %v298
      %v321 = vunpack.c.h.b16 %v298
      %v322 = vunpack.c.l.b16 %v299
      %v323 = vunpack.c.h.b16 %v299
      %v324 = vunpack.c.l.b16 %v300
      %v325 = vunpack.c.h.b16 %v300
      %v326 = vunpack.c.l.b16 %v301
      %v327 = vunpack.c.h.b16 %v301
      %v328 = vunpack.c.l.b16 %v302
      %v329 = vunpack.c.h.b16 %v302
      %v330 = vunpack.c.l.b16 %v303
      %v331 = vunpack.c.h.b16 %v303
      %v332 = vunpack.c.l.b16 %v304
      %v333 = vunpack.c.h.b16 %v304
      %v334 = vunpack.c.l.b16 %v305
      %v335 = vunpack.c.h.b16 %v305
      %v336 = vpack.c.b16 %v322, %v320
      %v337 = vpack.c.b16 %v323, %v321
      %v338 = vpack.c.b16 %v326, %v324
      %v339 = vpack.c.b16 %v327, %v325
      %v340 = vpack.c.b16 %v330, %v328
      %v341 = vpack.c.b16 %v331, %v329
      %v342 = vpack.c.b16 %v334, %v332
      %v343 = vpack.c.b16 %v335, %v333
      %v353 = vsel %vm235, %v297, 0
      %355 = vmatpush.bf16.msra.mxu0 0
      %356 = vmatpush.bf16.msra.mxu0 0
      %357 = vmatpush.bf16.msra.mxu0 0
      %358 = vmatpush.bf16.msra.mxu0 0
      %359 = vmatpush.bf16.msra.mxu0 %v342
      %360 = vmatpush.bf16.msra.mxu0 %v340
      %361 = vmatpush.bf16.msra.mxu0 %v338
      %362 = vmatpush.bf16.msra.mxu0 %v336
      %363 = vmatmul.bf16.gmra.mxu0 %v353
      %v364 = vpop.f32.mrf.mxu0
      %v365 = vadd.f32 %v308, %v364
      %v366 = vpop.f32.mrf.mxu0
      %v367 = vadd.f32 %v308, %v366
      %368 = vdwg.mxu0
      %369 = vmatpush.bf16.msra.mxu0 0
      %370 = vmatpush.bf16.msra.mxu0 0
      %371 = vmatpush.bf16.msra.mxu0 0
      %372 = vmatpush.bf16.msra.mxu0 0
      %373 = vmatpush.bf16.msra.mxu0 %v343
      %374 = vmatpush.bf16.msra.mxu0 %v341
      %375 = vmatpush.bf16.msra.mxu0 %v339
      %376 = vmatpush.bf16.msra.mxu0 %v337
      %377 = vmatmul.bf16.gmra.mxu0 %v353
      %v378 = vpop.f32.mrf.mxu0
      %v379 = vadd.f32 %v309, %v378
      %v380 = vpop.f32.mrf.mxu0
      %v381 = vadd.f32 %v309, %v380
      %382 = vdwg.mxu0
      %383 = vst [vmem:[%s228] sm:$0xff] %v365
      %384 = vst.msk [vmem:[%s228 + $0x8] sm:$0xff] %vm235, %v379
      %385 = vst [vmem:[%s228 + $0x10] sm:$0xff] %v367
      %386 = vst.msk [vmem:[%s228 + $0x18] sm:$0xff] %vm235, %v381
      %s387 = smul.u32 2, %s16
      %p388 = scmp.lt.s32.totalorder %s387, 3
      %s389 = scalar_select %p388, %s387, 3
      %s390 = smul.addr %s389, 2
      %s391 = smul.addr %s390, 8
      %s392 = scalar_lea.vmem %s5, %s391
      // Predicated region
      $region41: #{mhr_medseg_forward.20} parent=39 // pred_check
        %p393 = pneg %p144
      $region42: #{mhr_medseg_forward.20} parent=39 // pred_check_branch
        %395 = sbr.rel (%p393) target = $region44
      $region43: #{mhr_medseg_forward.20} parent=39 // pred_region
        %s396 = smul.u32 2, %s16
      $region44: #{mhr_medseg_forward.20} parent=39 // pred_fallthru
        _
    $region40: #{mhr_medseg_forward.20} parent=5 // pred_fallthru
      _
    %p397 = scmp.le.s32.totalorder 2, %s11
    // Predicated region
    $region45: #{mhr_medseg_forward.20} parent=5 // pred_check
      %p398 = pneg %p397
    $region46: #{mhr_medseg_forward.20} parent=5 // pred_check_branch
      %400 = sbr.rel (%p398) target = $region48
    $region47: #{mhr_medseg_forward.20} parent=5 // pred_region
      %s401 = ssub.s32 %s11, 2
      // Predicated region
      $region49: #{mhr_medseg_forward.20} parent=47 // pred_check
        %p402 = pneg %p150
      $region50: #{mhr_medseg_forward.20} parent=47 // pred_check_branch
        %404 = sbr.rel (%p402) target = $region52
      $region51: #{mhr_medseg_forward.20} parent=47 // pred_region
        %s405 = smul.u32 2, %s17
        %p406 = scmp.lt.s32.totalorder %s405, 3
        %s407 = scalar_select %p406, %s405, 3
        %s408 = smul.addr %s407, 2
        %s409 = smul.addr %s408, 8
        %s410 = scalar_lea.vmem %s5, %s409
      $region52: #{mhr_medseg_forward.20} parent=47 // pred_fallthru
        _
    $region48: #{mhr_medseg_forward.20} parent=5 // pred_fallthru
      _
  $region6: #{mhr_medseg_forward.20} parent=0 // loop_footer
    %s15 = sadd.s32 1, %s11
  $region7: #{mhr_medseg_forward.20} parent=0 // loop_footer_branch
    %10 = sbr.rel target = $region3
  $region8: #{mhr_medseg_forward.20} parent=0 // loop_exit
    _

// kernel: mhr_medseg_forward.22
$region0: #{mhr_medseg_forward.22}
  #allocation0 [shape = 'u32[]', space=smem, size = 0x4, offset = 0x4, fixed_abs, tag = 'smem constant byte address 0x4 - core index']
  #allocation1 [shape = 'u32[72,128]{1,0:T(1,128)}', space=vmem, size = 0x9000, scoped, tag = 'internal scratch']
  #allocation2 [shape = 'f32[16,64]{1,0:T(8,128)}', space=vmem, size = 0x2000, scoped, tag = 'scratch operand']
  %s0 = inlined_call_operand.vmem [shape: bf16[32,64], index: 0, kind: input, shape index: {}]
  %s1 = inlined_call_operand.vmem [shape: bf16[64,64], index: 1, kind: input, shape index: {}]
  %s2 = inlined_call_operand.vmem [shape: f32[1,64], index: 2, kind: input, shape index: {}]
  %s3 = inlined_call_operand.vmem [shape: f32[32,64], index: 3, kind: output, shape index: {}]
  %s4 = sld [smem:[#allocation0]]
  $region53: #{mhr_medseg_forward.22} parent=0
    _
  %s6 = ssub.s32 1, %s4
  %s7 = scalar_select 0, %s6, %s4
  loop: start=0, step=1, limit=4
  $region2: #{mhr_medseg_forward.22} parent=0 // loop_pre_header
    _
  $region3: #{mhr_medseg_forward.22} parent=0 // loop_header
    %s9 = sphi 0, %s13
    %p10 = scmp.ge.s32.totalorder %s9, 4
    %s16 = sphi 0, %s35
    %s17 = sphi 0, %s31
    %s18 = sphi 0, %s27
    %s19 = sphi 0, %s16
    %s20 = sphi 0, %s17
    %s21 = sphi 0, %s18
    %s22 = sphi 0, %s19
    %s23 = sphi 0, %s20
    %s24 = sphi 0, %s21
    %s40 = sphi 0, %s42
    %s43 = sphi 0, %s40
    %s44 = sphi 0, %s43
    %s60 = sphi 0, %s44
    %s68 = sphi 0, %s70
    %s71 = sphi 0, %s68
    %s72 = sphi 0, %s71
    %s88 = sphi 0, %s72
    %s94 = sphi 0, %s96
    %s97 = sphi 0, %s94
    %s98 = sphi 0, %s97
    %s114 = sphi 0, %s98
    %s122 = sphi 0, %s124
    %s125 = sphi 0, %s122
    %s126 = sphi 0, %s125
    %s142 = sphi 0, %s126
  $region4: #{mhr_medseg_forward.22} parent=0 // loop_header_branch
    %12 = sbr.rel (%p10) target = $region8
  $region5: #{mhr_medseg_forward.22} parent=0 // loop_body
    %s14 = ssub.s32 %s9, 1
    %s15 = ssub.s32 %s9, 2
    %s25 = sadd.s32 1, %s18
    %p26 = scmp.ge.s32.totalorder %s25, 1
    %s27 = scalar_select %p26, 0, %s25
    %s28 = sadd.s32 1, %s17
    %s29 = scalar_select %p26, %s28, %s17
    %p30 = scmp.ge.s32.totalorder %s29, 1
    %s31 = scalar_select %p30, 0, %s29
    %s32 = sadd.s32 1, %s16
    %s33 = scalar_select %p30, %s32, %s16
    %p34 = scmp.ge.s32.totalorder %s33, 2
    %s35 = scalar_select %p34, 0, %s33
    %s36 = ssub.s32 %s16, %s35
    %s37 = ssub.s32 %s18, %s27
    %s38 = sor.u32 %s36, %s37
    %p39 = scmp.eq.s32.totalorder %s38, 0
    %s41 = sadd.s32 %s40, 1
    %s42 = scalar_select %p39, %s40, %s41
    %p45 = pneg %p39
    %p46 = scmp.eq.s32.totalorder %s9, 1
    %p47 = por %p45, %p46
    %p48 = scmp.ne.s32.totalorder %s40, %s43
    %p49 = scmp.eq.s32.totalorder %s9, 0
    %p50 = por %p48, %p49
    %p51 = scmp.ne.s32.totalorder %s40, %s43
    %p52 = scmp.eq.s32.totalorder %s14, 1
    %p53 = por %p51, %p52
    %p54 = scmp.ne.s32.totalorder %s43, %s44
    %p55 = scmp.eq.s32.totalorder %s14, 0
    %p56 = por %p54, %p55
    %p57 = scmp.ne.s32.totalorder %s43, %s44
    %p58 = scmp.eq.s32.totalorder %s15, 1
    %p59 = por %p57, %p58
    %p61 = scmp.ne.s32.totalorder %s44, %s60
    %p62 = scmp.eq.s32.totalorder %s15, 0
    %p63 = por %p61, %p62
    %s64 = ssub.s32 %s18, %s27
    %s65 = ssub.s32 %s17, %s31
    %s66 = sor.u32 %s64, %s65
    %p67 = scmp.eq.s32.totalorder %s66, 0
    %s69 = sadd.s32 %s68, 1
    %s70 = scalar_select %p67, %s68, %s69
    %p73 = pneg %p67
    %p74 = scmp.eq.s32.totalorder %s9, 1
    %p75 = por %p73, %p74
    %p76 = scmp.ne.s32.totalorder %s68, %s71
    %p77 = scmp.eq.s32.totalorder %s9, 0
    %p78 = por %p76, %p77
    %p79 = scmp.ne.s32.totalorder %s68, %s71
    %p80 = scmp.eq.s32.totalorder %s14, 1
    %p81 = por %p79, %p80
    %p82 = scmp.ne.s32.totalorder %s71, %s72
    %p83 = scmp.eq.s32.totalorder %s14, 0
    %p84 = por %p82, %p83
    %p85 = scmp.ne.s32.totalorder %s71, %s72
    %p86 = scmp.eq.s32.totalorder %s15, 1
    %p87 = por %p85, %p86
    %p89 = scmp.ne.s32.totalorder %s72, %s88
    %p90 = scmp.eq.s32.totalorder %s15, 0
    %p91 = por %p89, %p90
    %s92 = ssub.s32 %s17, %s31
    %p93 = scmp.eq.s32.totalorder %s92, 0
    %s95 = sadd.s32 %s94, 1
    %s96 = scalar_select %p93, %s94, %s95
    %p99 = pneg %p93
    %p100 = scmp.eq.s32.totalorder %s9, 1
    %p101 = por %p99, %p100
    %p102 = scmp.ne.s32.totalorder %s94, %s97
    %p103 = scmp.eq.s32.totalorder %s9, 0
    %p104 = por %p102, %p103
    %p105 = scmp.ne.s32.totalorder %s94, %s97
    %p106 = scmp.eq.s32.totalorder %s14, 1
    %p107 = por %p105, %p106
    %p108 = scmp.ne.s32.totalorder %s97, %s98
    %p109 = scmp.eq.s32.totalorder %s14, 0
    %p110 = por %p108, %p109
    %p111 = scmp.ne.s32.totalorder %s97, %s98
    %p112 = scmp.eq.s32.totalorder %s15, 1
    %p113 = por %p111, %p112
    %p115 = scmp.ne.s32.totalorder %s98, %s114
    %p116 = scmp.eq.s32.totalorder %s15, 0
    %p117 = por %p115, %p116
    %s118 = ssub.s32 %s16, %s35
    %s119 = ssub.s32 %s17, %s31
    %s120 = sor.u32 %s118, %s119
    %p121 = scmp.eq.s32.totalorder %s120, 0
    %s123 = sadd.s32 %s122, 1
    %s124 = scalar_select %p121, %s122, %s123
    %p127 = pneg %p121
    %p128 = scmp.eq.s32.totalorder %s9, 1
    %p129 = por %p127, %p128
    %p130 = scmp.ne.s32.totalorder %s122, %s125
    %p131 = scmp.eq.s32.totalorder %s9, 0
    %p132 = por %p130, %p131
    %p133 = scmp.ne.s32.totalorder %s122, %s125
    %p134 = scmp.eq.s32.totalorder %s14, 1
    %p135 = por %p133, %p134
    %p136 = scmp.ne.s32.totalorder %s125, %s126
    %p137 = scmp.eq.s32.totalorder %s14, 0
    %p138 = por %p136, %p137
    %p139 = scmp.ne.s32.totalorder %s125, %s126
    %p140 = scmp.eq.s32.totalorder %s15, 1
    %p141 = por %p139, %p140
    %p143 = scmp.ne.s32.totalorder %s126, %s142
    %p144 = scmp.eq.s32.totalorder %s15, 0
    %p145 = por %p143, %p144
    %p146 = scmp.le.s32.totalorder 1, %s9
    %p147 = scmp.lt.s32.totalorder %s9, 3
    %p148 = pnand %p146, %p147
    %p149 = pneg %p148
    // Predicated region
    $region9: #{mhr_medseg_forward.22} parent=5 // pred_check
      _
    $region10: #{mhr_medseg_forward.22} parent=5 // pred_check_branch
      %151 = sbr.rel (%p148) target = $region12
    $region11: #{mhr_medseg_forward.22} parent=5 // pred_region
      %s152 = ssub.s32 %s9, 1
      // Predicated region
      $region13: #{mhr_medseg_forward.22} parent=11 // pred_check
        %p153 = pneg %p84
      $region14: #{mhr_medseg_forward.22} parent=11 // pred_check_branch
        %155 = sbr.rel (%p153) target = $region16
      $region15: #{mhr_medseg_forward.22} parent=11 // pred_region
        %s156 = smul.u32 8, %s21
        %p157 = scmp.lt.s32.totalorder %s156, 7
        %s158 = scalar_select %p157, %s156, 7
        %p159 = scmp.lt.s32.totalorder %s20, 0
        %s160 = scalar_select %p159, %s20, 0
        %s161 = sadd.s32 %s160, %s158
        %s162 = smul.addr %s161, 4
        %s163 = scalar_lea.vmem %s1, %s162
        %s164 = smul.u32 8, %s21
      $region16: #{mhr_medseg_forward.22} parent=11 // pred_fallthru
        _
      // Predicated region
      $region17: #{mhr_medseg_forward.22} parent=11 // pred_check
        %p165 = pneg %p110
      $region18: #{mhr_medseg_forward.22} parent=11 // pred_check_branch
        %167 = sbr.rel (%p165) target = $region20
      $region19: #{mhr_medseg_forward.22} parent=11 // pred_region
        %p168 = scmp.lt.s32.totalorder %s20, 0
        %s169 = scalar_select %p168, %s20, 0
        %s170 = scalar_lea.vmem %s2, %s169
      $region20: #{mhr_medseg_forward.22} parent=11 // pred_fallthru
        _
    $region12: #{mhr_medseg_forward.22} parent=5 // pred_fallthru
      _
    %p171 = scmp.lt.s32.totalorder %s9, 2
    // Predicated region
    $region21: #{mhr_medseg_forward.22} parent=5 // pred_check
      %p172 = pneg %p171
    $region22: #{mhr_medseg_forward.22} parent=5 // pred_check_branch
      %174 = sbr.rel (%p172) target = $region24
    $region23: #{mhr_medseg_forward.22} parent=5 // pred_region
      // Predicated region
      $region25: #{mhr_medseg_forward.22} parent=23 // pred_check
        %p175 = pneg %p50
      $region26: #{mhr_medseg_forward.22} parent=23 // pred_check_branch
        %177 = sbr.rel (%p175) target = $region28
      $region27: #{mhr_medseg_forward.22} parent=23 // pred_region
        %s178 = smul.u32 2, %s16
        %p179 = scmp.lt.s32.totalorder %s178, 3
        %s180 = scalar_select %p179, %s178, 3
        %p181 = scmp.lt.s32.totalorder %s18, 0
        %s182 = scalar_select %p181, %s18, 0
        %s183 = sadd.s32 %s182, %s180
        %s184 = smul.addr %s183, 4
        %s185 = scalar_lea.vmem %s0, %s184
        %s186 = smul.u32 2, %s16
      $region28: #{mhr_medseg_forward.22} parent=23 // pred_fallthru
        _
    $region24: #{mhr_medseg_forward.22} parent=5 // pred_fallthru
      _
    %p187 = scmp.le.s32.totalorder 1, %s9
    %p188 = scmp.lt.s32.totalorder %s9, 3
    %p189 = pnand %p187, %p188
    %p190 = pneg %p189
    // Predicated region
    $region29: #{mhr_medseg_forward.22} parent=5 // pred_check
      _
    $region30: #{mhr_medseg_forward.22} parent=5 // pred_check_branch
      %192 = sbr.rel (%p189) target = $region32
    $region31: #{mhr_medseg_forward.22} parent=5 // pred_region
      %s193 = ssub.s32 %s9, 1
      %s194 = smul.u32 2, %s19
      %p195 = scmp.lt.s32.totalorder %s194, 3
      %s196 = scalar_select %p195, %s194, 3
      %p197 = scmp.lt.s32.totalorder %s21, 0
      %s198 = scalar_select %p197, %s21, 0
      %s199 = sadd.s32 %s198, %s196
      %s200 = smul.addr %s199, 4
      %s201 = scalar_lea.vmem %s0, %s200
      %p202 = pneg %p56
      %p203 = pneg %p53
      %s204 = smul.u32 8, %s21
      %p205 = scmp.lt.s32.totalorder %s204, 7
      %s206 = scalar_select %p205, %s204, 7
      %p207 = scmp.lt.s32.totalorder %s20, 0
      %s208 = scalar_select %p207, %s20, 0
      %s209 = sadd.s32 %s208, %s206
      %s210 = smul.addr %s209, 4
      %s211 = scalar_lea.vmem %s1, %s210
      %p212 = pneg %p84
      %p213 = pneg %p81
      %p214 = scmp.lt.s32.totalorder %s20, 0
      %s215 = scalar_select %p214, %s20, 0
      %s216 = scalar_lea.vmem %s2, %s215
      %p217 = pneg %p110
      %p218 = pneg %p107
      %p219 = pneg %p138
      %p220 = pneg %p135
      %s221 = smul.u32 2, %s19
      %p222 = scmp.lt.s32.totalorder %s221, 3
      %s223 = scalar_select %p222, %s221, 3
      %p224 = scmp.lt.s32.totalorder %s20, 0
      %s225 = scalar_select %p224, %s20, 0
      %s226 = sadd.s32 %s225, %s223
      %s227 = smul.addr %s226, 8
      %s228 = scalar_lea.vmem %s3, %s227
      %s229 = smul.u32 2, %s19
      %p230 = scmp.lt.s32.totalorder %s229, 3
      %s231 = scalar_select %p230, %s229, 3
      %p232 = scmp.lt.s32.totalorder %s21, 0
      %s233 = scalar_select %p232, %s21, 0
      %s234 = sadd.s32 %s233, %s231
      %s235 = smul.addr %s234, 4
      %s236 = scalar_lea.vmem %s0, %s235
      %s237 = smul.u32 2, %s19
      %s238 = smul.u32 8, %s21
      %p239 = scmp.lt.s32.totalorder %s238, 7
      %s240 = scalar_select %p239, %s238, 7
      %p241 = scmp.lt.s32.totalorder %s20, 0
      %s242 = scalar_select %p241, %s20, 0
      %s243 = sadd.s32 %s242, %s240
      %s244 = smul.addr %s243, 4
      %s245 = scalar_lea.vmem %s1, %s244
      %s246 = smul.u32 8, %s21
      %p247 = scmp.lt.s32.totalorder %s20, 0
      %s248 = scalar_select %p247, %s20, 0
      %s249 = scalar_lea.vmem %s2, %s248
      %s250 = smul.u32 2, %s19
      %p251 = scmp.lt.s32.totalorder %s250, 3
      %s252 = scalar_select %p251, %s250, 3
      %p253 = scmp.lt.s32.totalorder %s20, 0
      %s254 = scalar_select %p253, %s20, 0
      %s255 = sadd.s32 %s254, %s252
      %s256 = smul.addr %s255, 8
      %s257 = scalar_lea.vmem %s3, %s256
      %s258 = smul.u32 2, %s19
      %p260 = scmp.eq.s32.totalorder %s21, 0
      // Predicated region
      $region33: #{mhr_medseg_forward.22} parent=31 // pred_check
        %p261 = pneg %p260
      $region34: #{mhr_medseg_forward.22} parent=31 // pred_check_branch
        %263 = sbr.rel (%p261) target = $region36
      $region35: #{mhr_medseg_forward.22} parent=31 // pred_region
        %vm264 = vcmask 523264
        %265 = vst.msk [vmem:[#allocation2] sm:$0xff] %vm264, 0.0
        %266 = vst.msk [vmem:[#allocation2 + $0x8] sm:$0xff] %vm264, 0.0
      $region36: #{mhr_medseg_forward.22} parent=31 // pred_fallthru
        _
      %v267 = vld [vmem:[#allocation2] sm:$0xff]
      %v268 = vld [vmem:[#allocation2 + $0x8] sm:$0xff]
      %v269 = vld [vmem:[%s236] sm:$0xf]
      %v270 = vld [vmem:[%s236 + $0x4] sm:$0xf]
      %v271 = vld [vmem:[%s245] sm:$0xf]
      %v272 = vld [vmem:[%s245 + $0x4] sm:$0xf]
      %v273 = vld [vmem:[%s245 + $0x8] sm:$0xf]
      %v274 = vld [vmem:[%s245 + $0xc] sm:$0xf]
      %v275 = vld [vmem:[%s245 + $0x10] sm:$0xf]
      %v276 = vld [vmem:[%s245 + $0x14] sm:$0xf]
      %v277 = vld [vmem:[%s245 + $0x18] sm:$0xf]
      %v278 = vld [vmem:[%s245 + $0x1c] sm:$0xf]
      %v281 = vunpack.c.l.b16 %v269
      %v282 = vunpack.c.l.b16 %v270
      %v283 = vpack.c.b16 %v282, %v281
      %v292 = vunpack.c.l.b16 %v271
      %v293 = vunpack.c.l.b16 %v272
      %v294 = vunpack.c.l.b16 %v273
      %v295 = vunpack.c.l.b16 %v274
      %v296 = vunpack.c.l.b16 %v275
      %v297 = vunpack.c.l.b16 %v276
      %v298 = vunpack.c.l.b16 %v277
      %v299 = vunpack.c.l.b16 %v278
      %v300 = vpack.c.b16 %v293, %v292
      %v301 = vpack.c.b16 %v295, %v294
      %v302 = vpack.c.b16 %v297, %v296
      %v303 = vpack.c.b16 %v299, %v298
      %vm308 = vcmask 523264
      %v310 = vsel %vm308, %v283, 0
      %312 = vmatpush.bf16.msra.mxu0 0
      %313 = vmatpush.bf16.msra.mxu0 0
      %314 = vmatpush.bf16.msra.mxu0 0
      %315 = vmatpush.bf16.msra.mxu0 0
      %316 = vmatpush.bf16.msra.mxu0 %v303
      %317 = vmatpush.bf16.msra.mxu0 %v302
      %318 = vmatpush.bf16.msra.mxu0 %v301
      %319 = vmatpush.bf16.msra.mxu0 %v300
      %320 = vmatmul.bf16.gmra.mxu0 %v310
      %v321 = vpop.f32.mrf.mxu0
      %v322 = vadd.f32 0.0, %v321
      %v323 = vpop.f32.mrf.mxu0
      %v324 = vadd.f32 0.0, %v323
      %325 = vdwg.mxu0
      %v326 = vadd.f32 %v267, %v322
      %v327 = vadd.f32 %v268, %v324
      %328 = vst.msk [vmem:[#allocation2] sm:$0xff] %vm308, %v326
      %329 = vst.msk [vmem:[#allocation2 + $0x8] sm:$0xff] %vm308, %v327
      // Predicated region
      $region37: #{mhr_medseg_forward.22} parent=31 // pred_check
        %p330 = pneg %p260
      $region38: #{mhr_medseg_forward.22} parent=31 // pred_check_branch
        %332 = sbr.rel (%p330) target = $region40
      $region39: #{mhr_medseg_forward.22} parent=31 // pred_region
        %v333 = vld [vmem:[#allocation2] sm:$0xff]
        %v334 = vld [vmem:[#allocation2 + $0x8] sm:$0xff]
        %v335 = vld [vmem:[%s249] sm:$0x1]
        %v337 = vperm.slane %v335, 0
        %v339 = vadd.f32 %v333, %v337
        %v340 = vadd.f32 %v334, %v337
        %341 = vst.msk [vmem:[%s257] sm:$0xff] %vm308, %v339
        %342 = vst.msk [vmem:[%s257 + $0x8] sm:$0xff] %vm308, %v340
      $region40: #{mhr_medseg_forward.22} parent=31 // pred_fallthru
        _
      %s343 = smul.u32 2, %s19
      %p344 = scmp.lt.s32.totalorder %s343, 3
      %s345 = scalar_select %p344, %s343, 3
      %p346 = scmp.lt.s32.totalorder %s20, 0
      %s347 = scalar_select %p346, %s20, 0
      %s348 = sadd.s32 %s347, %s345
      %s349 = smul.addr %s348, 8
      %s350 = scalar_lea.vmem %s3, %s349
      // Predicated region
      $region41: #{mhr_medseg_forward.22} parent=31 // pred_check
        %p351 = pneg %p135
      $region42: #{mhr_medseg_forward.22} parent=31 // pred_check_branch
        %353 = sbr.rel (%p351) target = $region44
      $region43: #{mhr_medseg_forward.22} parent=31 // pred_region
        %s354 = smul.u32 2, %s19
      $region44: #{mhr_medseg_forward.22} parent=31 // pred_fallthru
        _
    $region32: #{mhr_medseg_forward.22} parent=5 // pred_fallthru
      _
    %p355 = scmp.le.s32.totalorder 2, %s9
    // Predicated region
    $region45: #{mhr_medseg_forward.22} parent=5 // pred_check
      %p356 = pneg %p355
    $region46: #{mhr_medseg_forward.22} parent=5 // pred_check_branch
      %358 = sbr.rel (%p356) target = $region48
    $region47: #{mhr_medseg_forward.22} parent=5 // pred_region
      %s359 = ssub.s32 %s9, 2
      // Predicated region
      $region49: #{mhr_medseg_forward.22} parent=47 // pred_check
        %p360 = pneg %p141
      $region50: #{mhr_medseg_forward.22} parent=47 // pred_check_branch
        %362 = sbr.rel (%p360) target = $region52
      $region51: #{mhr_medseg_forward.22} parent=47 // pred_region
        %s363 = smul.u32 2, %s22
        %p364 = scmp.lt.s32.totalorder %s363, 3
        %s365 = scalar_select %p364, %s363, 3
        %p366 = scmp.lt.s32.totalorder %s23, 0
        %s367 = scalar_select %p366, %s23, 0
        %s368 = sadd.s32 %s367, %s365
        %s369 = smul.addr %s368, 8
        %s370 = scalar_lea.vmem %s3, %s369
      $region52: #{mhr_medseg_forward.22} parent=47 // pred_fallthru
        _
    $region48: #{mhr_medseg_forward.22} parent=5 // pred_fallthru
      _
  $region6: #{mhr_medseg_forward.22} parent=0 // loop_footer
    %s13 = sadd.s32 1, %s9
  $region7: #{mhr_medseg_forward.22} parent=0 // loop_footer_branch
    %8 = sbr.rel target = $region3
  $region8: #{mhr_medseg_forward.22} parent=0 // loop_exit
    _

// kernel: mhr_medseg_forward.21
$region0: #{mhr_medseg_forward.21}
  #allocation0 [shape = 'u32[]', space=smem, size = 0x4, offset = 0x4, fixed_abs, tag = 'smem constant byte address 0x4 - core index']
  #allocation1 [shape = 'u32[72,128]{1,0:T(1,128)}', space=vmem, size = 0x9000, scoped, tag = 'internal scratch']
  %s0 = inlined_call_operand.vmem [shape: bf16[32,4,16], index: 0, kind: input, shape index: {}]
  %s1 = inlined_call_operand.vmem [shape: bf16[32,4,16], index: 1, kind: input, shape index: {}]
  %s2 = inlined_call_operand.vmem [shape: bf16[32,4,16], index: 2, kind: input, shape index: {}]
  %s3 = inlined_call_operand.vmem [shape: f32[32,4,2], index: 3, kind: input, shape index: {}]
  %s4 = inlined_call_operand.vmem [shape: f32[32,4,2], index: 4, kind: input, shape index: {}]
  %s5 = inlined_call_operand.vmem [shape: f32[2,4], index: 5, kind: input, shape index: {}]
  %s6 = inlined_call_operand.vmem [shape: f32[2,4], index: 6, kind: input, shape index: {}]
  %s7 = inlined_call_operand.vmem [shape: f32[32,4,16], index: 7, kind: output, shape index: {}]
  %s8 = sld [smem:[#allocation0]]
  $region61: #{mhr_medseg_forward.21} parent=0
    _
  %s10 = ssub.s32 1, %s8
  %s11 = scalar_select 0, %s10, %s8
  loop: start=0, step=1, limit=4
  $region2: #{mhr_medseg_forward.21} parent=0 // loop_pre_header
    _
  $region3: #{mhr_medseg_forward.21} parent=0 // loop_header
    %s13 = sphi 0, %s17
    %p14 = scmp.ge.s32.totalorder %s13, 4
    %s23 = sphi 0, %s25
    %s26 = sphi 0, %s23
    %s27 = sphi 0, %s26
    %s43 = sphi 0, %s27
    %s49 = sphi 0, %s51
    %s52 = sphi 0, %s49
    %s53 = sphi 0, %s52
    %s69 = sphi 0, %s53
    %s75 = sphi 0, %s77
    %s78 = sphi 0, %s75
    %s79 = sphi 0, %s78
    %s95 = sphi 0, %s79
    %s101 = sphi 0, %s103
    %s104 = sphi 0, %s101
    %s105 = sphi 0, %s104
    %s121 = sphi 0, %s105
    %s127 = sphi 0, %s129
    %s130 = sphi 0, %s127
    %s131 = sphi 0, %s130
    %s147 = sphi 0, %s131
    %s151 = sphi 0, %s151
    %s153 = sphi 0, %s151
    %s154 = sphi 0, %s153
    %s168 = sphi 0, %s154
    %s172 = sphi 0, %s172
    %s174 = sphi 0, %s172
    %s175 = sphi 0, %s174
    %s189 = sphi 0, %s175
    %s195 = sphi 0, %s197
    %s198 = sphi 0, %s195
    %s199 = sphi 0, %s198
    %s215 = sphi 0, %s199
  $region4: #{mhr_medseg_forward.21} parent=0 // loop_header_branch
    %16 = sbr.rel (%p14) target = $region8
  $region5: #{mhr_medseg_forward.21} parent=0 // loop_body
    %s18 = ssub.s32 %s13, 1
    %s19 = ssub.s32 %s13, 2
    %s20 = sadd.s32 %s13, 1
    %s21 = ssub.s32 %s13, %s20
    %p22 = scmp.eq.s32.totalorder %s21, 0
    %s24 = sadd.s32 %s23, 1
    %s25 = scalar_select %p22, %s23, %s24
    %p28 = pneg %p22
    %p29 = scmp.eq.s32.totalorder %s13, 1
    %p30 = por %p28, %p29
    %p31 = scmp.ne.s32.totalorder %s23, %s26
    %p32 = scmp.eq.s32.totalorder %s13, 0
    %p33 = por %p31, %p32
    %p34 = scmp.ne.s32.totalorder %s23, %s26
    %p35 = scmp.eq.s32.totalorder %s18, 1
    %p36 = por %p34, %p35
    %p37 = scmp.ne.s32.totalorder %s26, %s27
    %p38 = scmp.eq.s32.totalorder %s18, 0
    %p39 = por %p37, %p38
    %p40 = scmp.ne.s32.totalorder %s26, %s27
    %p41 = scmp.eq.s32.totalorder %s19, 1
    %p42 = por %p40, %p41
    %p44 = scmp.ne.s32.totalorder %s27, %s43
    %p45 = scmp.eq.s32.totalorder %s19, 0
    %p46 = por %p44, %p45
    %s47 = ssub.s32 %s13, %s20
    %p48 = scmp.eq.s32.totalorder %s47, 0
    %s50 = sadd.s32 %s49, 1
    %s51 = scalar_select %p48, %s49, %s50
    %p54 = pneg %p48
    %p55 = scmp.eq.s32.totalorder %s13, 1
    %p56 = por %p54, %p55
    %p57 = scmp.ne.s32.totalorder %s49, %s52
    %p58 = scmp.eq.s32.totalorder %s13, 0
    %p59 = por %p57, %p58
    %p60 = scmp.ne.s32.totalorder %s49, %s52
    %p61 = scmp.eq.s32.totalorder %s18, 1
    %p62 = por %p60, %p61
    %p63 = scmp.ne.s32.totalorder %s52, %s53
    %p64 = scmp.eq.s32.totalorder %s18, 0
    %p65 = por %p63, %p64
    %p66 = scmp.ne.s32.totalorder %s52, %s53
    %p67 = scmp.eq.s32.totalorder %s19, 1
    %p68 = por %p66, %p67
    %p70 = scmp.ne.s32.totalorder %s53, %s69
    %p71 = scmp.eq.s32.totalorder %s19, 0
    %p72 = por %p70, %p71
    %s73 = ssub.s32 %s13, %s20
    %p74 = scmp.eq.s32.totalorder %s73, 0
    %s76 = sadd.s32 %s75, 1
    %s77 = scalar_select %p74, %s75, %s76
    %p80 = pneg %p74
    %p81 = scmp.eq.s32.totalorder %s13, 1
    %p82 = por %p80, %p81
    %p83 = scmp.ne.s32.totalorder %s75, %s78
    %p84 = scmp.eq.s32.totalorder %s13, 0
    %p85 = por %p83, %p84
    %p86 = scmp.ne.s32.totalorder %s75, %s78
    %p87 = scmp.eq.s32.totalorder %s18, 1
    %p88 = por %p86, %p87
    %p89 = scmp.ne.s32.totalorder %s78, %s79
    %p90 = scmp.eq.s32.totalorder %s18, 0
    %p91 = por %p89, %p90
    %p92 = scmp.ne.s32.totalorder %s78, %s79
    %p93 = scmp.eq.s32.totalorder %s19, 1
    %p94 = por %p92, %p93
    %p96 = scmp.ne.s32.totalorder %s79, %s95
    %p97 = scmp.eq.s32.totalorder %s19, 0
    %p98 = por %p96, %p97
    %s99 = ssub.s32 %s13, %s20
    %p100 = scmp.eq.s32.totalorder %s99, 0
    %s102 = sadd.s32 %s101, 1
    %s103 = scalar_select %p100, %s101, %s102
    %p106 = pneg %p100
    %p107 = scmp.eq.s32.totalorder %s13, 1
    %p108 = por %p106, %p107
    %p109 = scmp.ne.s32.totalorder %s101, %s104
    %p110 = scmp.eq.s32.totalorder %s13, 0
    %p111 = por %p109, %p110
    %p112 = scmp.ne.s32.totalorder %s101, %s104
    %p113 = scmp.eq.s32.totalorder %s18, 1
    %p114 = por %p112, %p113
    %p115 = scmp.ne.s32.totalorder %s104, %s105
    %p116 = scmp.eq.s32.totalorder %s18, 0
    %p117 = por %p115, %p116
    %p118 = scmp.ne.s32.totalorder %s104, %s105
    %p119 = scmp.eq.s32.totalorder %s19, 1
    %p120 = por %p118, %p119
    %p122 = scmp.ne.s32.totalorder %s105, %s121
    %p123 = scmp.eq.s32.totalorder %s19, 0
    %p124 = por %p122, %p123
    %s125 = ssub.s32 %s13, %s20
    %p126 = scmp.eq.s32.totalorder %s125, 0
    %s128 = sadd.s32 %s127, 1
    %s129 = scalar_select %p126, %s127, %s128
    %p132 = pneg %p126
    %p133 = scmp.eq.s32.totalorder %s13, 1
    %p134 = por %p132, %p133
    %p135 = scmp.ne.s32.totalorder %s127, %s130
    %p136 = scmp.eq.s32.totalorder %s13, 0
    %p137 = por %p135, %p136
    %p138 = scmp.ne.s32.totalorder %s127, %s130
    %p139 = scmp.eq.s32.totalorder %s18, 1
    %p140 = por %p138, %p139
    %p141 = scmp.ne.s32.totalorder %s130, %s131
    %p142 = scmp.eq.s32.totalorder %s18, 0
    %p143 = por %p141, %p142
    %p144 = scmp.ne.s32.totalorder %s130, %s131
    %p145 = scmp.eq.s32.totalorder %s19, 1
    %p146 = por %p144, %p145
    %p148 = scmp.ne.s32.totalorder %s131, %s147
    %p149 = scmp.eq.s32.totalorder %s19, 0
    %p150 = por %p148, %p149
    %s152 = sadd.s32 %s151, 1
    %p155 = scmp.eq.s32.totalorder %s13, 1
    %p156 = scmp.ne.s32.totalorder %s151, %s153
    %p157 = scmp.eq.s32.totalorder %s13, 0
    %p158 = por %p156, %p157
    %p159 = scmp.ne.s32.totalorder %s151, %s153
    %p160 = scmp.eq.s32.totalorder %s18, 1
    %p161 = por %p159, %p160
    %p162 = scmp.ne.s32.totalorder %s153, %s154
    %p163 = scmp.eq.s32.totalorder %s18, 0
    %p164 = por %p162, %p163
    %p165 = scmp.ne.s32.totalorder %s153, %s154
    %p166 = scmp.eq.s32.totalorder %s19, 1
    %p167 = por %p165, %p166
    %p169 = scmp.ne.s32.totalorder %s154, %s168
    %p170 = scmp.eq.s32.totalorder %s19, 0
    %p171 = por %p169, %p170
    %s173 = sadd.s32 %s172, 1
    %p176 = scmp.eq.s32.totalorder %s13, 1
    %p177 = scmp.ne.s32.totalorder %s172, %s174
    %p178 = scmp.eq.s32.totalorder %s13, 0
    %p179 = por %p177, %p178
    %p180 = scmp.ne.s32.totalorder %s172, %s174
    %p181 = scmp.eq.s32.totalorder %s18, 1
    %p182 = por %p180, %p181
    %p183 = scmp.ne.s32.totalorder %s174, %s175
    %p184 = scmp.eq.s32.totalorder %s18, 0
    %p185 = por %p183, %p184
    %p186 = scmp.ne.s32.totalorder %s174, %s175
    %p187 = scmp.eq.s32.totalorder %s19, 1
    %p188 = por %p186, %p187
    %p190 = scmp.ne.s32.totalorder %s175, %s189
    %p191 = scmp.eq.s32.totalorder %s19, 0
    %p192 = por %p190, %p191
    %s193 = ssub.s32 %s13, %s20
    %p194 = scmp.eq.s32.totalorder %s193, 0
    %s196 = sadd.s32 %s195, 1
    %s197 = scalar_select %p194, %s195, %s196
    %p200 = pneg %p194
    %p201 = scmp.eq.s32.totalorder %s13, 1
    %p202 = por %p200, %p201
    %p203 = scmp.ne.s32.totalorder %s195, %s198
    %p204 = scmp.eq.s32.totalorder %s13, 0
    %p205 = por %p203, %p204
    %p206 = scmp.ne.s32.totalorder %s195, %s198
    %p207 = scmp.eq.s32.totalorder %s18, 1
    %p208 = por %p206, %p207
    %p209 = scmp.ne.s32.totalorder %s198, %s199
    %p210 = scmp.eq.s32.totalorder %s18, 0
    %p211 = por %p209, %p210
    %p212 = scmp.ne.s32.totalorder %s198, %s199
    %p213 = scmp.eq.s32.totalorder %s19, 1
    %p214 = por %p212, %p213
    %p216 = scmp.ne.s32.totalorder %s199, %s215
    %p217 = scmp.eq.s32.totalorder %s19, 0
    %p218 = por %p216, %p217
    %p219 = scmp.le.s32.totalorder 1, %s13
    %p220 = scmp.lt.s32.totalorder %s13, 3
    %p221 = pnand %p219, %p220
    %p222 = pneg %p221
    // Predicated region
    $region9: #{mhr_medseg_forward.21} parent=5 // pred_check
      _
    $region10: #{mhr_medseg_forward.21} parent=5 // pred_check_branch
      %224 = sbr.rel (%p221) target = $region12
    $region11: #{mhr_medseg_forward.21} parent=5 // pred_region
      %s225 = ssub.s32 %s13, 1
      // Predicated region
      $region13: #{mhr_medseg_forward.21} parent=11 // pred_check
        %p226 = pneg %p164
      $region14: #{mhr_medseg_forward.21} parent=11 // pred_check_branch
        %228 = sbr.rel (%p226) target = $region16
      $region15: #{mhr_medseg_forward.21} parent=11 // pred_region
        _
      $region16: #{mhr_medseg_forward.21} parent=11 // pred_fallthru
        _
      // Predicated region
      $region17: #{mhr_medseg_forward.21} parent=11 // pred_check
        %p229 = pneg %p185
      $region18: #{mhr_medseg_forward.21} parent=11 // pred_check_branch
        %231 = sbr.rel (%p229) target = $region20
      $region19: #{mhr_medseg_forward.21} parent=11 // pred_region
        _
      $region20: #{mhr_medseg_forward.21} parent=11 // pred_fallthru
        _
    $region12: #{mhr_medseg_forward.21} parent=5 // pred_fallthru
      _
    %p232 = scmp.lt.s32.totalorder %s13, 2
    // Predicated region
    $region21: #{mhr_medseg_forward.21} parent=5 // pred_check
      %p233 = pneg %p232
    $region22: #{mhr_medseg_forward.21} parent=5 // pred_check_branch
      %235 = sbr.rel (%p233) target = $region24
    $region23: #{mhr_medseg_forward.21} parent=5 // pred_region
      // Predicated region
      $region25: #{mhr_medseg_forward.21} parent=23 // pred_check
        %p236 = pneg %p33
      $region26: #{mhr_medseg_forward.21} parent=23 // pred_check_branch
        %238 = sbr.rel (%p236) target = $region28
      $region27: #{mhr_medseg_forward.21} parent=23 // pred_region
        %s239 = smul.u32 16, %s13
        %p240 = scmp.lt.s32.totalorder %s239, 31
        %s241 = scalar_select %p240, %s239, 31
        %s242 = smul.addr %s241, 2
        %s243 = scalar_lea.vmem %s0, %s242
        %s244 = smul.u32 16, %s13
      $region28: #{mhr_medseg_forward.21} parent=23 // pred_fallthru
        _
      // Predicated region
      $region29: #{mhr_medseg_forward.21} parent=23 // pred_check
        %p245 = pneg %p59
      $region30: #{mhr_medseg_forward.21} parent=23 // pred_check_branch
        %247 = sbr.rel (%p245) target = $region32
      $region31: #{mhr_medseg_forward.21} parent=23 // pred_region
        %s248 = smul.u32 16, %s13
        %p249 = scmp.lt.s32.totalorder %s248, 31
        %s250 = scalar_select %p249, %s248, 31
        %s251 = smul.addr %s250, 2
        %s252 = scalar_lea.vmem %s1, %s251
        %s253 = smul.u32 16, %s13
      $region32: #{mhr_medseg_forward.21} parent=23 // pred_fallthru
        _
      // Predicated region
      $region33: #{mhr_medseg_forward.21} parent=23 // pred_check
        %p254 = pneg %p85
      $region34: #{mhr_medseg_forward.21} parent=23 // pred_check_branch
        %256 = sbr.rel (%p254) target = $region36
      $region35: #{mhr_medseg_forward.21} parent=23 // pred_region
        %s257 = smul.u32 16, %s13
        %p258 = scmp.lt.s32.totalorder %s257, 31
        %s259 = scalar_select %p258, %s257, 31
        %s260 = smul.addr %s259, 2
        %s261 = scalar_lea.vmem %s2, %s260
        %s262 = smul.u32 16, %s13
      $region36: #{mhr_medseg_forward.21} parent=23 // pred_fallthru
        _
      // Predicated region
      $region37: #{mhr_medseg_forward.21} parent=23 // pred_check
        %p263 = pneg %p111
      $region38: #{mhr_medseg_forward.21} parent=23 // pred_check_branch
        %265 = sbr.rel (%p263) target = $region40
      $region39: #{mhr_medseg_forward.21} parent=23 // pred_region
        %s266 = smul.u32 16, %s13
        %p267 = scmp.lt.s32.totalorder %s266, 31
        %s268 = scalar_select %p267, %s266, 31
        %s269 = smul.addr %s268, 4
        %s270 = scalar_lea.vmem %s3, %s269
        %s271 = smul.u32 16, %s13
      $region40: #{mhr_medseg_forward.21} parent=23 // pred_fallthru
        _
      // Predicated region
      $region41: #{mhr_medseg_forward.21} parent=23 // pred_check
        %p272 = pneg %p137
      $region42: #{mhr_medseg_forward.21} parent=23 // pred_check_branch
        %274 = sbr.rel (%p272) target = $region44
      $region43: #{mhr_medseg_forward.21} parent=23 // pred_region
        %s275 = smul.u32 16, %s13
        %p276 = scmp.lt.s32.totalorder %s275, 31
        %s277 = scalar_select %p276, %s275, 31
        %s278 = smul.addr %s277, 4
        %s279 = scalar_lea.vmem %s4, %s278
        %s280 = smul.u32 16, %s13
      $region44: #{mhr_medseg_forward.21} parent=23 // pred_fallthru
        _
    $region24: #{mhr_medseg_forward.21} parent=5 // pred_fallthru
      _
    %p281 = scmp.le.s32.totalorder 1, %s13
    %p282 = scmp.lt.s32.totalorder %s13, 3
    %p283 = pnand %p281, %p282
    %p284 = pneg %p283
    // Predicated region
    $region45: #{mhr_medseg_forward.21} parent=5 // pred_check
      _
    $region46: #{mhr_medseg_forward.21} parent=5 // pred_check_branch
      %286 = sbr.rel (%p283) target = $region48
    $region47: #{mhr_medseg_forward.21} parent=5 // pred_region
      %s287 = ssub.s32 %s13, 1
      %s288 = smul.u32 16, %s18
      %p289 = scmp.lt.s32.totalorder %s288, 31
      %s290 = scalar_select %p289, %s288, 31
      %s291 = smul.addr %s290, 2
      %s292 = scalar_lea.vmem %s0, %s291
      %p293 = pneg %p39
      %p294 = pneg %p36
      %s295 = smul.u32 16, %s18
      %p296 = scmp.lt.s32.totalorder %s295, 31
      %s297 = scalar_select %p296, %s295, 31
      %s298 = smul.addr %s297, 2
      %s299 = scalar_lea.vmem %s1, %s298
      %p300 = pneg %p65
      %p301 = pneg %p62
      %s302 = smul.u32 16, %s18
      %p303 = scmp.lt.s32.totalorder %s302, 31
      %s304 = scalar_select %p303, %s302, 31
      %s305 = smul.addr %s304, 2
      %s306 = scalar_lea.vmem %s2, %s305
      %p307 = pneg %p91
      %p308 = pneg %p88
      %s309 = smul.u32 16, %s18
      %p310 = scmp.lt.s32.totalorder %s309, 31
      %s311 = scalar_select %p310, %s309, 31
      %s312 = smul.addr %s311, 4
      %s313 = scalar_lea.vmem %s3, %s312
      %p314 = pneg %p117
      %p315 = pneg %p114
      %s316 = smul.u32 16, %s18
      %p317 = scmp.lt.s32.totalorder %s316, 31
      %s318 = scalar_select %p317, %s316, 31
      %s319 = smul.addr %s318, 4
      %s320 = scalar_lea.vmem %s4, %s319
      %p321 = pneg %p143
      %p322 = pneg %p140
      %p323 = pneg %p164
      %p324 = pneg %p161
      %p325 = pneg %p185
      %p326 = pneg %p182
      %p327 = pneg %p211
      %p328 = pneg %p208
      %s329 = smul.u32 16, %s18
      %p330 = scmp.lt.s32.totalorder %s329, 31
      %s331 = scalar_select %p330, %s329, 31
      %s332 = smul.addr %s331, 4
      %s333 = scalar_lea.vmem %s7, %s332
      %s334 = smul.u32 16, %s18
      %p335 = scmp.lt.s32.totalorder %s334, 31
      %s336 = scalar_select %p335, %s334, 31
      %s337 = smul.addr %s336, 2
      %s338 = scalar_lea.vmem %s0, %s337
      %s339 = smul.u32 16, %s18
      %s340 = smul.u32 16, %s18
      %p341 = scmp.lt.s32.totalorder %s340, 31
      %s342 = scalar_select %p341, %s340, 31
      %s343 = smul.addr %s342, 2
      %s344 = scalar_lea.vmem %s1, %s343
      %s345 = smul.u32 16, %s18
      %s346 = smul.u32 16, %s18
      %p347 = scmp.lt.s32.totalorder %s346, 31
      %s348 = scalar_select %p347, %s346, 31
      %s349 = smul.addr %s348, 2
      %s350 = scalar_lea.vmem %s2, %s349
      %s351 = smul.u32 16, %s18
      %s352 = smul.u32 16, %s18
      %p353 = scmp.lt.s32.totalorder %s352, 31
      %s354 = scalar_select %p353, %s352, 31
      %s355 = smul.addr %s354, 4
      %s356 = scalar_lea.vmem %s3, %s355
      %s357 = smul.u32 16, %s18
      %s358 = smul.u32 16, %s18
      %p359 = scmp.lt.s32.totalorder %s358, 31
      %s360 = scalar_select %p359, %s358, 31
      %s361 = smul.addr %s360, 4
      %s362 = scalar_lea.vmem %s4, %s361
      %s363 = smul.u32 16, %s18
      %s364 = smul.u32 16, %s18
      %p365 = scmp.lt.s32.totalorder %s364, 31
      %s366 = scalar_select %p365, %s364, 31
      %s367 = smul.addr %s366, 4
      %s368 = scalar_lea.vmem %s7, %s367
      %s369 = smul.u32 16, %s18
      %v371 = vld [vmem:[%s338] sm:$0x3]
      %v372 = vld [vmem:[%s338 + $0x2] sm:$0x3]
      %v373 = vld [vmem:[%s338 + $0x4] sm:$0x3]
      %v374 = vld [vmem:[%s338 + $0x6] sm:$0x3]
      %v375 = vld [vmem:[%s338 + $0x8] sm:$0x3]
      %v376 = vld [vmem:[%s338 + $0xa] sm:$0x3]
      %v377 = vld [vmem:[%s338 + $0xc] sm:$0x3]
      %v378 = vld [vmem:[%s338 + $0xe] sm:$0x3]
      %v379 = vld [vmem:[%s338 + $0x10] sm:$0x3]
      %v380 = vld [vmem:[%s338 + $0x12] sm:$0x3]
      %v381 = vld [vmem:[%s338 + $0x14] sm:$0x3]
      %v382 = vld [vmem:[%s338 + $0x16] sm:$0x3]
      %v383 = vld [vmem:[%s338 + $0x18] sm:$0x3]
      %v384 = vld [vmem:[%s338 + $0x1a] sm:$0x3]
      %v385 = vld [vmem:[%s338 + $0x1c] sm:$0x3]
      %v386 = vld [vmem:[%s338 + $0x1e] sm:$0x3]
      %v387 = vld [vmem:[%s344] sm:$0x3]
      %v388 = vld [vmem:[%s344 + $0x2] sm:$0x3]
      %v389 = vld [vmem:[%s344 + $0x4] sm:$0x3]
      %v390 = vld [vmem:[%s344 + $0x6] sm:$0x3]
      %v391 = vld [vmem:[%s344 + $0x8] sm:$0x3]
      %v392 = vld [vmem:[%s344 + $0xa] sm:$0x3]
      %v393 = vld [vmem:[%s344 + $0xc] sm:$0x3]
      %v394 = vld [vmem:[%s344 + $0xe] sm:$0x3]
      %v395 = vld [vmem:[%s344 + $0x10] sm:$0x3]
      %v396 = vld [vmem:[%s344 + $0x12] sm:$0x3]
      %v397 = vld [vmem:[%s344 + $0x14] sm:$0x3]
      %v398 = vld [vmem:[%s344 + $0x16] sm:$0x3]
      %v399 = vld [vmem:[%s344 + $0x18] sm:$0x3]
      %v400 = vld [vmem:[%s344 + $0x1a] sm:$0x3]
      %v401 = vld [vmem:[%s344 + $0x1c] sm:$0x3]
      %v402 = vld [vmem:[%s344 + $0x1e] sm:$0x3]
      %v403 = vld [vmem:[%s350] sm:$0x3]
      %v404 = vld [vmem:[%s350 + $0x2] sm:$0x3]
      %v405 = vld [vmem:[%s350 + $0x4] sm:$0x3]
      %v406 = vld [vmem:[%s350 + $0x6] sm:$0x3]
      %v407 = vld [vmem:[%s350 + $0x8] sm:$0x3]
      %v408 = vld [vmem:[%s350 + $0xa] sm:$0x3]
      %v409 = vld [vmem:[%s350 + $0xc] sm:$0x3]
      %v410 = vld [vmem:[%s350 + $0xe] sm:$0x3]
      %v411 = vld [vmem:[%s350 + $0x10] sm:$0x3]
      %v412 = vld [vmem:[%s350 + $0x12] sm:$0x3]
      %v413 = vld [vmem:[%s350 + $0x14] sm:$0x3]
      %v414 = vld [vmem:[%s350 + $0x16] sm:$0x3]
      %v415 = vld [vmem:[%s350 + $0x18] sm:$0x3]
      %v416 = vld [vmem:[%s350 + $0x1a] sm:$0x3]
      %v417 = vld [vmem:[%s350 + $0x1c] sm:$0x3]
      %v418 = vld [vmem:[%s350 + $0x1e] sm:$0x3]
      %vm419 = vcmask 130048
      %v421 = vsel %vm419, %v371, 0
      %v424 = vsel %vm419, %v387, 0
      %426 = vmatpush.bf16.xpose.msra.mxu0 0
      %427 = vmatpush.bf16.xpose.msra.mxu0 0
      %428 = vmatpush.bf16.xpose.msra.mxu0 0
      %429 = vmatpush.bf16.xpose.msra.mxu0 0
      %430 = vmatpush.bf16.xpose.msra.mxu0 0
      %431 = vmatpush.bf16.xpose.msra.mxu0 0
      %432 = vmatpush.bf16.xpose.msra.mxu0 0
      %433 = vmatpush.bf16.xpose.msra.mxu0 %v424
      %434 = vmatmul.bf16.gmra.mxu0 %v421
      %v435 = vpop.f32.mrf.mxu0
      %v436 = vadd.f32 0.0, %v435
      %v437 = vpop.f32.mrf.mxu0
      %438 = vdwg.mxu0
      %v440 = vsel %vm419, %v372, 0
      %v443 = vsel %vm419, %v388, 0
      %445 = vmatpush.bf16.xpose.msra.mxu0 0
      %446 = vmatpush.bf16.xpose.msra.mxu0 0
      %447 = vmatpush.bf16.xpose.msra.mxu0 0
      %448 = vmatpush.bf16.xpose.msra.mxu0 0
      %449 = vmatpush.bf16.xpose.msra.mxu0 0
      %450 = vmatpush.bf16.xpose.msra.mxu0 0
      %451 = vmatpush.bf16.xpose.msra.mxu0 0
      %452 = vmatpush.bf16.xpose.msra.mxu0 %v443
      %453 = vmatmul.bf16.gmra.mxu0 %v440
      %v454 = vpop.f32.mrf.mxu0
      %v455 = vadd.f32 0.0, %v454
      %v456 = vpop.f32.mrf.mxu0
      %457 = vdwg.mxu0
      %v459 = vsel %vm419, %v373, 0
      %v462 = vsel %vm419, %v389, 0
      %464 = vmatpush.bf16.xpose.msra.mxu0 0
      %465 = vmatpush.bf16.xpose.msra.mxu0 0
      %466 = vmatpush.bf16.xpose.msra.mxu0 0
      %467 = vmatpush.bf16.xpose.msra.mxu0 0
      %468 = vmatpush.bf16.xpose.msra.mxu0 0
      %469 = vmatpush.bf16.xpose.msra.mxu0 0
      %470 = vmatpush.bf16.xpose.msra.mxu0 0
      %471 = vmatpush.bf16.xpose.msra.mxu0 %v462
      %472 = vmatmul.bf16.gmra.mxu0 %v459
      %v473 = vpop.f32.mrf.mxu0
      %v474 = vadd.f32 0.0, %v473
      %v475 = vpop.f32.mrf.mxu0
      %476 = vdwg.mxu0
      %v478 = vsel %vm419, %v374, 0
      %v481 = vsel %vm419, %v390, 0
      %483 = vmatpush.bf16.xpose.msra.mxu0 0
      %484 = vmatpush.bf16.xpose.msra.mxu0 0
      %485 = vmatpush.bf16.xpose.msra.mxu0 0
      %486 = vmatpush.bf16.xpose.msra.mxu0 0
      %487 = vmatpush.bf16.xpose.msra.mxu0 0
      %488 = vmatpush.bf16.xpose.msra.mxu0 0
      %489 = vmatpush.bf16.xpose.msra.mxu0 0
      %490 = vmatpush.bf16.xpose.msra.mxu0 %v481
      %491 = vmatmul.bf16.gmra.mxu0 %v478
      %v492 = vpop.f32.mrf.mxu0
      %v493 = vadd.f32 0.0, %v492
      %v494 = vpop.f32.mrf.mxu0
      %495 = vdwg.mxu0
      %v497 = vsel %vm419, %v375, 0
      %v500 = vsel %vm419, %v391, 0
      %502 = vmatpush.bf16.xpose.msra.mxu0 0
      %503 = vmatpush.bf16.xpose.msra.mxu0 0
      %504 = vmatpush.bf16.xpose.msra.mxu0 0
      %505 = vmatpush.bf16.xpose.msra.mxu0 0
      %506 = vmatpush.bf16.xpose.msra.mxu0 0
      %507 = vmatpush.bf16.xpose.msra.mxu0 0
      %508 = vmatpush.bf16.xpose.msra.mxu0 0
      %509 = vmatpush.bf16.xpose.msra.mxu0 %v500
      %510 = vmatmul.bf16.gmra.mxu0 %v497
      %v511 = vpop.f32.mrf.mxu0
      %v512 = vadd.f32 0.0, %v511
      %v513 = vpop.f32.mrf.mxu0
      %514 = vdwg.mxu0
      %v516 = vsel %vm419, %v376, 0
      %v519 = vsel %vm419, %v392, 0
      %521 = vmatpush.bf16.xpose.msra.mxu0 0
      %522 = vmatpush.bf16.xpose.msra.mxu0 0
      %523 = vmatpush.bf16.xpose.msra.mxu0 0
      %524 = vmatpush.bf16.xpose.msra.mxu0 0
      %525 = vmatpush.bf16.xpose.msra.mxu0 0
      %526 = vmatpush.bf16.xpose.msra.mxu0 0
      %527 = vmatpush.bf16.xpose.msra.mxu0 0
      %528 = vmatpush.bf16.xpose.msra.mxu0 %v519
      %529 = vmatmul.bf16.gmra.mxu0 %v516
      %v530 = vpop.f32.mrf.mxu0
      %v531 = vadd.f32 0.0, %v530
      %v532 = vpop.f32.mrf.mxu0
      %533 = vdwg.mxu0
      %v535 = vsel %vm419, %v377, 0
      %v538 = vsel %vm419, %v393, 0
      %540 = vmatpush.bf16.xpose.msra.mxu0 0
      %541 = vmatpush.bf16.xpose.msra.mxu0 0
      %542 = vmatpush.bf16.xpose.msra.mxu0 0
      %543 = vmatpush.bf16.xpose.msra.mxu0 0
      %544 = vmatpush.bf16.xpose.msra.mxu0 0
      %545 = vmatpush.bf16.xpose.msra.mxu0 0
      %546 = vmatpush.bf16.xpose.msra.mxu0 0
      %547 = vmatpush.bf16.xpose.msra.mxu0 %v538
      %548 = vmatmul.bf16.gmra.mxu0 %v535
      %v549 = vpop.f32.mrf.mxu0
      %v550 = vadd.f32 0.0, %v549
      %v551 = vpop.f32.mrf.mxu0
      %552 = vdwg.mxu0
      %v554 = vsel %vm419, %v378, 0
      %v557 = vsel %vm419, %v394, 0
      %559 = vmatpush.bf16.xpose.msra.mxu0 0
      %560 = vmatpush.bf16.xpose.msra.mxu0 0
      %561 = vmatpush.bf16.xpose.msra.mxu0 0
      %562 = vmatpush.bf16.xpose.msra.mxu0 0
      %563 = vmatpush.bf16.xpose.msra.mxu0 0
      %564 = vmatpush.bf16.xpose.msra.mxu0 0
      %565 = vmatpush.bf16.xpose.msra.mxu0 0
      %566 = vmatpush.bf16.xpose.msra.mxu0 %v557
      %567 = vmatmul.bf16.gmra.mxu0 %v554
      %v568 = vpop.f32.mrf.mxu0
      %v569 = vadd.f32 0.0, %v568
      %v570 = vpop.f32.mrf.mxu0
      %571 = vdwg.mxu0
      %v573 = vsel %vm419, %v379, 0
      %v576 = vsel %vm419, %v395, 0
      %578 = vmatpush.bf16.xpose.msra.mxu0 0
      %579 = vmatpush.bf16.xpose.msra.mxu0 0
      %580 = vmatpush.bf16.xpose.msra.mxu0 0
      %581 = vmatpush.bf16.xpose.msra.mxu0 0
      %582 = vmatpush.bf16.xpose.msra.mxu0 0
      %583 = vmatpush.bf16.xpose.msra.mxu0 0
      %584 = vmatpush.bf16.xpose.msra.mxu0 0
      %585 = vmatpush.bf16.xpose.msra.mxu0 %v576
      %586 = vmatmul.bf16.gmra.mxu0 %v573
      %v587 = vpop.f32.mrf.mxu0
      %v588 = vadd.f32 0.0, %v587
      %v589 = vpop.f32.mrf.mxu0
      %590 = vdwg.mxu0
      %v592 = vsel %vm419, %v380, 0
      %v595 = vsel %vm419, %v396, 0
      %597 = vmatpush.bf16.xpose.msra.mxu0 0
      %598 = vmatpush.bf16.xpose.msra.mxu0 0
      %599 = vmatpush.bf16.xpose.msra.mxu0 0
      %600 = vmatpush.bf16.xpose.msra.mxu0 0
      %601 = vmatpush.bf16.xpose.msra.mxu0 0
      %602 = vmatpush.bf16.xpose.msra.mxu0 0
      %603 = vmatpush.bf16.xpose.msra.mxu0 0
      %604 = vmatpush.bf16.xpose.msra.mxu0 %v595
      %605 = vmatmul.bf16.gmra.mxu0 %v592
      %v606 = vpop.f32.mrf.mxu0
      %v607 = vadd.f32 0.0, %v606
      %v608 = vpop.f32.mrf.mxu0
      %609 = vdwg.mxu0
      %v611 = vsel %vm419, %v381, 0
      %v614 = vsel %vm419, %v397, 0
      %616 = vmatpush.bf16.xpose.msra.mxu0 0
      %617 = vmatpush.bf16.xpose.msra.mxu0 0
      %618 = vmatpush.bf16.xpose.msra.mxu0 0
      %619 = vmatpush.bf16.xpose.msra.mxu0 0
      %620 = vmatpush.bf16.xpose.msra.mxu0 0
      %621 = vmatpush.bf16.xpose.msra.mxu0 0
      %622 = vmatpush.bf16.xpose.msra.mxu0 0
      %623 = vmatpush.bf16.xpose.msra.mxu0 %v614
      %624 = vmatmul.bf16.gmra.mxu0 %v611
      %v625 = vpop.f32.mrf.mxu0
      %v626 = vadd.f32 0.0, %v625
      %v627 = vpop.f32.mrf.mxu0
      %628 = vdwg.mxu0
      %v630 = vsel %vm419, %v382, 0
      %v633 = vsel %vm419, %v398, 0
      %635 = vmatpush.bf16.xpose.msra.mxu0 0
      %636 = vmatpush.bf16.xpose.msra.mxu0 0
      %637 = vmatpush.bf16.xpose.msra.mxu0 0
      %638 = vmatpush.bf16.xpose.msra.mxu0 0
      %639 = vmatpush.bf16.xpose.msra.mxu0 0
      %640 = vmatpush.bf16.xpose.msra.mxu0 0
      %641 = vmatpush.bf16.xpose.msra.mxu0 0
      %642 = vmatpush.bf16.xpose.msra.mxu0 %v633
      %643 = vmatmul.bf16.gmra.mxu0 %v630
      %v644 = vpop.f32.mrf.mxu0
      %v645 = vadd.f32 0.0, %v644
      %v646 = vpop.f32.mrf.mxu0
      %647 = vdwg.mxu0
      %v649 = vsel %vm419, %v383, 0
      %v652 = vsel %vm419, %v399, 0
      %654 = vmatpush.bf16.xpose.msra.mxu0 0
      %655 = vmatpush.bf16.xpose.msra.mxu0 0
      %656 = vmatpush.bf16.xpose.msra.mxu0 0
      %657 = vmatpush.bf16.xpose.msra.mxu0 0
      %658 = vmatpush.bf16.xpose.msra.mxu0 0
      %659 = vmatpush.bf16.xpose.msra.mxu0 0
      %660 = vmatpush.bf16.xpose.msra.mxu0 0
      %661 = vmatpush.bf16.xpose.msra.mxu0 %v652
      %662 = vmatmul.bf16.gmra.mxu0 %v649
      %v663 = vpop.f32.mrf.mxu0
      %v664 = vadd.f32 0.0, %v663
      %v665 = vpop.f32.mrf.mxu0
      %666 = vdwg.mxu0
      %v668 = vsel %vm419, %v384, 0
      %v671 = vsel %vm419, %v400, 0
      %673 = vmatpush.bf16.xpose.msra.mxu0 0
      %674 = vmatpush.bf16.xpose.msra.mxu0 0
      %675 = vmatpush.bf16.xpose.msra.mxu0 0
      %676 = vmatpush.bf16.xpose.msra.mxu0 0
      %677 = vmatpush.bf16.xpose.msra.mxu0 0
      %678 = vmatpush.bf16.xpose.msra.mxu0 0
      %679 = vmatpush.bf16.xpose.msra.mxu0 0
      %680 = vmatpush.bf16.xpose.msra.mxu0 %v671
      %681 = vmatmul.bf16.gmra.mxu0 %v668
      %v682 = vpop.f32.mrf.mxu0
      %v683 = vadd.f32 0.0, %v682
      %v684 = vpop.f32.mrf.mxu0
      %685 = vdwg.mxu0
      %v687 = vsel %vm419, %v385, 0
      %v690 = vsel %vm419, %v401, 0
      %692 = vmatpush.bf16.xpose.msra.mxu0 0
      %693 = vmatpush.bf16.xpose.msra.mxu0 0
      %694 = vmatpush.bf16.xpose.msra.mxu0 0
      %695 = vmatpush.bf16.xpose.msra.mxu0 0
      %696 = vmatpush.bf16.xpose.msra.mxu0 0
      %697 = vmatpush.bf16.xpose.msra.mxu0 0
      %698 = vmatpush.bf16.xpose.msra.mxu0 0
      %699 = vmatpush.bf16.xpose.msra.mxu0 %v690
      %700 = vmatmul.bf16.gmra.mxu0 %v687
      %v701 = vpop.f32.mrf.mxu0
      %v702 = vadd.f32 0.0, %v701
      %v703 = vpop.f32.mrf.mxu0
      %704 = vdwg.mxu0
      %v706 = vsel %vm419, %v386, 0
      %v709 = vsel %vm419, %v402, 0
      %711 = vmatpush.bf16.xpose.msra.mxu0 0
      %712 = vmatpush.bf16.xpose.msra.mxu0 0
      %713 = vmatpush.bf16.xpose.msra.mxu0 0
      %714 = vmatpush.bf16.xpose.msra.mxu0 0
      %715 = vmatpush.bf16.xpose.msra.mxu0 0
      %716 = vmatpush.bf16.xpose.msra.mxu0 0
      %717 = vmatpush.bf16.xpose.msra.mxu0 0
      %718 = vmatpush.bf16.xpose.msra.mxu0 %v709
      %719 = vmatmul.bf16.gmra.mxu0 %v706
      %v720 = vpop.f32.mrf.mxu0
      %v721 = vadd.f32 0.0, %v720
      %v722 = vpop.f32.mrf.mxu0
      %723 = vdwg.mxu0
      %v724 = vmul.f32 %v436, 0.25
      %v725 = vmul.f32 %v455, 0.25
      %v726 = vmul.f32 %v474, 0.25
      %v727 = vmul.f32 %v493, 0.25
      %v728 = vmul.f32 %v512, 0.25
      %v729 = vmul.f32 %v531, 0.25
      %v730 = vmul.f32 %v550, 0.25
      %v731 = vmul.f32 %v569, 0.25
      %v732 = vmul.f32 %v588, 0.25
      %v733 = vmul.f32 %v607, 0.25
      %v734 = vmul.f32 %v626, 0.25
      %v735 = vmul.f32 %v645, 0.25
      %v736 = vmul.f32 %v664, 0.25
      %v737 = vmul.f32 %v683, 0.25
      %v738 = vmul.f32 %v702, 0.25
      %v739 = vmul.f32 %v721, 0.25
      %v740 = vld [vmem:[%s356] sm:$0xf]
      %v741 = vld [vmem:[%s356 + $0x4] sm:$0xf]
      %v742 = vld [vmem:[%s356 + $0x8] sm:$0xf]
      %v743 = vld [vmem:[%s356 + $0xc] sm:$0xf]
      %v744 = vld [vmem:[%s356 + $0x10] sm:$0xf]
      %v745 = vld [vmem:[%s356 + $0x14] sm:$0xf]
      %v746 = vld [vmem:[%s356 + $0x18] sm:$0xf]
      %v747 = vld [vmem:[%s356 + $0x1c] sm:$0xf]
      %v748 = vld [vmem:[%s356 + $0x20] sm:$0xf]
      %v749 = vld [vmem:[%s356 + $0x24] sm:$0xf]
      %v750 = vld [vmem:[%s356 + $0x28] sm:$0xf]
      %v751 = vld [vmem:[%s356 + $0x2c] sm:$0xf]
      %v752 = vld [vmem:[%s356 + $0x30] sm:$0xf]
      %v753 = vld [vmem:[%s356 + $0x34] sm:$0xf]
      %v754 = vld [vmem:[%s356 + $0x38] sm:$0xf]
      %v755 = vld [vmem:[%s356 + $0x3c] sm:$0xf]
      %v756 = vld [vmem:[%s362] sm:$0xf]
      %v757 = vld [vmem:[%s362 + $0x4] sm:$0xf]
      %v758 = vld [vmem:[%s362 + $0x8] sm:$0xf]
      %v759 = vld [vmem:[%s362 + $0xc] sm:$0xf]
      %v760 = vld [vmem:[%s362 + $0x10] sm:$0xf]
      %v761 = vld [vmem:[%s362 + $0x14] sm:$0xf]
      %v762 = vld [vmem:[%s362 + $0x18] sm:$0xf]
      %v763 = vld [vmem:[%s362 + $0x1c] sm:$0xf]
      %v764 = vld [vmem:[%s362 + $0x20] sm:$0xf]
      %v765 = vld [vmem:[%s362 + $0x24] sm:$0xf]
      %v766 = vld [vmem:[%s362 + $0x28] sm:$0xf]
      %v767 = vld [vmem:[%s362 + $0x2c] sm:$0xf]
      %v768 = vld [vmem:[%s362 + $0x30] sm:$0xf]
      %v769 = vld [vmem:[%s362 + $0x34] sm:$0xf]
      %v770 = vld [vmem:[%s362 + $0x38] sm:$0xf]
      %v771 = vld [vmem:[%s362 + $0x3c] sm:$0xf]
      %v772 = vld [vmem:[%s5] sm:$0x3]
      %v773 = vld [vmem:[%s6] sm:$0x3]
      %790 = vst [vmem:[#allocation1] ss:$2 sm:$0xff] %v756
      %s791 = scalar_lea.vmem [#allocation1], 1
      %792 = vst [vmem:[%s791] ss:$2 sm:$0xff] %v757
      %s793 = scalar_lea.vmem [#allocation1], 16
      %794 = vst [vmem:[%s793] ss:$2 sm:$0xff] %v758
      %s795 = scalar_lea.vmem [#allocation1], 17
      %796 = vst [vmem:[%s795] ss:$2 sm:$0xff] %v759
      %s797 = scalar_lea.vmem [#allocation1], 32
      %798 = vst [vmem:[%s797] ss:$2 sm:$0xff] %v760
      %s799 = scalar_lea.vmem [#allocation1], 33
      %800 = vst [vmem:[%s799] ss:$2 sm:$0xff] %v761
      %s801 = scalar_lea.vmem [#allocation1], 48
      %802 = vst [vmem:[%s801] ss:$2 sm:$0xff] %v762
      %s803 = scalar_lea.vmem [#allocation1], 49
      %804 = vst [vmem:[%s803] ss:$2 sm:$0xff] %v763
      %v805 = vld.sshfl [vmem:[#allocation1] sm:$0xff pattern:$0x75316420]
      %v806 = vld.sshfl [vmem:[#allocation1 + $0x10] sm:$0xff pattern:$0x75316420]
      %v807 = vld.sshfl [vmem:[#allocation1 + $0x20] sm:$0xff pattern:$0x75316420]
      %v808 = vld.sshfl [vmem:[#allocation1 + $0x30] sm:$0xff pattern:$0x75316420]
      %809 = vst [vmem:[#allocation1] ss:$2 sm:$0xff] %v764
      %810 = vst [vmem:[%s791] ss:$2 sm:$0xff] %v765
      %811 = vst [vmem:[%s793] ss:$2 sm:$0xff] %v766
      %812 = vst [vmem:[%s795] ss:$2 sm:$0xff] %v767
      %813 = vst [vmem:[%s797] ss:$2 sm:$0xff] %v768
      %814 = vst [vmem:[%s799] ss:$2 sm:$0xff] %v769
      %815 = vst [vmem:[%s801] ss:$2 sm:$0xff] %v770
      %816 = vst [vmem:[%s803] ss:$2 sm:$0xff] %v771
      %v817 = vld.sshfl [vmem:[#allocation1] sm:$0xff pattern:$0x75316420]
      %v818 = vld.sshfl [vmem:[#allocation1 + $0x10] sm:$0xff pattern:$0x75316420]
      %v819 = vld.sshfl [vmem:[#allocation1 + $0x20] sm:$0xff pattern:$0x75316420]
      %v820 = vld.sshfl [vmem:[#allocation1 + $0x30] sm:$0xff pattern:$0x75316420]
      %vm821 = vcmask 15360
      %v822 = vsel %vm821, %v805, 0
      %v824 = vsel %vm821, %v806, 0
      %v826 = vsel %vm821, %v807, 0
      %v828 = vsel %vm821, %v808, 0
      %v830 = vsel %vm821, %v817, 0
      %v832 = vsel %vm821, %v818, 0
      %v834 = vsel %vm821, %v819, 0
      %v836 = vsel %vm821, %v820, 0
      %vm838 = vcmask 1041408
      %v840 = vsel %vm838, %v773, 0
      %842 = vmatpush.msra.mxu0 0.0
      %843 = vmatpush.msra.mxu0 0.0
      %844 = vmatpush.msra.mxu0 0.0
      %845 = vmatpush.msra.mxu0 0.0
      %846 = vmatpush.msra.mxu0 0.0
      %847 = vmatpush.msra.mxu0 0.0
      %848 = vmatpush.msra.mxu0 0.0
      %849 = vmatpush.msra.mxu0 0.0
      %850 = vmatpush.msra.mxu0 0.0
      %851 = vmatpush.msra.mxu0 0.0
      %852 = vmatpush.msra.mxu0 0.0
      %853 = vmatpush.msra.mxu0 0.0
      %854 = vmatpush.msra.mxu0 0.0
      %855 = vmatpush.msra.mxu0 0.0
      %856 = vmatpush.msra.mxu0 0.0
      %857 = vmatpush.msra.mxu0 %v840
      %858 = vmatmul.f32.gmra.mxu0 %v822
      %v859 = vpop.f32.mrf.mxu0
      %v860 = vadd.f32 0.0, %v859
      %861 = vmatmul.f32.gmra.mxu0 %v824
      %v862 = vpop.f32.mrf.mxu0
      %v863 = vadd.f32 0.0, %v862
      %864 = vmatmul.f32.gmra.mxu0 %v826
      %v865 = vpop.f32.mrf.mxu0
      %v866 = vadd.f32 0.0, %v865
      %867 = vmatmul.f32.gmra.mxu0 %v828
      %v868 = vpop.f32.mrf.mxu0
      %v869 = vadd.f32 0.0, %v868
      %870 = vmatmul.f32.gmra.mxu0 %v830
      %v871 = vpop.f32.mrf.mxu0
      %v872 = vadd.f32 0.0, %v871
      %873 = vmatmul.f32.gmra.mxu0 %v832
      %v874 = vpop.f32.mrf.mxu0
      %v875 = vadd.f32 0.0, %v874
      %876 = vmatmul.f32.gmra.mxu0 %v834
      %v877 = vpop.f32.mrf.mxu0
      %v878 = vadd.f32 0.0, %v877
      %879 = vmatmul.f32.gmra.mxu0 %v836
      %v880 = vpop.f32.mrf.mxu0
      %v881 = vadd.f32 0.0, %v880
      %882 = vdwg.mxu0
      %899 = vst [vmem:[#allocation1] ss:$2 sm:$0xff] %v740
      %s900 = scalar_lea.vmem [#allocation1], 1
      %901 = vst [vmem:[%s900] ss:$2 sm:$0xff] %v741
      %s902 = scalar_lea.vmem [#allocation1], 16
      %903 = vst [vmem:[%s902] ss:$2 sm:$0xff] %v742
      %s904 = scalar_lea.vmem [#allocation1], 17
      %905 = vst [vmem:[%s904] ss:$2 sm:$0xff] %v743
      %s906 = scalar_lea.vmem [#allocation1], 32
      %907 = vst [vmem:[%s906] ss:$2 sm:$0xff] %v744
      %s908 = scalar_lea.vmem [#allocation1], 33
      %909 = vst [vmem:[%s908] ss:$2 sm:$0xff] %v745
      %s910 = scalar_lea.vmem [#allocation1], 48
      %911 = vst [vmem:[%s910] ss:$2 sm:$0xff] %v746
      %s912 = scalar_lea.vmem [#allocation1], 49
      %913 = vst [vmem:[%s912] ss:$2 sm:$0xff] %v747
      %v914 = vld.sshfl [vmem:[#allocation1] sm:$0xff pattern:$0x75316420]
      %v915 = vld.sshfl [vmem:[#allocation1 + $0x10] sm:$0xff pattern:$0x75316420]
      %v916 = vld.sshfl [vmem:[#allocation1 + $0x20] sm:$0xff pattern:$0x75316420]
      %v917 = vld.sshfl [vmem:[#allocation1 + $0x30] sm:$0xff pattern:$0x75316420]
      %918 = vst [vmem:[#allocation1] ss:$2 sm:$0xff] %v748
      %919 = vst [vmem:[%s900] ss:$2 sm:$0xff] %v749
      %920 = vst [vmem:[%s902] ss:$2 sm:$0xff] %v750
      %921 = vst [vmem:[%s904] ss:$2 sm:$0xff] %v751
      %922 = vst [vmem:[%s906] ss:$2 sm:$0xff] %v752
      %923 = vst [vmem:[%s908] ss:$2 sm:$0xff] %v753
      %924 = vst [vmem:[%s910] ss:$2 sm:$0xff] %v754
      %925 = vst [vmem:[%s912] ss:$2 sm:$0xff] %v755
      %v926 = vld.sshfl [vmem:[#allocation1] sm:$0xff pattern:$0x75316420]
      %v927 = vld.sshfl [vmem:[#allocation1 + $0x10] sm:$0xff pattern:$0x75316420]
      %v928 = vld.sshfl [vmem:[#allocation1 + $0x20] sm:$0xff pattern:$0x75316420]
      %v929 = vld.sshfl [vmem:[#allocation1 + $0x30] sm:$0xff pattern:$0x75316420]
      %v930 = vsel %vm821, %v914, 0
      %v932 = vsel %vm821, %v915, 0
      %v934 = vsel %vm821, %v916, 0
      %v936 = vsel %vm821, %v917, 0
      %v938 = vsel %vm821, %v926, 0
      %v940 = vsel %vm821, %v927, 0
      %v942 = vsel %vm821, %v928, 0
      %v944 = vsel %vm821, %v929, 0
      %v947 = vsel %vm838, %v772, 0
      %949 = vmatpush.msra.mxu0 0.0
      %950 = vmatpush.msra.mxu0 0.0
      %951 = vmatpush.msra.mxu0 0.0
      %952 = vmatpush.msra.mxu0 0.0
      %953 = vmatpush.msra.mxu0 0.0
      %954 = vmatpush.msra.mxu0 0.0
      %955 = vmatpush.msra.mxu0 0.0
      %956 = vmatpush.msra.mxu0 0.0
      %957 = vmatpush.msra.mxu0 0.0
      %958 = vmatpush.msra.mxu0 0.0
      %959 = vmatpush.msra.mxu0 0.0
      %960 = vmatpush.msra.mxu0 0.0
      %961 = vmatpush.msra.mxu0 0.0
      %962 = vmatpush.msra.mxu0 0.0
      %963 = vmatpush.msra.mxu0 0.0
      %964 = vmatpush.msra.mxu0 %v947
      %965 = vmatmul.f32.gmra.mxu0 %v930
      %v966 = vpop.f32.mrf.mxu0
      %v967 = vadd.f32 %v860, %v966
      %968 = vmatmul.f32.gmra.mxu0 %v932
      %v969 = vpop.f32.mrf.mxu0
      %v970 = vadd.f32 %v863, %v969
      %971 = vmatmul.f32.gmra.mxu0 %v934
      %v972 = vpop.f32.mrf.mxu0
      %v973 = vadd.f32 %v866, %v972
      %974 = vmatmul.f32.gmra.mxu0 %v936
      %v975 = vpop.f32.mrf.mxu0
      %v976 = vadd.f32 %v869, %v975
      %977 = vmatmul.f32.gmra.mxu0 %v938
      %v978 = vpop.f32.mrf.mxu0
      %v979 = vadd.f32 %v872, %v978
      %980 = vmatmul.f32.gmra.mxu0 %v940
      %v981 = vpop.f32.mrf.mxu0
      %v982 = vadd.f32 %v875, %v981
      %983 = vmatmul.f32.gmra.mxu0 %v942
      %v984 = vpop.f32.mrf.mxu0
      %v985 = vadd.f32 %v878, %v984
      %986 = vmatmul.f32.gmra.mxu0 %v944
      %v987 = vpop.f32.mrf.mxu0
      %v988 = vadd.f32 %v881, %v987
      %989 = vdwg.mxu0
      %v998 = vrot.slane %v967, 4
      %v999 = vrot.slane %v970, 4
      %v1000 = vrot.slane %v973, 4
      %v1001 = vrot.slane %v976, 4
      %v1002 = vrot.slane %v979, 4
      %v1003 = vrot.slane %v982, 4
      %v1004 = vrot.slane %v985, 4
      %v1005 = vrot.slane %v988, 4
      %v1014 = vadd.f32 %v724, %v967
      %v1015 = vadd.f32 %v725, %v998
      %v1016 = vadd.f32 %v726, %v970
      %v1017 = vadd.f32 %v727, %v999
      %v1018 = vadd.f32 %v728, %v973
      %v1019 = vadd.f32 %v729, %v1000
      %v1020 = vadd.f32 %v730, %v976
      %v1021 = vadd.f32 %v731, %v1001
      %v1022 = vadd.f32 %v732, %v979
      %v1023 = vadd.f32 %v733, %v1002
      %v1024 = vadd.f32 %v734, %v982
      %v1025 = vadd.f32 %v735, %v1003
      %v1026 = vadd.f32 %v736, %v985
      %v1027 = vadd.f32 %v737, %v1004
      %v1028 = vadd.f32 %v738, %v988
      %v1029 = vadd.f32 %v739, %v1005
      %vm1030 = vcmask 27648
      %v1031 = vsel %vm1030, %v1014, -inf
      %1032 = vmax.xlane.f32.xlu0 %v1031
      %v1033 = vpop.xlane.xlu0 %1032
      %v1034 = vsel %vm1030, %v1015, -inf
      %1035 = vmax.xlane.f32.xlu0 %v1034
      %v1036 = vpop.xlane.xlu0 %1035
      %v1037 = vsel %vm1030, %v1016, -inf
      %1038 = vmax.xlane.f32.xlu0 %v1037
      %v1039 = vpop.xlane.xlu0 %1038
      %v1040 = vsel %vm1030, %v1017, -inf
      %1041 = vmax.xlane.f32.xlu0 %v1040
      %v1042 = vpop.xlane.xlu0 %1041
      %v1043 = vsel %vm1030, %v1018, -inf
      %1044 = vmax.xlane.f32.xlu0 %v1043
      %v1045 = vpop.xlane.xlu0 %1044
      %v1046 = vsel %vm1030, %v1019, -inf
      %1047 = vmax.xlane.f32.xlu0 %v1046
      %v1048 = vpop.xlane.xlu0 %1047
      %v1049 = vsel %vm1030, %v1020, -inf
      %1050 = vmax.xlane.f32.xlu0 %v1049
      %v1051 = vpop.xlane.xlu0 %1050
      %v1052 = vsel %vm1030, %v1021, -inf
      %1053 = vmax.xlane.f32.xlu0 %v1052
      %v1054 = vpop.xlane.xlu0 %1053
      %v1055 = vsel %vm1030, %v1022, -inf
      %1056 = vmax.xlane.f32.xlu0 %v1055
      %v1057 = vpop.xlane.xlu0 %1056
      %v1058 = vsel %vm1030, %v1023, -inf
      %1059 = vmax.xlane.f32.xlu0 %v1058
      %v1060 = vpop.xlane.xlu0 %1059
      %v1061 = vsel %vm1030, %v1024, -inf
      %1062 = vmax.xlane.f32.xlu0 %v1061
      %v1063 = vpop.xlane.xlu0 %1062
      %v1064 = vsel %vm1030, %v1025, -inf
      %1065 = vmax.xlane.f32.xlu0 %v1064
      %v1066 = vpop.xlane.xlu0 %1065
      %v1067 = vsel %vm1030, %v1026, -inf
      %1068 = vmax.xlane.f32.xlu0 %v1067
      %v1069 = vpop.xlane.xlu0 %1068
      %v1070 = vsel %vm1030, %v1027, -inf
      %1071 = vmax.xlane.f32.xlu0 %v1070
      %v1072 = vpop.xlane.xlu0 %1071
      %v1073 = vsel %vm1030, %v1028, -inf
      %1074 = vmax.xlane.f32.xlu0 %v1073
      %v1075 = vpop.xlane.xlu0 %1074
      %v1076 = vsel %vm1030, %v1029, -inf
      %1077 = vmax.xlane.f32.xlu0 %v1076
      %v1078 = vpop.xlane.xlu0 %1077
      %v1079 = vsub.f32 %v1014, %v1033
      %v1080 = vsub.f32 %v1015, %v1036
      %v1081 = vsub.f32 %v1016, %v1039
      %v1082 = vsub.f32 %v1017, %v1042
      %v1083 = vsub.f32 %v1018, %v1045
      %v1084 = vsub.f32 %v1019, %v1048
      %v1085 = vsub.f32 %v1020, %v1051
      %v1086 = vsub.f32 %v1021, %v1054
      %v1087 = vsub.f32 %v1022, %v1057
      %v1088 = vsub.f32 %v1023, %v1060
      %v1089 = vsub.f32 %v1024, %v1063
      %v1090 = vsub.f32 %v1025, %v1066
      %v1091 = vsub.f32 %v1026, %v1069
      %v1092 = vsub.f32 %v1027, %v1072
      %v1093 = vsub.f32 %v1028, %v1075
      %v1094 = vsub.f32 %v1029, %v1078
      %v1095 = vmul.f32 %v1079, 1.442695
      %v1096 = vpow.pop %v1095
      %v1097 = vmul.f32 %v1080, 1.442695
      %v1098 = vpow.pop %v1097
      %v1099 = vmul.f32 %v1081, 1.442695
      %v1100 = vpow.pop %v1099
      %v1101 = vmul.f32 %v1082, 1.442695
      %v1102 = vpow.pop %v1101
      %v1103 = vmul.f32 %v1083, 1.442695
      %v1104 = vpow.pop %v1103
      %v1105 = vmul.f32 %v1084, 1.442695
      %v1106 = vpow.pop %v1105
      %v1107 = vmul.f32 %v1085, 1.442695
      %v1108 = vpow.pop %v1107
      %v1109 = vmul.f32 %v1086, 1.442695
      %v1110 = vpow.pop %v1109
      %v1111 = vmul.f32 %v1087, 1.442695
      %v1112 = vpow.pop %v1111
      %v1113 = vmul.f32 %v1088, 1.442695
      %v1114 = vpow.pop %v1113
      %v1115 = vmul.f32 %v1089, 1.442695
      %v1116 = vpow.pop %v1115
      %v1117 = vmul.f32 %v1090, 1.442695
      %v1118 = vpow.pop %v1117
      %v1119 = vmul.f32 %v1091, 1.442695
      %v1120 = vpow.pop %v1119
      %v1121 = vmul.f32 %v1092, 1.442695
      %v1122 = vpow.pop %v1121
      %v1123 = vmul.f32 %v1093, 1.442695
      %v1124 = vpow.pop %v1123
      %v1125 = vmul.f32 %v1094, 1.442695
      %v1126 = vpow.pop %v1125
      %v1127 = vsel %vm1030, %v1096, 0.0
      %1128 = vadd.xlane.f32.xlu0 %v1127
      %v1129 = vpop.xlane.xlu0 %1128
      %v1130 = vsel %vm1030, %v1098, 0.0
      %1131 = vadd.xlane.f32.xlu0 %v1130
      %v1132 = vpop.xlane.xlu0 %1131
      %v1133 = vsel %vm1030, %v1100, 0.0
      %1134 = vadd.xlane.f32.xlu0 %v1133
      %v1135 = vpop.xlane.xlu0 %1134
      %v1136 = vsel %vm1030, %v1102, 0.0
      %1137 = vadd.xlane.f32.xlu0 %v1136
      %v1138 = vpop.xlane.xlu0 %1137
      %v1139 = vsel %vm1030, %v1104, 0.0
      %1140 = vadd.xlane.f32.xlu0 %v1139
      %v1141 = vpop.xlane.xlu0 %1140
      %v1142 = vsel %vm1030, %v1106, 0.0
      %1143 = vadd.xlane.f32.xlu0 %v1142
      %v1144 = vpop.xlane.xlu0 %1143
      %v1145 = vsel %vm1030, %v1108, 0.0
      %1146 = vadd.xlane.f32.xlu0 %v1145
      %v1147 = vpop.xlane.xlu0 %1146
      %v1148 = vsel %vm1030, %v1110, 0.0
      %1149 = vadd.xlane.f32.xlu0 %v1148
      %v1150 = vpop.xlane.xlu0 %1149
      %v1151 = vsel %vm1030, %v1112, 0.0
      %1152 = vadd.xlane.f32.xlu0 %v1151
      %v1153 = vpop.xlane.xlu0 %1152
      %v1154 = vsel %vm1030, %v1114, 0.0
      %1155 = vadd.xlane.f32.xlu0 %v1154
      %v1156 = vpop.xlane.xlu0 %1155
      %v1157 = vsel %vm1030, %v1116, 0.0
      %1158 = vadd.xlane.f32.xlu0 %v1157
      %v1159 = vpop.xlane.xlu0 %1158
      %v1160 = vsel %vm1030, %v1118, 0.0
      %1161 = vadd.xlane.f32.xlu0 %v1160
      %v1162 = vpop.xlane.xlu0 %1161
      %v1163 = vsel %vm1030, %v1120, 0.0
      %1164 = vadd.xlane.f32.xlu0 %v1163
      %v1165 = vpop.xlane.xlu0 %1164
      %v1166 = vsel %vm1030, %v1122, 0.0
      %1167 = vadd.xlane.f32.xlu0 %v1166
      %v1168 = vpop.xlane.xlu0 %1167
      %v1169 = vsel %vm1030, %v1124, 0.0
      %1170 = vadd.xlane.f32.xlu0 %v1169
      %v1171 = vpop.xlane.xlu0 %1170
      %v1172 = vsel %vm1030, %v1126, 0.0
      %1173 = vadd.xlane.f32.xlu0 %v1172
      %v1174 = vpop.xlane.xlu0 %1173
      %v1175 = vrcp.pop %v1129
      %v1176 = vrcp.pop %v1132
      %v1177 = vrcp.pop %v1135
      %v1178 = vrcp.pop %v1138
      %v1179 = vrcp.pop %v1141
      %v1180 = vrcp.pop %v1144
      %v1181 = vrcp.pop %v1147
      %v1182 = vrcp.pop %v1150
      %v1183 = vrcp.pop %v1153
      %v1184 = vrcp.pop %v1156
      %v1185 = vrcp.pop %v1159
      %v1186 = vrcp.pop %v1162
      %v1187 = vrcp.pop %v1165
      %v1188 = vrcp.pop %v1168
      %v1189 = vrcp.pop %v1171
      %v1190 = vrcp.pop %v1174
      %v1191 = vmul.f32 %v1096, %v1175
      %v1192 = vmul.f32 %v1098, %v1176
      %v1193 = vmul.f32 %v1100, %v1177
      %v1194 = vmul.f32 %v1102, %v1178
      %v1195 = vmul.f32 %v1104, %v1179
      %v1196 = vmul.f32 %v1106, %v1180
      %v1197 = vmul.f32 %v1108, %v1181
      %v1198 = vmul.f32 %v1110, %v1182
      %v1199 = vmul.f32 %v1112, %v1183
      %v1200 = vmul.f32 %v1114, %v1184
      %v1201 = vmul.f32 %v1116, %v1185
      %v1202 = vmul.f32 %v1118, %v1186
      %v1203 = vmul.f32 %v1120, %v1187
      %v1204 = vmul.f32 %v1122, %v1188
      %v1205 = vmul.f32 %v1124, %v1189
      %v1206 = vmul.f32 %v1126, %v1190
      %v1207 = vpack.c.bf16 %v1191, %v1191
      %v1208 = vpack.c.bf16 %v1192, %v1192
      %v1209 = vpack.c.bf16 %v1193, %v1193
      %v1210 = vpack.c.bf16 %v1194, %v1194
      %v1211 = vpack.c.bf16 %v1195, %v1195
      %v1212 = vpack.c.bf16 %v1196, %v1196
      %v1213 = vpack.c.bf16 %v1197, %v1197
      %v1214 = vpack.c.bf16 %v1198, %v1198
      %v1215 = vpack.c.bf16 %v1199, %v1199
      %v1216 = vpack.c.bf16 %v1200, %v1200
      %v1217 = vpack.c.bf16 %v1201, %v1201
      %v1218 = vpack.c.bf16 %v1202, %v1202
      %v1219 = vpack.c.bf16 %v1203, %v1203
      %v1220 = vpack.c.bf16 %v1204, %v1204
      %v1221 = vpack.c.bf16 %v1205, %v1205
      %v1222 = vpack.c.bf16 %v1206, %v1206
      %vm1223 = vcmask 31744
      %v1225 = vsel %vm1223, %v1207, 0
      %v1228 = vsel %vm838, %v403, 0
      %1230 = vmatpush.bf16.msra.mxu0 0
      %1231 = vmatpush.bf16.msra.mxu0 0
      %1232 = vmatpush.bf16.msra.mxu0 0
      %1233 = vmatpush.bf16.msra.mxu0 0
      %1234 = vmatpush.bf16.msra.mxu0 0
      %1235 = vmatpush.bf16.msra.mxu0 0
      %1236 = vmatpush.bf16.msra.mxu0 0
      %1237 = vmatpush.bf16.msra.mxu0 %v1228
      %1238 = vmatmul.bf16.gmra.mxu0 %v1225
      %v1239 = vpop.f32.mrf.mxu0
      %v1240 = vadd.f32 0.0, %v1239
      %v1241 = vpop.f32.mrf.mxu0
      %1242 = vdwg.mxu0
      %v1244 = vsel %vm1223, %v1208, 0
      %v1247 = vsel %vm838, %v404, 0
      %1249 = vmatpush.bf16.msra.mxu0 0
      %1250 = vmatpush.bf16.msra.mxu0 0
      %1251 = vmatpush.bf16.msra.mxu0 0
      %1252 = vmatpush.bf16.msra.mxu0 0
      %1253 = vmatpush.bf16.msra.mxu0 0
      %1254 = vmatpush.bf16.msra.mxu0 0
      %1255 = vmatpush.bf16.msra.mxu0 0
      %1256 = vmatpush.bf16.msra.mxu0 %v1247
      %1257 = vmatmul.bf16.gmra.mxu0 %v1244
      %v1258 = vpop.f32.mrf.mxu0
      %v1259 = vadd.f32 0.0, %v1258
      %v1260 = vpop.f32.mrf.mxu0
      %1261 = vdwg.mxu0
      %v1263 = vsel %vm1223, %v1209, 0
      %v1266 = vsel %vm838, %v405, 0
      %1268 = vmatpush.bf16.msra.mxu0 0
      %1269 = vmatpush.bf16.msra.mxu0 0
      %1270 = vmatpush.bf16.msra.mxu0 0
      %1271 = vmatpush.bf16.msra.mxu0 0
      %1272 = vmatpush.bf16.msra.mxu0 0
      %1273 = vmatpush.bf16.msra.mxu0 0
      %1274 = vmatpush.bf16.msra.mxu0 0
      %1275 = vmatpush.bf16.msra.mxu0 %v1266
      %1276 = vmatmul.bf16.gmra.mxu0 %v1263
      %v1277 = vpop.f32.mrf.mxu0
      %v1278 = vadd.f32 0.0, %v1277
      %v1279 = vpop.f32.mrf.mxu0
      %1280 = vdwg.mxu0
      %v1282 = vsel %vm1223, %v1210, 0
      %v1285 = vsel %vm838, %v406, 0
      %1287 = vmatpush.bf16.msra.mxu0 0
      %1288 = vmatpush.bf16.msra.mxu0 0
      %1289 = vmatpush.bf16.msra.mxu0 0
      %1290 = vmatpush.bf16.msra.mxu0 0
      %1291 = vmatpush.bf16.msra.mxu0 0
      %1292 = vmatpush.bf16.msra.mxu0 0
      %1293 = vmatpush.bf16.msra.mxu0 0
      %1294 = vmatpush.bf16.msra.mxu0 %v1285
      %1295 = vmatmul.bf16.gmra.mxu0 %v1282
      %v1296 = vpop.f32.mrf.mxu0
      %v1297 = vadd.f32 0.0, %v1296
      %v1298 = vpop.f32.mrf.mxu0
      %1299 = vdwg.mxu0
      %v1301 = vsel %vm1223, %v1211, 0
      %v1304 = vsel %vm838, %v407, 0
      %1306 = vmatpush.bf16.msra.mxu0 0
      %1307 = vmatpush.bf16.msra.mxu0 0
      %1308 = vmatpush.bf16.msra.mxu0 0
      %1309 = vmatpush.bf16.msra.mxu0 0
      %1310 = vmatpush.bf16.msra.mxu0 0
      %1311 = vmatpush.bf16.msra.mxu0 0
      %1312 = vmatpush.bf16.msra.mxu0 0
      %1313 = vmatpush.bf16.msra.mxu0 %v1304
      %1314 = vmatmul.bf16.gmra.mxu0 %v1301
      %v1315 = vpop.f32.mrf.mxu0
      %v1316 = vadd.f32 0.0, %v1315
      %v1317 = vpop.f32.mrf.mxu0
      %1318 = vdwg.mxu0
      %v1320 = vsel %vm1223, %v1212, 0
      %v1323 = vsel %vm838, %v408, 0
      %1325 = vmatpush.bf16.msra.mxu0 0
      %1326 = vmatpush.bf16.msra.mxu0 0
      %1327 = vmatpush.bf16.msra.mxu0 0
      %1328 = vmatpush.bf16.msra.mxu0 0
      %1329 = vmatpush.bf16.msra.mxu0 0
      %1330 = vmatpush.bf16.msra.mxu0 0
      %1331 = vmatpush.bf16.msra.mxu0 0
      %1332 = vmatpush.bf16.msra.mxu0 %v1323
      %1333 = vmatmul.bf16.gmra.mxu0 %v1320
      %v1334 = vpop.f32.mrf.mxu0
      %v1335 = vadd.f32 0.0, %v1334
      %v1336 = vpop.f32.mrf.mxu0
      %1337 = vdwg.mxu0
      %v1339 = vsel %vm1223, %v1213, 0
      %v1342 = vsel %vm838, %v409, 0
      %1344 = vmatpush.bf16.msra.mxu0 0
      %1345 = vmatpush.bf16.msra.mxu0 0
      %1346 = vmatpush.bf16.msra.mxu0 0
      %1347 = vmatpush.bf16.msra.mxu0 0
      %1348 = vmatpush.bf16.msra.mxu0 0
      %1349 = vmatpush.bf16.msra.mxu0 0
      %1350 = vmatpush.bf16.msra.mxu0 0
      %1351 = vmatpush.bf16.msra.mxu0 %v1342
      %1352 = vmatmul.bf16.gmra.mxu0 %v1339
      %v1353 = vpop.f32.mrf.mxu0
      %v1354 = vadd.f32 0.0, %v1353
      %v1355 = vpop.f32.mrf.mxu0
      %1356 = vdwg.mxu0
      %v1358 = vsel %vm1223, %v1214, 0
      %v1361 = vsel %vm838, %v410, 0
      %1363 = vmatpush.bf16.msra.mxu0 0
      %1364 = vmatpush.bf16.msra.mxu0 0
      %1365 = vmatpush.bf16.msra.mxu0 0
      %1366 = vmatpush.bf16.msra.mxu0 0
      %1367 = vmatpush.bf16.msra.mxu0 0
      %1368 = vmatpush.bf16.msra.mxu0 0
      %1369 = vmatpush.bf16.msra.mxu0 0
      %1370 = vmatpush.bf16.msra.mxu0 %v1361
      %1371 = vmatmul.bf16.gmra.mxu0 %v1358
      %v1372 = vpop.f32.mrf.mxu0
      %v1373 = vadd.f32 0.0, %v1372
      %v1374 = vpop.f32.mrf.mxu0
      %1375 = vdwg.mxu0
      %v1377 = vsel %vm1223, %v1215, 0
      %v1380 = vsel %vm838, %v411, 0
      %1382 = vmatpush.bf16.msra.mxu0 0
      %1383 = vmatpush.bf16.msra.mxu0 0
      %1384 = vmatpush.bf16.msra.mxu0 0
      %1385 = vmatpush.bf16.msra.mxu0 0
      %1386 = vmatpush.bf16.msra.mxu0 0
      %1387 = vmatpush.bf16.msra.mxu0 0
      %1388 = vmatpush.bf16.msra.mxu0 0
      %1389 = vmatpush.bf16.msra.mxu0 %v1380
      %1390 = vmatmul.bf16.gmra.mxu0 %v1377
      %v1391 = vpop.f32.mrf.mxu0
      %v1392 = vadd.f32 0.0, %v1391
      %v1393 = vpop.f32.mrf.mxu0
      %1394 = vdwg.mxu0
      %v1396 = vsel %vm1223, %v1216, 0
      %v1399 = vsel %vm838, %v412, 0
      %1401 = vmatpush.bf16.msra.mxu0 0
      %1402 = vmatpush.bf16.msra.mxu0 0
      %1403 = vmatpush.bf16.msra.mxu0 0
      %1404 = vmatpush.bf16.msra.mxu0 0
      %1405 = vmatpush.bf16.msra.mxu0 0
      %1406 = vmatpush.bf16.msra.mxu0 0
      %1407 = vmatpush.bf16.msra.mxu0 0
      %1408 = vmatpush.bf16.msra.mxu0 %v1399
      %1409 = vmatmul.bf16.gmra.mxu0 %v1396
      %v1410 = vpop.f32.mrf.mxu0
      %v1411 = vadd.f32 0.0, %v1410
      %v1412 = vpop.f32.mrf.mxu0
      %1413 = vdwg.mxu0
      %v1415 = vsel %vm1223, %v1217, 0
      %v1418 = vsel %vm838, %v413, 0
      %1420 = vmatpush.bf16.msra.mxu0 0
      %1421 = vmatpush.bf16.msra.mxu0 0
      %1422 = vmatpush.bf16.msra.mxu0 0
      %1423 = vmatpush.bf16.msra.mxu0 0
      %1424 = vmatpush.bf16.msra.mxu0 0
      %1425 = vmatpush.bf16.msra.mxu0 0
      %1426 = vmatpush.bf16.msra.mxu0 0
      %1427 = vmatpush.bf16.msra.mxu0 %v1418
      %1428 = vmatmul.bf16.gmra.mxu0 %v1415
      %v1429 = vpop.f32.mrf.mxu0
      %v1430 = vadd.f32 0.0, %v1429
      %v1431 = vpop.f32.mrf.mxu0
      %1432 = vdwg.mxu0
      %v1434 = vsel %vm1223, %v1218, 0
      %v1437 = vsel %vm838, %v414, 0
      %1439 = vmatpush.bf16.msra.mxu0 0
      %1440 = vmatpush.bf16.msra.mxu0 0
      %1441 = vmatpush.bf16.msra.mxu0 0
      %1442 = vmatpush.bf16.msra.mxu0 0
      %1443 = vmatpush.bf16.msra.mxu0 0
      %1444 = vmatpush.bf16.msra.mxu0 0
      %1445 = vmatpush.bf16.msra.mxu0 0
      %1446 = vmatpush.bf16.msra.mxu0 %v1437
      %1447 = vmatmul.bf16.gmra.mxu0 %v1434
      %v1448 = vpop.f32.mrf.mxu0
      %v1449 = vadd.f32 0.0, %v1448
      %v1450 = vpop.f32.mrf.mxu0
      %1451 = vdwg.mxu0
      %v1453 = vsel %vm1223, %v1219, 0
      %v1456 = vsel %vm838, %v415, 0
      %1458 = vmatpush.bf16.msra.mxu0 0
      %1459 = vmatpush.bf16.msra.mxu0 0
      %1460 = vmatpush.bf16.msra.mxu0 0
      %1461 = vmatpush.bf16.msra.mxu0 0
      %1462 = vmatpush.bf16.msra.mxu0 0
      %1463 = vmatpush.bf16.msra.mxu0 0
      %1464 = vmatpush.bf16.msra.mxu0 0
      %1465 = vmatpush.bf16.msra.mxu0 %v1456
      %1466 = vmatmul.bf16.gmra.mxu0 %v1453
      %v1467 = vpop.f32.mrf.mxu0
      %v1468 = vadd.f32 0.0, %v1467
      %v1469 = vpop.f32.mrf.mxu0
      %1470 = vdwg.mxu0
      %v1472 = vsel %vm1223, %v1220, 0
      %v1475 = vsel %vm838, %v416, 0
      %1477 = vmatpush.bf16.msra.mxu0 0
      %1478 = vmatpush.bf16.msra.mxu0 0
      %1479 = vmatpush.bf16.msra.mxu0 0
      %1480 = vmatpush.bf16.msra.mxu0 0
      %1481 = vmatpush.bf16.msra.mxu0 0
      %1482 = vmatpush.bf16.msra.mxu0 0
      %1483 = vmatpush.bf16.msra.mxu0 0
      %1484 = vmatpush.bf16.msra.mxu0 %v1475
      %1485 = vmatmul.bf16.gmra.mxu0 %v1472
      %v1486 = vpop.f32.mrf.mxu0
      %v1487 = vadd.f32 0.0, %v1486
      %v1488 = vpop.f32.mrf.mxu0
      %1489 = vdwg.mxu0
      %v1491 = vsel %vm1223, %v1221, 0
      %v1494 = vsel %vm838, %v417, 0
      %1496 = vmatpush.bf16.msra.mxu0 0
      %1497 = vmatpush.bf16.msra.mxu0 0
      %1498 = vmatpush.bf16.msra.mxu0 0
      %1499 = vmatpush.bf16.msra.mxu0 0
      %1500 = vmatpush.bf16.msra.mxu0 0
      %1501 = vmatpush.bf16.msra.mxu0 0
      %1502 = vmatpush.bf16.msra.mxu0 0
      %1503 = vmatpush.bf16.msra.mxu0 %v1494
      %1504 = vmatmul.bf16.gmra.mxu0 %v1491
      %v1505 = vpop.f32.mrf.mxu0
      %v1506 = vadd.f32 0.0, %v1505
      %v1507 = vpop.f32.mrf.mxu0
      %1508 = vdwg.mxu0
      %v1510 = vsel %vm1223, %v1222, 0
      %v1513 = vsel %vm838, %v418, 0
      %1515 = vmatpush.bf16.msra.mxu0 0
      %1516 = vmatpush.bf16.msra.mxu0 0
      %1517 = vmatpush.bf16.msra.mxu0 0
      %1518 = vmatpush.bf16.msra.mxu0 0
      %1519 = vmatpush.bf16.msra.mxu0 0
      %1520 = vmatpush.bf16.msra.mxu0 0
      %1521 = vmatpush.bf16.msra.mxu0 0
      %1522 = vmatpush.bf16.msra.mxu0 %v1513
      %1523 = vmatmul.bf16.gmra.mxu0 %v1510
      %v1524 = vpop.f32.mrf.mxu0
      %v1525 = vadd.f32 0.0, %v1524
      %v1526 = vpop.f32.mrf.mxu0
      %1527 = vdwg.mxu0
      %vm1528 = vcmask 125952
      %1529 = vst.msk [vmem:[%s368] sm:$0xf] %vm1528, %v1240
      %1530 = vst.msk [vmem:[%s368 + $0x4] sm:$0xf] %vm1528, %v1259
      %1531 = vst.msk [vmem:[%s368 + $0x8] sm:$0xf] %vm1528, %v1278
      %1532 = vst.msk [vmem:[%s368 + $0xc] sm:$0xf] %vm1528, %v1297
      %1533 = vst.msk [vmem:[%s368 + $0x10] sm:$0xf] %vm1528, %v1316
      %1534 = vst.msk [vmem:[%s368 + $0x14] sm:$0xf] %vm1528, %v1335
      %1535 = vst.msk [vmem:[%s368 + $0x18] sm:$0xf] %vm1528, %v1354
      %1536 = vst.msk [vmem:[%s368 + $0x1c] sm:$0xf] %vm1528, %v1373
      %1537 = vst.msk [vmem:[%s368 + $0x20] sm:$0xf] %vm1528, %v1392
      %1538 = vst.msk [vmem:[%s368 + $0x24] sm:$0xf] %vm1528, %v1411
      %1539 = vst.msk [vmem:[%s368 + $0x28] sm:$0xf] %vm1528, %v1430
      %1540 = vst.msk [vmem:[%s368 + $0x2c] sm:$0xf] %vm1528, %v1449
      %1541 = vst.msk [vmem:[%s368 + $0x30] sm:$0xf] %vm1528, %v1468
      %1542 = vst.msk [vmem:[%s368 + $0x34] sm:$0xf] %vm1528, %v1487
      %1543 = vst.msk [vmem:[%s368 + $0x38] sm:$0xf] %vm1528, %v1506
      %1544 = vst.msk [vmem:[%s368 + $0x3c] sm:$0xf] %vm1528, %v1525
      %s1545 = smul.u32 16, %s18
      %p1546 = scmp.lt.s32.totalorder %s1545, 31
      %s1547 = scalar_select %p1546, %s1545, 31
      %s1548 = smul.addr %s1547, 4
      %s1549 = scalar_lea.vmem %s7, %s1548
      // Predicated region
      $region49: #{mhr_medseg_forward.21} parent=47 // pred_check
        %p1550 = pneg %p208
      $region50: #{mhr_medseg_forward.21} parent=47 // pred_check_branch
        %1552 = sbr.rel (%p1550) target = $region52
      $region51: #{mhr_medseg_forward.21} parent=47 // pred_region
        %s1553 = smul.u32 16, %s18
      $region52: #{mhr_medseg_forward.21} parent=47 // pred_fallthru
        _
    $region48: #{mhr_medseg_forward.21} parent=5 // pred_fallthru
      _
    %p1554 = scmp.le.s32.totalorder 2, %s13
    // Predicated region
    $region53: #{mhr_medseg_forward.21} parent=5 // pred_check
      %p1555 = pneg %p1554
    $region54: #{mhr_medseg_forward.21} parent=5 // pred_check_branch
      %1557 = sbr.rel (%p1555) target = $region56
    $region55: #{mhr_medseg_forward.21} parent=5 // pred_region
      %s1558 = ssub.s32 %s13, 2
      // Predicated region
      $region57: #{mhr_medseg_forward.21} parent=55 // pred_check
        %p1559 = pneg %p214
      $region58: #{mhr_medseg_forward.21} parent=55 // pred_check_branch
        %1561 = sbr.rel (%p1559) target = $region60
      $region59: #{mhr_medseg_forward.21} parent=55 // pred_region
        %s1562 = smul.u32 16, %s19
        %p1563 = scmp.lt.s32.totalorder %s1562, 31
        %s1564 = scalar_select %p1563, %s1562, 31
        %s1565 = smul.addr %s1564, 4
        %s1566 = scalar_lea.vmem %s7, %s1565
      $region60: #{mhr_medseg_forward.21} parent=55 // pred_fallthru
        _
    $region56: #{mhr_medseg_forward.21} parent=5 // pred_fallthru
      _
  $region6: #{mhr_medseg_forward.21} parent=0 // loop_footer
    %s17 = sadd.s32 1, %s13
  $region7: #{mhr_medseg_forward.21} parent=0 // loop_footer_branch
    %12 = sbr.rel target = $region3
  $region8: #{mhr_medseg_forward.21} parent=0 // loop_exit
    _

// kernel: mhr_medseg_forward.23
$region0: #{mhr_medseg_forward.23}
  #allocation0 [shape = 'u32[]', space=smem, size = 0x4, offset = 0x4, fixed_abs, tag = 'smem constant byte address 0x4 - core index']
  #allocation1 [shape = 'u32[72,128]{1,0:T(1,128)}', space=vmem, size = 0x9000, scoped, tag = 'internal scratch']
  %s0 = inlined_call_operand.vmem [shape: f32[32,64], index: 0, kind: input, shape index: {}]
  %s1 = inlined_call_operand.vmem [shape: f32[1,64], index: 1, kind: input, shape index: {}]
  %s2 = inlined_call_operand.vmem [shape: f32[1,64], index: 2, kind: input, shape index: {}]
  %s3 = inlined_call_operand.vmem [shape: bf16[64,256], index: 3, kind: input, shape index: {}]
  %s4 = inlined_call_operand.vmem [shape: f32[1,256], index: 4, kind: input, shape index: {}]
  %s5 = inlined_call_operand.vmem [shape: bf16[256,64], index: 5, kind: input, shape index: {}]
  %s6 = inlined_call_operand.vmem [shape: f32[1,64], index: 6, kind: input, shape index: {}]
  %s7 = inlined_call_operand.vmem [shape: f32[32,64], index: 7, kind: output, shape index: {}]
  %s8 = sld [smem:[#allocation0]]
  $region61: #{mhr_medseg_forward.23} parent=0
    _
  %s10 = ssub.s32 1, %s8
  %s11 = scalar_select 0, %s10, %s8
  loop: start=0, step=1, limit=4
  $region2: #{mhr_medseg_forward.23} parent=0 // loop_pre_header
    _
  $region3: #{mhr_medseg_forward.23} parent=0 // loop_header
    %s13 = sphi 0, %s17
    %p14 = scmp.ge.s32.totalorder %s13, 4
    %s23 = sphi 0, %s25
    %s26 = sphi 0, %s23
    %s27 = sphi 0, %s26
    %s43 = sphi 0, %s27
    %s47 = sphi 0, %s47
    %s49 = sphi 0, %s47
    %s50 = sphi 0, %s49
    %s64 = sphi 0, %s50
    %s68 = sphi 0, %s68
    %s70 = sphi 0, %s68
    %s71 = sphi 0, %s70
    %s85 = sphi 0, %s71
    %s89 = sphi 0, %s89
    %s91 = sphi 0, %s89
    %s92 = sphi 0, %s91
    %s106 = sphi 0, %s92
    %s110 = sphi 0, %s110
    %s112 = sphi 0, %s110
    %s113 = sphi 0, %s112
    %s127 = sphi 0, %s113
    %s131 = sphi 0, %s131
    %s133 = sphi 0, %s131
    %s134 = sphi 0, %s133
    %s148 = sphi 0, %s134
    %s152 = sphi 0, %s152
    %s154 = sphi 0, %s152
    %s155 = sphi 0, %s154
    %s169 = sphi 0, %s155
    %s175 = sphi 0, %s177
    %s178 = sphi 0, %s175
    %s179 = sphi 0, %s178
    %s195 = sphi 0, %s179
  $region4: #{mhr_medseg_forward.23} parent=0 // loop_header_branch
    %16 = sbr.rel (%p14) target = $region8
  $region5: #{mhr_medseg_forward.23} parent=0 // loop_body
    %s18 = ssub.s32 %s13, 1
    %s19 = ssub.s32 %s13, 2
    %s20 = sadd.s32 %s13, 1
    %s21 = ssub.s32 %s13, %s20
    %p22 = scmp.eq.s32.totalorder %s21, 0
    %s24 = sadd.s32 %s23, 1
    %s25 = scalar_select %p22, %s23, %s24
    %p28 = pneg %p22
    %p29 = scmp.eq.s32.totalorder %s13, 1
    %p30 = por %p28, %p29
    %p31 = scmp.ne.s32.totalorder %s23, %s26
    %p32 = scmp.eq.s32.totalorder %s13, 0
    %p33 = por %p31, %p32
    %p34 = scmp.ne.s32.totalorder %s23, %s26
    %p35 = scmp.eq.s32.totalorder %s18, 1
    %p36 = por %p34, %p35
    %p37 = scmp.ne.s32.totalorder %s26, %s27
    %p38 = scmp.eq.s32.totalorder %s18, 0
    %p39 = por %p37, %p38
    %p40 = scmp.ne.s32.totalorder %s26, %s27
    %p41 = scmp.eq.s32.totalorder %s19, 1
    %p42 = por %p40, %p41
    %p44 = scmp.ne.s32.totalorder %s27, %s43
    %p45 = scmp.eq.s32.totalorder %s19, 0
    %p46 = por %p44, %p45
    %s48 = sadd.s32 %s47, 1
    %p51 = scmp.eq.s32.totalorder %s13, 1
    %p52 = scmp.ne.s32.totalorder %s47, %s49
    %p53 = scmp.eq.s32.totalorder %s13, 0
    %p54 = por %p52, %p53
    %p55 = scmp.ne.s32.totalorder %s47, %s49
    %p56 = scmp.eq.s32.totalorder %s18, 1
    %p57 = por %p55, %p56
    %p58 = scmp.ne.s32.totalorder %s49, %s50
    %p59 = scmp.eq.s32.totalorder %s18, 0
    %p60 = por %p58, %p59
    %p61 = scmp.ne.s32.totalorder %s49, %s50
    %p62 = scmp.eq.s32.totalorder %s19, 1
    %p63 = por %p61, %p62
    %p65 = scmp.ne.s32.totalorder %s50, %s64
    %p66 = scmp.eq.s32.totalorder %s19, 0
    %p67 = por %p65, %p66
    %s69 = sadd.s32 %s68, 1
    %p72 = scmp.eq.s32.totalorder %s13, 1
    %p73 = scmp.ne.s32.totalorder %s68, %s70
    %p74 = scmp.eq.s32.totalorder %s13, 0
    %p75 = por %p73, %p74
    %p76 = scmp.ne.s32.totalorder %s68, %s70
    %p77 = scmp.eq.s32.totalorder %s18, 1
    %p78 = por %p76, %p77
    %p79 = scmp.ne.s32.totalorder %s70, %s71
    %p80 = scmp.eq.s32.totalorder %s18, 0
    %p81 = por %p79, %p80
    %p82 = scmp.ne.s32.totalorder %s70, %s71
    %p83 = scmp.eq.s32.totalorder %s19, 1
    %p84 = por %p82, %p83
    %p86 = scmp.ne.s32.totalorder %s71, %s85
    %p87 = scmp.eq.s32.totalorder %s19, 0
    %p88 = por %p86, %p87
    %s90 = sadd.s32 %s89, 1
    %p93 = scmp.eq.s32.totalorder %s13, 1
    %p94 = scmp.ne.s32.totalorder %s89, %s91
    %p95 = scmp.eq.s32.totalorder %s13, 0
    %p96 = por %p94, %p95
    %p97 = scmp.ne.s32.totalorder %s89, %s91
    %p98 = scmp.eq.s32.totalorder %s18, 1
    %p99 = por %p97, %p98
    %p100 = scmp.ne.s32.totalorder %s91, %s92
    %p101 = scmp.eq.s32.totalorder %s18, 0
    %p102 = por %p100, %p101
    %p103 = scmp.ne.s32.totalorder %s91, %s92
    %p104 = scmp.eq.s32.totalorder %s19, 1
    %p105 = por %p103, %p104
    %p107 = scmp.ne.s32.totalorder %s92, %s106
    %p108 = scmp.eq.s32.totalorder %s19, 0
    %p109 = por %p107, %p108
    %s111 = sadd.s32 %s110, 1
    %p114 = scmp.eq.s32.totalorder %s13, 1
    %p115 = scmp.ne.s32.totalorder %s110, %s112
    %p116 = scmp.eq.s32.totalorder %s13, 0
    %p117 = por %p115, %p116
    %p118 = scmp.ne.s32.totalorder %s110, %s112
    %p119 = scmp.eq.s32.totalorder %s18, 1
    %p120 = por %p118, %p119
    %p121 = scmp.ne.s32.totalorder %s112, %s113
    %p122 = scmp.eq.s32.totalorder %s18, 0
    %p123 = por %p121, %p122
    %p124 = scmp.ne.s32.totalorder %s112, %s113
    %p125 = scmp.eq.s32.totalorder %s19, 1
    %p126 = por %p124, %p125
    %p128 = scmp.ne.s32.totalorder %s113, %s127
    %p129 = scmp.eq.s32.totalorder %s19, 0
    %p130 = por %p128, %p129
    %s132 = sadd.s32 %s131, 1
    %p135 = scmp.eq.s32.totalorder %s13, 1
    %p136 = scmp.ne.s32.totalorder %s131, %s133
    %p137 = scmp.eq.s32.totalorder %s13, 0
    %p138 = por %p136, %p137
    %p139 = scmp.ne.s32.totalorder %s131, %s133
    %p140 = scmp.eq.s32.totalorder %s18, 1
    %p141 = por %p139, %p140
    %p142 = scmp.ne.s32.totalorder %s133, %s134
    %p143 = scmp.eq.s32.totalorder %s18, 0
    %p144 = por %p142, %p143
    %p145 = scmp.ne.s32.totalorder %s133, %s134
    %p146 = scmp.eq.s32.totalorder %s19, 1
    %p147 = por %p145, %p146
    %p149 = scmp.ne.s32.totalorder %s134, %s148
    %p150 = scmp.eq.s32.totalorder %s19, 0
    %p151 = por %p149, %p150
    %s153 = sadd.s32 %s152, 1
    %p156 = scmp.eq.s32.totalorder %s13, 1
    %p157 = scmp.ne.s32.totalorder %s152, %s154
    %p158 = scmp.eq.s32.totalorder %s13, 0
    %p159 = por %p157, %p158
    %p160 = scmp.ne.s32.totalorder %s152, %s154
    %p161 = scmp.eq.s32.totalorder %s18, 1
    %p162 = por %p160, %p161
    %p163 = scmp.ne.s32.totalorder %s154, %s155
    %p164 = scmp.eq.s32.totalorder %s18, 0
    %p165 = por %p163, %p164
    %p166 = scmp.ne.s32.totalorder %s154, %s155
    %p167 = scmp.eq.s32.totalorder %s19, 1
    %p168 = por %p166, %p167
    %p170 = scmp.ne.s32.totalorder %s155, %s169
    %p171 = scmp.eq.s32.totalorder %s19, 0
    %p172 = por %p170, %p171
    %s173 = ssub.s32 %s13, %s20
    %p174 = scmp.eq.s32.totalorder %s173, 0
    %s176 = sadd.s32 %s175, 1
    %s177 = scalar_select %p174, %s175, %s176
    %p180 = pneg %p174
    %p181 = scmp.eq.s32.totalorder %s13, 1
    %p182 = por %p180, %p181
    %p183 = scmp.ne.s32.totalorder %s175, %s178
    %p184 = scmp.eq.s32.totalorder %s13, 0
    %p185 = por %p183, %p184
    %p186 = scmp.ne.s32.totalorder %s175, %s178
    %p187 = scmp.eq.s32.totalorder %s18, 1
    %p188 = por %p186, %p187
    %p189 = scmp.ne.s32.totalorder %s178, %s179
    %p190 = scmp.eq.s32.totalorder %s18, 0
    %p191 = por %p189, %p190
    %p192 = scmp.ne.s32.totalorder %s178, %s179
    %p193 = scmp.eq.s32.totalorder %s19, 1
    %p194 = por %p192, %p193
    %p196 = scmp.ne.s32.totalorder %s179, %s195
    %p197 = scmp.eq.s32.totalorder %s19, 0
    %p198 = por %p196, %p197
    %p199 = scmp.le.s32.totalorder 1, %s13
    %p200 = scmp.lt.s32.totalorder %s13, 3
    %p201 = pnand %p199, %p200
    %p202 = pneg %p201
    // Predicated region
    $region9: #{mhr_medseg_forward.23} parent=5 // pred_check
      _
    $region10: #{mhr_medseg_forward.23} parent=5 // pred_check_branch
      %204 = sbr.rel (%p201) target = $region12
    $region11: #{mhr_medseg_forward.23} parent=5 // pred_region
      %s205 = ssub.s32 %s13, 1
      // Predicated region
      $region13: #{mhr_medseg_forward.23} parent=11 // pred_check
        %p206 = pneg %p60
      $region14: #{mhr_medseg_forward.23} parent=11 // pred_check_branch
        %208 = sbr.rel (%p206) target = $region16
      $region15: #{mhr_medseg_forward.23} parent=11 // pred_region
        _
      $region16: #{mhr_medseg_forward.23} parent=11 // pred_fallthru
        _
      // Predicated region
      $region17: #{mhr_medseg_forward.23} parent=11 // pred_check
        %p209 = pneg %p81
      $region18: #{mhr_medseg_forward.23} parent=11 // pred_check_branch
        %211 = sbr.rel (%p209) target = $region20
      $region19: #{mhr_medseg_forward.23} parent=11 // pred_region
        _
      $region20: #{mhr_medseg_forward.23} parent=11 // pred_fallthru
        _
      // Predicated region
      $region21: #{mhr_medseg_forward.23} parent=11 // pred_check
        %p212 = pneg %p102
      $region22: #{mhr_medseg_forward.23} parent=11 // pred_check_branch
        %214 = sbr.rel (%p212) target = $region24
      $region23: #{mhr_medseg_forward.23} parent=11 // pred_region
        _
      $region24: #{mhr_medseg_forward.23} parent=11 // pred_fallthru
        _
      // Predicated region
      $region25: #{mhr_medseg_forward.23} parent=11 // pred_check
        %p215 = pneg %p123
      $region26: #{mhr_medseg_forward.23} parent=11 // pred_check_branch
        %217 = sbr.rel (%p215) target = $region28
      $region27: #{mhr_medseg_forward.23} parent=11 // pred_region
        _
      $region28: #{mhr_medseg_forward.23} parent=11 // pred_fallthru
        _
      // Predicated region
      $region29: #{mhr_medseg_forward.23} parent=11 // pred_check
        %p218 = pneg %p144
      $region30: #{mhr_medseg_forward.23} parent=11 // pred_check_branch
        %220 = sbr.rel (%p218) target = $region32
      $region31: #{mhr_medseg_forward.23} parent=11 // pred_region
        _
      $region32: #{mhr_medseg_forward.23} parent=11 // pred_fallthru
        _
      // Predicated region
      $region33: #{mhr_medseg_forward.23} parent=11 // pred_check
        %p221 = pneg %p165
      $region34: #{mhr_medseg_forward.23} parent=11 // pred_check_branch
        %223 = sbr.rel (%p221) target = $region36
      $region35: #{mhr_medseg_forward.23} parent=11 // pred_region
        _
      $region36: #{mhr_medseg_forward.23} parent=11 // pred_fallthru
        _
    $region12: #{mhr_medseg_forward.23} parent=5 // pred_fallthru
      _
    %p224 = scmp.lt.s32.totalorder %s13, 2
    // Predicated region
    $region37: #{mhr_medseg_forward.23} parent=5 // pred_check
      %p225 = pneg %p224
    $region38: #{mhr_medseg_forward.23} parent=5 // pred_check_branch
      %227 = sbr.rel (%p225) target = $region40
    $region39: #{mhr_medseg_forward.23} parent=5 // pred_region
      // Predicated region
      $region41: #{mhr_medseg_forward.23} parent=39 // pred_check
        %p228 = pneg %p33
      $region42: #{mhr_medseg_forward.23} parent=39 // pred_check_branch
        %230 = sbr.rel (%p228) target = $region44
      $region43: #{mhr_medseg_forward.23} parent=39 // pred_region
        %s231 = smul.u32 2, %s13
        %p232 = scmp.lt.s32.totalorder %s231, 3
        %s233 = scalar_select %p232, %s231, 3
        %s234 = smul.addr %s233, 8
        %s235 = scalar_lea.vmem %s0, %s234
        %s236 = smul.u32 2, %s13
      $region44: #{mhr_medseg_forward.23} parent=39 // pred_fallthru
        _
    $region40: #{mhr_medseg_forward.23} parent=5 // pred_fallthru
      _
    %p237 = scmp.le.s32.totalorder 1, %s13
    %p238 = scmp.lt.s32.totalorder %s13, 3
    %p239 = pnand %p237, %p238
    %p240 = pneg %p239
    // Predicated region
    $region45: #{mhr_medseg_forward.23} parent=5 // pred_check
      _
    $region46: #{mhr_medseg_forward.23} parent=5 // pred_check_branch
      %242 = sbr.rel (%p239) target = $region48
    $region47: #{mhr_medseg_forward.23} parent=5 // pred_region
      %s243 = ssub.s32 %s13, 1
      %s244 = smul.u32 2, %s18
      %p245 = scmp.lt.s32.totalorder %s244, 3
      %s246 = scalar_select %p245, %s244, 3
      %s247 = smul.addr %s246, 8
      %s248 = scalar_lea.vmem %s0, %s247
      %p249 = pneg %p39
      %p250 = pneg %p36
      %p251 = pneg %p60
      %p252 = pneg %p57
      %p253 = pneg %p81
      %p254 = pneg %p78
      %p255 = pneg %p102
      %p256 = pneg %p99
      %p257 = pneg %p123
      %p258 = pneg %p120
      %p259 = pneg %p144
      %p260 = pneg %p141
      %p261 = pneg %p165
      %p262 = pneg %p162
      %p263 = pneg %p191
      %p264 = pneg %p188
      %s265 = smul.u32 2, %s18
      %p266 = scmp.lt.s32.totalorder %s265, 3
      %s267 = scalar_select %p266, %s265, 3
      %s268 = smul.addr %s267, 8
      %s269 = scalar_lea.vmem %s7, %s268
      %s270 = smul.u32 2, %s18
      %p271 = scmp.lt.s32.totalorder %s270, 3
      %s272 = scalar_select %p271, %s270, 3
      %s273 = smul.addr %s272, 8
      %s274 = scalar_lea.vmem %s0, %s273
      %s275 = smul.u32 2, %s18
      %s276 = smul.u32 2, %s18
      %p277 = scmp.lt.s32.totalorder %s276, 3
      %s278 = scalar_select %p277, %s276, 3
      %s279 = smul.addr %s278, 8
      %s280 = scalar_lea.vmem %s7, %s279
      %s281 = smul.u32 2, %s18
      %v283 = vld [vmem:[%s274] sm:$0xff]
      %v284 = vld [vmem:[%s274 + $0x8] sm:$0xff]
      %v285 = vld [vmem:[%s1] sm:$0x1]
      %v286 = vld [vmem:[%s2] sm:$0x1]
      %vm287 = vcmask 523264
      %v288 = vsel %vm287, %v283, 0.0
      %289 = vadd.xlane.f32.xlu0 %v288
      %v290 = vpop.xlane.xlu0 %289
      %v291 = vsel %vm287, %v284, 0.0
      %292 = vadd.xlane.f32.xlu0 %v291
      %v293 = vpop.xlane.xlu0 %292
      %v294 = vrcp.pop 64.0
      %v295 = vmul.f32 64.0, %v294
      %v296 = vsub.f32 1.0, %v295
      %v297 = vmul.f32 %v294, %v296
      %v298 = vadd.f32 %v294, %v297
      %vm299 = vweird.f32 %v294
      %v300 = vsel %vm299, %v294, %v298
      %v301 = vmul.f32 %v290, %v300
      %v302 = vmul.f32 %v293, %v300
      %v303 = vsub.f32 %v283, %v301
      %v304 = vsub.f32 %v284, %v302
      %v305 = vmul.f32 %v303, %v303
      %v306 = vmul.f32 %v304, %v304
      %v307 = vsel %vm287, %v305, 0.0
      %308 = vadd.xlane.f32.xlu0 %v307
      %v309 = vpop.xlane.xlu0 %308
      %v310 = vsel %vm287, %v306, 0.0
      %311 = vadd.xlane.f32.xlu0 %v310
      %v312 = vpop.xlane.xlu0 %311
      %v313 = vmul.f32 %v309, %v300
      %v314 = vmul.f32 %v312, %v300
      %v315 = vadd.f32 %v313, 1e-06
      %v316 = vadd.f32 %v314, 1e-06
      %v317 = vrsqrt.pop %v315
      %v318 = vmul.f32 %v317, %v315
      %v319 = vmul.f32 %v318, %v317
      %v320 = vmul.f32 0.5, %v319
      %v321 = vsub.f32 1.5, %v320
      %v322 = vmul.f32 %v317, %v321
      %vm323 = vweird.f32 %v315
      %vm324 = vweird.f32 %v317
      %vm325 = vmor %vm323, %vm324
      %v326 = vsel %vm325, %v317, %v322
      %v327 = vrsqrt.pop %v316
      %v328 = vmul.f32 %v327, %v316
      %v329 = vmul.f32 %v328, %v327
      %v330 = vmul.f32 0.5, %v329
      %v331 = vsub.f32 1.5, %v330
      %v332 = vmul.f32 %v327, %v331
      %vm333 = vweird.f32 %v316
      %vm334 = vweird.f32 %v327
      %vm335 = vmor %vm333, %vm334
      %v336 = vsel %vm335, %v327, %v332
      %v337 = vmul.f32 %v303, %v326
      %v338 = vmul.f32 %v304, %v336
      %v340 = vperm.slane %v285, 0
      %v342 = vmul.f32 %v337, %v340
      %v343 = vmul.f32 %v338, %v340
      %v345 = vperm.slane %v286, 0
      %v347 = vadd.f32 %v342, %v345
      %v348 = vadd.f32 %v343, %v345
      %v349 = vpack.c.bf16 %v348, %v347
      %v350 = vld [vmem:[%s3] sm:$0xff]
      %v351 = vld [vmem:[%s3 + $0x8] sm:$0xff]
      %v352 = vld [vmem:[%s3 + $0x10] sm:$0xff]
      %v353 = vld [vmem:[%s3 + $0x18] sm:$0xff]
      %v354 = vld [vmem:[%s3 + $0x20] sm:$0xff]
      %v355 = vld [vmem:[%s3 + $0x28] sm:$0xff]
      %v356 = vld [vmem:[%s3 + $0x30] sm:$0xff]
      %v357 = vld [vmem:[%s3 + $0x38] sm:$0xff]
      %v358 = vld [vmem:[%s4] sm:$0x3]
      %v360 = vperm.slane %v358, 0
      %v361 = vperm.slane %v358, 1
      %v372 = vunpack.c.l.b16 %v350
      %v373 = vunpack.c.h.b16 %v350
      %v374 = vunpack.c.l.b16 %v351
      %v375 = vunpack.c.h.b16 %v351
      %v376 = vunpack.c.l.b16 %v352
      %v377 = vunpack.c.h.b16 %v352
      %v378 = vunpack.c.l.b16 %v353
      %v379 = vunpack.c.h.b16 %v353
      %v380 = vunpack.c.l.b16 %v354
      %v381 = vunpack.c.h.b16 %v354
      %v382 = vunpack.c.l.b16 %v355
      %v383 = vunpack.c.h.b16 %v355
      %v384 = vunpack.c.l.b16 %v356
      %v385 = vunpack.c.h.b16 %v356
      %v386 = vunpack.c.l.b16 %v357
      %v387 = vunpack.c.h.b16 %v357
      %v388 = vpack.c.b16 %v374, %v372
      %v389 = vpack.c.b16 %v375, %v373
      %v390 = vpack.c.b16 %v378, %v376
      %v391 = vpack.c.b16 %v379, %v377
      %v392 = vpack.c.b16 %v382, %v380
      %v393 = vpack.c.b16 %v383, %v381
      %v394 = vpack.c.b16 %v386, %v384
      %v395 = vpack.c.b16 %v387, %v385
      %v405 = vsel %vm287, %v349, 0
      %407 = vmatpush.bf16.msra.mxu0 0
      %408 = vmatpush.bf16.msra.mxu0 0
      %409 = vmatpush.bf16.msra.mxu0 0
      %410 = vmatpush.bf16.msra.mxu0 0
      %411 = vmatpush.bf16.msra.mxu0 %v394
      %412 = vmatpush.bf16.msra.mxu0 %v392
      %413 = vmatpush.bf16.msra.mxu0 %v390
      %414 = vmatpush.bf16.msra.mxu0 %v388
      %415 = vmatmul.bf16.gmra.mxu0 %v405
      %v416 = vpop.f32.mrf.mxu0
      %v417 = vadd.f32 %v360, %v416
      %v418 = vpop.f32.mrf.mxu0
      %v419 = vadd.f32 %v360, %v418
      %420 = vdwg.mxu0
      %421 = vmatpush.bf16.msra.mxu0 0
      %422 = vmatpush.bf16.msra.mxu0 0
      %423 = vmatpush.bf16.msra.mxu0 0
      %424 = vmatpush.bf16.msra.mxu0 0
      %425 = vmatpush.bf16.msra.mxu0 %v395
      %426 = vmatpush.bf16.msra.mxu0 %v393
      %427 = vmatpush.bf16.msra.mxu0 %v391
      %428 = vmatpush.bf16.msra.mxu0 %v389
      %429 = vmatmul.bf16.gmra.mxu0 %v405
      %v430 = vpop.f32.mrf.mxu0
      %v431 = vadd.f32 %v361, %v430
      %v432 = vpop.f32.mrf.mxu0
      %v433 = vadd.f32 %v361, %v432
      %434 = vdwg.mxu0
      %v435 = vmul.f32 %v417, 0.5
      %v436 = vmul.f32 %v431, 0.5
      %v437 = vmul.f32 %v419, 0.5
      %v438 = vmul.f32 %v433, 0.5
      %v439 = vmul.f32 %v417, 0.70710677
      %v440 = vmul.f32 %v431, 0.70710677
      %v441 = vmul.f32 %v419, 0.70710677
      %v442 = vmul.f32 %v433, 0.70710677
      %v443 = vand.u32 2147483647, %v439
      %v444 = vand.u32 2147483647, %v440
      %v445 = vand.u32 2147483647, %v441
      %v446 = vand.u32 2147483647, %v442
      %v447 = vmul.f32 %v443, 0.3275911
      %v448 = vmul.f32 %v444, 0.3275911
      %v449 = vmul.f32 %v445, 0.3275911
      %v450 = vmul.f32 %v446, 0.3275911
      %v451 = vadd.f32 %v447, 1.0
      %v452 = vadd.f32 %v448, 1.0
      %v453 = vadd.f32 %v449, 1.0
      %v454 = vadd.f32 %v450, 1.0
      %v455 = vrcp.pop %v451
      %v456 = vmul.f32 %v451, %v455
      %v457 = vsub.f32 1.0, %v456
      %v458 = vmul.f32 %v455, %v457
      %v459 = vadd.f32 %v455, %v458
      %vm460 = vweird.f32 %v451
      %vm461 = vweird.f32 %v455
      %vm462 = vmor %vm460, %vm461
      %v463 = vsel %vm462, %v455, %v459
      %v464 = vand.u32 2147483647, %v451
      %vm465 = vcmp.eq.f32.partialorder %v464, 8.507059e+37
      %v466 = vand.u32 %v451, 2147483648
      %v467 = vor.u32 1.1754944e-38, %v466
      %v468 = vsel %vm465, %v467, %v463
      %v469 = vmul.f32 1.0, %v468
      %v470 = vrcp.pop %v452
      %v471 = vmul.f32 %v452, %v470
      %v472 = vsub.f32 1.0, %v471
      %v473 = vmul.f32 %v470, %v472
      %v474 = vadd.f32 %v470, %v473
      %vm475 = vweird.f32 %v452
      %vm476 = vweird.f32 %v470
      %vm477 = vmor %vm475, %vm476
      %v478 = vsel %vm477, %v470, %v474
      %v479 = vand.u32 2147483647, %v452
      %vm480 = vcmp.eq.f32.partialorder %v479, 8.507059e+37
      %v481 = vand.u32 %v452, 2147483648
      %v482 = vor.u32 1.1754944e-38, %v481
      %v483 = vsel %vm480, %v482, %v478
      %v484 = vmul.f32 1.0, %v483
      %v485 = vrcp.pop %v453
      %v486 = vmul.f32 %v453, %v485
      %v487 = vsub.f32 1.0, %v486
      %v488 = vmul.f32 %v485, %v487
      %v489 = vadd.f32 %v485, %v488
      %vm490 = vweird.f32 %v453
      %vm491 = vweird.f32 %v485
      %vm492 = vmor %vm490, %vm491
      %v493 = vsel %vm492, %v485, %v489
      %v494 = vand.u32 2147483647, %v453
      %vm495 = vcmp.eq.f32.partialorder %v494, 8.507059e+37
      %v496 = vand.u32 %v453, 2147483648
      %v497 = vor.u32 1.1754944e-38, %v496
      %v498 = vsel %vm495, %v497, %v493
      %v499 = vmul.f32 1.0, %v498
      %v500 = vrcp.pop %v454
      %v501 = vmul.f32 %v454, %v500
      %v502 = vsub.f32 1.0, %v501
      %v503 = vmul.f32 %v500, %v502
      %v504 = vadd.f32 %v500, %v503
      %vm505 = vweird.f32 %v454
      %vm506 = vweird.f32 %v500
      %vm507 = vmor %vm505, %vm506
      %v508 = vsel %vm507, %v500, %v504
      %v509 = vand.u32 2147483647, %v454
      %vm510 = vcmp.eq.f32.partialorder %v509, 8.507059e+37
      %v511 = vand.u32 %v454, 2147483648
      %v512 = vor.u32 1.1754944e-38, %v511
      %v513 = vsel %vm510, %v512, %v508
      %v514 = vmul.f32 1.0, %v513
      %v515 = vmul.f32 %v469, 1.0614054
      %v516 = vmul.f32 %v484, 1.0614054
      %v517 = vmul.f32 %v499, 1.0614054
      %v518 = vmul.f32 %v514, 1.0614054
      %v519 = vadd.f32 %v515, -1.4531521
      %v520 = vadd.f32 %v516, -1.4531521
      %v521 = vadd.f32 %v517, -1.4531521
      %v522 = vadd.f32 %v518, -1.4531521
      %v523 = vmul.f32 %v519, %v469
      %v524 = vmul.f32 %v520, %v484
      %v525 = vmul.f32 %v521, %v499
      %v526 = vmul.f32 %v522, %v514
      %v527 = vadd.f32 %v523, 1.4214138
      %v528 = vadd.f32 %v524, 1.4214138
      %v529 = vadd.f32 %v525, 1.4214138
      %v530 = vadd.f32 %v526, 1.4214138
      %v531 = vmul.f32 %v527, %v469
      %v532 = vmul.f32 %v528, %v484
      %v533 = vmul.f32 %v529, %v499
      %v534 = vmul.f32 %v530, %v514
      %v535 = vadd.f32 %v531, -0.28449672
      %v536 = vadd.f32 %v532, -0.28449672
      %v537 = vadd.f32 %v533, -0.28449672
      %v538 = vadd.f32 %v534, -0.28449672
      %v539 = vmul.f32 %v535, %v469
      %v540 = vmul.f32 %v536, %v484
      %v541 = vmul.f32 %v537, %v499
      %v542 = vmul.f32 %v538, %v514
      %v543 = vadd.f32 %v539, 0.2548296
      %v544 = vadd.f32 %v540, 0.2548296
      %v545 = vadd.f32 %v541, 0.2548296
      %v546 = vadd.f32 %v542, 0.2548296
      %v547 = vmul.f32 %v543, %v469
      %v548 = vmul.f32 %v544, %v484
      %v549 = vmul.f32 %v545, %v499
      %v550 = vmul.f32 %v546, %v514
      %v551 = vsub.f32 0.0, %v443
      %v552 = vsub.f32 0.0, %v444
      %v553 = vsub.f32 0.0, %v445
      %v554 = vsub.f32 0.0, %v446
      %v555 = vmul.f32 %v551, %v443
      %v556 = vmul.f32 %v552, %v444
      %v557 = vmul.f32 %v553, %v445
      %v558 = vmul.f32 %v554, %v446
      %v559 = vmul.f32 %v555, 1.442695
      %v560 = vpow.pop %v559
      %v561 = vmul.f32 %v556, 1.442695
      %v562 = vpow.pop %v561
      %v563 = vmul.f32 %v557, 1.442695
      %v564 = vpow.pop %v563
      %v565 = vmul.f32 %v558, 1.442695
      %v566 = vpow.pop %v565
      %v567 = vmul.f32 %v547, %v560
      %v568 = vmul.f32 %v548, %v562
      %v569 = vmul.f32 %v549, %v564
      %v570 = vmul.f32 %v550, %v566
      %v571 = vsub.f32 1.0, %v567
      %v572 = vsub.f32 1.0, %v568
      %v573 = vsub.f32 1.0, %v569
      %v574 = vsub.f32 1.0, %v570
      %vm575 = vcmp.ge.f32.partialorder %v439, 0.0
      %vm576 = vcmp.ge.f32.partialorder %v440, 0.0
      %vm577 = vcmp.ge.f32.partialorder %v441, 0.0
      %vm578 = vcmp.ge.f32.partialorder %v442, 0.0
      %v579 = vsub.f32 0.0, %v571
      %v580 = vsub.f32 0.0, %v572
      %v581 = vsub.f32 0.0, %v573
      %v582 = vsub.f32 0.0, %v574
      %v583 = vsel %vm575, %v571, %v579
      %v584 = vsel %vm576, %v572, %v580
      %v585 = vsel %vm577, %v573, %v581
      %v586 = vsel %vm578, %v574, %v582
      %v587 = vadd.f32 %v583, 1.0
      %v588 = vadd.f32 %v584, 1.0
      %v589 = vadd.f32 %v585, 1.0
      %v590 = vadd.f32 %v586, 1.0
      %v591 = vmul.f32 %v435, %v587
      %v592 = vmul.f32 %v436, %v588
      %v593 = vmul.f32 %v437, %v589
      %v594 = vmul.f32 %v438, %v590
      %v595 = vpack.c.bf16 %v593, %v591
      %v596 = vpack.c.bf16 %v594, %v592
      %v597 = vld [vmem:[%s5] sm:$0xf]
      %v598 = vld [vmem:[%s5 + $0x4] sm:$0xf]
      %v599 = vld [vmem:[%s5 + $0x8] sm:$0xf]
      %v600 = vld [vmem:[%s5 + $0xc] sm:$0xf]
      %v601 = vld [vmem:[%s5 + $0x10] sm:$0xf]
      %v602 = vld [vmem:[%s5 + $0x14] sm:$0xf]
      %v603 = vld [vmem:[%s5 + $0x18] sm:$0xf]
      %v604 = vld [vmem:[%s5 + $0x1c] sm:$0xf]
      %v605 = vld [vmem:[%s5 + $0x20] sm:$0xf]
      %v606 = vld [vmem:[%s5 + $0x24] sm:$0xf]
      %v607 = vld [vmem:[%s5 + $0x28] sm:$0xf]
      %v608 = vld [vmem:[%s5 + $0x2c] sm:$0xf]
      %v609 = vld [vmem:[%s5 + $0x30] sm:$0xf]
      %v610 = vld [vmem:[%s5 + $0x34] sm:$0xf]
      %v611 = vld [vmem:[%s5 + $0x38] sm:$0xf]
      %v612 = vld [vmem:[%s5 + $0x3c] sm:$0xf]
      %v613 = vld [vmem:[%s5 + $0x40] sm:$0xf]
      %v614 = vld [vmem:[%s5 + $0x44] sm:$0xf]
      %v615 = vld [vmem:[%s5 + $0x48] sm:$0xf]
      %v616 = vld [vmem:[%s5 + $0x4c] sm:$0xf]
      %v617 = vld [vmem:[%s5 + $0x50] sm:$0xf]
      %v618 = vld [vmem:[%s5 + $0x54] sm:$0xf]
      %v619 = vld [vmem:[%s5 + $0x58] sm:$0xf]
      %v620 = vld [vmem:[%s5 + $0x5c] sm:$0xf]
      %v621 = vld [vmem:[%s5 + $0x60] sm:$0xf]
      %v622 = vld [vmem:[%s5 + $0x64] sm:$0xf]
      %v623 = vld [vmem:[%s5 + $0x68] sm:$0xf]
      %v624 = vld [vmem:[%s5 + $0x6c] sm:$0xf]
      %v625 = vld [vmem:[%s5 + $0x70] sm:$0xf]
      %v626 = vld [vmem:[%s5 + $0x74] sm:$0xf]
      %v627 = vld [vmem:[%s5 + $0x78] sm:$0xf]
      %v628 = vld [vmem:[%s5 + $0x7c] sm:$0xf]
      %v629 = vld [vmem:[%s6] sm:$0x1]
      %v631 = vperm.slane %v629, 0
      %v665 = vunpack.c.l.b16 %v597
      %v666 = vunpack.c.l.b16 %v598
      %v667 = vunpack.c.l.b16 %v599
      %v668 = vunpack.c.l.b16 %v600
      %v669 = vunpack.c.l.b16 %v601
      %v670 = vunpack.c.l.b16 %v602
      %v671 = vunpack.c.l.b16 %v603
      %v672 = vunpack.c.l.b16 %v604
      %v673 = vunpack.c.l.b16 %v605
      %v674 = vunpack.c.l.b16 %v606
      %v675 = vunpack.c.l.b16 %v607
      %v676 = vunpack.c.l.b16 %v608
      %v677 = vunpack.c.l.b16 %v609
      %v678 = vunpack.c.l.b16 %v610
      %v679 = vunpack.c.l.b16 %v611
      %v680 = vunpack.c.l.b16 %v612
      %v681 = vunpack.c.l.b16 %v613
      %v682 = vunpack.c.l.b16 %v614
      %v683 = vunpack.c.l.b16 %v615
      %v684 = vunpack.c.l.b16 %v616
      %v685 = vunpack.c.l.b16 %v617
      %v686 = vunpack.c.l.b16 %v618
      %v687 = vunpack.c.l.b16 %v619
      %v688 = vunpack.c.l.b16 %v620
      %v689 = vunpack.c.l.b16 %v621
      %v690 = vunpack.c.l.b16 %v622
      %v691 = vunpack.c.l.b16 %v623
      %v692 = vunpack.c.l.b16 %v624
      %v693 = vunpack.c.l.b16 %v625
      %v694 = vunpack.c.l.b16 %v626
      %v695 = vunpack.c.l.b16 %v627
      %v696 = vunpack.c.l.b16 %v628
      %v697 = vpack.c.b16 %v666, %v665
      %v698 = vpack.c.b16 %v668, %v667
      %v699 = vpack.c.b16 %v670, %v669
      %v700 = vpack.c.b16 %v672, %v671
      %v701 = vpack.c.b16 %v674, %v673
      %v702 = vpack.c.b16 %v676, %v675
      %v703 = vpack.c.b16 %v678, %v677
      %v704 = vpack.c.b16 %v680, %v679
      %v705 = vpack.c.b16 %v682, %v681
      %v706 = vpack.c.b16 %v684, %v683
      %v707 = vpack.c.b16 %v686, %v685
      %v708 = vpack.c.b16 %v688, %v687
      %v709 = vpack.c.b16 %v690, %v689
      %v710 = vpack.c.b16 %v692, %v691
      %v711 = vpack.c.b16 %v694, %v693
      %v712 = vpack.c.b16 %v696, %v695
      %729 = vmatpush.bf16.msra.mxu0 %v704
      %730 = vmatpush.bf16.msra.mxu0 %v703
      %731 = vmatpush.bf16.msra.mxu0 %v702
      %732 = vmatpush.bf16.msra.mxu0 %v701
      %733 = vmatpush.bf16.msra.mxu0 %v700
      %734 = vmatpush.bf16.msra.mxu0 %v699
      %735 = vmatpush.bf16.msra.mxu0 %v698
      %736 = vmatpush.bf16.msra.mxu0 %v697
      %737 = vmatmul.bf16.gmra.mxu0 %v595
      %v738 = vpop.f32.mrf.mxu0
      %v739 = vadd.f32 %v631, %v738
      %v740 = vpop.f32.mrf.mxu0
      %v741 = vadd.f32 %v631, %v740
      %742 = vdwg.mxu0
      %743 = vmatpush.bf16.msra.mxu0 %v712
      %744 = vmatpush.bf16.msra.mxu0 %v711
      %745 = vmatpush.bf16.msra.mxu0 %v710
      %746 = vmatpush.bf16.msra.mxu0 %v709
      %747 = vmatpush.bf16.msra.mxu0 %v708
      %748 = vmatpush.bf16.msra.mxu0 %v707
      %749 = vmatpush.bf16.msra.mxu0 %v706
      %750 = vmatpush.bf16.msra.mxu0 %v705
      %751 = vmatmul.bf16.gmra.mxu0 %v596
      %v752 = vpop.f32.mrf.mxu0
      %v753 = vadd.f32 %v739, %v752
      %v754 = vpop.f32.mrf.mxu0
      %v755 = vadd.f32 %v741, %v754
      %756 = vdwg.mxu0
      %v757 = vadd.f32 %v283, %v753
      %v758 = vadd.f32 %v284, %v755
      %759 = vst.msk [vmem:[%s280] sm:$0xff] %vm287, %v757
      %760 = vst.msk [vmem:[%s280 + $0x8] sm:$0xff] %vm287, %v758
      %s761 = smul.u32 2, %s18
      %p762 = scmp.lt.s32.totalorder %s761, 3
      %s763 = scalar_select %p762, %s761, 3
      %s764 = smul.addr %s763, 8
      %s765 = scalar_lea.vmem %s7, %s764
      // Predicated region
      $region49: #{mhr_medseg_forward.23} parent=47 // pred_check
        %p766 = pneg %p188
      $region50: #{mhr_medseg_forward.23} parent=47 // pred_check_branch
        %768 = sbr.rel (%p766) target = $region52
      $region51: #{mhr_medseg_forward.23} parent=47 // pred_region
        %s769 = smul.u32 2, %s18
      $region52: #{mhr_medseg_forward.23} parent=47 // pred_fallthru
        _
    $region48: #{mhr_medseg_forward.23} parent=5 // pred_fallthru
      _
    %p770 = scmp.le.s32.totalorder 2, %s13
    // Predicated region
    $region53: #{mhr_medseg_forward.23} parent=5 // pred_check
      %p771 = pneg %p770
    $region54: #{mhr_medseg_forward.23} parent=5 // pred_check_branch
      %773 = sbr.rel (%p771) target = $region56
    $region55: #{mhr_medseg_forward.23} parent=5 // pred_region
      %s774 = ssub.s32 %s13, 2
      // Predicated region
      $region57: #{mhr_medseg_forward.23} parent=55 // pred_check
        %p775 = pneg %p194
      $region58: #{mhr_medseg_forward.23} parent=55 // pred_check_branch
        %777 = sbr.rel (%p775) target = $region60
      $region59: #{mhr_medseg_forward.23} parent=55 // pred_region
        %s778 = smul.u32 2, %s19
        %p779 = scmp.lt.s32.totalorder %s778, 3
        %s780 = scalar_select %p779, %s778, 3
        %s781 = smul.addr %s780, 8
        %s782 = scalar_lea.vmem %s7, %s781
      $region60: #{mhr_medseg_forward.23} parent=55 // pred_fallthru
        _
    $region56: #{mhr_medseg_forward.23} parent=5 // pred_fallthru
      _
  $region6: #{mhr_medseg_forward.23} parent=0 // loop_footer
    %s17 = sadd.s32 1, %s13
  $region7: #{mhr_medseg_forward.23} parent=0 // loop_footer_branch
    %12 = sbr.rel target = $region3
  $region8: #{mhr_medseg_forward.23} parent=0 // loop_exit
    _

// kernel: mhr_medseg_forward.36
$region0: #{mhr_medseg_forward.36}
  #allocation0 [shape = 'u32[]', space=smem, size = 0x4, offset = 0x4, fixed_abs, tag = 'smem constant byte address 0x4 - core index']
  #allocation1 [shape = 'u32[72,128]{1,0:T(1,128)}', space=vmem, size = 0x9000, scoped, tag = 'internal scratch']
  %s0 = inlined_call_operand.vmem [shape: f32[32,64], index: 0, kind: input, shape index: {}]
  %s1 = inlined_call_operand.vmem [shape: bf16[64,128], index: 1, kind: input, shape index: {}]
  %s2 = inlined_call_operand.vmem [shape: f32[1,128], index: 2, kind: input, shape index: {}]
  %s3 = inlined_call_operand.vmem [shape: f32[1,128], index: 3, kind: input, shape index: {}]
  %s4 = inlined_call_operand.vmem [shape: f32[32,128], index: 4, kind: output, shape index: {}]
  %s5 = sld [smem:[#allocation0]]
  $region49: #{mhr_medseg_forward.36} parent=0
    _
  %s7 = ssub.s32 1, %s5
  %s8 = scalar_select 0, %s7, %s5
  loop: start=0, step=1, limit=4
  $region2: #{mhr_medseg_forward.36} parent=0 // loop_pre_header
    _
  $region3: #{mhr_medseg_forward.36} parent=0 // loop_header
    %s10 = sphi 0, %s14
    %p11 = scmp.ge.s32.totalorder %s10, 4
    %s20 = sphi 0, %s22
    %s23 = sphi 0, %s20
    %s24 = sphi 0, %s23
    %s40 = sphi 0, %s24
    %s44 = sphi 0, %s44
    %s46 = sphi 0, %s44
    %s47 = sphi 0, %s46
    %s61 = sphi 0, %s47
    %s65 = sphi 0, %s65
    %s67 = sphi 0, %s65
    %s68 = sphi 0, %s67
    %s82 = sphi 0, %s68
    %s86 = sphi 0, %s86
    %s88 = sphi 0, %s86
    %s89 = sphi 0, %s88
    %s103 = sphi 0, %s89
    %s109 = sphi 0, %s111
    %s112 = sphi 0, %s109
    %s113 = sphi 0, %s112
    %s129 = sphi 0, %s113
  $region4: #{mhr_medseg_forward.36} parent=0 // loop_header_branch
    %13 = sbr.rel (%p11) target = $region8
  $region5: #{mhr_medseg_forward.36} parent=0 // loop_body
    %s15 = ssub.s32 %s10, 1
    %s16 = ssub.s32 %s10, 2
    %s17 = sadd.s32 %s10, 1
    %s18 = ssub.s32 %s10, %s17
    %p19 = scmp.eq.s32.totalorder %s18, 0
    %s21 = sadd.s32 %s20, 1
    %s22 = scalar_select %p19, %s20, %s21
    %p25 = pneg %p19
    %p26 = scmp.eq.s32.totalorder %s10, 1
    %p27 = por %p25, %p26
    %p28 = scmp.ne.s32.totalorder %s20, %s23
    %p29 = scmp.eq.s32.totalorder %s10, 0
    %p30 = por %p28, %p29
    %p31 = scmp.ne.s32.totalorder %s20, %s23
    %p32 = scmp.eq.s32.totalorder %s15, 1
    %p33 = por %p31, %p32
    %p34 = scmp.ne.s32.totalorder %s23, %s24
    %p35 = scmp.eq.s32.totalorder %s15, 0
    %p36 = por %p34, %p35
    %p37 = scmp.ne.s32.totalorder %s23, %s24
    %p38 = scmp.eq.s32.totalorder %s16, 1
    %p39 = por %p37, %p38
    %p41 = scmp.ne.s32.totalorder %s24, %s40
    %p42 = scmp.eq.s32.totalorder %s16, 0
    %p43 = por %p41, %p42
    %s45 = sadd.s32 %s44, 1
    %p48 = scmp.eq.s32.totalorder %s10, 1
    %p49 = scmp.ne.s32.totalorder %s44, %s46
    %p50 = scmp.eq.s32.totalorder %s10, 0
    %p51 = por %p49, %p50
    %p52 = scmp.ne.s32.totalorder %s44, %s46
    %p53 = scmp.eq.s32.totalorder %s15, 1
    %p54 = por %p52, %p53
    %p55 = scmp.ne.s32.totalorder %s46, %s47
    %p56 = scmp.eq.s32.totalorder %s15, 0
    %p57 = por %p55, %p56
    %p58 = scmp.ne.s32.totalorder %s46, %s47
    %p59 = scmp.eq.s32.totalorder %s16, 1
    %p60 = por %p58, %p59
    %p62 = scmp.ne.s32.totalorder %s47, %s61
    %p63 = scmp.eq.s32.totalorder %s16, 0
    %p64 = por %p62, %p63
    %s66 = sadd.s32 %s65, 1
    %p69 = scmp.eq.s32.totalorder %s10, 1
    %p70 = scmp.ne.s32.totalorder %s65, %s67
    %p71 = scmp.eq.s32.totalorder %s10, 0
    %p72 = por %p70, %p71
    %p73 = scmp.ne.s32.totalorder %s65, %s67
    %p74 = scmp.eq.s32.totalorder %s15, 1
    %p75 = por %p73, %p74
    %p76 = scmp.ne.s32.totalorder %s67, %s68
    %p77 = scmp.eq.s32.totalorder %s15, 0
    %p78 = por %p76, %p77
    %p79 = scmp.ne.s32.totalorder %s67, %s68
    %p80 = scmp.eq.s32.totalorder %s16, 1
    %p81 = por %p79, %p80
    %p83 = scmp.ne.s32.totalorder %s68, %s82
    %p84 = scmp.eq.s32.totalorder %s16, 0
    %p85 = por %p83, %p84
    %s87 = sadd.s32 %s86, 1
    %p90 = scmp.eq.s32.totalorder %s10, 1
    %p91 = scmp.ne.s32.totalorder %s86, %s88
    %p92 = scmp.eq.s32.totalorder %s10, 0
    %p93 = por %p91, %p92
    %p94 = scmp.ne.s32.totalorder %s86, %s88
    %p95 = scmp.eq.s32.totalorder %s15, 1
    %p96 = por %p94, %p95
    %p97 = scmp.ne.s32.totalorder %s88, %s89
    %p98 = scmp.eq.s32.totalorder %s15, 0
    %p99 = por %p97, %p98
    %p100 = scmp.ne.s32.totalorder %s88, %s89
    %p101 = scmp.eq.s32.totalorder %s16, 1
    %p102 = por %p100, %p101
    %p104 = scmp.ne.s32.totalorder %s89, %s103
    %p105 = scmp.eq.s32.totalorder %s16, 0
    %p106 = por %p104, %p105
    %s107 = ssub.s32 %s10, %s17
    %p108 = scmp.eq.s32.totalorder %s107, 0
    %s110 = sadd.s32 %s109, 1
    %s111 = scalar_select %p108, %s109, %s110
    %p114 = pneg %p108
    %p115 = scmp.eq.s32.totalorder %s10, 1
    %p116 = por %p114, %p115
    %p117 = scmp.ne.s32.totalorder %s109, %s112
    %p118 = scmp.eq.s32.totalorder %s10, 0
    %p119 = por %p117, %p118
    %p120 = scmp.ne.s32.totalorder %s109, %s112
    %p121 = scmp.eq.s32.totalorder %s15, 1
    %p122 = por %p120, %p121
    %p123 = scmp.ne.s32.totalorder %s112, %s113
    %p124 = scmp.eq.s32.totalorder %s15, 0
    %p125 = por %p123, %p124
    %p126 = scmp.ne.s32.totalorder %s112, %s113
    %p127 = scmp.eq.s32.totalorder %s16, 1
    %p128 = por %p126, %p127
    %p130 = scmp.ne.s32.totalorder %s113, %s129
    %p131 = scmp.eq.s32.totalorder %s16, 0
    %p132 = por %p130, %p131
    %p133 = scmp.le.s32.totalorder 1, %s10
    %p134 = scmp.lt.s32.totalorder %s10, 3
    %p135 = pnand %p133, %p134
    %p136 = pneg %p135
    // Predicated region
    $region9: #{mhr_medseg_forward.36} parent=5 // pred_check
      _
    $region10: #{mhr_medseg_forward.36} parent=5 // pred_check_branch
      %138 = sbr.rel (%p135) target = $region12
    $region11: #{mhr_medseg_forward.36} parent=5 // pred_region
      %s139 = ssub.s32 %s10, 1
      // Predicated region
      $region13: #{mhr_medseg_forward.36} parent=11 // pred_check
        %p140 = pneg %p57
      $region14: #{mhr_medseg_forward.36} parent=11 // pred_check_branch
        %142 = sbr.rel (%p140) target = $region16
      $region15: #{mhr_medseg_forward.36} parent=11 // pred_region
        _
      $region16: #{mhr_medseg_forward.36} parent=11 // pred_fallthru
        _
      // Predicated region
      $region17: #{mhr_medseg_forward.36} parent=11 // pred_check
        %p143 = pneg %p78
      $region18: #{mhr_medseg_forward.36} parent=11 // pred_check_branch
        %145 = sbr.rel (%p143) target = $region20
      $region19: #{mhr_medseg_forward.36} parent=11 // pred_region
        _
      $region20: #{mhr_medseg_forward.36} parent=11 // pred_fallthru
        _
      // Predicated region
      $region21: #{mhr_medseg_forward.36} parent=11 // pred_check
        %p146 = pneg %p99
      $region22: #{mhr_medseg_forward.36} parent=11 // pred_check_branch
        %148 = sbr.rel (%p146) target = $region24
      $region23: #{mhr_medseg_forward.36} parent=11 // pred_region
        _
      $region24: #{mhr_medseg_forward.36} parent=11 // pred_fallthru
        _
    $region12: #{mhr_medseg_forward.36} parent=5 // pred_fallthru
      _
    %p149 = scmp.lt.s32.totalorder %s10, 2
    // Predicated region
    $region25: #{mhr_medseg_forward.36} parent=5 // pred_check
      %p150 = pneg %p149
    $region26: #{mhr_medseg_forward.36} parent=5 // pred_check_branch
      %152 = sbr.rel (%p150) target = $region28
    $region27: #{mhr_medseg_forward.36} parent=5 // pred_region
      // Predicated region
      $region29: #{mhr_medseg_forward.36} parent=27 // pred_check
        %p153 = pneg %p30
      $region30: #{mhr_medseg_forward.36} parent=27 // pred_check_branch
        %155 = sbr.rel (%p153) target = $region32
      $region31: #{mhr_medseg_forward.36} parent=27 // pred_region
        %s156 = smul.u32 2, %s10
        %p157 = scmp.lt.s32.totalorder %s156, 3
        %s158 = scalar_select %p157, %s156, 3
        %s159 = smul.addr %s158, 8
        %s160 = scalar_lea.vmem %s0, %s159
        %s161 = smul.u32 2, %s10
      $region32: #{mhr_medseg_forward.36} parent=27 // pred_fallthru
        _
    $region28: #{mhr_medseg_forward.36} parent=5 // pred_fallthru
      _
    %p162 = scmp.le.s32.totalorder 1, %s10
    %p163 = scmp.lt.s32.totalorder %s10, 3
    %p164 = pnand %p162, %p163
    %p165 = pneg %p164
    // Predicated region
    $region33: #{mhr_medseg_forward.36} parent=5 // pred_check
      _
    $region34: #{mhr_medseg_forward.36} parent=5 // pred_check_branch
      %167 = sbr.rel (%p164) target = $region36
    $region35: #{mhr_medseg_forward.36} parent=5 // pred_region
      %s168 = ssub.s32 %s10, 1
      %s169 = smul.u32 2, %s15
      %p170 = scmp.lt.s32.totalorder %s169, 3
      %s171 = scalar_select %p170, %s169, 3
      %s172 = smul.addr %s171, 8
      %s173 = scalar_lea.vmem %s0, %s172
      %p174 = pneg %p36
      %p175 = pneg %p33
      %p176 = pneg %p57
      %p177 = pneg %p54
      %p178 = pneg %p78
      %p179 = pneg %p75
      %p180 = pneg %p99
      %p181 = pneg %p96
      %p182 = pneg %p125
      %p183 = pneg %p122
      %s184 = smul.u32 2, %s15
      %p185 = scmp.lt.s32.totalorder %s184, 3
      %s186 = scalar_select %p185, %s184, 3
      %s187 = smul.addr %s186, 8
      %s188 = scalar_lea.vmem %s4, %s187
      %s189 = smul.u32 2, %s15
      %p190 = scmp.lt.s32.totalorder %s189, 3
      %s191 = scalar_select %p190, %s189, 3
      %s192 = smul.addr %s191, 8
      %s193 = scalar_lea.vmem %s0, %s192
      %s194 = smul.u32 2, %s15
      %s195 = smul.u32 2, %s15
      %p196 = scmp.lt.s32.totalorder %s195, 3
      %s197 = scalar_select %p196, %s195, 3
      %s198 = smul.addr %s197, 8
      %s199 = scalar_lea.vmem %s4, %s198
      %s200 = smul.u32 2, %s15
      %v202 = vld [vmem:[%s193] sm:$0xff]
      %v203 = vld [vmem:[%s193 + $0x8] sm:$0xff]
      %v204 = vpack.c.bf16 %v203, %v202
      %v205 = vld [vmem:[%s1] sm:$0xf]
      %v206 = vld [vmem:[%s1 + $0x4] sm:$0xf]
      %v207 = vld [vmem:[%s1 + $0x8] sm:$0xf]
      %v208 = vld [vmem:[%s1 + $0xc] sm:$0xf]
      %v209 = vld [vmem:[%s1 + $0x10] sm:$0xf]
      %v210 = vld [vmem:[%s1 + $0x14] sm:$0xf]
      %v211 = vld [vmem:[%s1 + $0x18] sm:$0xf]
      %v212 = vld [vmem:[%s1 + $0x1c] sm:$0xf]
      %v221 = vunpack.c.l.b16 %v205
      %v222 = vunpack.c.l.b16 %v206
      %v223 = vunpack.c.l.b16 %v207
      %v224 = vunpack.c.l.b16 %v208
      %v225 = vunpack.c.l.b16 %v209
      %v226 = vunpack.c.l.b16 %v210
      %v227 = vunpack.c.l.b16 %v211
      %v228 = vunpack.c.l.b16 %v212
      %v229 = vpack.c.b16 %v222, %v221
      %v230 = vpack.c.b16 %v224, %v223
      %v231 = vpack.c.b16 %v226, %v225
      %v232 = vpack.c.b16 %v228, %v227
      %vm237 = vcmask 523264
      %v239 = vsel %vm237, %v204, 0
      %241 = vmatpush.bf16.msra.mxu0 0
      %242 = vmatpush.bf16.msra.mxu0 0
      %243 = vmatpush.bf16.msra.mxu0 0
      %244 = vmatpush.bf16.msra.mxu0 0
      %245 = vmatpush.bf16.msra.mxu0 %v232
      %246 = vmatpush.bf16.msra.mxu0 %v231
      %247 = vmatpush.bf16.msra.mxu0 %v230
      %248 = vmatpush.bf16.msra.mxu0 %v229
      %249 = vmatmul.bf16.gmra.mxu0 %v239
      %v250 = vpop.f32.mrf.mxu0
      %v251 = vadd.f32 0.0, %v250
      %v252 = vpop.f32.mrf.mxu0
      %v253 = vadd.f32 0.0, %v252
      %254 = vdwg.mxu0
      %v255 = vld [vmem:[%s2] sm:$0x1]
      %v256 = vld [vmem:[%s3] sm:$0x1]
      %257 = vadd.xlane.f32.xlu0 %v251
      %v258 = vpop.xlane.xlu0 %257
      %259 = vadd.xlane.f32.xlu0 %v253
      %v260 = vpop.xlane.xlu0 %259
      %v261 = vrcp.pop 128.0
      %v262 = vmul.f32 128.0, %v261
      %v263 = vsub.f32 1.0, %v262
      %v264 = vmul.f32 %v261, %v263
      %v265 = vadd.f32 %v261, %v264
      %vm266 = vweird.f32 %v261
      %v267 = vsel %vm266, %v261, %v265
      %v268 = vmul.f32 %v258, %v267
      %v269 = vmul.f32 %v260, %v267
      %v270 = vsub.f32 %v251, %v268
      %v271 = vsub.f32 %v253, %v269
      %v272 = vmul.f32 %v270, %v270
      %v273 = vmul.f32 %v271, %v271
      %274 = vadd.xlane.f32.xlu0 %v272
      %v275 = vpop.xlane.xlu0 %274
      %276 = vadd.xlane.f32.xlu0 %v273
      %v277 = vpop.xlane.xlu0 %276
      %v278 = vmul.f32 %v275, %v267
      %v279 = vmul.f32 %v277, %v267
      %v280 = vadd.f32 %v278, 1e-06
      %v281 = vadd.f32 %v279, 1e-06
      %v282 = vrsqrt.pop %v280
      %v283 = vmul.f32 %v282, %v280
      %v284 = vmul.f32 %v283, %v282
      %v285 = vmul.f32 0.5, %v284
      %v286 = vsub.f32 1.5, %v285
      %v287 = vmul.f32 %v282, %v286
      %vm288 = vweird.f32 %v280
      %vm289 = vweird.f32 %v282
      %vm290 = vmor %vm288, %vm289
      %v291 = vsel %vm290, %v282, %v287
      %v292 = vrsqrt.pop %v281
      %v293 = vmul.f32 %v292, %v281
      %v294 = vmul.f32 %v293, %v292
      %v295 = vmul.f32 0.5, %v294
      %v296 = vsub.f32 1.5, %v295
      %v297 = vmul.f32 %v292, %v296
      %vm298 = vweird.f32 %v281
      %vm299 = vweird.f32 %v292
      %vm300 = vmor %vm298, %vm299
      %v301 = vsel %vm300, %v292, %v297
      %v302 = vmul.f32 %v270, %v291
      %v303 = vmul.f32 %v271, %v301
      %v305 = vperm.slane %v255, 0
      %v307 = vmul.f32 %v302, %v305
      %v308 = vmul.f32 %v303, %v305
      %v310 = vperm.slane %v256, 0
      %v312 = vadd.f32 %v307, %v310
      %v313 = vadd.f32 %v308, %v310
      %314 = vst [vmem:[%s199] sm:$0xff] %v312
      %315 = vst [vmem:[%s199 + $0x8] sm:$0xff] %v313
      %s316 = smul.u32 2, %s15
      %p317 = scmp.lt.s32.totalorder %s316, 3
      %s318 = scalar_select %p317, %s316, 3
      %s319 = smul.addr %s318, 8
      %s320 = scalar_lea.vmem %s4, %s319
      // Predicated region
      $region37: #{mhr_medseg_forward.36} parent=35 // pred_check
        %p321 = pneg %p122
      $region38: #{mhr_medseg_forward.36} parent=35 // pred_check_branch
        %323 = sbr.rel (%p321) target = $region40
      $region39: #{mhr_medseg_forward.36} parent=35 // pred_region
        %s324 = smul.u32 2, %s15
      $region40: #{mhr_medseg_forward.36} parent=35 // pred_fallthru
        _
    $region36: #{mhr_medseg_forward.36} parent=5 // pred_fallthru
      _
    %p325 = scmp.le.s32.totalorder 2, %s10
    // Predicated region
    $region41: #{mhr_medseg_forward.36} parent=5 // pred_check
      %p326 = pneg %p325
    $region42: #{mhr_medseg_forward.36} parent=5 // pred_check_branch
      %328 = sbr.rel (%p326) target = $region44
    $region43: #{mhr_medseg_forward.36} parent=5 // pred_region
      %s329 = ssub.s32 %s10, 2
      // Predicated region
      $region45: #{mhr_medseg_forward.36} parent=43 // pred_check
        %p330 = pneg %p128
      $region46: #{mhr_medseg_forward.36} parent=43 // pred_check_branch
        %332 = sbr.rel (%p330) target = $region48
      $region47: #{mhr_medseg_forward.36} parent=43 // pred_region
        %s333 = smul.u32 2, %s16
        %p334 = scmp.lt.s32.totalorder %s333, 3
        %s335 = scalar_select %p334, %s333, 3
        %s336 = smul.addr %s335, 8
        %s337 = scalar_lea.vmem %s4, %s336
      $region48: #{mhr_medseg_forward.36} parent=43 // pred_fallthru
        _
    $region44: #{mhr_medseg_forward.36} parent=5 // pred_fallthru
      _
  $region6: #{mhr_medseg_forward.36} parent=0 // loop_footer
    %s14 = sadd.s32 1, %s10
  $region7: #{mhr_medseg_forward.36} parent=0 // loop_footer_branch
    %9 = sbr.rel target = $region3
  $region8: #{mhr_medseg_forward.36} parent=0 // loop_exit
    _

// kernel: mhr_medseg_forward.25
$region0: #{mhr_medseg_forward.25}
  #allocation0 [shape = 'u32[]', space=smem, size = 0x4, offset = 0x4, fixed_abs, tag = 'smem constant byte address 0x4 - core index']
  #allocation1 [shape = 'u32[72,128]{1,0:T(1,128)}', space=vmem, size = 0x9000, scoped, tag = 'internal scratch']
  %s0 = inlined_call_operand.vmem [shape: bf16[8,16,16], index: 0, kind: input, shape index: {}]
  %s1 = inlined_call_operand.vmem [shape: bf16[8,16,16], index: 1, kind: input, shape index: {}]
  %s2 = inlined_call_operand.vmem [shape: bf16[8,16,16], index: 2, kind: input, shape index: {}]
  %s3 = inlined_call_operand.vmem [shape: f32[8,16,4], index: 3, kind: input, shape index: {}]
  %s4 = inlined_call_operand.vmem [shape: f32[8,16,4], index: 4, kind: input, shape index: {}]
  %s5 = inlined_call_operand.vmem [shape: f32[4,16], index: 5, kind: input, shape index: {}]
  %s6 = inlined_call_operand.vmem [shape: f32[4,16], index: 6, kind: input, shape index: {}]
  %s7 = inlined_call_operand.vmem [shape: f32[8,16,16], index: 7, kind: output, shape index: {}]
  %s8 = sld [smem:[#allocation0]]
  $region61: #{mhr_medseg_forward.25} parent=0
    _
  %s10 = ssub.s32 1, %s8
  %s11 = scalar_select 0, %s10, %s8
  loop: start=0, step=1, limit=4
  $region2: #{mhr_medseg_forward.25} parent=0 // loop_pre_header
    _
  $region3: #{mhr_medseg_forward.25} parent=0 // loop_header
    %s13 = sphi 0, %s17
    %p14 = scmp.ge.s32.totalorder %s13, 4
    %s23 = sphi 0, %s25
    %s26 = sphi 0, %s23
    %s27 = sphi 0, %s26
    %s43 = sphi 0, %s27
    %s49 = sphi 0, %s51
    %s52 = sphi 0, %s49
    %s53 = sphi 0, %s52
    %s69 = sphi 0, %s53
    %s75 = sphi 0, %s77
    %s78 = sphi 0, %s75
    %s79 = sphi 0, %s78
    %s95 = sphi 0, %s79
    %s101 = sphi 0, %s103
    %s104 = sphi 0, %s101
    %s105 = sphi 0, %s104
    %s121 = sphi 0, %s105
    %s127 = sphi 0, %s129
    %s130 = sphi 0, %s127
    %s131 = sphi 0, %s130
    %s147 = sphi 0, %s131
    %s151 = sphi 0, %s151
    %s153 = sphi 0, %s151
    %s154 = sphi 0, %s153
    %s168 = sphi 0, %s154
    %s172 = sphi 0, %s172
    %s174 = sphi 0, %s172
    %s175 = sphi 0, %s174
    %s189 = sphi 0, %s175
    %s195 = sphi 0, %s197
    %s198 = sphi 0, %s195
    %s199 = sphi 0, %s198
    %s215 = sphi 0, %s199
  $region4: #{mhr_medseg_forward.25} parent=0 // loop_header_branch
    %16 = sbr.rel (%p14) target = $region8
  $region5: #{mhr_medseg_forward.25} parent=0 // loop_body
    %s18 = ssub.s32 %s13, 1
    %s19 = ssub.s32 %s13, 2
    %s20 = sadd.s32 %s13, 1
    %s21 = ssub.s32 %s13, %s20
    %p22 = scmp.eq.s32.totalorder %s21, 0
    %s24 = sadd.s32 %s23, 1
    %s25 = scalar_select %p22, %s23, %s24
    %p28 = pneg %p22
    %p29 = scmp.eq.s32.totalorder %s13, 1
    %p30 = por %p28, %p29
    %p31 = scmp.ne.s32.totalorder %s23, %s26
    %p32 = scmp.eq.s32.totalorder %s13, 0
    %p33 = por %p31, %p32
    %p34 = scmp.ne.s32.totalorder %s23, %s26
    %p35 = scmp.eq.s32.totalorder %s18, 1
    %p36 = por %p34, %p35
    %p37 = scmp.ne.s32.totalorder %s26, %s27
    %p38 = scmp.eq.s32.totalorder %s18, 0
    %p39 = por %p37, %p38
    %p40 = scmp.ne.s32.totalorder %s26, %s27
    %p41 = scmp.eq.s32.totalorder %s19, 1
    %p42 = por %p40, %p41
    %p44 = scmp.ne.s32.totalorder %s27, %s43
    %p45 = scmp.eq.s32.totalorder %s19, 0
    %p46 = por %p44, %p45
    %s47 = ssub.s32 %s13, %s20
    %p48 = scmp.eq.s32.totalorder %s47, 0
    %s50 = sadd.s32 %s49, 1
    %s51 = scalar_select %p48, %s49, %s50
    %p54 = pneg %p48
    %p55 = scmp.eq.s32.totalorder %s13, 1
    %p56 = por %p54, %p55
    %p57 = scmp.ne.s32.totalorder %s49, %s52
    %p58 = scmp.eq.s32.totalorder %s13, 0
    %p59 = por %p57, %p58
    %p60 = scmp.ne.s32.totalorder %s49, %s52
    %p61 = scmp.eq.s32.totalorder %s18, 1
    %p62 = por %p60, %p61
    %p63 = scmp.ne.s32.totalorder %s52, %s53
    %p64 = scmp.eq.s32.totalorder %s18, 0
    %p65 = por %p63, %p64
    %p66 = scmp.ne.s32.totalorder %s52, %s53
    %p67 = scmp.eq.s32.totalorder %s19, 1
    %p68 = por %p66, %p67
    %p70 = scmp.ne.s32.totalorder %s53, %s69
    %p71 = scmp.eq.s32.totalorder %s19, 0
    %p72 = por %p70, %p71
    %s73 = ssub.s32 %s13, %s20
    %p74 = scmp.eq.s32.totalorder %s73, 0
    %s76 = sadd.s32 %s75, 1
    %s77 = scalar_select %p74, %s75, %s76
    %p80 = pneg %p74
    %p81 = scmp.eq.s32.totalorder %s13, 1
    %p82 = por %p80, %p81
    %p83 = scmp.ne.s32.totalorder %s75, %s78
    %p84 = scmp.eq.s32.totalorder %s13, 0
    %p85 = por %p83, %p84
    %p86 = scmp.ne.s32.totalorder %s75, %s78
    %p87 = scmp.eq.s32.totalorder %s18, 1
    %p88 = por %p86, %p87
    %p89 = scmp.ne.s32.totalorder %s78, %s79
    %p90 = scmp.eq.s32.totalorder %s18, 0
    %p91 = por %p89, %p90
    %p92 = scmp.ne.s32.totalorder %s78, %s79
    %p93 = scmp.eq.s32.totalorder %s19, 1
    %p94 = por %p92, %p93
    %p96 = scmp.ne.s32.totalorder %s79, %s95
    %p97 = scmp.eq.s32.totalorder %s19, 0
    %p98 = por %p96, %p97
    %s99 = ssub.s32 %s13, %s20
    %p100 = scmp.eq.s32.totalorder %s99, 0
    %s102 = sadd.s32 %s101, 1
    %s103 = scalar_select %p100, %s101, %s102
    %p106 = pneg %p100
    %p107 = scmp.eq.s32.totalorder %s13, 1
    %p108 = por %p106, %p107
    %p109 = scmp.ne.s32.totalorder %s101, %s104
    %p110 = scmp.eq.s32.totalorder %s13, 0
    %p111 = por %p109, %p110
    %p112 = scmp.ne.s32.totalorder %s101, %s104
    %p113 = scmp.eq.s32.totalorder %s18, 1
    %p114 = por %p112, %p113
    %p115 = scmp.ne.s32.totalorder %s104, %s105
    %p116 = scmp.eq.s32.totalorder %s18, 0
    %p117 = por %p115, %p116
    %p118 = scmp.ne.s32.totalorder %s104, %s105
    %p119 = scmp.eq.s32.totalorder %s19, 1
    %p120 = por %p118, %p119
    %p122 = scmp.ne.s32.totalorder %s105, %s121
    %p123 = scmp.eq.s32.totalorder %s19, 0
    %p124 = por %p122, %p123
    %s125 = ssub.s32 %s13, %s20
    %p126 = scmp.eq.s32.totalorder %s125, 0
    %s128 = sadd.s32 %s127, 1
    %s129 = scalar_select %p126, %s127, %s128
    %p132 = pneg %p126
    %p133 = scmp.eq.s32.totalorder %s13, 1
    %p134 = por %p132, %p133
    %p135 = scmp.ne.s32.totalorder %s127, %s130
    %p136 = scmp.eq.s32.totalorder %s13, 0
    %p137 = por %p135, %p136
    %p138 = scmp.ne.s32.totalorder %s127, %s130
    %p139 = scmp.eq.s32.totalorder %s18, 1
    %p140 = por %p138, %p139
    %p141 = scmp.ne.s32.totalorder %s130, %s131
    %p142 = scmp.eq.s32.totalorder %s18, 0
    %p143 = por %p141, %p142
    %p144 = scmp.ne.s32.totalorder %s130, %s131
    %p145 = scmp.eq.s32.totalorder %s19, 1
    %p146 = por %p144, %p145
    %p148 = scmp.ne.s32.totalorder %s131, %s147
    %p149 = scmp.eq.s32.totalorder %s19, 0
    %p150 = por %p148, %p149
    %s152 = sadd.s32 %s151, 1
    %p155 = scmp.eq.s32.totalorder %s13, 1
    %p156 = scmp.ne.s32.totalorder %s151, %s153
    %p157 = scmp.eq.s32.totalorder %s13, 0
    %p158 = por %p156, %p157
    %p159 = scmp.ne.s32.totalorder %s151, %s153
    %p160 = scmp.eq.s32.totalorder %s18, 1
    %p161 = por %p159, %p160
    %p162 = scmp.ne.s32.totalorder %s153, %s154
    %p163 = scmp.eq.s32.totalorder %s18, 0
    %p164 = por %p162, %p163
    %p165 = scmp.ne.s32.totalorder %s153, %s154
    %p166 = scmp.eq.s32.totalorder %s19, 1
    %p167 = por %p165, %p166
    %p169 = scmp.ne.s32.totalorder %s154, %s168
    %p170 = scmp.eq.s32.totalorder %s19, 0
    %p171 = por %p169, %p170
    %s173 = sadd.s32 %s172, 1
    %p176 = scmp.eq.s32.totalorder %s13, 1
    %p177 = scmp.ne.s32.totalorder %s172, %s174
    %p178 = scmp.eq.s32.totalorder %s13, 0
    %p179 = por %p177, %p178
    %p180 = scmp.ne.s32.totalorder %s172, %s174
    %p181 = scmp.eq.s32.totalorder %s18, 1
    %p182 = por %p180, %p181
    %p183 = scmp.ne.s32.totalorder %s174, %s175
    %p184 = scmp.eq.s32.totalorder %s18, 0
    %p185 = por %p183, %p184
    %p186 = scmp.ne.s32.totalorder %s174, %s175
    %p187 = scmp.eq.s32.totalorder %s19, 1
    %p188 = por %p186, %p187
    %p190 = scmp.ne.s32.totalorder %s175, %s189
    %p191 = scmp.eq.s32.totalorder %s19, 0
    %p192 = por %p190, %p191
    %s193 = ssub.s32 %s13, %s20
    %p194 = scmp.eq.s32.totalorder %s193, 0
    %s196 = sadd.s32 %s195, 1
    %s197 = scalar_select %p194, %s195, %s196
    %p200 = pneg %p194
    %p201 = scmp.eq.s32.totalorder %s13, 1
    %p202 = por %p200, %p201
    %p203 = scmp.ne.s32.totalorder %s195, %s198
    %p204 = scmp.eq.s32.totalorder %s13, 0
    %p205 = por %p203, %p204
    %p206 = scmp.ne.s32.totalorder %s195, %s198
    %p207 = scmp.eq.s32.totalorder %s18, 1
    %p208 = por %p206, %p207
    %p209 = scmp.ne.s32.totalorder %s198, %s199
    %p210 = scmp.eq.s32.totalorder %s18, 0
    %p211 = por %p209, %p210
    %p212 = scmp.ne.s32.totalorder %s198, %s199
    %p213 = scmp.eq.s32.totalorder %s19, 1
    %p214 = por %p212, %p213
    %p216 = scmp.ne.s32.totalorder %s199, %s215
    %p217 = scmp.eq.s32.totalorder %s19, 0
    %p218 = por %p216, %p217
    %p219 = scmp.le.s32.totalorder 1, %s13
    %p220 = scmp.lt.s32.totalorder %s13, 3
    %p221 = pnand %p219, %p220
    %p222 = pneg %p221
    // Predicated region
    $region9: #{mhr_medseg_forward.25} parent=5 // pred_check
      _
    $region10: #{mhr_medseg_forward.25} parent=5 // pred_check_branch
      %224 = sbr.rel (%p221) target = $region12
    $region11: #{mhr_medseg_forward.25} parent=5 // pred_region
      %s225 = ssub.s32 %s13, 1
      // Predicated region
      $region13: #{mhr_medseg_forward.25} parent=11 // pred_check
        %p226 = pneg %p164
      $region14: #{mhr_medseg_forward.25} parent=11 // pred_check_branch
        %228 = sbr.rel (%p226) target = $region16
      $region15: #{mhr_medseg_forward.25} parent=11 // pred_region
        _
      $region16: #{mhr_medseg_forward.25} parent=11 // pred_fallthru
        _
      // Predicated region
      $region17: #{mhr_medseg_forward.25} parent=11 // pred_check
        %p229 = pneg %p185
      $region18: #{mhr_medseg_forward.25} parent=11 // pred_check_branch
        %231 = sbr.rel (%p229) target = $region20
      $region19: #{mhr_medseg_forward.25} parent=11 // pred_region
        _
      $region20: #{mhr_medseg_forward.25} parent=11 // pred_fallthru
        _
    $region12: #{mhr_medseg_forward.25} parent=5 // pred_fallthru
      _
    %p232 = scmp.lt.s32.totalorder %s13, 2
    // Predicated region
    $region21: #{mhr_medseg_forward.25} parent=5 // pred_check
      %p233 = pneg %p232
    $region22: #{mhr_medseg_forward.25} parent=5 // pred_check_branch
      %235 = sbr.rel (%p233) target = $region24
    $region23: #{mhr_medseg_forward.25} parent=5 // pred_region
      // Predicated region
      $region25: #{mhr_medseg_forward.25} parent=23 // pred_check
        %p236 = pneg %p33
      $region26: #{mhr_medseg_forward.25} parent=23 // pred_check_branch
        %238 = sbr.rel (%p236) target = $region28
      $region27: #{mhr_medseg_forward.25} parent=23 // pred_region
        %s239 = smul.u32 4, %s13
        %p240 = scmp.lt.s32.totalorder %s239, 7
        %s241 = scalar_select %p240, %s239, 7
        %s242 = smul.addr %s241, 2
        %s243 = smul.addr %s242, 4
        %s244 = scalar_lea.vmem %s0, %s243
        %s245 = smul.u32 4, %s13
      $region28: #{mhr_medseg_forward.25} parent=23 // pred_fallthru
        _
      // Predicated region
      $region29: #{mhr_medseg_forward.25} parent=23 // pred_check
        %p246 = pneg %p59
      $region30: #{mhr_medseg_forward.25} parent=23 // pred_check_branch
        %248 = sbr.rel (%p246) target = $region32
      $region31: #{mhr_medseg_forward.25} parent=23 // pred_region
        %s249 = smul.u32 4, %s13
        %p250 = scmp.lt.s32.totalorder %s249, 7
        %s251 = scalar_select %p250, %s249, 7
        %s252 = smul.addr %s251, 2
        %s253 = smul.addr %s252, 4
        %s254 = scalar_lea.vmem %s1, %s253
        %s255 = smul.u32 4, %s13
      $region32: #{mhr_medseg_forward.25} parent=23 // pred_fallthru
        _
      // Predicated region
      $region33: #{mhr_medseg_forward.25} parent=23 // pred_check
        %p256 = pneg %p85
      $region34: #{mhr_medseg_forward.25} parent=23 // pred_check_branch
        %258 = sbr.rel (%p256) target = $region36
      $region35: #{mhr_medseg_forward.25} parent=23 // pred_region
        %s259 = smul.u32 4, %s13
        %p260 = scmp.lt.s32.totalorder %s259, 7
        %s261 = scalar_select %p260, %s259, 7
        %s262 = smul.addr %s261, 2
        %s263 = smul.addr %s262, 4
        %s264 = scalar_lea.vmem %s2, %s263
        %s265 = smul.u32 4, %s13
      $region36: #{mhr_medseg_forward.25} parent=23 // pred_fallthru
        _
      // Predicated region
      $region37: #{mhr_medseg_forward.25} parent=23 // pred_check
        %p266 = pneg %p111
      $region38: #{mhr_medseg_forward.25} parent=23 // pred_check_branch
        %268 = sbr.rel (%p266) target = $region40
      $region39: #{mhr_medseg_forward.25} parent=23 // pred_region
        %s269 = smul.u32 4, %s13
        %p270 = scmp.lt.s32.totalorder %s269, 7
        %s271 = scalar_select %p270, %s269, 7
        %s272 = smul.addr %s271, 2
        %s273 = smul.addr %s272, 8
        %s274 = scalar_lea.vmem %s3, %s273
        %s275 = smul.u32 4, %s13
      $region40: #{mhr_medseg_forward.25} parent=23 // pred_fallthru
        _
      // Predicated region
      $region41: #{mhr_medseg_forward.25} parent=23 // pred_check
        %p276 = pneg %p137
      $region42: #{mhr_medseg_forward.25} parent=23 // pred_check_branch
        %278 = sbr.rel (%p276) target = $region44
      $region43: #{mhr_medseg_forward.25} parent=23 // pred_region
        %s279 = smul.u32 4, %s13
        %p280 = scmp.lt.s32.totalorder %s279, 7
        %s281 = scalar_select %p280, %s279, 7
        %s282 = smul.addr %s281, 2
        %s283 = smul.addr %s282, 8
        %s284 = scalar_lea.vmem %s4, %s283
        %s285 = smul.u32 4, %s13
      $region44: #{mhr_medseg_forward.25} parent=23 // pred_fallthru
        _
    $region24: #{mhr_medseg_forward.25} parent=5 // pred_fallthru
      _
    %p286 = scmp.le.s32.totalorder 1, %s13
    %p287 = scmp.lt.s32.totalorder %s13, 3
    %p288 = pnand %p286, %p287
    %p289 = pneg %p288
    // Predicated region
    $region45: #{mhr_medseg_forward.25} parent=5 // pred_check
      _
    $region46: #{mhr_medseg_forward.25} parent=5 // pred_check_branch
      %291 = sbr.rel (%p288) target = $region48
    $region47: #{mhr_medseg_forward.25} parent=5 // pred_region
      %s292 = ssub.s32 %s13, 1
      %s293 = smul.u32 4, %s18
      %p294 = scmp.lt.s32.totalorder %s293, 7
      %s295 = scalar_select %p294, %s293, 7
      %s296 = smul.addr %s295, 2
      %s297 = smul.addr %s296, 4
      %s298 = scalar_lea.vmem %s0, %s297
      %p299 = pneg %p39
      %p300 = pneg %p36
      %s301 = smul.u32 4, %s18
      %p302 = scmp.lt.s32.totalorder %s301, 7
      %s303 = scalar_select %p302, %s301, 7
      %s304 = smul.addr %s303, 2
      %s305 = smul.addr %s304, 4
      %s306 = scalar_lea.vmem %s1, %s305
      %p307 = pneg %p65
      %p308 = pneg %p62
      %s309 = smul.u32 4, %s18
      %p310 = scmp.lt.s32.totalorder %s309, 7
      %s311 = scalar_select %p310, %s309, 7
      %s312 = smul.addr %s311, 2
      %s313 = smul.addr %s312, 4
      %s314 = scalar_lea.vmem %s2, %s313
      %p315 = pneg %p91
      %p316 = pneg %p88
      %s317 = smul.u32 4, %s18
      %p318 = scmp.lt.s32.totalorder %s317, 7
      %s319 = scalar_select %p318, %s317, 7
      %s320 = smul.addr %s319, 2
      %s321 = smul.addr %s320, 8
      %s322 = scalar_lea.vmem %s3, %s321
      %p323 = pneg %p117
      %p324 = pneg %p114
      %s325 = smul.u32 4, %s18
      %p326 = scmp.lt.s32.totalorder %s325, 7
      %s327 = scalar_select %p326, %s325, 7
      %s328 = smul.addr %s327, 2
      %s329 = smul.addr %s328, 8
      %s330 = scalar_lea.vmem %s4, %s329
      %p331 = pneg %p143
      %p332 = pneg %p140
      %p333 = pneg %p164
      %p334 = pneg %p161
      %p335 = pneg %p185
      %p336 = pneg %p182
      %p337 = pneg %p211
      %p338 = pneg %p208
      %s339 = smul.u32 4, %s18
      %p340 = scmp.lt.s32.totalorder %s339, 7
      %s341 = scalar_select %p340, %s339, 7
      %s342 = smul.addr %s341, 2
      %s343 = smul.addr %s342, 8
      %s344 = scalar_lea.vmem %s7, %s343
      %s345 = smul.u32 4, %s18
      %p346 = scmp.lt.s32.totalorder %s345, 7
      %s347 = scalar_select %p346, %s345, 7
      %s348 = smul.addr %s347, 2
      %s349 = smul.addr %s348, 4
      %s350 = scalar_lea.vmem %s0, %s349
      %s351 = smul.u32 4, %s18
      %s352 = smul.u32 4, %s18
      %p353 = scmp.lt.s32.totalorder %s352, 7
      %s354 = scalar_select %p353, %s352, 7
      %s355 = smul.addr %s354, 2
      %s356 = smul.addr %s355, 4
      %s357 = scalar_lea.vmem %s1, %s356
      %s358 = smul.u32 4, %s18
      %s359 = smul.u32 4, %s18
      %p360 = scmp.lt.s32.totalorder %s359, 7
      %s361 = scalar_select %p360, %s359, 7
      %s362 = smul.addr %s361, 2
      %s363 = smul.addr %s362, 4
      %s364 = scalar_lea.vmem %s2, %s363
      %s365 = smul.u32 4, %s18
      %s366 = smul.u32 4, %s18
      %p367 = scmp.lt.s32.totalorder %s366, 7
      %s368 = scalar_select %p367, %s366, 7
      %s369 = smul.addr %s368, 2
      %s370 = smul.addr %s369, 8
      %s371 = scalar_lea.vmem %s3, %s370
      %s372 = smul.u32 4, %s18
      %s373 = smul.u32 4, %s18
      %p374 = scmp.lt.s32.totalorder %s373, 7
      %s375 = scalar_select %p374, %s373, 7
      %s376 = smul.addr %s375, 2
      %s377 = smul.addr %s376, 8
      %s378 = scalar_lea.vmem %s4, %s377
      %s379 = smul.u32 4, %s18
      %s380 = smul.u32 4, %s18
      %p381 = scmp.lt.s32.totalorder %s380, 7
      %s382 = scalar_select %p381, %s380, 7
      %s383 = smul.addr %s382, 2
      %s384 = smul.addr %s383, 8
      %s385 = scalar_lea.vmem %s7, %s384
      %s386 = smul.u32 4, %s18
      %v388 = vld [vmem:[%s350] sm:$0xf]
      %v389 = vld [vmem:[%s350 + $0x4] sm:$0xf]
      %v390 = vld [vmem:[%s350 + $0x8] sm:$0xf]
      %v391 = vld [vmem:[%s350 + $0xc] sm:$0xf]
      %v392 = vld [vmem:[%s350 + $0x10] sm:$0xf]
      %v393 = vld [vmem:[%s350 + $0x14] sm:$0xf]
      %v394 = vld [vmem:[%s350 + $0x18] sm:$0xf]
      %v395 = vld [vmem:[%s350 + $0x1c] sm:$0xf]
      %v396 = vld [vmem:[%s357] sm:$0xf]
      %v397 = vld [vmem:[%s357 + $0x4] sm:$0xf]
      %v398 = vld [vmem:[%s357 + $0x8] sm:$0xf]
      %v399 = vld [vmem:[%s357 + $0xc] sm:$0xf]
      %v400 = vld [vmem:[%s357 + $0x10] sm:$0xf]
      %v401 = vld [vmem:[%s357 + $0x14] sm:$0xf]
      %v402 = vld [vmem:[%s357 + $0x18] sm:$0xf]
      %v403 = vld [vmem:[%s357 + $0x1c] sm:$0xf]
      %v404 = vld [vmem:[%s364] sm:$0xf]
      %v405 = vld [vmem:[%s364 + $0x4] sm:$0xf]
      %v406 = vld [vmem:[%s364 + $0x8] sm:$0xf]
      %v407 = vld [vmem:[%s364 + $0xc] sm:$0xf]
      %v408 = vld [vmem:[%s364 + $0x10] sm:$0xf]
      %v409 = vld [vmem:[%s364 + $0x14] sm:$0xf]
      %v410 = vld [vmem:[%s364 + $0x18] sm:$0xf]
      %v411 = vld [vmem:[%s364 + $0x1c] sm:$0xf]
      %v414 = vunpack.c.l.b16 %v388
      %v415 = vunpack.c.l.b16 %v389
      %v416 = vpack.c.b16 %v415, %v414
      %v419 = vunpack.c.l.b16 %v396
      %v420 = vunpack.c.l.b16 %v397
      %v421 = vpack.c.b16 %v420, %v419
      %vm422 = vcmask 130048
      %v424 = vsel %vm422, %v416, 0
      %v427 = vsel %vm422, %v421, 0
      %429 = vmatpush.bf16.xpose.msra.mxu0 0
      %430 = vmatpush.bf16.xpose.msra.mxu0 0
      %431 = vmatpush.bf16.xpose.msra.mxu0 0
      %432 = vmatpush.bf16.xpose.msra.mxu0 0
      %433 = vmatpush.bf16.xpose.msra.mxu0 0
      %434 = vmatpush.bf16.xpose.msra.mxu0 0
      %435 = vmatpush.bf16.xpose.msra.mxu0 0
      %436 = vmatpush.bf16.xpose.msra.mxu0 %v427
      %437 = vmatmul.bf16.gmra.mxu0 %v424
      %v438 = vpop.f32.mrf.mxu0
      %v439 = vadd.f32 0.0, %v438
      %v440 = vpop.f32.mrf.mxu0
      %v441 = vadd.f32 0.0, %v440
      %442 = vdwg.mxu0
      %v445 = vunpack.c.l.b16 %v390
      %v446 = vunpack.c.l.b16 %v391
      %v447 = vpack.c.b16 %v446, %v445
      %v450 = vunpack.c.l.b16 %v398
      %v451 = vunpack.c.l.b16 %v399
      %v452 = vpack.c.b16 %v451, %v450
      %v454 = vsel %vm422, %v447, 0
      %v457 = vsel %vm422, %v452, 0
      %459 = vmatpush.bf16.xpose.msra.mxu0 0
      %460 = vmatpush.bf16.xpose.msra.mxu0 0
      %461 = vmatpush.bf16.xpose.msra.mxu0 0
      %462 = vmatpush.bf16.xpose.msra.mxu0 0
      %463 = vmatpush.bf16.xpose.msra.mxu0 0
      %464 = vmatpush.bf16.xpose.msra.mxu0 0
      %465 = vmatpush.bf16.xpose.msra.mxu0 0
      %466 = vmatpush.bf16.xpose.msra.mxu0 %v457
      %467 = vmatmul.bf16.gmra.mxu0 %v454
      %v468 = vpop.f32.mrf.mxu0
      %v469 = vadd.f32 0.0, %v468
      %v470 = vpop.f32.mrf.mxu0
      %v471 = vadd.f32 0.0, %v470
      %472 = vdwg.mxu0
      %v475 = vunpack.c.l.b16 %v392
      %v476 = vunpack.c.l.b16 %v393
      %v477 = vpack.c.b16 %v476, %v475
      %v480 = vunpack.c.l.b16 %v400
      %v481 = vunpack.c.l.b16 %v401
      %v482 = vpack.c.b16 %v481, %v480
      %v484 = vsel %vm422, %v477, 0
      %v487 = vsel %vm422, %v482, 0
      %489 = vmatpush.bf16.xpose.msra.mxu0 0
      %490 = vmatpush.bf16.xpose.msra.mxu0 0
      %491 = vmatpush.bf16.xpose.msra.mxu0 0
      %492 = vmatpush.bf16.xpose.msra.mxu0 0
      %493 = vmatpush.bf16.xpose.msra.mxu0 0
      %494 = vmatpush.bf16.xpose.msra.mxu0 0
      %495 = vmatpush.bf16.xpose.msra.mxu0 0
      %496 = vmatpush.bf16.xpose.msra.mxu0 %v487
      %497 = vmatmul.bf16.gmra.mxu0 %v484
      %v498 = vpop.f32.mrf.mxu0
      %v499 = vadd.f32 0.0, %v498
      %v500 = vpop.f32.mrf.mxu0
      %v501 = vadd.f32 0.0, %v500
      %502 = vdwg.mxu0
      %v505 = vunpack.c.l.b16 %v394
      %v506 = vunpack.c.l.b16 %v395
      %v507 = vpack.c.b16 %v506, %v505
      %v510 = vunpack.c.l.b16 %v402
      %v511 = vunpack.c.l.b16 %v403
      %v512 = vpack.c.b16 %v511, %v510
      %v514 = vsel %vm422, %v507, 0
      %v517 = vsel %vm422, %v512, 0
      %519 = vmatpush.bf16.xpose.msra.mxu0 0
      %520 = vmatpush.bf16.xpose.msra.mxu0 0
      %521 = vmatpush.bf16.xpose.msra.mxu0 0
      %522 = vmatpush.bf16.xpose.msra.mxu0 0
      %523 = vmatpush.bf16.xpose.msra.mxu0 0
      %524 = vmatpush.bf16.xpose.msra.mxu0 0
      %525 = vmatpush.bf16.xpose.msra.mxu0 0
      %526 = vmatpush.bf16.xpose.msra.mxu0 %v517
      %527 = vmatmul.bf16.gmra.mxu0 %v514
      %v528 = vpop.f32.mrf.mxu0
      %v529 = vadd.f32 0.0, %v528
      %v530 = vpop.f32.mrf.mxu0
      %v531 = vadd.f32 0.0, %v530
      %532 = vdwg.mxu0
      %v533 = vmul.f32 %v439, 0.25
      %v534 = vmul.f32 %v441, 0.25
      %v535 = vmul.f32 %v469, 0.25
      %v536 = vmul.f32 %v471, 0.25
      %v537 = vmul.f32 %v499, 0.25
      %v538 = vmul.f32 %v501, 0.25
      %v539 = vmul.f32 %v529, 0.25
      %v540 = vmul.f32 %v531, 0.25
      %v541 = vld [vmem:[%s371] sm:$0xff]
      %v542 = vld [vmem:[%s371 + $0x8] sm:$0xff]
      %v543 = vld [vmem:[%s371 + $0x10] sm:$0xff]
      %v544 = vld [vmem:[%s371 + $0x18] sm:$0xff]
      %v545 = vld [vmem:[%s371 + $0x20] sm:$0xff]
      %v546 = vld [vmem:[%s371 + $0x28] sm:$0xff]
      %v547 = vld [vmem:[%s371 + $0x30] sm:$0xff]
      %v548 = vld [vmem:[%s371 + $0x38] sm:$0xff]
      %v549 = vld [vmem:[%s378] sm:$0xff]
      %v550 = vld [vmem:[%s378 + $0x8] sm:$0xff]
      %v551 = vld [vmem:[%s378 + $0x10] sm:$0xff]
      %v552 = vld [vmem:[%s378 + $0x18] sm:$0xff]
      %v553 = vld [vmem:[%s378 + $0x20] sm:$0xff]
      %v554 = vld [vmem:[%s378 + $0x28] sm:$0xff]
      %v555 = vld [vmem:[%s378 + $0x30] sm:$0xff]
      %v556 = vld [vmem:[%s378 + $0x38] sm:$0xff]
      %v557 = vld [vmem:[%s5] sm:$0xf]
      %v558 = vld [vmem:[%s6] sm:$0xf]
      %vm559 = vcmask 31744
      %v561 = vsel %vm559, %v549, 0
      %v564 = vsel %vm559, %v550, 0
      %v567 = vsel %vm559, %v551, 0
      %v570 = vsel %vm559, %v552, 0
      %v573 = vsel %vm559, %v553, 0
      %v576 = vsel %vm559, %v554, 0
      %v579 = vsel %vm559, %v555, 0
      %v582 = vsel %vm559, %v556, 0
      %vm584 = vcmask 1043456
      %v586 = vsel %vm584, %v558, 0
      %588 = vmatpush.msra.mxu0 0.0
      %589 = vmatpush.msra.mxu0 0.0
      %590 = vmatpush.msra.mxu0 0.0
      %591 = vmatpush.msra.mxu0 0.0
      %592 = vmatpush.msra.mxu0 0.0
      %593 = vmatpush.msra.mxu0 0.0
      %594 = vmatpush.msra.mxu0 0.0
      %595 = vmatpush.msra.mxu0 0.0
      %596 = vmatpush.msra.mxu0 0.0
      %597 = vmatpush.msra.mxu0 0.0
      %598 = vmatpush.msra.mxu0 0.0
      %599 = vmatpush.msra.mxu0 0.0
      %600 = vmatpush.msra.mxu0 0.0
      %601 = vmatpush.msra.mxu0 0.0
      %602 = vmatpush.msra.mxu0 0.0
      %603 = vmatpush.msra.mxu0 %v586
      %604 = vmatmul.f32.gmra.mxu0 %v561
      %v605 = vpop.f32.mrf.mxu0
      %v606 = vadd.f32 0.0, %v605
      %607 = vmatmul.f32.gmra.mxu0 %v564
      %v608 = vpop.f32.mrf.mxu0
      %v609 = vadd.f32 0.0, %v608
      %610 = vmatmul.f32.gmra.mxu0 %v567
      %v611 = vpop.f32.mrf.mxu0
      %v612 = vadd.f32 0.0, %v611
      %613 = vmatmul.f32.gmra.mxu0 %v570
      %v614 = vpop.f32.mrf.mxu0
      %v615 = vadd.f32 0.0, %v614
      %616 = vmatmul.f32.gmra.mxu0 %v573
      %v617 = vpop.f32.mrf.mxu0
      %v618 = vadd.f32 0.0, %v617
      %619 = vmatmul.f32.gmra.mxu0 %v576
      %v620 = vpop.f32.mrf.mxu0
      %v621 = vadd.f32 0.0, %v620
      %622 = vmatmul.f32.gmra.mxu0 %v579
      %v623 = vpop.f32.mrf.mxu0
      %v624 = vadd.f32 0.0, %v623
      %625 = vmatmul.f32.gmra.mxu0 %v582
      %v626 = vpop.f32.mrf.mxu0
      %v627 = vadd.f32 0.0, %v626
      %628 = vdwg.mxu0
      %v630 = vsel %vm559, %v541, 0
      %v633 = vsel %vm559, %v542, 0
      %v636 = vsel %vm559, %v543, 0
      %v639 = vsel %vm559, %v544, 0
      %v642 = vsel %vm559, %v545, 0
      %v645 = vsel %vm559, %v546, 0
      %v648 = vsel %vm559, %v547, 0
      %v651 = vsel %vm559, %v548, 0
      %v654 = vsel %vm584, %v557, 0
      %656 = vmatpush.msra.mxu0 0.0
      %657 = vmatpush.msra.mxu0 0.0
      %658 = vmatpush.msra.mxu0 0.0
      %659 = vmatpush.msra.mxu0 0.0
      %660 = vmatpush.msra.mxu0 0.0
      %661 = vmatpush.msra.mxu0 0.0
      %662 = vmatpush.msra.mxu0 0.0
      %663 = vmatpush.msra.mxu0 0.0
      %664 = vmatpush.msra.mxu0 0.0
      %665 = vmatpush.msra.mxu0 0.0
      %666 = vmatpush.msra.mxu0 0.0
      %667 = vmatpush.msra.mxu0 0.0
      %668 = vmatpush.msra.mxu0 0.0
      %669 = vmatpush.msra.mxu0 0.0
      %670 = vmatpush.msra.mxu0 0.0
      %671 = vmatpush.msra.mxu0 %v654
      %672 = vmatmul.f32.gmra.mxu0 %v630
      %v673 = vpop.f32.mrf.mxu0
      %v674 = vadd.f32 %v606, %v673
      %675 = vmatmul.f32.gmra.mxu0 %v633
      %v676 = vpop.f32.mrf.mxu0
      %v677 = vadd.f32 %v609, %v676
      %678 = vmatmul.f32.gmra.mxu0 %v636
      %v679 = vpop.f32.mrf.mxu0
      %v680 = vadd.f32 %v612, %v679
      %681 = vmatmul.f32.gmra.mxu0 %v639
      %v682 = vpop.f32.mrf.mxu0
      %v683 = vadd.f32 %v615, %v682
      %684 = vmatmul.f32.gmra.mxu0 %v642
      %v685 = vpop.f32.mrf.mxu0
      %v686 = vadd.f32 %v618, %v685
      %687 = vmatmul.f32.gmra.mxu0 %v645
      %v688 = vpop.f32.mrf.mxu0
      %v689 = vadd.f32 %v621, %v688
      %690 = vmatmul.f32.gmra.mxu0 %v648
      %v691 = vpop.f32.mrf.mxu0
      %v692 = vadd.f32 %v624, %v691
      %693 = vmatmul.f32.gmra.mxu0 %v651
      %v694 = vpop.f32.mrf.mxu0
      %v695 = vadd.f32 %v627, %v694
      %696 = vdwg.mxu0
      %v697 = vadd.f32 %v533, %v674
      %v698 = vadd.f32 %v534, %v677
      %v699 = vadd.f32 %v535, %v680
      %v700 = vadd.f32 %v536, %v683
      %v701 = vadd.f32 %v537, %v686
      %v702 = vadd.f32 %v538, %v689
      %v703 = vadd.f32 %v539, %v692
      %v704 = vadd.f32 %v540, %v695
      %v705 = vsel %vm422, %v697, -inf
      %706 = vmax.xlane.f32.xlu0 %v705
      %v707 = vpop.xlane.xlu0 %706
      %v708 = vsel %vm422, %v698, -inf
      %709 = vmax.xlane.f32.xlu0 %v708
      %v710 = vpop.xlane.xlu0 %709
      %v711 = vsel %vm422, %v699, -inf
      %712 = vmax.xlane.f32.xlu0 %v711
      %v713 = vpop.xlane.xlu0 %712
      %v714 = vsel %vm422, %v700, -inf
      %715 = vmax.xlane.f32.xlu0 %v714
      %v716 = vpop.xlane.xlu0 %715
      %v717 = vsel %vm422, %v701, -inf
      %718 = vmax.xlane.f32.xlu0 %v717
      %v719 = vpop.xlane.xlu0 %718
      %v720 = vsel %vm422, %v702, -inf
      %721 = vmax.xlane.f32.xlu0 %v720
      %v722 = vpop.xlane.xlu0 %721
      %v723 = vsel %vm422, %v703, -inf
      %724 = vmax.xlane.f32.xlu0 %v723
      %v725 = vpop.xlane.xlu0 %724
      %v726 = vsel %vm422, %v704, -inf
      %727 = vmax.xlane.f32.xlu0 %v726
      %v728 = vpop.xlane.xlu0 %727
      %v729 = vsub.f32 %v697, %v707
      %v730 = vsub.f32 %v698, %v710
      %v731 = vsub.f32 %v699, %v713
      %v732 = vsub.f32 %v700, %v716
      %v733 = vsub.f32 %v701, %v719
      %v734 = vsub.f32 %v702, %v722
      %v735 = vsub.f32 %v703, %v725
      %v736 = vsub.f32 %v704, %v728
      %v737 = vmul.f32 %v729, 1.442695
      %v738 = vpow.pop %v737
      %v739 = vmul.f32 %v730, 1.442695
      %v740 = vpow.pop %v739
      %v741 = vmul.f32 %v731, 1.442695
      %v742 = vpow.pop %v741
      %v743 = vmul.f32 %v732, 1.442695
      %v744 = vpow.pop %v743
      %v745 = vmul.f32 %v733, 1.442695
      %v746 = vpow.pop %v745
      %v747 = vmul.f32 %v734, 1.442695
      %v748 = vpow.pop %v747
      %v749 = vmul.f32 %v735, 1.442695
      %v750 = vpow.pop %v749
      %v751 = vmul.f32 %v736, 1.442695
      %v752 = vpow.pop %v751
      %v753 = vsel %vm422, %v738, 0.0
      %754 = vadd.xlane.f32.xlu0 %v753
      %v755 = vpop.xlane.xlu0 %754
      %v756 = vsel %vm422, %v740, 0.0
      %757 = vadd.xlane.f32.xlu0 %v756
      %v758 = vpop.xlane.xlu0 %757
      %v759 = vsel %vm422, %v742, 0.0
      %760 = vadd.xlane.f32.xlu0 %v759
      %v761 = vpop.xlane.xlu0 %760
      %v762 = vsel %vm422, %v744, 0.0
      %763 = vadd.xlane.f32.xlu0 %v762
      %v764 = vpop.xlane.xlu0 %763
      %v765 = vsel %vm422, %v746, 0.0
      %766 = vadd.xlane.f32.xlu0 %v765
      %v767 = vpop.xlane.xlu0 %766
      %v768 = vsel %vm422, %v748, 0.0
      %769 = vadd.xlane.f32.xlu0 %v768
      %v770 = vpop.xlane.xlu0 %769
      %v771 = vsel %vm422, %v750, 0.0
      %772 = vadd.xlane.f32.xlu0 %v771
      %v773 = vpop.xlane.xlu0 %772
      %v774 = vsel %vm422, %v752, 0.0
      %775 = vadd.xlane.f32.xlu0 %v774
      %v776 = vpop.xlane.xlu0 %775
      %v777 = vrcp.pop %v755
      %v778 = vrcp.pop %v758
      %v779 = vrcp.pop %v761
      %v780 = vrcp.pop %v764
      %v781 = vrcp.pop %v767
      %v782 = vrcp.pop %v770
      %v783 = vrcp.pop %v773
      %v784 = vrcp.pop %v776
      %v785 = vmul.f32 %v738, %v777
      %v786 = vmul.f32 %v740, %v778
      %v787 = vmul.f32 %v742, %v779
      %v788 = vmul.f32 %v744, %v780
      %v789 = vmul.f32 %v746, %v781
      %v790 = vmul.f32 %v748, %v782
      %v791 = vmul.f32 %v750, %v783
      %v792 = vmul.f32 %v752, %v784
      %v793 = vpack.c.bf16 %v785, %v785
      %v794 = vpack.c.bf16 %v786, %v786
      %v795 = vpack.c.bf16 %v787, %v787
      %v796 = vpack.c.bf16 %v788, %v788
      %v797 = vpack.c.bf16 %v789, %v789
      %v798 = vpack.c.bf16 %v790, %v790
      %v799 = vpack.c.bf16 %v791, %v791
      %v800 = vpack.c.bf16 %v792, %v792
      %v803 = vunpack.c.l.b16 %v793
      %v804 = vunpack.c.l.b16 %v794
      %v805 = vpack.c.b16 %v804, %v803
      %v808 = vunpack.c.l.b16 %v404
      %v809 = vunpack.c.l.b16 %v405
      %v810 = vpack.c.b16 %v809, %v808
      %v813 = vsel %vm422, %v805, 0
      %815 = vmatpush.bf16.msra.mxu0 0
      %816 = vmatpush.bf16.msra.mxu0 0
      %817 = vmatpush.bf16.msra.mxu0 0
      %818 = vmatpush.bf16.msra.mxu0 0
      %819 = vmatpush.bf16.msra.mxu0 0
      %820 = vmatpush.bf16.msra.mxu0 0
      %821 = vmatpush.bf16.msra.mxu0 0
      %822 = vmatpush.bf16.msra.mxu0 %v810
      %823 = vmatmul.bf16.gmra.mxu0 %v813
      %v824 = vpop.f32.mrf.mxu0
      %v825 = vadd.f32 0.0, %v824
      %v826 = vpop.f32.mrf.mxu0
      %v827 = vadd.f32 0.0, %v826
      %828 = vdwg.mxu0
      %v831 = vunpack.c.l.b16 %v795
      %v832 = vunpack.c.l.b16 %v796
      %v833 = vpack.c.b16 %v832, %v831
      %v836 = vunpack.c.l.b16 %v406
      %v837 = vunpack.c.l.b16 %v407
      %v838 = vpack.c.b16 %v837, %v836
      %v841 = vsel %vm422, %v833, 0
      %843 = vmatpush.bf16.msra.mxu0 0
      %844 = vmatpush.bf16.msra.mxu0 0
      %845 = vmatpush.bf16.msra.mxu0 0
      %846 = vmatpush.bf16.msra.mxu0 0
      %847 = vmatpush.bf16.msra.mxu0 0
      %848 = vmatpush.bf16.msra.mxu0 0
      %849 = vmatpush.bf16.msra.mxu0 0
      %850 = vmatpush.bf16.msra.mxu0 %v838
      %851 = vmatmul.bf16.gmra.mxu0 %v841
      %v852 = vpop.f32.mrf.mxu0
      %v853 = vadd.f32 0.0, %v852
      %v854 = vpop.f32.mrf.mxu0
      %v855 = vadd.f32 0.0, %v854
      %856 = vdwg.mxu0
      %v859 = vunpack.c.l.b16 %v797
      %v860 = vunpack.c.l.b16 %v798
      %v861 = vpack.c.b16 %v860, %v859
      %v864 = vunpack.c.l.b16 %v408
      %v865 = vunpack.c.l.b16 %v409
      %v866 = vpack.c.b16 %v865, %v864
      %v869 = vsel %vm422, %v861, 0
      %871 = vmatpush.bf16.msra.mxu0 0
      %872 = vmatpush.bf16.msra.mxu0 0
      %873 = vmatpush.bf16.msra.mxu0 0
      %874 = vmatpush.bf16.msra.mxu0 0
      %875 = vmatpush.bf16.msra.mxu0 0
      %876 = vmatpush.bf16.msra.mxu0 0
      %877 = vmatpush.bf16.msra.mxu0 0
      %878 = vmatpush.bf16.msra.mxu0 %v866
      %879 = vmatmul.bf16.gmra.mxu0 %v869
      %v880 = vpop.f32.mrf.mxu0
      %v881 = vadd.f32 0.0, %v880
      %v882 = vpop.f32.mrf.mxu0
      %v883 = vadd.f32 0.0, %v882
      %884 = vdwg.mxu0
      %v887 = vunpack.c.l.b16 %v799
      %v888 = vunpack.c.l.b16 %v800
      %v889 = vpack.c.b16 %v888, %v887
      %v892 = vunpack.c.l.b16 %v410
      %v893 = vunpack.c.l.b16 %v411
      %v894 = vpack.c.b16 %v893, %v892
      %v897 = vsel %vm422, %v889, 0
      %899 = vmatpush.bf16.msra.mxu0 0
      %900 = vmatpush.bf16.msra.mxu0 0
      %901 = vmatpush.bf16.msra.mxu0 0
      %902 = vmatpush.bf16.msra.mxu0 0
      %903 = vmatpush.bf16.msra.mxu0 0
      %904 = vmatpush.bf16.msra.mxu0 0
      %905 = vmatpush.bf16.msra.mxu0 0
      %906 = vmatpush.bf16.msra.mxu0 %v894
      %907 = vmatmul.bf16.gmra.mxu0 %v897
      %v908 = vpop.f32.mrf.mxu0
      %v909 = vadd.f32 0.0, %v908
      %v910 = vpop.f32.mrf.mxu0
      %v911 = vadd.f32 0.0, %v910
      %912 = vdwg.mxu0
      %913 = vst.msk [vmem:[%s385] sm:$0xff] %vm422, %v825
      %914 = vst.msk [vmem:[%s385 + $0x8] sm:$0xff] %vm422, %v827
      %915 = vst.msk [vmem:[%s385 + $0x10] sm:$0xff] %vm422, %v853
      %916 = vst.msk [vmem:[%s385 + $0x18] sm:$0xff] %vm422, %v855
      %917 = vst.msk [vmem:[%s385 + $0x20] sm:$0xff] %vm422, %v881
      %918 = vst.msk [vmem:[%s385 + $0x28] sm:$0xff] %vm422, %v883
      %919 = vst.msk [vmem:[%s385 + $0x30] sm:$0xff] %vm422, %v909
      %920 = vst.msk [vmem:[%s385 + $0x38] sm:$0xff] %vm422, %v911
      %s921 = smul.u32 4, %s18
      %p922 = scmp.lt.s32.totalorder %s921, 7
      %s923 = scalar_select %p922, %s921, 7
      %s924 = smul.addr %s923, 2
      %s925 = smul.addr %s924, 8
      %s926 = scalar_lea.vmem %s7, %s925
      // Predicated region
      $region49: #{mhr_medseg_forward.25} parent=47 // pred_check
        %p927 = pneg %p208
      $region50: #{mhr_medseg_forward.25} parent=47 // pred_check_branch
        %929 = sbr.rel (%p927) target = $region52
      $region51: #{mhr_medseg_forward.25} parent=47 // pred_region
        %s930 = smul.u32 4, %s18
      $region52: #{mhr_medseg_forward.25} parent=47 // pred_fallthru
        _
    $region48: #{mhr_medseg_forward.25} parent=5 // pred_fallthru
      _
    %p931 = scmp.le.s32.totalorder 2, %s13
    // Predicated region
    $region53: #{mhr_medseg_forward.25} parent=5 // pred_check
      %p932 = pneg %p931
    $region54: #{mhr_medseg_forward.25} parent=5 // pred_check_branch
      %934 = sbr.rel (%p932) target = $region56
    $region55: #{mhr_medseg_forward.25} parent=5 // pred_region
      %s935 = ssub.s32 %s13, 2
      // Predicated region
      $region57: #{mhr_medseg_forward.25} parent=55 // pred_check
        %p936 = pneg %p214
      $region58: #{mhr_medseg_forward.25} parent=55 // pred_check_branch
        %938 = sbr.rel (%p936) target = $region60
      $region59: #{mhr_medseg_forward.25} parent=55 // pred_region
        %s939 = smul.u32 4, %s19
        %p940 = scmp.lt.s32.totalorder %s939, 7
        %s941 = scalar_select %p940, %s939, 7
        %s942 = smul.addr %s941, 2
        %s943 = smul.addr %s942, 8
        %s944 = scalar_lea.vmem %s7, %s943
      $region60: #{mhr_medseg_forward.25} parent=55 // pred_fallthru
        _
    $region56: #{mhr_medseg_forward.25} parent=5 // pred_fallthru
      _
  $region6: #{mhr_medseg_forward.25} parent=0 // loop_footer
    %s17 = sadd.s32 1, %s13
  $region7: #{mhr_medseg_forward.25} parent=0 // loop_footer_branch
    %12 = sbr.rel target = $region3
  $region8: #{mhr_medseg_forward.25} parent=0 // loop_exit
    _

// kernel: mhr_medseg_forward.37
$region0: #{mhr_medseg_forward.37}
  #allocation0 [shape = 'u32[]', space=smem, size = 0x4, offset = 0x4, fixed_abs, tag = 'smem constant byte address 0x4 - core index']
  #allocation1 [shape = 'u32[72,128]{1,0:T(1,128)}', space=vmem, size = 0x9000, scoped, tag = 'internal scratch']
  %s0 = inlined_call_operand.vmem [shape: bf16[2,6,6,128], index: 0, kind: input, shape index: {}]
  %s1 = inlined_call_operand.vmem [shape: bf16[9,128,128], index: 1, kind: input, shape index: {}]
  %s2 = inlined_call_operand.vmem [shape: f32[1,128], index: 2, kind: input, shape index: {}]
  %s3 = inlined_call_operand.vmem [shape: f32[1,128], index: 3, kind: input, shape index: {}]
  %s4 = inlined_call_operand.hbm [shape: f32[2,4,4,128], index: 4, kind: output, shape index: {}]
  %s5 = sld [smem:[#allocation0]]
  $region49: #{mhr_medseg_forward.37} parent=0
    _
  %s7 = ssub.s32 1, %s5
  %s8 = scalar_select 0, %s7, %s5
  $region1: #{mhr_medseg_forward.37} parent=0
    #allocation2 [shape = 'u8[16384]{0}', space=vmem, size = 0x4000, scoped, tag = 'output window, operand 0']
    #allocation3 [shape = 's32[2]{0}', space=sflag, size = 0x8, scoped, tag = 'scoped memory for mhr_medseg_forward.37']
    %9 = vsyncpa [#allocation3], 0
    %s10 = scalar_lea.sflag [#allocation3], 1
    %11 = vsyncpa %s10, 0
    loop: start=0, step=1, limit=4
    $region2: #{mhr_medseg_forward.37} parent=1 // loop_pre_header
      _
    $region3: #{mhr_medseg_forward.37} parent=1 // loop_header
      %s13 = sphi 0, %s17
      %p14 = scmp.ge.s32.totalorder %s13, 4
      %s23 = sphi 0, %s25
      %s26 = sphi 0, %s23
      %s27 = sphi 0, %s26
      %s43 = sphi 0, %s27
      %s47 = sphi 0, %s47
      %s49 = sphi 0, %s47
      %s50 = sphi 0, %s49
      %s64 = sphi 0, %s50
      %s68 = sphi 0, %s68
      %s70 = sphi 0, %s68
      %s71 = sphi 0, %s70
      %s85 = sphi 0, %s71
      %s89 = sphi 0, %s89
      %s91 = sphi 0, %s89
      %s92 = sphi 0, %s91
      %s106 = sphi 0, %s92
      %s112 = sphi 0, %s114
      %s115 = sphi 0, %s112
      %s116 = sphi 0, %s115
      %s132 = sphi 0, %s116
    $region4: #{mhr_medseg_forward.37} parent=1 // loop_header_branch
      %16 = sbr.rel (%p14) target = $region8
    $region5: #{mhr_medseg_forward.37} parent=1 // loop_body
      %s18 = ssub.s32 %s13, 1
      %s19 = ssub.s32 %s13, 2
      %s20 = sadd.s32 %s13, 1
      %s21 = ssub.s32 %s13, %s20
      %p22 = scmp.eq.s32.totalorder %s21, 0
      %s24 = sadd.s32 %s23, 1
      %s25 = scalar_select %p22, %s23, %s24
      %p28 = pneg %p22
      %p29 = scmp.eq.s32.totalorder %s13, 1
      %p30 = por %p28, %p29
      %p31 = scmp.ne.s32.totalorder %s23, %s26
      %p32 = scmp.eq.s32.totalorder %s13, 0
      %p33 = por %p31, %p32
      %p34 = scmp.ne.s32.totalorder %s23, %s26
      %p35 = scmp.eq.s32.totalorder %s18, 1
      %p36 = por %p34, %p35
      %p37 = scmp.ne.s32.totalorder %s26, %s27
      %p38 = scmp.eq.s32.totalorder %s18, 0
      %p39 = por %p37, %p38
      %p40 = scmp.ne.s32.totalorder %s26, %s27
      %p41 = scmp.eq.s32.totalorder %s19, 1
      %p42 = por %p40, %p41
      %p44 = scmp.ne.s32.totalorder %s27, %s43
      %p45 = scmp.eq.s32.totalorder %s19, 0
      %p46 = por %p44, %p45
      %s48 = sadd.s32 %s47, 1
      %p51 = scmp.eq.s32.totalorder %s13, 1
      %p52 = scmp.ne.s32.totalorder %s47, %s49
      %p53 = scmp.eq.s32.totalorder %s13, 0
      %p54 = por %p52, %p53
      %p55 = scmp.ne.s32.totalorder %s47, %s49
      %p56 = scmp.eq.s32.totalorder %s18, 1
      %p57 = por %p55, %p56
      %p58 = scmp.ne.s32.totalorder %s49, %s50
      %p59 = scmp.eq.s32.totalorder %s18, 0
      %p60 = por %p58, %p59
      %p61 = scmp.ne.s32.totalorder %s49, %s50
      %p62 = scmp.eq.s32.totalorder %s19, 1
      %p63 = por %p61, %p62
      %p65 = scmp.ne.s32.totalorder %s50, %s64
      %p66 = scmp.eq.s32.totalorder %s19, 0
      %p67 = por %p65, %p66
      %s69 = sadd.s32 %s68, 1
      %p72 = scmp.eq.s32.totalorder %s13, 1
      %p73 = scmp.ne.s32.totalorder %s68, %s70
      %p74 = scmp.eq.s32.totalorder %s13, 0
      %p75 = por %p73, %p74
      %p76 = scmp.ne.s32.totalorder %s68, %s70
      %p77 = scmp.eq.s32.totalorder %s18, 1
      %p78 = por %p76, %p77
      %p79 = scmp.ne.s32.totalorder %s70, %s71
      %p80 = scmp.eq.s32.totalorder %s18, 0
      %p81 = por %p79, %p80
      %p82 = scmp.ne.s32.totalorder %s70, %s71
      %p83 = scmp.eq.s32.totalorder %s19, 1
      %p84 = por %p82, %p83
      %p86 = scmp.ne.s32.totalorder %s71, %s85
      %p87 = scmp.eq.s32.totalorder %s19, 0
      %p88 = por %p86, %p87
      %s90 = sadd.s32 %s89, 1
      %p93 = scmp.eq.s32.totalorder %s13, 1
      %p94 = scmp.ne.s32.totalorder %s89, %s91
      %p95 = scmp.eq.s32.totalorder %s13, 0
      %p96 = por %p94, %p95
      %p97 = scmp.ne.s32.totalorder %s89, %s91
      %p98 = scmp.eq.s32.totalorder %s18, 1
      %p99 = por %p97, %p98
      %p100 = scmp.ne.s32.totalorder %s91, %s92
      %p101 = scmp.eq.s32.totalorder %s18, 0
      %p102 = por %p100, %p101
      %p103 = scmp.ne.s32.totalorder %s91, %s92
      %p104 = scmp.eq.s32.totalorder %s19, 1
      %p105 = por %p103, %p104
      %p107 = scmp.ne.s32.totalorder %s92, %s106
      %p108 = scmp.eq.s32.totalorder %s19, 0
      %p109 = por %p107, %p108
      %s110 = ssub.s32 %s13, %s20
      %p111 = scmp.eq.s32.totalorder %s110, 0
      %s113 = sadd.s32 %s112, 1
      %s114 = scalar_select %p111, %s112, %s113
      %p117 = pneg %p111
      %p118 = scmp.eq.s32.totalorder %s13, 1
      %p119 = por %p117, %p118
      %p120 = scmp.ne.s32.totalorder %s112, %s115
      %p121 = scmp.eq.s32.totalorder %s13, 0
      %p122 = por %p120, %p121
      %p123 = scmp.ne.s32.totalorder %s112, %s115
      %p124 = scmp.eq.s32.totalorder %s18, 1
      %p125 = por %p123, %p124
      %p126 = scmp.ne.s32.totalorder %s115, %s116
      %p127 = scmp.eq.s32.totalorder %s18, 0
      %p128 = por %p126, %p127
      %p129 = scmp.ne.s32.totalorder %s115, %s116
      %p130 = scmp.eq.s32.totalorder %s19, 1
      %p131 = por %p129, %p130
      %p133 = scmp.ne.s32.totalorder %s116, %s132
      %p134 = scmp.eq.s32.totalorder %s19, 0
      %p135 = por %p133, %p134
      %p136 = scmp.le.s32.totalorder 1, %s13
      %p137 = scmp.lt.s32.totalorder %s13, 3
      %p138 = pnand %p136, %p137
      %p139 = pneg %p138
      // Predicated region
      $region9: #{mhr_medseg_forward.37} parent=5 // pred_check
        _
      $region10: #{mhr_medseg_forward.37} parent=5 // pred_check_branch
        %141 = sbr.rel (%p138) target = $region12
      $region11: #{mhr_medseg_forward.37} parent=5 // pred_region
        %s142 = ssub.s32 %s13, 1
        // Predicated region
        $region13: #{mhr_medseg_forward.37} parent=11 // pred_check
          %p143 = pneg %p60
        $region14: #{mhr_medseg_forward.37} parent=11 // pred_check_branch
          %145 = sbr.rel (%p143) target = $region16
        $region15: #{mhr_medseg_forward.37} parent=11 // pred_region
          _
        $region16: #{mhr_medseg_forward.37} parent=11 // pred_fallthru
          _
        // Predicated region
        $region17: #{mhr_medseg_forward.37} parent=11 // pred_check
          %p146 = pneg %p81
        $region18: #{mhr_medseg_forward.37} parent=11 // pred_check_branch
          %148 = sbr.rel (%p146) target = $region20
        $region19: #{mhr_medseg_forward.37} parent=11 // pred_region
          _
        $region20: #{mhr_medseg_forward.37} parent=11 // pred_fallthru
          _
        // Predicated region
        $region21: #{mhr_medseg_forward.37} parent=11 // pred_check
          %p149 = pneg %p102
        $region22: #{mhr_medseg_forward.37} parent=11 // pred_check_branch
          %151 = sbr.rel (%p149) target = $region24
        $region23: #{mhr_medseg_forward.37} parent=11 // pred_region
          _
        $region24: #{mhr_medseg_forward.37} parent=11 // pred_fallthru
          _
      $region12: #{mhr_medseg_forward.37} parent=5 // pred_fallthru
        _
      %p152 = scmp.lt.s32.totalorder %s13, 2
      // Predicated region
      $region25: #{mhr_medseg_forward.37} parent=5 // pred_check
        %p153 = pneg %p152
      $region26: #{mhr_medseg_forward.37} parent=5 // pred_check_branch
        %155 = sbr.rel (%p153) target = $region28
      $region27: #{mhr_medseg_forward.37} parent=5 // pred_region
        // Predicated region
        $region29: #{mhr_medseg_forward.37} parent=27 // pred_check
          %p156 = pneg %p33
        $region30: #{mhr_medseg_forward.37} parent=27 // pred_check_branch
          %158 = sbr.rel (%p156) target = $region32
        $region31: #{mhr_medseg_forward.37} parent=27 // pred_region
          %p159 = scmp.lt.s32.totalorder %s13, 1
          %s160 = scalar_select %p159, %s13, 1
          %s161 = smul.addr %s160, 6
          %s162 = smul.addr %s161, 4
          %s163 = scalar_lea.vmem %s0, %s162
        $region32: #{mhr_medseg_forward.37} parent=27 // pred_fallthru
          _
      $region28: #{mhr_medseg_forward.37} parent=5 // pred_fallthru
        _
      %p164 = scmp.le.s32.totalorder 1, %s13
      %p165 = scmp.lt.s32.totalorder %s13, 3
      %p166 = pnand %p164, %p165
      %p167 = pneg %p166
      // Predicated region
      $region33: #{mhr_medseg_forward.37} parent=5 // pred_check
        _
      $region34: #{mhr_medseg_forward.37} parent=5 // pred_check_branch
        %169 = sbr.rel (%p166) target = $region36
      $region35: #{mhr_medseg_forward.37} parent=5 // pred_region
        %s170 = ssub.s32 %s13, 1
        %p171 = scmp.lt.s32.totalorder %s18, 1
        %s172 = scalar_select %p171, %s18, 1
        %s173 = smul.addr %s172, 6
        %s174 = smul.addr %s173, 4
        %s175 = scalar_lea.vmem %s0, %s174
        %p176 = pneg %p39
        %p177 = pneg %p36
        %p178 = pneg %p60
        %p179 = pneg %p57
        %p180 = pneg %p81
        %p181 = pneg %p78
        %p182 = pneg %p102
        %p183 = pneg %p99
        %p184 = pneg %p128
        %p185 = pneg %p125
        %s186 = sand.u32 %s115, 1
        %s187 = scalar_lea.sflag [#allocation3], %s186
        %s188 = sand.u32 %s115, 1
        %s189 = smul.addr %s188, 16
        %s190 = scalar_lea.vmem [#allocation2], %s189
        %p191 = scmp.lt.s32.totalorder %s18, 1
        %s192 = scalar_select %p191, %s18, 1
        %s193 = smul.addr %s192, 6
        %s194 = smul.addr %s193, 4
        %s195 = scalar_lea.vmem %s0, %s194
        %v196 = vld [vmem:[%s195] sm:$0x7]
        %v197 = vld [vmem:[%s195 + $0x4] sm:$0x7]
        %v198 = vld [vmem:[%s195 + $0x8] sm:$0x7]
        %v199 = vld [vmem:[%s195 + $0xc] sm:$0x7]
        %v200 = vld [vmem:[%s195 + $0x10] sm:$0x7]
        %v201 = vld [vmem:[%s195 + $0x14] sm:$0x7]
        %v202 = vld [vmem:[%s1] sm:$0xf]
        %v203 = vld [vmem:[%s1 + $0x4] sm:$0xf]
        %v204 = vld [vmem:[%s1 + $0x8] sm:$0xf]
        %v205 = vld [vmem:[%s1 + $0xc] sm:$0xf]
        %v206 = vld [vmem:[%s1 + $0x10] sm:$0xf]
        %v207 = vld [vmem:[%s1 + $0x14] sm:$0xf]
        %v208 = vld [vmem:[%s1 + $0x18] sm:$0xf]
        %v209 = vld [vmem:[%s1 + $0x1c] sm:$0xf]
        %v210 = vld [vmem:[%s1 + $0x20] sm:$0xf]
        %v211 = vld [vmem:[%s1 + $0x24] sm:$0xf]
        %v212 = vld [vmem:[%s1 + $0x28] sm:$0xf]
        %v213 = vld [vmem:[%s1 + $0x2c] sm:$0xf]
        %v214 = vld [vmem:[%s1 + $0x30] sm:$0xf]
        %v215 = vld [vmem:[%s1 + $0x34] sm:$0xf]
        %v216 = vld [vmem:[%s1 + $0x38] sm:$0xf]
        %v217 = vld [vmem:[%s1 + $0x3c] sm:$0xf]
        %v222 = vrot.slane %v196, 2
        %v223 = vrot.slane %v197, 2
        %v224 = vrot.slane %v198, 2
        %v225 = vrot.slane %v199, 2
        %vm226 = vcmask 1041408
        %v229 = vsel %vm226, %v196, %v222
        %vm230 = vcmask 1043458
        %v231 = vsel %vm230, %v196, %v222
        %v233 = vrot.slane %v231, 2
        %v236 = vsel %vm226, %v197, %v223
        %v237 = vsel %vm230, %v197, %v223
        %v239 = vrot.slane %v237, 2
        %v242 = vsel %vm226, %v198, %v224
        %v243 = vsel %vm230, %v198, %v224
        %v245 = vrot.slane %v243, 2
        %v248 = vsel %vm226, %v199, %v225
        %v249 = vsel %vm230, %v199, %v225
        %v251 = vrot.slane %v249, 2
        %vm252 = vsmask.f32 1280
        %vm253 = vsmask.f32 3336
        %vm254 = vmor %vm252, %vm253
        %vm255 = vsmask.f32 5392
        %vm256 = vmor %vm254, %vm255
        %vm257 = vsmask.f32 7448
        %vm258 = vmor %vm256, %vm257
        %v259 = vshrl.u32 %v229, 16
        %v261 = vrot.slane %v259, 6
        %v262 = vshll.u32 %v229, 16
        %v264 = vrot.slane %v262, 7
        %v265 = vor.u32 %v261, %v264
        %v266 = vrot.slane %v265, 2
        %v268 = vshll.u32 %v233, 16
        %v270 = vrot.slane %v268, 7
        %v271 = vsel %vm258, %v266, %v270
        %v272 = vshrl.u32 %v236, 16
        %v274 = vrot.slane %v272, 6
        %v275 = vshll.u32 %v236, 16
        %v277 = vrot.slane %v275, 7
        %v278 = vor.u32 %v274, %v277
        %v279 = vrot.slane %v278, 2
        %v281 = vshll.u32 %v239, 16
        %v283 = vrot.slane %v281, 7
        %v284 = vsel %vm258, %v279, %v283
        %v285 = vshrl.u32 %v242, 16
        %v287 = vrot.slane %v285, 6
        %v288 = vshll.u32 %v242, 16
        %v290 = vrot.slane %v288, 7
        %v291 = vor.u32 %v287, %v290
        %v292 = vrot.slane %v291, 2
        %v294 = vshll.u32 %v245, 16
        %v296 = vrot.slane %v294, 7
        %v297 = vsel %vm258, %v292, %v296
        %v298 = vshrl.u32 %v248, 16
        %v300 = vrot.slane %v298, 6
        %v301 = vshll.u32 %v248, 16
        %v303 = vrot.slane %v301, 7
        %v304 = vor.u32 %v300, %v303
        %v305 = vrot.slane %v304, 2
        %v307 = vshll.u32 %v251, 16
        %v309 = vrot.slane %v307, 7
        %v310 = vsel %vm258, %v305, %v309
        %s311 = scalar_lea.vmem %s1, 64
        %v312 = vld [vmem:[%s311] sm:$0xf]
        %v313 = vld [vmem:[%s311 + $0x4] sm:$0xf]
        %v314 = vld [vmem:[%s311 + $0x8] sm:$0xf]
        %v315 = vld [vmem:[%s311 + $0xc] sm:$0xf]
        %v316 = vld [vmem:[%s311 + $0x10] sm:$0xf]
        %v317 = vld [vmem:[%s311 + $0x14] sm:$0xf]
        %v318 = vld [vmem:[%s311 + $0x18] sm:$0xf]
        %v319 = vld [vmem:[%s311 + $0x1c] sm:$0xf]
        %v320 = vld [vmem:[%s311 + $0x20] sm:$0xf]
        %v321 = vld [vmem:[%s311 + $0x24] sm:$0xf]
        %v322 = vld [vmem:[%s311 + $0x28] sm:$0xf]
        %v323 = vld [vmem:[%s311 + $0x2c] sm:$0xf]
        %v324 = vld [vmem:[%s311 + $0x30] sm:$0xf]
        %v325 = vld [vmem:[%s311 + $0x34] sm:$0xf]
        %v326 = vld [vmem:[%s311 + $0x38] sm:$0xf]
        %v327 = vld [vmem:[%s311 + $0x3c] sm:$0xf]
        %329 = vst [vmem:[#allocation1] ss:$4 sm:$0xff] %v271
        %s331 = scalar_lea.vmem [#allocation1], 1
        %332 = vst [vmem:[%s331] ss:$4 sm:$0xff] %v284
        %s334 = scalar_lea.vmem [#allocation1], 2
        %335 = vst [vmem:[%s334] ss:$4 sm:$0xff] %v297
        %s337 = scalar_lea.vmem [#allocation1], 3
        %338 = vst [vmem:[%s337] ss:$4 sm:$0xff] %v310
        %v339 = vld.sshfl [vmem:[#allocation1] sm:$0xff pattern:$0x73625140]
        %v357 = vunpack.c.l.b16 %v312
        %v358 = vunpack.c.l.b16 %v313
        %v359 = vunpack.c.l.b16 %v314
        %v360 = vunpack.c.l.b16 %v315
        %v361 = vunpack.c.l.b16 %v316
        %v362 = vunpack.c.l.b16 %v317
        %v363 = vunpack.c.l.b16 %v318
        %v364 = vunpack.c.l.b16 %v319
        %v365 = vunpack.c.l.b16 %v320
        %v366 = vunpack.c.l.b16 %v321
        %v367 = vunpack.c.l.b16 %v322
        %v368 = vunpack.c.l.b16 %v323
        %v369 = vunpack.c.l.b16 %v324
        %v370 = vunpack.c.l.b16 %v325
        %v371 = vunpack.c.l.b16 %v326
        %v372 = vunpack.c.l.b16 %v327
        %v373 = vpack.c.b16 %v358, %v357
        %v374 = vpack.c.b16 %v360, %v359
        %v375 = vpack.c.b16 %v362, %v361
        %v376 = vpack.c.b16 %v364, %v363
        %v377 = vpack.c.b16 %v366, %v365
        %v378 = vpack.c.b16 %v368, %v367
        %v379 = vpack.c.b16 %v370, %v369
        %v380 = vpack.c.b16 %v372, %v371
        %389 = vmatpush.bf16.msra.mxu0 %v380
        %390 = vmatpush.bf16.msra.mxu0 %v379
        %391 = vmatpush.bf16.msra.mxu0 %v378
        %392 = vmatpush.bf16.msra.mxu0 %v377
        %393 = vmatpush.bf16.msra.mxu0 %v376
        %394 = vmatpush.bf16.msra.mxu0 %v375
        %395 = vmatpush.bf16.msra.mxu0 %v374
        %396 = vmatpush.bf16.msra.mxu0 %v373
        %397 = vmatmul.bf16.gmra.mxu0 %v339
        %v398 = vpop.f32.mrf.mxu0
        %v399 = vadd.f32 0.0, %v398
        %v400 = vpop.f32.mrf.mxu0
        %v401 = vadd.f32 0.0, %v400
        %402 = vdwg.mxu0
        %403 = vst [vmem:[#allocation1] ss:$4 sm:$0xff] %v196
        %s404 = scalar_lea.vmem [#allocation1], 1
        %405 = vst [vmem:[%s404] ss:$4 sm:$0xff] %v197
        %s406 = scalar_lea.vmem [#allocation1], 2
        %407 = vst [vmem:[%s406] ss:$4 sm:$0xff] %v198
        %s408 = scalar_lea.vmem [#allocation1], 3
        %409 = vst [vmem:[%s408] ss:$4 sm:$0xff] %v199
        %v410 = vld.sshfl [vmem:[#allocation1] sm:$0xff pattern:$0x73625140]
        %v428 = vunpack.c.l.b16 %v202
        %v429 = vunpack.c.l.b16 %v203
        %v430 = vunpack.c.l.b16 %v204
        %v431 = vunpack.c.l.b16 %v205
        %v432 = vunpack.c.l.b16 %v206
        %v433 = vunpack.c.l.b16 %v207
        %v434 = vunpack.c.l.b16 %v208
        %v435 = vunpack.c.l.b16 %v209
        %v436 = vunpack.c.l.b16 %v210
        %v437 = vunpack.c.l.b16 %v211
        %v438 = vunpack.c.l.b16 %v212
        %v439 = vunpack.c.l.b16 %v213
        %v440 = vunpack.c.l.b16 %v214
        %v441 = vunpack.c.l.b16 %v215
        %v442 = vunpack.c.l.b16 %v216
        %v443 = vunpack.c.l.b16 %v217
        %v444 = vpack.c.b16 %v429, %v428
        %v445 = vpack.c.b16 %v431, %v430
        %v446 = vpack.c.b16 %v433, %v432
        %v447 = vpack.c.b16 %v435, %v434
        %v448 = vpack.c.b16 %v437, %v436
        %v449 = vpack.c.b16 %v439, %v438
        %v450 = vpack.c.b16 %v441, %v440
        %v451 = vpack.c.b16 %v443, %v442
        %460 = vmatpush.bf16.msra.mxu0 %v451
        %461 = vmatpush.bf16.msra.mxu0 %v450
        %462 = vmatpush.bf16.msra.mxu0 %v449
        %463 = vmatpush.bf16.msra.mxu0 %v448
        %464 = vmatpush.bf16.msra.mxu0 %v447
        %465 = vmatpush.bf16.msra.mxu0 %v446
        %466 = vmatpush.bf16.msra.mxu0 %v445
        %467 = vmatpush.bf16.msra.mxu0 %v444
        %468 = vmatmul.bf16.gmra.mxu0 %v410
        %v469 = vpop.f32.mrf.mxu0
        %v470 = vadd.f32 %v399, %v469
        %v471 = vpop.f32.mrf.mxu0
        %v472 = vadd.f32 %v401, %v471
        %473 = vdwg.mxu0
        %vm478 = vcmask 1040384
        %vm479 = vcmask 1042434
        %vm480 = vmor %vm478, %vm479
        %vm481 = vcmask 1044484
        %vm482 = vmor %vm480, %vm481
        %vm483 = vcmask 1046534
        %vm484 = vmor %vm482, %vm483
        %v485 = vrot.slane %v229, 7
        %v486 = vrot.slane %v485, 2
        %v487 = vrot.slane %v233, 7
        %v488 = vsel %vm484, %v486, %v487
        %v489 = vrot.slane %v236, 7
        %v490 = vrot.slane %v489, 2
        %v491 = vrot.slane %v239, 7
        %v492 = vsel %vm484, %v490, %v491
        %v493 = vrot.slane %v242, 7
        %v494 = vrot.slane %v493, 2
        %v495 = vrot.slane %v245, 7
        %v496 = vsel %vm484, %v494, %v495
        %v497 = vrot.slane %v248, 7
        %v498 = vrot.slane %v497, 2
        %v499 = vrot.slane %v251, 7
        %v500 = vsel %vm484, %v498, %v499
        %s501 = scalar_lea.vmem %s1, 128
        %v502 = vld [vmem:[%s501] sm:$0xf]
        %v503 = vld [vmem:[%s501 + $0x4] sm:$0xf]
        %v504 = vld [vmem:[%s501 + $0x8] sm:$0xf]
        %v505 = vld [vmem:[%s501 + $0xc] sm:$0xf]
        %v506 = vld [vmem:[%s501 + $0x10] sm:$0xf]
        %v507 = vld [vmem:[%s501 + $0x14] sm:$0xf]
        %v508 = vld [vmem:[%s501 + $0x18] sm:$0xf]
        %v509 = vld [vmem:[%s501 + $0x1c] sm:$0xf]
        %v510 = vld [vmem:[%s501 + $0x20] sm:$0xf]
        %v511 = vld [vmem:[%s501 + $0x24] sm:$0xf]
        %v512 = vld [vmem:[%s501 + $0x28] sm:$0xf]
        %v513 = vld [vmem:[%s501 + $0x2c] sm:$0xf]
        %v514 = vld [vmem:[%s501 + $0x30] sm:$0xf]
        %v515 = vld [vmem:[%s501 + $0x34] sm:$0xf]
        %v516 = vld [vmem:[%s501 + $0x38] sm:$0xf]
        %v517 = vld [vmem:[%s501 + $0x3c] sm:$0xf]
        %519 = vst [vmem:[#allocation1] ss:$4 sm:$0xff] %v488
        %s521 = scalar_lea.vmem [#allocation1], 1
        %522 = vst [vmem:[%s521] ss:$4 sm:$0xff] %v492
        %s524 = scalar_lea.vmem [#allocation1], 2
        %525 = vst [vmem:[%s524] ss:$4 sm:$0xff] %v496
        %s527 = scalar_lea.vmem [#allocation1], 3
        %528 = vst [vmem:[%s527] ss:$4 sm:$0xff] %v500
        %v529 = vld.sshfl [vmem:[#allocation1] sm:$0xff pattern:$0x73625140]
        %v547 = vunpack.c.l.b16 %v502
        %v548 = vunpack.c.l.b16 %v503
        %v549 = vunpack.c.l.b16 %v504
        %v550 = vunpack.c.l.b16 %v505
        %v551 = vunpack.c.l.b16 %v506
        %v552 = vunpack.c.l.b16 %v507
        %v553 = vunpack.c.l.b16 %v508
        %v554 = vunpack.c.l.b16 %v509
        %v555 = vunpack.c.l.b16 %v510
        %v556 = vunpack.c.l.b16 %v511
        %v557 = vunpack.c.l.b16 %v512
        %v558 = vunpack.c.l.b16 %v513
        %v559 = vunpack.c.l.b16 %v514
        %v560 = vunpack.c.l.b16 %v515
        %v561 = vunpack.c.l.b16 %v516
        %v562 = vunpack.c.l.b16 %v517
        %v563 = vpack.c.b16 %v548, %v547
        %v564 = vpack.c.b16 %v550, %v549
        %v565 = vpack.c.b16 %v552, %v551
        %v566 = vpack.c.b16 %v554, %v553
        %v567 = vpack.c.b16 %v556, %v555
        %v568 = vpack.c.b16 %v558, %v557
        %v569 = vpack.c.b16 %v560, %v559
        %v570 = vpack.c.b16 %v562, %v561
        %579 = vmatpush.bf16.msra.mxu0 %v570
        %580 = vmatpush.bf16.msra.mxu0 %v569
        %581 = vmatpush.bf16.msra.mxu0 %v568
        %582 = vmatpush.bf16.msra.mxu0 %v567
        %583 = vmatpush.bf16.msra.mxu0 %v566
        %584 = vmatpush.bf16.msra.mxu0 %v565
        %585 = vmatpush.bf16.msra.mxu0 %v564
        %586 = vmatpush.bf16.msra.mxu0 %v563
        %587 = vmatmul.bf16.gmra.mxu0 %v529
        %v588 = vpop.f32.mrf.mxu0
        %v589 = vadd.f32 0.0, %v588
        %v590 = vpop.f32.mrf.mxu0
        %v591 = vadd.f32 0.0, %v590
        %592 = vdwg.mxu0
        %v593 = vadd.f32 %v470, %v589
        %v594 = vadd.f32 %v472, %v591
        %s595 = scalar_lea.vmem %s1, 192
        %v596 = vld [vmem:[%s595] sm:$0xf]
        %v597 = vld [vmem:[%s595 + $0x4] sm:$0xf]
        %v598 = vld [vmem:[%s595 + $0x8] sm:$0xf]
        %v599 = vld [vmem:[%s595 + $0xc] sm:$0xf]
        %v600 = vld [vmem:[%s595 + $0x10] sm:$0xf]
        %v601 = vld [vmem:[%s595 + $0x14] sm:$0xf]
        %v602 = vld [vmem:[%s595 + $0x18] sm:$0xf]
        %v603 = vld [vmem:[%s595 + $0x1c] sm:$0xf]
        %v604 = vld [vmem:[%s595 + $0x20] sm:$0xf]
        %v605 = vld [vmem:[%s595 + $0x24] sm:$0xf]
        %v606 = vld [vmem:[%s595 + $0x28] sm:$0xf]
        %v607 = vld [vmem:[%s595 + $0x2c] sm:$0xf]
        %v608 = vld [vmem:[%s595 + $0x30] sm:$0xf]
        %v609 = vld [vmem:[%s595 + $0x34] sm:$0xf]
        %v610 = vld [vmem:[%s595 + $0x38] sm:$0xf]
        %v611 = vld [vmem:[%s595 + $0x3c] sm:$0xf]
        %612 = vst [vmem:[#allocation1] ss:$4 sm:$0xff] %v197
        %s613 = scalar_lea.vmem [#allocation1], 1
        %614 = vst [vmem:[%s613] ss:$4 sm:$0xff] %v198
        %s615 = scalar_lea.vmem [#allocation1], 2
        %616 = vst [vmem:[%s615] ss:$4 sm:$0xff] %v199
        %s618 = scalar_lea.vmem [#allocation1], 3
        %619 = vst [vmem:[%s618] ss:$4 sm:$0xff] %v200
        %v620 = vld.sshfl [vmem:[#allocation1] sm:$0xff pattern:$0x73625140]
        %v638 = vunpack.c.l.b16 %v596
        %v639 = vunpack.c.l.b16 %v597
        %v640 = vunpack.c.l.b16 %v598
        %v641 = vunpack.c.l.b16 %v599
        %v642 = vunpack.c.l.b16 %v600
        %v643 = vunpack.c.l.b16 %v601
        %v644 = vunpack.c.l.b16 %v602
        %v645 = vunpack.c.l.b16 %v603
        %v646 = vunpack.c.l.b16 %v604
        %v647 = vunpack.c.l.b16 %v605
        %v648 = vunpack.c.l.b16 %v606
        %v649 = vunpack.c.l.b16 %v607
        %v650 = vunpack.c.l.b16 %v608
        %v651 = vunpack.c.l.b16 %v609
        %v652 = vunpack.c.l.b16 %v610
        %v653 = vunpack.c.l.b16 %v611
        %v654 = vpack.c.b16 %v639, %v638
        %v655 = vpack.c.b16 %v641, %v640
        %v656 = vpack.c.b16 %v643, %v642
        %v657 = vpack.c.b16 %v645, %v644
        %v658 = vpack.c.b16 %v647, %v646
        %v659 = vpack.c.b16 %v649, %v648
        %v660 = vpack.c.b16 %v651, %v650
        %v661 = vpack.c.b16 %v653, %v652
        %670 = vmatpush.bf16.msra.mxu0 %v661
        %671 = vmatpush.bf16.msra.mxu0 %v660
        %672 = vmatpush.bf16.msra.mxu0 %v659
        %673 = vmatpush.bf16.msra.mxu0 %v658
        %674 = vmatpush.bf16.msra.mxu0 %v657
        %675 = vmatpush.bf16.msra.mxu0 %v656
        %676 = vmatpush.bf16.msra.mxu0 %v655
        %677 = vmatpush.bf16.msra.mxu0 %v654
        %678 = vmatmul.bf16.gmra.mxu0 %v620
        %v679 = vpop.f32.mrf.mxu0
        %v680 = vadd.f32 0.0, %v679
        %v681 = vpop.f32.mrf.mxu0
        %v682 = vadd.f32 0.0, %v681
        %683 = vdwg.mxu0
        %v684 = vadd.f32 %v593, %v680
        %v685 = vadd.f32 %v594, %v682
        %v687 = vrot.slane %v200, 2
        %v689 = vsel %vm226, %v200, %v687
        %v690 = vsel %vm230, %v200, %v687
        %v692 = vrot.slane %v690, 2
        %v693 = vshrl.u32 %v689, 16
        %v695 = vrot.slane %v693, 6
        %v696 = vshll.u32 %v689, 16
        %v698 = vrot.slane %v696, 7
        %v699 = vor.u32 %v695, %v698
        %v700 = vrot.slane %v699, 2
        %v702 = vshll.u32 %v692, 16
        %v704 = vrot.slane %v702, 7
        %v705 = vsel %vm258, %v700, %v704
        %s706 = scalar_lea.vmem %s1, 256
        %v707 = vld [vmem:[%s706] sm:$0xf]
        %v708 = vld [vmem:[%s706 + $0x4] sm:$0xf]
        %v709 = vld [vmem:[%s706 + $0x8] sm:$0xf]
        %v710 = vld [vmem:[%s706 + $0xc] sm:$0xf]
        %v711 = vld [vmem:[%s706 + $0x10] sm:$0xf]
        %v712 = vld [vmem:[%s706 + $0x14] sm:$0xf]
        %v713 = vld [vmem:[%s706 + $0x18] sm:$0xf]
        %v714 = vld [vmem:[%s706 + $0x1c] sm:$0xf]
        %v715 = vld [vmem:[%s706 + $0x20] sm:$0xf]
        %v716 = vld [vmem:[%s706 + $0x24] sm:$0xf]
        %v717 = vld [vmem:[%s706 + $0x28] sm:$0xf]
        %v718 = vld [vmem:[%s706 + $0x2c] sm:$0xf]
        %v719 = vld [vmem:[%s706 + $0x30] sm:$0xf]
        %v720 = vld [vmem:[%s706 + $0x34] sm:$0xf]
        %v721 = vld [vmem:[%s706 + $0x38] sm:$0xf]
        %v722 = vld [vmem:[%s706 + $0x3c] sm:$0xf]
        %723 = vst [vmem:[#allocation1] ss:$4 sm:$0xff] %v284
        %s724 = scalar_lea.vmem [#allocation1], 1
        %725 = vst [vmem:[%s724] ss:$4 sm:$0xff] %v297
        %s726 = scalar_lea.vmem [#allocation1], 2
        %727 = vst [vmem:[%s726] ss:$4 sm:$0xff] %v310
        %s729 = scalar_lea.vmem [#allocation1], 3
        %730 = vst [vmem:[%s729] ss:$4 sm:$0xff] %v705
        %v731 = vld.sshfl [vmem:[#allocation1] sm:$0xff pattern:$0x73625140]
        %v749 = vunpack.c.l.b16 %v707
        %v750 = vunpack.c.l.b16 %v708
        %v751 = vunpack.c.l.b16 %v709
        %v752 = vunpack.c.l.b16 %v710
        %v753 = vunpack.c.l.b16 %v711
        %v754 = vunpack.c.l.b16 %v712
        %v755 = vunpack.c.l.b16 %v713
        %v756 = vunpack.c.l.b16 %v714
        %v757 = vunpack.c.l.b16 %v715
        %v758 = vunpack.c.l.b16 %v716
        %v759 = vunpack.c.l.b16 %v717
        %v760 = vunpack.c.l.b16 %v718
        %v761 = vunpack.c.l.b16 %v719
        %v762 = vunpack.c.l.b16 %v720
        %v763 = vunpack.c.l.b16 %v721
        %v764 = vunpack.c.l.b16 %v722
        %v765 = vpack.c.b16 %v750, %v749
        %v766 = vpack.c.b16 %v752, %v751
        %v767 = vpack.c.b16 %v754, %v753
        %v768 = vpack.c.b16 %v756, %v755
        %v769 = vpack.c.b16 %v758, %v757
        %v770 = vpack.c.b16 %v760, %v759
        %v771 = vpack.c.b16 %v762, %v761
        %v772 = vpack.c.b16 %v764, %v763
        %781 = vmatpush.bf16.msra.mxu0 %v772
        %782 = vmatpush.bf16.msra.mxu0 %v771
        %783 = vmatpush.bf16.msra.mxu0 %v770
        %784 = vmatpush.bf16.msra.mxu0 %v769
        %785 = vmatpush.bf16.msra.mxu0 %v768
        %786 = vmatpush.bf16.msra.mxu0 %v767
        %787 = vmatpush.bf16.msra.mxu0 %v766
        %788 = vmatpush.bf16.msra.mxu0 %v765
        %789 = vmatmul.bf16.gmra.mxu0 %v731
        %v790 = vpop.f32.mrf.mxu0
        %v791 = vadd.f32 0.0, %v790
        %v792 = vpop.f32.mrf.mxu0
        %v793 = vadd.f32 0.0, %v792
        %794 = vdwg.mxu0
        %v795 = vadd.f32 %v684, %v791
        %v796 = vadd.f32 %v685, %v793
        %v798 = vrot.slane %v689, 7
        %v799 = vrot.slane %v798, 2
        %v800 = vrot.slane %v692, 7
        %v801 = vsel %vm484, %v799, %v800
        %s802 = scalar_lea.vmem %s1, 320
        %v803 = vld [vmem:[%s802] sm:$0xf]
        %v804 = vld [vmem:[%s802 + $0x4] sm:$0xf]
        %v805 = vld [vmem:[%s802 + $0x8] sm:$0xf]
        %v806 = vld [vmem:[%s802 + $0xc] sm:$0xf]
        %v807 = vld [vmem:[%s802 + $0x10] sm:$0xf]
        %v808 = vld [vmem:[%s802 + $0x14] sm:$0xf]
        %v809 = vld [vmem:[%s802 + $0x18] sm:$0xf]
        %v810 = vld [vmem:[%s802 + $0x1c] sm:$0xf]
        %v811 = vld [vmem:[%s802 + $0x20] sm:$0xf]
        %v812 = vld [vmem:[%s802 + $0x24] sm:$0xf]
        %v813 = vld [vmem:[%s802 + $0x28] sm:$0xf]
        %v814 = vld [vmem:[%s802 + $0x2c] sm:$0xf]
        %v815 = vld [vmem:[%s802 + $0x30] sm:$0xf]
        %v816 = vld [vmem:[%s802 + $0x34] sm:$0xf]
        %v817 = vld [vmem:[%s802 + $0x38] sm:$0xf]
        %v818 = vld [vmem:[%s802 + $0x3c] sm:$0xf]
        %819 = vst [vmem:[#allocation1] ss:$4 sm:$0xff] %v492
        %s820 = scalar_lea.vmem [#allocation1], 1
        %821 = vst [vmem:[%s820] ss:$4 sm:$0xff] %v496
        %s822 = scalar_lea.vmem [#allocation1], 2
        %823 = vst [vmem:[%s822] ss:$4 sm:$0xff] %v500
        %s825 = scalar_lea.vmem [#allocation1], 3
        %826 = vst [vmem:[%s825] ss:$4 sm:$0xff] %v801
        %v827 = vld.sshfl [vmem:[#allocation1] sm:$0xff pattern:$0x73625140]
        %v845 = vunpack.c.l.b16 %v803
        %v846 = vunpack.c.l.b16 %v804
        %v847 = vunpack.c.l.b16 %v805
        %v848 = vunpack.c.l.b16 %v806
        %v849 = vunpack.c.l.b16 %v807
        %v850 = vunpack.c.l.b16 %v808
        %v851 = vunpack.c.l.b16 %v809
        %v852 = vunpack.c.l.b16 %v810
        %v853 = vunpack.c.l.b16 %v811
        %v854 = vunpack.c.l.b16 %v812
        %v855 = vunpack.c.l.b16 %v813
        %v856 = vunpack.c.l.b16 %v814
        %v857 = vunpack.c.l.b16 %v815
        %v858 = vunpack.c.l.b16 %v816
        %v859 = vunpack.c.l.b16 %v817
        %v860 = vunpack.c.l.b16 %v818
        %v861 = vpack.c.b16 %v846, %v845
        %v862 = vpack.c.b16 %v848, %v847
        %v863 = vpack.c.b16 %v850, %v849
        %v864 = vpack.c.b16 %v852, %v851
        %v865 = vpack.c.b16 %v854, %v853
        %v866 = vpack.c.b16 %v856, %v855
        %v867 = vpack.c.b16 %v858, %v857
        %v868 = vpack.c.b16 %v860, %v859
        %877 = vmatpush.bf16.msra.mxu0 %v868
        %878 = vmatpush.bf16.msra.mxu0 %v867
        %879 = vmatpush.bf16.msra.mxu0 %v866
        %880 = vmatpush.bf16.msra.mxu0 %v865
        %881 = vmatpush.bf16.msra.mxu0 %v864
        %882 = vmatpush.bf16.msra.mxu0 %v863
        %883 = vmatpush.bf16.msra.mxu0 %v862
        %884 = vmatpush.bf16.msra.mxu0 %v861
        %885 = vmatmul.bf16.gmra.mxu0 %v827
        %v886 = vpop.f32.mrf.mxu0
        %v887 = vadd.f32 0.0, %v886
        %v888 = vpop.f32.mrf.mxu0
        %v889 = vadd.f32 0.0, %v888
        %890 = vdwg.mxu0
        %v891 = vadd.f32 %v795, %v887
        %v892 = vadd.f32 %v796, %v889
        %s893 = scalar_lea.vmem %s1, 384
        %v894 = vld [vmem:[%s893] sm:$0xf]
        %v895 = vld [vmem:[%s893 + $0x4] sm:$0xf]
        %v896 = vld [vmem:[%s893 + $0x8] sm:$0xf]
        %v897 = vld [vmem:[%s893 + $0xc] sm:$0xf]
        %v898 = vld [vmem:[%s893 + $0x10] sm:$0xf]
        %v899 = vld [vmem:[%s893 + $0x14] sm:$0xf]
        %v900 = vld [vmem:[%s893 + $0x18] sm:$0xf]
        %v901 = vld [vmem:[%s893 + $0x1c] sm:$0xf]
        %v902 = vld [vmem:[%s893 + $0x20] sm:$0xf]
        %v903 = vld [vmem:[%s893 + $0x24] sm:$0xf]
        %v904 = vld [vmem:[%s893 + $0x28] sm:$0xf]
        %v905 = vld [vmem:[%s893 + $0x2c] sm:$0xf]
        %v906 = vld [vmem:[%s893 + $0x30] sm:$0xf]
        %v907 = vld [vmem:[%s893 + $0x34] sm:$0xf]
        %v908 = vld [vmem:[%s893 + $0x38] sm:$0xf]
        %v909 = vld [vmem:[%s893 + $0x3c] sm:$0xf]
        %910 = vst [vmem:[#allocation1] ss:$4 sm:$0xff] %v198
        %s911 = scalar_lea.vmem [#allocation1], 1
        %912 = vst [vmem:[%s911] ss:$4 sm:$0xff] %v199
        %s913 = scalar_lea.vmem [#allocation1], 2
        %914 = vst [vmem:[%s913] ss:$4 sm:$0xff] %v200
        %s916 = scalar_lea.vmem [#allocation1], 3
        %917 = vst [vmem:[%s916] ss:$4 sm:$0xff] %v201
        %v918 = vld.sshfl [vmem:[#allocation1] sm:$0xff pattern:$0x73625140]
        %v936 = vunpack.c.l.b16 %v894
        %v937 = vunpack.c.l.b16 %v895
        %v938 = vunpack.c.l.b16 %v896
        %v939 = vunpack.c.l.b16 %v897
        %v940 = vunpack.c.l.b16 %v898
        %v941 = vunpack.c.l.b16 %v899
        %v942 = vunpack.c.l.b16 %v900
        %v943 = vunpack.c.l.b16 %v901
        %v944 = vunpack.c.l.b16 %v902
        %v945 = vunpack.c.l.b16 %v903
        %v946 = vunpack.c.l.b16 %v904
        %v947 = vunpack.c.l.b16 %v905
        %v948 = vunpack.c.l.b16 %v906
        %v949 = vunpack.c.l.b16 %v907
        %v950 = vunpack.c.l.b16 %v908
        %v951 = vunpack.c.l.b16 %v909
        %v952 = vpack.c.b16 %v937, %v936
        %v953 = vpack.c.b16 %v939, %v938
        %v954 = vpack.c.b16 %v941, %v940
        %v955 = vpack.c.b16 %v943, %v942
        %v956 = vpack.c.b16 %v945, %v944
        %v957 = vpack.c.b16 %v947, %v946
        %v958 = vpack.c.b16 %v949, %v948
        %v959 = vpack.c.b16 %v951, %v950
        %968 = vmatpush.bf16.msra.mxu0 %v959
        %969 = vmatpush.bf16.msra.mxu0 %v958
        %970 = vmatpush.bf16.msra.mxu0 %v957
        %971 = vmatpush.bf16.msra.mxu0 %v956
        %972 = vmatpush.bf16.msra.mxu0 %v955
        %973 = vmatpush.bf16.msra.mxu0 %v954
        %974 = vmatpush.bf16.msra.mxu0 %v953
        %975 = vmatpush.bf16.msra.mxu0 %v952
        %976 = vmatmul.bf16.gmra.mxu0 %v918
        %v977 = vpop.f32.mrf.mxu0
        %v978 = vadd.f32 0.0, %v977
        %v979 = vpop.f32.mrf.mxu0
        %v980 = vadd.f32 0.0, %v979
        %981 = vdwg.mxu0
        %v982 = vadd.f32 %v891, %v978
        %v983 = vadd.f32 %v892, %v980
        %v985 = vrot.slane %v201, 2
        %v987 = vsel %vm226, %v201, %v985
        %v988 = vsel %vm230, %v201, %v985
        %v990 = vrot.slane %v988, 2
        %v991 = vshrl.u32 %v987, 16
        %v993 = vrot.slane %v991, 6
        %v994 = vshll.u32 %v987, 16
        %v996 = vrot.slane %v994, 7
        %v997 = vor.u32 %v993, %v996
        %v998 = vrot.slane %v997, 2
        %v1000 = vshll.u32 %v990, 16
        %v1002 = vrot.slane %v1000, 7
        %v1003 = vsel %vm258, %v998, %v1002
        %s1004 = scalar_lea.vmem %s1, 448
        %v1005 = vld [vmem:[%s1004] sm:$0xf]
        %v1006 = vld [vmem:[%s1004 + $0x4] sm:$0xf]
        %v1007 = vld [vmem:[%s1004 + $0x8] sm:$0xf]
        %v1008 = vld [vmem:[%s1004 + $0xc] sm:$0xf]
        %v1009 = vld [vmem:[%s1004 + $0x10] sm:$0xf]
        %v1010 = vld [vmem:[%s1004 + $0x14] sm:$0xf]
        %v1011 = vld [vmem:[%s1004 + $0x18] sm:$0xf]
        %v1012 = vld [vmem:[%s1004 + $0x1c] sm:$0xf]
        %v1013 = vld [vmem:[%s1004 + $0x20] sm:$0xf]
        %v1014 = vld [vmem:[%s1004 + $0x24] sm:$0xf]
        %v1015 = vld [vmem:[%s1004 + $0x28] sm:$0xf]
        %v1016 = vld [vmem:[%s1004 + $0x2c] sm:$0xf]
        %v1017 = vld [vmem:[%s1004 + $0x30] sm:$0xf]
        %v1018 = vld [vmem:[%s1004 + $0x34] sm:$0xf]
        %v1019 = vld [vmem:[%s1004 + $0x38] sm:$0xf]
        %v1020 = vld [vmem:[%s1004 + $0x3c] sm:$0xf]
        %1021 = vst [vmem:[#allocation1] ss:$4 sm:$0xff] %v297
        %s1022 = scalar_lea.vmem [#allocation1], 1
        %1023 = vst [vmem:[%s1022] ss:$4 sm:$0xff] %v310
        %s1024 = scalar_lea.vmem [#allocation1], 2
        %1025 = vst [vmem:[%s1024] ss:$4 sm:$0xff] %v705
        %s1027 = scalar_lea.vmem [#allocation1], 3
        %1028 = vst [vmem:[%s1027] ss:$4 sm:$0xff] %v1003
        %v1029 = vld.sshfl [vmem:[#allocation1] sm:$0xff pattern:$0x73625140]
        %v1047 = vunpack.c.l.b16 %v1005
        %v1048 = vunpack.c.l.b16 %v1006
        %v1049 = vunpack.c.l.b16 %v1007
        %v1050 = vunpack.c.l.b16 %v1008
        %v1051 = vunpack.c.l.b16 %v1009
        %v1052 = vunpack.c.l.b16 %v1010
        %v1053 = vunpack.c.l.b16 %v1011
        %v1054 = vunpack.c.l.b16 %v1012
        %v1055 = vunpack.c.l.b16 %v1013
        %v1056 = vunpack.c.l.b16 %v1014
        %v1057 = vunpack.c.l.b16 %v1015
        %v1058 = vunpack.c.l.b16 %v1016
        %v1059 = vunpack.c.l.b16 %v1017
        %v1060 = vunpack.c.l.b16 %v1018
        %v1061 = vunpack.c.l.b16 %v1019
        %v1062 = vunpack.c.l.b16 %v1020
        %v1063 = vpack.c.b16 %v1048, %v1047
        %v1064 = vpack.c.b16 %v1050, %v1049
        %v1065 = vpack.c.b16 %v1052, %v1051
        %v1066 = vpack.c.b16 %v1054, %v1053
        %v1067 = vpack.c.b16 %v1056, %v1055
        %v1068 = vpack.c.b16 %v1058, %v1057
        %v1069 = vpack.c.b16 %v1060, %v1059
        %v1070 = vpack.c.b16 %v1062, %v1061
        %1079 = vmatpush.bf16.msra.mxu0 %v1070
        %1080 = vmatpush.bf16.msra.mxu0 %v1069
        %1081 = vmatpush.bf16.msra.mxu0 %v1068
        %1082 = vmatpush.bf16.msra.mxu0 %v1067
        %1083 = vmatpush.bf16.msra.mxu0 %v1066
        %1084 = vmatpush.bf16.msra.mxu0 %v1065
        %1085 = vmatpush.bf16.msra.mxu0 %v1064
        %1086 = vmatpush.bf16.msra.mxu0 %v1063
        %1087 = vmatmul.bf16.gmra.mxu0 %v1029
        %v1088 = vpop.f32.mrf.mxu0
        %v1089 = vadd.f32 0.0, %v1088
        %v1090 = vpop.f32.mrf.mxu0
        %v1091 = vadd.f32 0.0, %v1090
        %1092 = vdwg.mxu0
        %v1093 = vadd.f32 %v982, %v1089
        %v1094 = vadd.f32 %v983, %v1091
        %v1096 = vrot.slane %v987, 7
        %v1097 = vrot.slane %v1096, 2
        %v1098 = vrot.slane %v990, 7
        %v1099 = vsel %vm484, %v1097, %v1098
        %s1100 = scalar_lea.vmem %s1, 512
        %v1101 = vld [vmem:[%s1100] sm:$0xf]
        %v1102 = vld [vmem:[%s1100 + $0x4] sm:$0xf]
        %v1103 = vld [vmem:[%s1100 + $0x8] sm:$0xf]
        %v1104 = vld [vmem:[%s1100 + $0xc] sm:$0xf]
        %v1105 = vld [vmem:[%s1100 + $0x10] sm:$0xf]
        %v1106 = vld [vmem:[%s1100 + $0x14] sm:$0xf]
        %v1107 = vld [vmem:[%s1100 + $0x18] sm:$0xf]
        %v1108 = vld [vmem:[%s1100 + $0x1c] sm:$0xf]
        %v1109 = vld [vmem:[%s1100 + $0x20] sm:$0xf]
        %v1110 = vld [vmem:[%s1100 + $0x24] sm:$0xf]
        %v1111 = vld [vmem:[%s1100 + $0x28] sm:$0xf]
        %v1112 = vld [vmem:[%s1100 + $0x2c] sm:$0xf]
        %v1113 = vld [vmem:[%s1100 + $0x30] sm:$0xf]
        %v1114 = vld [vmem:[%s1100 + $0x34] sm:$0xf]
        %v1115 = vld [vmem:[%s1100 + $0x38] sm:$0xf]
        %v1116 = vld [vmem:[%s1100 + $0x3c] sm:$0xf]
        %1117 = vst [vmem:[#allocation1] ss:$4 sm:$0xff] %v496
        %s1118 = scalar_lea.vmem [#allocation1], 1
        %1119 = vst [vmem:[%s1118] ss:$4 sm:$0xff] %v500
        %s1120 = scalar_lea.vmem [#allocation1], 2
        %1121 = vst [vmem:[%s1120] ss:$4 sm:$0xff] %v801
        %s1123 = scalar_lea.vmem [#allocation1], 3
        %1124 = vst [vmem:[%s1123] ss:$4 sm:$0xff] %v1099
        %v1125 = vld.sshfl [vmem:[#allocation1] sm:$0xff pattern:$0x73625140]
        %v1143 = vunpack.c.l.b16 %v1101
        %v1144 = vunpack.c.l.b16 %v1102
        %v1145 = vunpack.c.l.b16 %v1103
        %v1146 = vunpack.c.l.b16 %v1104
        %v1147 = vunpack.c.l.b16 %v1105
        %v1148 = vunpack.c.l.b16 %v1106
        %v1149 = vunpack.c.l.b16 %v1107
        %v1150 = vunpack.c.l.b16 %v1108
        %v1151 = vunpack.c.l.b16 %v1109
        %v1152 = vunpack.c.l.b16 %v1110
        %v1153 = vunpack.c.l.b16 %v1111
        %v1154 = vunpack.c.l.b16 %v1112
        %v1155 = vunpack.c.l.b16 %v1113
        %v1156 = vunpack.c.l.b16 %v1114
        %v1157 = vunpack.c.l.b16 %v1115
        %v1158 = vunpack.c.l.b16 %v1116
        %v1159 = vpack.c.b16 %v1144, %v1143
        %v1160 = vpack.c.b16 %v1146, %v1145
        %v1161 = vpack.c.b16 %v1148, %v1147
        %v1162 = vpack.c.b16 %v1150, %v1149
        %v1163 = vpack.c.b16 %v1152, %v1151
        %v1164 = vpack.c.b16 %v1154, %v1153
        %v1165 = vpack.c.b16 %v1156, %v1155
        %v1166 = vpack.c.b16 %v1158, %v1157
        %1175 = vmatpush.bf16.msra.mxu0 %v1166
        %1176 = vmatpush.bf16.msra.mxu0 %v1165
        %1177 = vmatpush.bf16.msra.mxu0 %v1164
        %1178 = vmatpush.bf16.msra.mxu0 %v1163
        %1179 = vmatpush.bf16.msra.mxu0 %v1162
        %1180 = vmatpush.bf16.msra.mxu0 %v1161
        %1181 = vmatpush.bf16.msra.mxu0 %v1160
        %1182 = vmatpush.bf16.msra.mxu0 %v1159
        %1183 = vmatmul.bf16.gmra.mxu0 %v1125
        %v1184 = vpop.f32.mrf.mxu0
        %v1185 = vadd.f32 0.0, %v1184
        %v1186 = vpop.f32.mrf.mxu0
        %v1187 = vadd.f32 0.0, %v1186
        %1188 = vdwg.mxu0
        %v1189 = vadd.f32 %v1093, %v1185
        %v1190 = vadd.f32 %v1094, %v1187
        %v1191 = vld [vmem:[%s2] sm:$0x1]
        %v1192 = vld [vmem:[%s3] sm:$0x1]
        %1193 = vadd.xlane.f32.xlu0 %v1189
        %v1194 = vpop.xlane.xlu0 %1193
        %1195 = vadd.xlane.f32.xlu0 %v1190
        %v1196 = vpop.xlane.xlu0 %1195
        %v1197 = vrcp.pop 128.0
        %v1198 = vmul.f32 128.0, %v1197
        %v1199 = vsub.f32 1.0, %v1198
        %v1200 = vmul.f32 %v1197, %v1199
        %v1201 = vadd.f32 %v1197, %v1200
        %vm1202 = vweird.f32 %v1197
        %v1203 = vsel %vm1202, %v1197, %v1201
        %v1204 = vmul.f32 %v1194, %v1203
        %v1205 = vmul.f32 %v1196, %v1203
        %v1206 = vsub.f32 %v1189, %v1204
        %v1207 = vsub.f32 %v1190, %v1205
        %v1208 = vmul.f32 %v1206, %v1206
        %v1209 = vmul.f32 %v1207, %v1207
        %1210 = vadd.xlane.f32.xlu0 %v1208
        %v1211 = vpop.xlane.xlu0 %1210
        %1212 = vadd.xlane.f32.xlu0 %v1209
        %v1213 = vpop.xlane.xlu0 %1212
        %v1214 = vmul.f32 %v1211, %v1203
        %v1215 = vmul.f32 %v1213, %v1203
        %v1216 = vadd.f32 %v1214, 1e-06
        %v1217 = vadd.f32 %v1215, 1e-06
        %v1218 = vrsqrt.pop %v1216
        %v1219 = vmul.f32 %v1218, %v1216
        %v1220 = vmul.f32 %v1219, %v1218
        %v1221 = vmul.f32 0.5, %v1220
        %v1222 = vsub.f32 1.5, %v1221
        %v1223 = vmul.f32 %v1218, %v1222
        %vm1224 = vweird.f32 %v1216
        %vm1225 = vweird.f32 %v1218
        %vm1226 = vmor %vm1224, %vm1225
        %v1227 = vsel %vm1226, %v1218, %v1223
        %v1228 = vrsqrt.pop %v1217
        %v1229 = vmul.f32 %v1228, %v1217
        %v1230 = vmul.f32 %v1229, %v1228
        %v1231 = vmul.f32 0.5, %v1230
        %v1232 = vsub.f32 1.5, %v1231
        %v1233 = vmul.f32 %v1228, %v1232
        %vm1234 = vweird.f32 %v1217
        %vm1235 = vweird.f32 %v1228
        %vm1236 = vmor %vm1234, %vm1235
        %v1237 = vsel %vm1236, %v1228, %v1233
        %v1238 = vmul.f32 %v1206, %v1227
        %v1239 = vmul.f32 %v1207, %v1237
        %v1241 = vperm.slane %v1191, 0
        %v1243 = vmul.f32 %v1238, %v1241
        %v1244 = vmul.f32 %v1239, %v1241
        %v1246 = vperm.slane %v1192, 0
        %v1248 = vadd.f32 %v1243, %v1246
        %v1249 = vadd.f32 %v1244, %v1246
        %v1252 = vrot.slane %v1248, 4
        %v1253 = vrot.slane %v1249, 4
        %1256 = vst [vmem:[%s190] sm:$0xf] %v1248
        %1257 = vst [vmem:[%s190 + $0x4] sm:$0xf] %v1252
        %1258 = vst [vmem:[%s190 + $0x8] sm:$0xf] %v1249
        %1259 = vst [vmem:[%s190 + $0xc] sm:$0xf] %v1253
        %s1260 = sand.u32 %s115, 1
        %s1261 = scalar_lea.sflag [#allocation3], %s1260
        %s1262 = sand.u32 %s115, 1
        %s1263 = smul.addr %s1262, 16
        %s1264 = scalar_lea.vmem [#allocation2], %s1263
        // Predicated region
        $region37: #{mhr_medseg_forward.37} parent=35 // pred_check
          %p1265 = pneg %p125
        $region38: #{mhr_medseg_forward.37} parent=35 // pred_check_branch
          %1267 = sbr.rel (%p1265) target = $region40
        $region39: #{mhr_medseg_forward.37} parent=35 // pred_region
          %1269 = vsyncadd %s1261, 0
          %s1270 = smul.addr %s18, 4
          %s1271 = smul.addr %s1270, 4
          %s1272 = scalar_lea.hbm %s4, %s1271
          %s1273 = sshll.u32 %s1264, 4
          %s1274 = int_to_ptr.vmem [resolvable:$true] %s1273
          %s1275 = sshll.u32 %s1272, 4
          %s1276 = int_to_ptr.hbm [resolvable:$true] %s1275
          %1281 = dma.vmem_to_hbm [thread:$0]  %s1274, 256, %s1276, %s1261, 64, 64, 4
        $region40: #{mhr_medseg_forward.37} parent=35 // pred_fallthru
          _
      $region36: #{mhr_medseg_forward.37} parent=5 // pred_fallthru
        _
      %p1282 = scmp.le.s32.totalorder 2, %s13
      // Predicated region
      $region41: #{mhr_medseg_forward.37} parent=5 // pred_check
        %p1283 = pneg %p1282
      $region42: #{mhr_medseg_forward.37} parent=5 // pred_check_branch
        %1285 = sbr.rel (%p1283) target = $region44
      $region43: #{mhr_medseg_forward.37} parent=5 // pred_region
        %s1286 = ssub.s32 %s13, 2
        // Predicated region
        $region45: #{mhr_medseg_forward.37} parent=43 // pred_check
          %p1287 = pneg %p131
        $region46: #{mhr_medseg_forward.37} parent=43 // pred_check_branch
          %1289 = sbr.rel (%p1287) target = $region48
        $region47: #{mhr_medseg_forward.37} parent=43 // pred_region
          %s1290 = sand.u32 %s116, 1
          %s1291 = scalar_lea.sflag [#allocation3], %s1290
          %s1292 = sand.u32 %s116, 1
          %s1293 = smul.addr %s1292, 16
          %s1294 = scalar_lea.vmem [#allocation2], %s1293
          %1296 = dma.done %s1291, 256
        $region48: #{mhr_medseg_forward.37} parent=43 // pred_fallthru
          _
      $region44: #{mhr_medseg_forward.37} parent=5 // pred_fallthru
        _
    $region6: #{mhr_medseg_forward.37} parent=1 // loop_footer
      %s17 = sadd.s32 1, %s13
    $region7: #{mhr_medseg_forward.37} parent=1 // loop_footer_branch
      %12 = sbr.rel target = $region3
    $region8: #{mhr_medseg_forward.37} parent=1 // loop_exit
      _
    %1297 = vsyncpa [#allocation3], 1
    %s1298 = scalar_lea.sflag [#allocation3], 1
    %1299 = vsyncpa %s1298, 1

</llo_original>
